<compile_context>
chip_gen: v5e
topology: v5e:2x2
jax: 0.10.0
libtpu: 0.0.40
codegen_flags: <defaults>
</compile_context>

<pallas_src>
import jax
import jax.numpy as jnp
from jax.experimental import pallas as pl
from jax.experimental.pallas import tpu as pltpu

BN_EPS = 1e-5
LN_EPS = 1e-5
VMEM_LIMIT = 32 * 1024 * 1024  # conservative scoped-VMEM limit for all TPU gens


# ---------------------------------------------------------------------------
# Fused Conv2d(3x3, stride 1, pad 1) + BatchNorm2d(train-mode) + ReLU
# ---------------------------------------------------------------------------
def conv_bn_relu(x_bhwc, w9, gamma, beta):
    """x_bhwc: (B, H, W, Cin) f32;  w9: (9, Cin, N) bf16 (k = kh*3+kw);
    gamma/beta: (N,) f32.  Returns (B, H, W, N) f32."""
    B, H, W, Cin = x_bhwc.shape
    N = w9.shape[-1]
    Hp, Wp = H + 2, W + 2
    HW = H * W
    M_total = B * HW

    xp = jnp.pad(x_bhwc, ((0, 0), (1, 1), (1, 1), (0, 0)))  # zero pad H, W

    def kernel(x_ref, w_ref, g_ref, bt_ref, o_ref, sum_ref, sq_ref):
        p = pl.program_id(0)   # 0: stats pass, 1: normalize/apply pass
        b = pl.program_id(1)   # batch tile (M tile of the implicit GEMM)

        @pl.when(jnp.logical_and(p == 0, b == 0))
        def _init():
            sum_ref[...] = jnp.zeros_like(sum_ref)
            sq_ref[...] = jnp.zeros_like(sq_ref)

        # -- 3x3 conv: 9 shifted-slice matmuls, bf16 MXU, f32 accumulate -----
        acc = jnp.zeros((HW, N), jnp.float32)
        for kh in range(3):
            for kw in range(3):
                xs = x_ref[0, kh:kh + H, kw:kw + W, :]        # (H, W, Cin) f32
                xs = xs.reshape(HW, Cin).astype(jnp.bfloat16)
                acc = acc + jnp.dot(xs, w_ref[kh * 3 + kw],
                                    preferred_element_type=jnp.float32)
        # Conv bias omitted: BN's batch-mean subtraction cancels it exactly.

        @pl.when(p == 0)
        def _stats():
            sum_ref[...] += jnp.sum(acc, axis=0, keepdims=True)
            sq_ref[...] += jnp.sum(acc * acc, axis=0, keepdims=True)
            o_ref[0] = acc        # keep the block defined; overwritten in pass 1

        @pl.when(p == 1)
        def _apply():
            inv_m = 1.0 / float(M_total)
            mean = sum_ref[...] * inv_m                       # (1, N)
            var = sq_ref[...] * inv_m - mean * mean           # biased (torch)
            scale = jax.lax.rsqrt(var + BN_EPS) * g_ref[...]
            y = (acc - mean) * scale + bt_ref[...]
            o_ref[0] = jnp.maximum(y, 0.0)

    out = pl.pallas_call(
        kernel,
        grid=(2, B),
        out_shape=jax.ShapeDtypeStruct((B, HW, N), jnp.float32),
        in_specs=[
            pl.BlockSpec((1, Hp, Wp, Cin), lambda p, b: (b, 0, 0, 0)),
            pl.BlockSpec((9, Cin, N), lambda p, b: (0, 0, 0)),
            pl.BlockSpec((1, N), lambda p, b: (0, 0)),
            pl.BlockSpec((1, N), lambda p, b: (0, 0)),
        ],
        out_specs=pl.BlockSpec((1, HW, N), lambda p, b: (b, 0, 0)),
        scratch_shapes=[pltpu.VMEM((1, N), jnp.float32),   # per-channel sum
                        pltpu.VMEM((1, N), jnp.float32)],  # per-channel sum^2
        compiler_params=pltpu.CompilerParams(
            # Both axes "arbitrary": the batch tiles accumulate into a shared
            # BN-stats scratch (a per-core partial + combine would be needed to
            # mark them parallel on v7x megacore).
            dimension_semantics=("arbitrary", "arbitrary"),
            vmem_limit_bytes=VMEM_LIMIT),
    )(xp, w9, gamma.reshape(1, N), beta.reshape(1, N))
    return out.reshape(B, H, W, N)


# ---------------------------------------------------------------------------
# MaxPool2d(2, stride 2): single-read kernel over a free contiguous reshape
# ---------------------------------------------------------------------------
def maxpool2x2(x_bhwc):
    B, H, W, C = x_bhwc.shape
    Ho, Wo = H // 2, W // 2
    x6 = x_bhwc.reshape(B, Ho, 2, Wo, 2, C)   # contiguous reshape, no HBM copy

    def kernel(x_ref, o_ref):
        v = x_ref[0]                            # (Ho, 2, Wo, 2, C)
        o_ref[0] = jnp.max(jnp.max(v, axis=3), axis=1)

    return pl.pallas_call(
        kernel,
        grid=(B,),
        out_shape=jax.ShapeDtypeStruct((B, Ho, Wo, C), x_bhwc.dtype),
        in_specs=[pl.BlockSpec((1, Ho, 2, Wo, 2, C),
                               lambda b: (b, 0, 0, 0, 0, 0))],
        out_specs=pl.BlockSpec((1, Ho, Wo, C), lambda b: (b, 0, 0, 0)),
        compiler_params=pltpu.CompilerParams(
            dimension_semantics=("parallel",),
            vmem_limit_bytes=VMEM_LIMIT),
    )(x6)


# ---------------------------------------------------------------------------
# LayerNorm over the channel dim, tiled over flattened (B*L) rows
# ---------------------------------------------------------------------------
def _pick_row_tile(n_rows, cap=128):
    start = min(cap, n_rows)
    start -= start % 8
    for t in range(start, 7, -8):
        if n_rows % t == 0:
            return t
    return n_rows


def layernorm(x_blc, gamma, beta):
    B, L, C = x_blc.shape
    rows = B * L
    x2 = x_blc.reshape(rows, C)
    R = _pick_row_tile(rows)

    def kernel(x_ref, g_ref, b_ref, o_ref):
        x = x_ref[...]
        mean = jnp.mean(x, axis=1, keepdims=True)
        xc = x - mean
        var = jnp.mean(xc * xc, axis=1, keepdims=True)
        o_ref[...] = xc * jax.lax.rsqrt(var + LN_EPS) * g_ref[...] + b_ref[...]

    out = pl.pallas_call(
        kernel,
        grid=(rows // R,),
        out_shape=jax.ShapeDtypeStruct((rows, C), jnp.float32),
        in_specs=[pl.BlockSpec((R, C), lambda i: (i, 0)),
                  pl.BlockSpec((1, C), lambda i: (0, 0)),
                  pl.BlockSpec((1, C), lambda i: (0, 0))],
        out_specs=pl.BlockSpec((R, C), lambda i: (i, 0)),
        compiler_params=pltpu.CompilerParams(
            dimension_semantics=("parallel",),
            vmem_limit_bytes=VMEM_LIMIT),
    )(x2, gamma.reshape(1, C), beta.reshape(1, C))
    return out.reshape(B, L, C)


# ---------------------------------------------------------------------------
# Parameters (deterministic, synthetic)
# ---------------------------------------------------------------------------
def _prep_conv_weight(w_oihw):
    """(Cout, Cin, 3, 3) torch layout -> (9, Cin, Cout) bf16, k = kh*3 + kw."""
    cout, cin = w_oihw.shape[0], w_oihw.shape[1]
    return (jnp.transpose(w_oihw, (2, 3, 1, 0))
            .reshape(9, cin, cout).astype(jnp.bfloat16))


def make_params(in_ch, U, alpha=1):
    Wc = alpha * U
    ks = jax.random.split(jax.random.PRNGKey(0), 5)

    def conv_w(k, cin, cout):
        return jax.random.normal(k, (cout, cin, 3, 3), jnp.float32) * 0.1

    def bn(c):
        return jnp.ones((c,), jnp.float32), jnp.zeros((c,), jnp.float32)

    w_one = conv_w(ks[0], in_ch, 1)
    w_res = conv_w(ks[1], 1, Wc)
    w_3x3 = conv_w(ks[2], 1, Wc)
    w_5x5 = conv_w(ks[3], Wc, Wc)
    w_7x7 = conv_w(ks[4], Wc, Wc)

    g1, b1 = bn(1)
    # residual_layer and conv3x3 are fused along output channels; per-channel
    # BN stats are column-independent, so concatenating BN params is exact.
    gr, br = bn(Wc)
    g3, b3 = bn(Wc)
    g5, b5 = bn(Wc)
    g7, b7 = bn(Wc)
    return {
        "one_ch":  (_prep_conv_weight(w_one), g1, b1),
        "res_3x3": (_prep_conv_weight(jnp.concatenate([w_res, w_3x3], axis=0)),
                    jnp.concatenate([gr, g3]), jnp.concatenate([br, b3])),
        "conv5x5": (_prep_conv_weight(w_5x5), g5, b5),
        "conv7x7": (_prep_conv_weight(w_7x7), g7, b7),
        "ln":      (jnp.ones((Wc,), jnp.float32), jnp.zeros((Wc,), jnp.float32)),
    }


# ---------------------------------------------------------------------------
# MultiResBlock_157 forward
# ---------------------------------------------------------------------------
def multires_block_forward(x_nchw, params):
    # PyTorch input is NCHW; internal compute layout is NHWC.
    x = jnp.transpose(x_nchw, (0, 2, 3, 1)).astype(jnp.float32)
    B = x.shape[0]

    x1 = conv_bn_relu(x, *params["one_ch"])            # (B, H, W, 1)

    fused = conv_bn_relu(x1, *params["res_3x3"])        # (B, H, W, 2*Wc)
    Wc = fused.shape[-1] // 2
    res = fused[..., :Wc]                                # residual branch
    sbs = fused[..., Wc:]                                # conv3x3 branch

    res_out = maxpool2x2(res)                            # (B, Ho, Wo, Wc)
    Ho, Wo = res_out.shape[1], res_out.shape[2]

    obo = conv_bn_relu(sbs, *params["conv5x5"])          # (B, H, W, Wc)
    obo_out = maxpool2x2(obo)

    cbc = conv_bn_relu(obo, *params["conv7x7"])          # (B, H, W, Wc)
    cbc_out = maxpool2x2(cbc)

    def flat(t):                                         # == flatten(2).transpose(1, 2)
        return t.reshape(B, Ho * Wo, Wc)

    all_t = jnp.concatenate([flat(res_out), flat(obo_out), flat(cbc_out)],
                            axis=1)                      # (B, 3*Ho*Wo, Wc)
    return layernorm(all_t, *params["ln"])


# ---------------------------------------------------------------------------
if __name__ == "__main__":
    B, in_ch, H, Wd = 2, 4, 16, 16
    U, alpha = 8, 1
    Wc = alpha * U

    params = make_params(in_ch, U, alpha)
    x = jax.random.normal(jax.random.PRNGKey(0), (B, in_ch, H, Wd), jnp.float32)

    fwd = jax.jit(multires_block_forward)
    out = jax.block_until_ready(fwd(x, params))

    expected_shape = (B, 3 * (H // 2) * (Wd // 2), Wc)
    assert out.shape == expected_shape, (out.shape, expected_shape)
    assert bool(jnp.all(jnp.isfinite(out)))
    print("KERNEL_OK")
</pallas_src>

<mosaic_0001>
module attributes {stable_mosaic.version = 11 : i64} {
  func.func @kernel(%arg0: i32, %arg1: i32, %arg2: memref<1x18x18x4xf32, #tpu.memory_space<vmem>>, %arg3: memref<9x4x1xbf16, #tpu.memory_space<vmem>>, %arg4: memref<1x1xf32, #tpu.memory_space<vmem>>, %arg5: memref<1x1xf32, #tpu.memory_space<vmem>>, %arg6: memref<1x256x1xf32, #tpu.memory_space<vmem>>, %arg7: memref<1x1xf32, #tpu.memory_space<vmem>>, %arg8: memref<1x1xf32, #tpu.memory_space<vmem>>) attributes {dimension_semantics = [#tpu.dimension_semantics<arbitrary>, #tpu.dimension_semantics<arbitrary>], iteration_bounds = array<i64: 2, 2>, scalar_prefetch = 0 : i64, scratch_operands = 2 : i64, tpu.core_type = #tpu.core_type<tc>, window_params = [{transform_indices = @transform_0, window_bounds = array<i64: 1, 18, 18, 4>}, {pipeline_mode = #tpu.pipeline_mode<synchronous>, transform_indices = @transform_1, window_bounds = array<i64: 9, 4, 1>}, {pipeline_mode = #tpu.pipeline_mode<synchronous>, transform_indices = @transform_2, window_bounds = array<i64: 1, 1>}, {pipeline_mode = #tpu.pipeline_mode<synchronous>, transform_indices = @transform_3, window_bounds = array<i64: 1, 1>}, {transform_indices = @transform_4, window_bounds = array<i64: 1, 256, 1>}]} {
    %c0_i32 = arith.constant 0 : i32
    %0 = arith.cmpi eq, %arg0, %c0_i32 : i32
    %c0_i32_0 = arith.constant 0 : i32
    %1 = arith.cmpi eq, %arg1, %c0_i32_0 : i32
    %2 = arith.andi %0, %1 : i1
    %3 = arith.extui %2 : i1 to i32
    %c0_i32_1 = arith.constant 0 : i32
    %4 = arith.cmpi ne, %3, %c0_i32_1 : i32
    scf.if %4 {
      %cst_68 = arith.constant 0.000000e+00 : f32
      %84 = vector.broadcast %cst_68 : f32 to vector<1x1xf32>
      %c0_69 = arith.constant 0 : index
      %c0_70 = arith.constant 0 : index
      %85 = vector.load %arg7[%c0_69, %c0_70] : memref<1x1xf32, #tpu.memory_space<vmem>>, vector<1x1xf32>
      tpu.vector_store %arg7[%c0_69, %c0_70], %84 {strides = array<i32>} : memref<1x1xf32, #tpu.memory_space<vmem>>, vector<1x1xf32>,
      %cst_71 = arith.constant 0.000000e+00 : f32
      %86 = vector.broadcast %cst_71 : f32 to vector<1x1xf32>
      %c0_72 = arith.constant 0 : index
      %c0_73 = arith.constant 0 : index
      %87 = vector.load %arg8[%c0_72, %c0_73] : memref<1x1xf32, #tpu.memory_space<vmem>>, vector<1x1xf32>
      tpu.vector_store %arg8[%c0_72, %c0_73], %86 {strides = array<i32>} : memref<1x1xf32, #tpu.memory_space<vmem>>, vector<1x1xf32>,
    } else {
    }
    %cst = arith.constant 0.000000e+00 : f32
    %5 = vector.broadcast %cst : f32 to vector<256x1xf32>
    %c0 = arith.constant 0 : index
    %c0_2 = arith.constant 0 : index
    %c0_3 = arith.constant 0 : index
    %c0_4 = arith.constant 0 : index
    %6 = vector.load %arg2[%c0, %c0_2, %c0_3, %c0_4] : memref<1x18x18x4xf32, #tpu.memory_space<vmem>>, vector<1x16x16x4xf32>
    %7 = vector.shape_cast %6 : vector<1x16x16x4xf32> to vector<16x16x4xf32>
    %8 = vector.shape_cast %7 : vector<16x16x4xf32> to vector<256x4xf32>
    %9 = arith.truncf %8 : vector<256x4xf32> to vector<256x4xbf16>
    %c0_5 = arith.constant 0 : index
    %c0_6 = arith.constant 0 : index
    %c0_7 = arith.constant 0 : index
    %10 = vector.load %arg3[%c0_5, %c0_6, %c0_7] : memref<9x4x1xbf16, #tpu.memory_space<vmem>>, vector<1x4x1xbf16>
    %11 = vector.shape_cast %10 : vector<1x4x1xbf16> to vector<4x1xbf16>
    %cst_8 = arith.constant dense<0.000000e+00> : vector<256x1xf32>
    %12 = tpu.matmul %9, %11, %cst_8 {dimension_numbers = #tpu.dot_dimension_numbers<[1], [0], [0], [1], [0, 0, 1, 1], [], []>} : vector<256x4xbf16>, vector<4x1xbf16>, vector<256x1xf32> -> vector<256x1xf32>
    %13 = arith.addf %5, %12 : vector<256x1xf32>
    %c0_9 = arith.constant 0 : index
    %c0_10 = arith.constant 0 : index
    %c1 = arith.constant 1 : index
    %c0_11 = arith.constant 0 : index
    %14 = vector.load %arg2[%c0_9, %c0_10, %c1, %c0_11] : memref<1x18x18x4xf32, #tpu.memory_space<vmem>>, vector<1x16x16x4xf32>
    %15 = vector.shape_cast %14 : vector<1x16x16x4xf32> to vector<16x16x4xf32>
    %16 = vector.shape_cast %15 : vector<16x16x4xf32> to vector<256x4xf32>
    %17 = arith.truncf %16 : vector<256x4xf32> to vector<256x4xbf16>
    %c1_12 = arith.constant 1 : index
    %c0_13 = arith.constant 0 : index
    %c0_14 = arith.constant 0 : index
    %18 = vector.load %arg3[%c1_12, %c0_13, %c0_14] : memref<9x4x1xbf16, #tpu.memory_space<vmem>>, vector<1x4x1xbf16>
    %19 = vector.shape_cast %18 : vector<1x4x1xbf16> to vector<4x1xbf16>
    %cst_15 = arith.constant dense<0.000000e+00> : vector<256x1xf32>
    %20 = tpu.matmul %17, %19, %cst_15 {dimension_numbers = #tpu.dot_dimension_numbers<[1], [0], [0], [1], [0, 0, 1, 1], [], []>} : vector<256x4xbf16>, vector<4x1xbf16>, vector<256x1xf32> -> vector<256x1xf32>
    %21 = arith.addf %13, %20 : vector<256x1xf32>
    %c0_16 = arith.constant 0 : index
    %c0_17 = arith.constant 0 : index
    %c2 = arith.constant 2 : index
    %c0_18 = arith.constant 0 : index
    %22 = vector.load %arg2[%c0_16, %c0_17, %c2, %c0_18] : memref<1x18x18x4xf32, #tpu.memory_space<vmem>>, vector<1x16x16x4xf32>
    %23 = vector.shape_cast %22 : vector<1x16x16x4xf32> to vector<16x16x4xf32>
    %24 = vector.shape_cast %23 : vector<16x16x4xf32> to vector<256x4xf32>
    %25 = arith.truncf %24 : vector<256x4xf32> to vector<256x4xbf16>
    %c2_19 = arith.constant 2 : index
    %c0_20 = arith.constant 0 : index
    %c0_21 = arith.constant 0 : index
    %26 = vector.load %arg3[%c2_19, %c0_20, %c0_21] : memref<9x4x1xbf16, #tpu.memory_space<vmem>>, vector<1x4x1xbf16>
    %27 = vector.shape_cast %26 : vector<1x4x1xbf16> to vector<4x1xbf16>
    %cst_22 = arith.constant dense<0.000000e+00> : vector<256x1xf32>
    %28 = tpu.matmul %25, %27, %cst_22 {dimension_numbers = #tpu.dot_dimension_numbers<[1], [0], [0], [1], [0, 0, 1, 1], [], []>} : vector<256x4xbf16>, vector<4x1xbf16>, vector<256x1xf32> -> vector<256x1xf32>
    %29 = arith.addf %21, %28 : vector<256x1xf32>
    %c0_23 = arith.constant 0 : index
    %c1_24 = arith.constant 1 : index
    %c0_25 = arith.constant 0 : index
    %c0_26 = arith.constant 0 : index
    %30 = vector.load %arg2[%c0_23, %c1_24, %c0_25, %c0_26] : memref<1x18x18x4xf32, #tpu.memory_space<vmem>>, vector<1x16x16x4xf32>
    %31 = vector.shape_cast %30 : vector<1x16x16x4xf32> to vector<16x16x4xf32>
    %32 = vector.shape_cast %31 : vector<16x16x4xf32> to vector<256x4xf32>
    %33 = arith.truncf %32 : vector<256x4xf32> to vector<256x4xbf16>
    %c3 = arith.constant 3 : index
    %c0_27 = arith.constant 0 : index
    %c0_28 = arith.constant 0 : index
    %34 = vector.load %arg3[%c3, %c0_27, %c0_28] : memref<9x4x1xbf16, #tpu.memory_space<vmem>>, vector<1x4x1xbf16>
    %35 = vector.shape_cast %34 : vector<1x4x1xbf16> to vector<4x1xbf16>
    %cst_29 = arith.constant dense<0.000000e+00> : vector<256x1xf32>
    %36 = tpu.matmul %33, %35, %cst_29 {dimension_numbers = #tpu.dot_dimension_numbers<[1], [0], [0], [1], [0, 0, 1, 1], [], []>} : vector<256x4xbf16>, vector<4x1xbf16>, vector<256x1xf32> -> vector<256x1xf32>
    %37 = arith.addf %29, %36 : vector<256x1xf32>
    %c0_30 = arith.constant 0 : index
    %c1_31 = arith.constant 1 : index
    %c1_32 = arith.constant 1 : index
    %c0_33 = arith.constant 0 : index
    %38 = vector.load %arg2[%c0_30, %c1_31, %c1_32, %c0_33] : memref<1x18x18x4xf32, #tpu.memory_space<vmem>>, vector<1x16x16x4xf32>
    %39 = vector.shape_cast %38 : vector<1x16x16x4xf32> to vector<16x16x4xf32>
    %40 = vector.shape_cast %39 : vector<16x16x4xf32> to vector<256x4xf32>
    %41 = arith.truncf %40 : vector<256x4xf32> to vector<256x4xbf16>
    %c4 = arith.constant 4 : index
    %c0_34 = arith.constant 0 : index
    %c0_35 = arith.constant 0 : index
    %42 = vector.load %arg3[%c4, %c0_34, %c0_35] : memref<9x4x1xbf16, #tpu.memory_space<vmem>>, vector<1x4x1xbf16>
    %43 = vector.shape_cast %42 : vector<1x4x1xbf16> to vector<4x1xbf16>
    %cst_36 = arith.constant dense<0.000000e+00> : vector<256x1xf32>
    %44 = tpu.matmul %41, %43, %cst_36 {dimension_numbers = #tpu.dot_dimension_numbers<[1], [0], [0], [1], [0, 0, 1, 1], [], []>} : vector<256x4xbf16>, vector<4x1xbf16>, vector<256x1xf32> -> vector<256x1xf32>
    %45 = arith.addf %37, %44 : vector<256x1xf32>
    %c0_37 = arith.constant 0 : index
    %c1_38 = arith.constant 1 : index
    %c2_39 = arith.constant 2 : index
    %c0_40 = arith.constant 0 : index
    %46 = vector.load %arg2[%c0_37, %c1_38, %c2_39, %c0_40] : memref<1x18x18x4xf32, #tpu.memory_space<vmem>>, vector<1x16x16x4xf32>
    %47 = vector.shape_cast %46 : vector<1x16x16x4xf32> to vector<16x16x4xf32>
    %48 = vector.shape_cast %47 : vector<16x16x4xf32> to vector<256x4xf32>
    %49 = arith.truncf %48 : vector<256x4xf32> to vector<256x4xbf16>
    %c5 = arith.constant 5 : index
    %c0_41 = arith.constant 0 : index
    %c0_42 = arith.constant 0 : index
    %50 = vector.load %arg3[%c5, %c0_41, %c0_42] : memref<9x4x1xbf16, #tpu.memory_space<vmem>>, vector<1x4x1xbf16>
    %51 = vector.shape_cast %50 : vector<1x4x1xbf16> to vector<4x1xbf16>
    %cst_43 = arith.constant dense<0.000000e+00> : vector<256x1xf32>
    %52 = tpu.matmul %49, %51, %cst_43 {dimension_numbers = #tpu.dot_dimension_numbers<[1], [0], [0], [1], [0, 0, 1, 1], [], []>} : vector<256x4xbf16>, vector<4x1xbf16>, vector<256x1xf32> -> vector<256x1xf32>
    %53 = arith.addf %45, %52 : vector<256x1xf32>
    %c0_44 = arith.constant 0 : index
    %c2_45 = arith.constant 2 : index
    %c0_46 = arith.constant 0 : index
    %c0_47 = arith.constant 0 : index
    %54 = vector.load %arg2[%c0_44, %c2_45, %c0_46, %c0_47] : memref<1x18x18x4xf32, #tpu.memory_space<vmem>>, vector<1x16x16x4xf32>
    %55 = vector.shape_cast %54 : vector<1x16x16x4xf32> to vector<16x16x4xf32>
    %56 = vector.shape_cast %55 : vector<16x16x4xf32> to vector<256x4xf32>
    %57 = arith.truncf %56 : vector<256x4xf32> to vector<256x4xbf16>
    %c6 = arith.constant 6 : index
    %c0_48 = arith.constant 0 : index
    %c0_49 = arith.constant 0 : index
    %58 = vector.load %arg3[%c6, %c0_48, %c0_49] : memref<9x4x1xbf16, #tpu.memory_space<vmem>>, vector<1x4x1xbf16>
    %59 = vector.shape_cast %58 : vector<1x4x1xbf16> to vector<4x1xbf16>
    %cst_50 = arith.constant dense<0.000000e+00> : vector<256x1xf32>
    %60 = tpu.matmul %57, %59, %cst_50 {dimension_numbers = #tpu.dot_dimension_numbers<[1], [0], [0], [1], [0, 0, 1, 1], [], []>} : vector<256x4xbf16>, vector<4x1xbf16>, vector<256x1xf32> -> vector<256x1xf32>
    %61 = arith.addf %53, %60 : vector<256x1xf32>
    %c0_51 = arith.constant 0 : index
    %c2_52 = arith.constant 2 : index
    %c1_53 = arith.constant 1 : index
    %c0_54 = arith.constant 0 : index
    %62 = vector.load %arg2[%c0_51, %c2_52, %c1_53, %c0_54] : memref<1x18x18x4xf32, #tpu.memory_space<vmem>>, vector<1x16x16x4xf32>
    %63 = vector.shape_cast %62 : vector<1x16x16x4xf32> to vector<16x16x4xf32>
    %64 = vector.shape_cast %63 : vector<16x16x4xf32> to vector<256x4xf32>
    %65 = arith.truncf %64 : vector<256x4xf32> to vector<256x4xbf16>
    %c7 = arith.constant 7 : index
    %c0_55 = arith.constant 0 : index
    %c0_56 = arith.constant 0 : index
    %66 = vector.load %arg3[%c7, %c0_55, %c0_56] : memref<9x4x1xbf16, #tpu.memory_space<vmem>>, vector<1x4x1xbf16>
    %67 = vector.shape_cast %66 : vector<1x4x1xbf16> to vector<4x1xbf16>
    %cst_57 = arith.constant dense<0.000000e+00> : vector<256x1xf32>
    %68 = tpu.matmul %65, %67, %cst_57 {dimension_numbers = #tpu.dot_dimension_numbers<[1], [0], [0], [1], [0, 0, 1, 1], [], []>} : vector<256x4xbf16>, vector<4x1xbf16>, vector<256x1xf32> -> vector<256x1xf32>
    %69 = arith.addf %61, %68 : vector<256x1xf32>
    %c0_58 = arith.constant 0 : index
    %c2_59 = arith.constant 2 : index
    %c2_60 = arith.constant 2 : index
    %c0_61 = arith.constant 0 : index
    %70 = vector.load %arg2[%c0_58, %c2_59, %c2_60, %c0_61] : memref<1x18x18x4xf32, #tpu.memory_space<vmem>>, vector<1x16x16x4xf32>
    %71 = vector.shape_cast %70 : vector<1x16x16x4xf32> to vector<16x16x4xf32>
    %72 = vector.shape_cast %71 : vector<16x16x4xf32> to vector<256x4xf32>
    %73 = arith.truncf %72 : vector<256x4xf32> to vector<256x4xbf16>
    %c8 = arith.constant 8 : index
    %c0_62 = arith.constant 0 : index
    %c0_63 = arith.constant 0 : index
    %74 = vector.load %arg3[%c8, %c0_62, %c0_63] : memref<9x4x1xbf16, #tpu.memory_space<vmem>>, vector<1x4x1xbf16>
    %75 = vector.shape_cast %74 : vector<1x4x1xbf16> to vector<4x1xbf16>
    %cst_64 = arith.constant dense<0.000000e+00> : vector<256x1xf32>
    %76 = tpu.matmul %73, %75, %cst_64 {dimension_numbers = #tpu.dot_dimension_numbers<[1], [0], [0], [1], [0, 0, 1, 1], [], []>} : vector<256x4xbf16>, vector<4x1xbf16>, vector<256x1xf32> -> vector<256x1xf32>
    %77 = arith.addf %69, %76 : vector<256x1xf32>
    %c0_i32_65 = arith.constant 0 : i32
    %78 = arith.cmpi eq, %arg0, %c0_i32_65 : i32
    %79 = arith.extui %78 : i1 to i32
    %c0_i32_66 = arith.constant 0 : i32
    %80 = arith.cmpi ne, %79, %c0_i32_66 : i32
    scf.if %80 {
      %c0_68 = arith.constant 0 : index
      %c0_69 = arith.constant 0 : index
      %84 = vector.load %arg7[%c0_68, %c0_69] : memref<1x1xf32, #tpu.memory_space<vmem>>, vector<1x1xf32>
      %cst_70 = arith.constant dense<0.000000e+00> : vector<1xf32>
      %85 = vector.multi_reduction <add>, %77, %cst_70 [0] : vector<256x1xf32> to vector<1xf32>
      %86 = vector.shape_cast %85 : vector<1xf32> to vector<1x1xf32>
      %87 = arith.addf %84, %86 : vector<1x1xf32>
      %c0_71 = arith.constant 0 : index
      %c0_72 = arith.constant 0 : index
      %88 = vector.load %arg7[%c0_71, %c0_72] : memref<1x1xf32, #tpu.memory_space<vmem>>, vector<1x1xf32>
      tpu.vector_store %arg7[%c0_71, %c0_72], %87 {strides = array<i32>} : memref<1x1xf32, #tpu.memory_space<vmem>>, vector<1x1xf32>,
      %c0_73 = arith.constant 0 : index
      %c0_74 = arith.constant 0 : index
      %89 = vector.load %arg8[%c0_73, %c0_74] : memref<1x1xf32, #tpu.memory_space<vmem>>, vector<1x1xf32>
      %90 = arith.mulf %77, %77 : vector<256x1xf32>
      %cst_75 = arith.constant dense<0.000000e+00> : vector<1xf32>
      %91 = vector.multi_reduction <add>, %90, %cst_75 [0] : vector<256x1xf32> to vector<1xf32>
      %92 = vector.shape_cast %91 : vector<1xf32> to vector<1x1xf32>
      %93 = arith.addf %89, %92 : vector<1x1xf32>
      %c0_76 = arith.constant 0 : index
      %c0_77 = arith.constant 0 : index
      %94 = vector.load %arg8[%c0_76, %c0_77] : memref<1x1xf32, #tpu.memory_space<vmem>>, vector<1x1xf32>
      tpu.vector_store %arg8[%c0_76, %c0_77], %93 {strides = array<i32>} : memref<1x1xf32, #tpu.memory_space<vmem>>, vector<1x1xf32>,
      %c0_78 = arith.constant 0 : index
      %c0_79 = arith.constant 0 : index
      %c0_80 = arith.constant 0 : index
      %95 = vector.load %arg6[%c0_78, %c0_79, %c0_80] : memref<1x256x1xf32, #tpu.memory_space<vmem>>, vector<1x256x1xf32>
      %96 = vector.shape_cast %95 : vector<1x256x1xf32> to vector<256x1xf32>
      %97 = vector.shape_cast %77 : vector<256x1xf32> to vector<1x256x1xf32>
      tpu.vector_store %arg6[%c0_78, %c0_79, %c0_80], %97 {strides = array<i32>} : memref<1x256x1xf32, #tpu.memory_space<vmem>>, vector<1x256x1xf32>,
    } else {
    }
    %c1_i32 = arith.constant 1 : i32
    %81 = arith.cmpi eq, %arg0, %c1_i32 : i32
    %82 = arith.extui %81 : i1 to i32
    %c0_i32_67 = arith.constant 0 : i32
    %83 = arith.cmpi ne, %82, %c0_i32_67 : i32
    scf.if %83 {
      %c0_68 = arith.constant 0 : index
      %c0_69 = arith.constant 0 : index
      %84 = vector.load %arg7[%c0_68, %c0_69] : memref<1x1xf32, #tpu.memory_space<vmem>>, vector<1x1xf32>
      %cst_70 = arith.constant 0.001953125 : f32
      %85 = vector.broadcast %cst_70 : f32 to vector<1x1xf32>
      %86 = arith.mulf %84, %85 : vector<1x1xf32>
      %c0_71 = arith.constant 0 : index
      %c0_72 = arith.constant 0 : index
      %87 = vector.load %arg8[%c0_71, %c0_72] : memref<1x1xf32, #tpu.memory_space<vmem>>, vector<1x1xf32>
      %cst_73 = arith.constant 0.001953125 : f32
      %88 = vector.broadcast %cst_73 : f32 to vector<1x1xf32>
      %89 = arith.mulf %87, %88 : vector<1x1xf32>
      %90 = arith.mulf %86, %86 : vector<1x1xf32>
      %91 = arith.subf %89, %90 : vector<1x1xf32>
      %cst_74 = arith.constant 9.99999974E-6 : f32
      %92 = vector.broadcast %cst_74 : f32 to vector<1x1xf32>
      %93 = arith.addf %91, %92 : vector<1x1xf32>
      %94 = math.rsqrt %93 : vector<1x1xf32>
      %c0_75 = arith.constant 0 : index
      %c0_76 = arith.constant 0 : index
      %95 = vector.load %arg4[%c0_75, %c0_76] : memref<1x1xf32, #tpu.memory_space<vmem>>, vector<1x1xf32>
      %96 = arith.mulf %94, %95 : vector<1x1xf32>
      %97 = vector.broadcast %86 : vector<1x1xf32> to vector<256x1xf32>
      %98 = arith.subf %77, %97 : vector<256x1xf32>
      %99 = vector.broadcast %96 : vector<1x1xf32> to vector<256x1xf32>
      %100 = arith.mulf %98, %99 : vector<256x1xf32>
      %c0_77 = arith.constant 0 : index
      %c0_78 = arith.constant 0 : index
      %101 = vector.load %arg5[%c0_77, %c0_78] : memref<1x1xf32, #tpu.memory_space<vmem>>, vector<1x1xf32>
      %102 = vector.broadcast %101 : vector<1x1xf32> to vector<256x1xf32>
      %103 = arith.addf %100, %102 : vector<256x1xf32>
      %cst_79 = arith.constant 0.000000e+00 : f32
      %104 = vector.broadcast %cst_79 : f32 to vector<256x1xf32>
      %105 = arith.maximumf %103, %104 : vector<256x1xf32>
      %c0_80 = arith.constant 0 : index
      %c0_81 = arith.constant 0 : index
      %c0_82 = arith.constant 0 : index
      %106 = vector.load %arg6[%c0_80, %c0_81, %c0_82] : memref<1x256x1xf32, #tpu.memory_space<vmem>>, vector<1x256x1xf32>
      %107 = vector.shape_cast %106 : vector<1x256x1xf32> to vector<256x1xf32>
      %108 = vector.shape_cast %105 : vector<256x1xf32> to vector<1x256x1xf32>
      tpu.vector_store %arg6[%c0_80, %c0_81, %c0_82], %108 {strides = array<i32>} : memref<1x256x1xf32, #tpu.memory_space<vmem>>, vector<1x256x1xf32>,
    } else {
    }
    return
  }
  func.func @transform_0(%arg0: i32, %arg1: i32) -> (i32, i32, i32, i32) {
    %c0_i32 = arith.constant 0 : i32
    %c0_i32_0 = arith.constant 0 : i32
    %c0_i32_1 = arith.constant 0 : i32
    %c0_i32_2 = arith.constant 0 : i32
    return %arg1, %c0_i32, %c0_i32_0, %c0_i32_1 : i32, i32, i32, i32
  }
  func.func @transform_1(%arg0: i32, %arg1: i32) -> (i32, i32, i32) {
    %c0_i32 = arith.constant 0 : i32
    %c0_i32_0 = arith.constant 0 : i32
    %c0_i32_1 = arith.constant 0 : i32
    %c0_i32_2 = arith.constant 0 : i32
    return %c0_i32, %c0_i32_0, %c0_i32_1 : i32, i32, i32
  }
  func.func @transform_2(%arg0: i32, %arg1: i32) -> (i32, i32) {
    %c0_i32 = arith.constant 0 : i32
    %c0_i32_0 = arith.constant 0 : i32
    %c0_i32_1 = arith.constant 0 : i32
    return %c0_i32, %c0_i32_0 : i32, i32
  }
  func.func @transform_3(%arg0: i32, %arg1: i32) -> (i32, i32) {
    %c0_i32 = arith.constant 0 : i32
    %c0_i32_0 = arith.constant 0 : i32
    %c0_i32_1 = arith.constant 0 : i32
    return %c0_i32, %c0_i32_0 : i32, i32
  }
  func.func @transform_4(%arg0: i32, %arg1: i32) -> (i32, i32, i32) {
    %c0_i32 = arith.constant 0 : i32
    %c0_i32_0 = arith.constant 0 : i32
    %c0_i32_1 = arith.constant 0 : i32
    return %arg1, %c0_i32, %c0_i32_0 : i32, i32, i32
  }
}

module attributes {stable_mosaic.version = 11 : i64} {
  func.func @kernel(%arg0: i32, %arg1: i32, %arg2: memref<1x18x18x1xf32, #tpu.memory_space<vmem>>, %arg3: memref<9x1x16xbf16, #tpu.memory_space<vmem>>, %arg4: memref<1x16xf32, #tpu.memory_space<vmem>>, %arg5: memref<1x16xf32, #tpu.memory_space<vmem>>, %arg6: memref<1x256x16xf32, #tpu.memory_space<vmem>>, %arg7: memref<1x16xf32, #tpu.memory_space<vmem>>, %arg8: memref<1x16xf32, #tpu.memory_space<vmem>>) attributes {dimension_semantics = [#tpu.dimension_semantics<arbitrary>, #tpu.dimension_semantics<arbitrary>], iteration_bounds = array<i64: 2, 2>, scalar_prefetch = 0 : i64, scratch_operands = 2 : i64, tpu.core_type = #tpu.core_type<tc>, window_params = [{transform_indices = @transform_0, window_bounds = array<i64: 1, 18, 18, 1>}, {pipeline_mode = #tpu.pipeline_mode<synchronous>, transform_indices = @transform_1, window_bounds = array<i64: 9, 1, 16>}, {pipeline_mode = #tpu.pipeline_mode<synchronous>, transform_indices = @transform_2, window_bounds = array<i64: 1, 16>}, {pipeline_mode = #tpu.pipeline_mode<synchronous>, transform_indices = @transform_3, window_bounds = array<i64: 1, 16>}, {transform_indices = @transform_4, window_bounds = array<i64: 1, 256, 16>}]} {
    %c0_i32 = arith.constant 0 : i32
    %0 = arith.cmpi eq, %arg0, %c0_i32 : i32
    %c0_i32_0 = arith.constant 0 : i32
    %1 = arith.cmpi eq, %arg1, %c0_i32_0 : i32
    %2 = arith.andi %0, %1 : i1
    %3 = arith.extui %2 : i1 to i32
    %c0_i32_1 = arith.constant 0 : i32
    %4 = arith.cmpi ne, %3, %c0_i32_1 : i32
    scf.if %4 {
      %cst_68 = arith.constant 0.000000e+00 : f32
      %84 = vector.broadcast %cst_68 : f32 to vector<1x16xf32>
      %c0_69 = arith.constant 0 : index
      %c0_70 = arith.constant 0 : index
      %85 = vector.load %arg7[%c0_69, %c0_70] : memref<1x16xf32, #tpu.memory_space<vmem>>, vector<1x16xf32>
      tpu.vector_store %arg7[%c0_69, %c0_70], %84 {strides = array<i32>} : memref<1x16xf32, #tpu.memory_space<vmem>>, vector<1x16xf32>,
      %cst_71 = arith.constant 0.000000e+00 : f32
      %86 = vector.broadcast %cst_71 : f32 to vector<1x16xf32>
      %c0_72 = arith.constant 0 : index
      %c0_73 = arith.constant 0 : index
      %87 = vector.load %arg8[%c0_72, %c0_73] : memref<1x16xf32, #tpu.memory_space<vmem>>, vector<1x16xf32>
      tpu.vector_store %arg8[%c0_72, %c0_73], %86 {strides = array<i32>} : memref<1x16xf32, #tpu.memory_space<vmem>>, vector<1x16xf32>,
    } else {
    }
    %cst = arith.constant 0.000000e+00 : f32
    %5 = vector.broadcast %cst : f32 to vector<256x16xf32>
    %c0 = arith.constant 0 : index
    %c0_2 = arith.constant 0 : index
    %c0_3 = arith.constant 0 : index
    %c0_4 = arith.constant 0 : index
    %6 = vector.load %arg2[%c0, %c0_2, %c0_3, %c0_4] : memref<1x18x18x1xf32, #tpu.memory_space<vmem>>, vector<1x16x16x1xf32>
    %7 = vector.shape_cast %6 : vector<1x16x16x1xf32> to vector<16x16x1xf32>
    %8 = vector.shape_cast %7 : vector<16x16x1xf32> to vector<256x1xf32>
    %9 = arith.truncf %8 : vector<256x1xf32> to vector<256x1xbf16>
    %c0_5 = arith.constant 0 : index
    %c0_6 = arith.constant 0 : index
    %c0_7 = arith.constant 0 : index
    %10 = vector.load %arg3[%c0_5, %c0_6, %c0_7] : memref<9x1x16xbf16, #tpu.memory_space<vmem>>, vector<1x1x16xbf16>
    %11 = vector.shape_cast %10 : vector<1x1x16xbf16> to vector<1x16xbf16>
    %cst_8 = arith.constant dense<0.000000e+00> : vector<256x16xf32>
    %12 = tpu.matmul %9, %11, %cst_8 {dimension_numbers = #tpu.dot_dimension_numbers<[1], [0], [0], [1], [0, 0, 1, 1], [], []>} : vector<256x1xbf16>, vector<1x16xbf16>, vector<256x16xf32> -> vector<256x16xf32>
    %13 = arith.addf %5, %12 : vector<256x16xf32>
    %c0_9 = arith.constant 0 : index
    %c0_10 = arith.constant 0 : index
    %c1 = arith.constant 1 : index
    %c0_11 = arith.constant 0 : index
    %14 = vector.load %arg2[%c0_9, %c0_10, %c1, %c0_11] : memref<1x18x18x1xf32, #tpu.memory_space<vmem>>, vector<1x16x16x1xf32>
    %15 = vector.shape_cast %14 : vector<1x16x16x1xf32> to vector<16x16x1xf32>
    %16 = vector.shape_cast %15 : vector<16x16x1xf32> to vector<256x1xf32>
    %17 = arith.truncf %16 : vector<256x1xf32> to vector<256x1xbf16>
    %c1_12 = arith.constant 1 : index
    %c0_13 = arith.constant 0 : index
    %c0_14 = arith.constant 0 : index
    %18 = vector.load %arg3[%c1_12, %c0_13, %c0_14] : memref<9x1x16xbf16, #tpu.memory_space<vmem>>, vector<1x1x16xbf16>
    %19 = vector.shape_cast %18 : vector<1x1x16xbf16> to vector<1x16xbf16>
    %cst_15 = arith.constant dense<0.000000e+00> : vector<256x16xf32>
    %20 = tpu.matmul %17, %19, %cst_15 {dimension_numbers = #tpu.dot_dimension_numbers<[1], [0], [0], [1], [0, 0, 1, 1], [], []>} : vector<256x1xbf16>, vector<1x16xbf16>, vector<256x16xf32> -> vector<256x16xf32>
    %21 = arith.addf %13, %20 : vector<256x16xf32>
    %c0_16 = arith.constant 0 : index
    %c0_17 = arith.constant 0 : index
    %c2 = arith.constant 2 : index
    %c0_18 = arith.constant 0 : index
    %22 = vector.load %arg2[%c0_16, %c0_17, %c2, %c0_18] : memref<1x18x18x1xf32, #tpu.memory_space<vmem>>, vector<1x16x16x1xf32>
    %23 = vector.shape_cast %22 : vector<1x16x16x1xf32> to vector<16x16x1xf32>
    %24 = vector.shape_cast %23 : vector<16x16x1xf32> to vector<256x1xf32>
    %25 = arith.truncf %24 : vector<256x1xf32> to vector<256x1xbf16>
    %c2_19 = arith.constant 2 : index
    %c0_20 = arith.constant 0 : index
    %c0_21 = arith.constant 0 : index
    %26 = vector.load %arg3[%c2_19, %c0_20, %c0_21] : memref<9x1x16xbf16, #tpu.memory_space<vmem>>, vector<1x1x16xbf16>
    %27 = vector.shape_cast %26 : vector<1x1x16xbf16> to vector<1x16xbf16>
    %cst_22 = arith.constant dense<0.000000e+00> : vector<256x16xf32>
    %28 = tpu.matmul %25, %27, %cst_22 {dimension_numbers = #tpu.dot_dimension_numbers<[1], [0], [0], [1], [0, 0, 1, 1], [], []>} : vector<256x1xbf16>, vector<1x16xbf16>, vector<256x16xf32> -> vector<256x16xf32>
    %29 = arith.addf %21, %28 : vector<256x16xf32>
    %c0_23 = arith.constant 0 : index
    %c1_24 = arith.constant 1 : index
    %c0_25 = arith.constant 0 : index
    %c0_26 = arith.constant 0 : index
    %30 = vector.load %arg2[%c0_23, %c1_24, %c0_25, %c0_26] : memref<1x18x18x1xf32, #tpu.memory_space<vmem>>, vector<1x16x16x1xf32>
    %31 = vector.shape_cast %30 : vector<1x16x16x1xf32> to vector<16x16x1xf32>
    %32 = vector.shape_cast %31 : vector<16x16x1xf32> to vector<256x1xf32>
    %33 = arith.truncf %32 : vector<256x1xf32> to vector<256x1xbf16>
    %c3 = arith.constant 3 : index
    %c0_27 = arith.constant 0 : index
    %c0_28 = arith.constant 0 : index
    %34 = vector.load %arg3[%c3, %c0_27, %c0_28] : memref<9x1x16xbf16, #tpu.memory_space<vmem>>, vector<1x1x16xbf16>
    %35 = vector.shape_cast %34 : vector<1x1x16xbf16> to vector<1x16xbf16>
    %cst_29 = arith.constant dense<0.000000e+00> : vector<256x16xf32>
    %36 = tpu.matmul %33, %35, %cst_29 {dimension_numbers = #tpu.dot_dimension_numbers<[1], [0], [0], [1], [0, 0, 1, 1], [], []>} : vector<256x1xbf16>, vector<1x16xbf16>, vector<256x16xf32> -> vector<256x16xf32>
    %37 = arith.addf %29, %36 : vector<256x16xf32>
    %c0_30 = arith.constant 0 : index
    %c1_31 = arith.constant 1 : index
    %c1_32 = arith.constant 1 : index
    %c0_33 = arith.constant 0 : index
    %38 = vector.load %arg2[%c0_30, %c1_31, %c1_32, %c0_33] : memref<1x18x18x1xf32, #tpu.memory_space<vmem>>, vector<1x16x16x1xf32>
    %39 = vector.shape_cast %38 : vector<1x16x16x1xf32> to vector<16x16x1xf32>
    %40 = vector.shape_cast %39 : vector<16x16x1xf32> to vector<256x1xf32>
    %41 = arith.truncf %40 : vector<256x1xf32> to vector<256x1xbf16>
    %c4 = arith.constant 4 : index
    %c0_34 = arith.constant 0 : index
    %c0_35 = arith.constant 0 : index
    %42 = vector.load %arg3[%c4, %c0_34, %c0_35] : memref<9x1x16xbf16, #tpu.memory_space<vmem>>, vector<1x1x16xbf16>
    %43 = vector.shape_cast %42 : vector<1x1x16xbf16> to vector<1x16xbf16>
    %cst_36 = arith.constant dense<0.000000e+00> : vector<256x16xf32>
    %44 = tpu.matmul %41, %43, %cst_36 {dimension_numbers = #tpu.dot_dimension_numbers<[1], [0], [0], [1], [0, 0, 1, 1], [], []>} : vector<256x1xbf16>, vector<1x16xbf16>, vector<256x16xf32> -> vector<256x16xf32>
    %45 = arith.addf %37, %44 : vector<256x16xf32>
    %c0_37 = arith.constant 0 : index
    %c1_38 = arith.constant 1 : index
    %c2_39 = arith.constant 2 : index
    %c0_40 = arith.constant 0 : index
    %46 = vector.load %arg2[%c0_37, %c1_38, %c2_39, %c0_40] : memref<1x18x18x1xf32, #tpu.memory_space<vmem>>, vector<1x16x16x1xf32>
    %47 = vector.shape_cast %46 : vector<1x16x16x1xf32> to vector<16x16x1xf32>
    %48 = vector.shape_cast %47 : vector<16x16x1xf32> to vector<256x1xf32>
    %49 = arith.truncf %48 : vector<256x1xf32> to vector<256x1xbf16>
    %c5 = arith.constant 5 : index
    %c0_41 = arith.constant 0 : index
    %c0_42 = arith.constant 0 : index
    %50 = vector.load %arg3[%c5, %c0_41, %c0_42] : memref<9x1x16xbf16, #tpu.memory_space<vmem>>, vector<1x1x16xbf16>
    %51 = vector.shape_cast %50 : vector<1x1x16xbf16> to vector<1x16xbf16>
    %cst_43 = arith.constant dense<0.000000e+00> : vector<256x16xf32>
    %52 = tpu.matmul %49, %51, %cst_43 {dimension_numbers = #tpu.dot_dimension_numbers<[1], [0], [0], [1], [0, 0, 1, 1], [], []>} : vector<256x1xbf16>, vector<1x16xbf16>, vector<256x16xf32> -> vector<256x16xf32>
    %53 = arith.addf %45, %52 : vector<256x16xf32>
    %c0_44 = arith.constant 0 : index
    %c2_45 = arith.constant 2 : index
    %c0_46 = arith.constant 0 : index
    %c0_47 = arith.constant 0 : index
    %54 = vector.load %arg2[%c0_44, %c2_45, %c0_46, %c0_47] : memref<1x18x18x1xf32, #tpu.memory_space<vmem>>, vector<1x16x16x1xf32>
    %55 = vector.shape_cast %54 : vector<1x16x16x1xf32> to vector<16x16x1xf32>
    %56 = vector.shape_cast %55 : vector<16x16x1xf32> to vector<256x1xf32>
    %57 = arith.truncf %56 : vector<256x1xf32> to vector<256x1xbf16>
    %c6 = arith.constant 6 : index
    %c0_48 = arith.constant 0 : index
    %c0_49 = arith.constant 0 : index
    %58 = vector.load %arg3[%c6, %c0_48, %c0_49] : memref<9x1x16xbf16, #tpu.memory_space<vmem>>, vector<1x1x16xbf16>
    %59 = vector.shape_cast %58 : vector<1x1x16xbf16> to vector<1x16xbf16>
    %cst_50 = arith.constant dense<0.000000e+00> : vector<256x16xf32>
    %60 = tpu.matmul %57, %59, %cst_50 {dimension_numbers = #tpu.dot_dimension_numbers<[1], [0], [0], [1], [0, 0, 1, 1], [], []>} : vector<256x1xbf16>, vector<1x16xbf16>, vector<256x16xf32> -> vector<256x16xf32>
    %61 = arith.addf %53, %60 : vector<256x16xf32>
    %c0_51 = arith.constant 0 : index
    %c2_52 = arith.constant 2 : index
    %c1_53 = arith.constant 1 : index
    %c0_54 = arith.constant 0 : index
    %62 = vector.load %arg2[%c0_51, %c2_52, %c1_53, %c0_54] : memref<1x18x18x1xf32, #tpu.memory_space<vmem>>, vector<1x16x16x1xf32>
    %63 = vector.shape_cast %62 : vector<1x16x16x1xf32> to vector<16x16x1xf32>
    %64 = vector.shape_cast %63 : vector<16x16x1xf32> to vector<256x1xf32>
    %65 = arith.truncf %64 : vector<256x1xf32> to vector<256x1xbf16>
    %c7 = arith.constant 7 : index
    %c0_55 = arith.constant 0 : index
    %c0_56 = arith.constant 0 : index
    %66 = vector.load %arg3[%c7, %c0_55, %c0_56] : memref<9x1x16xbf16, #tpu.memory_space<vmem>>, vector<1x1x16xbf16>
    %67 = vector.shape_cast %66 : vector<1x1x16xbf16> to vector<1x16xbf16>
    %cst_57 = arith.constant dense<0.000000e+00> : vector<256x16xf32>
    %68 = tpu.matmul %65, %67, %cst_57 {dimension_numbers = #tpu.dot_dimension_numbers<[1], [0], [0], [1], [0, 0, 1, 1], [], []>} : vector<256x1xbf16>, vector<1x16xbf16>, vector<256x16xf32> -> vector<256x16xf32>
    %69 = arith.addf %61, %68 : vector<256x16xf32>
    %c0_58 = arith.constant 0 : index
    %c2_59 = arith.constant 2 : index
    %c2_60 = arith.constant 2 : index
    %c0_61 = arith.constant 0 : index
    %70 = vector.load %arg2[%c0_58, %c2_59, %c2_60, %c0_61] : memref<1x18x18x1xf32, #tpu.memory_space<vmem>>, vector<1x16x16x1xf32>
    %71 = vector.shape_cast %70 : vector<1x16x16x1xf32> to vector<16x16x1xf32>
    %72 = vector.shape_cast %71 : vector<16x16x1xf32> to vector<256x1xf32>
    %73 = arith.truncf %72 : vector<256x1xf32> to vector<256x1xbf16>
    %c8 = arith.constant 8 : index
    %c0_62 = arith.constant 0 : index
    %c0_63 = arith.constant 0 : index
    %74 = vector.load %arg3[%c8, %c0_62, %c0_63] : memref<9x1x16xbf16, #tpu.memory_space<vmem>>, vector<1x1x16xbf16>
    %75 = vector.shape_cast %74 : vector<1x1x16xbf16> to vector<1x16xbf16>
    %cst_64 = arith.constant dense<0.000000e+00> : vector<256x16xf32>
    %76 = tpu.matmul %73, %75, %cst_64 {dimension_numbers = #tpu.dot_dimension_numbers<[1], [0], [0], [1], [0, 0, 1, 1], [], []>} : vector<256x1xbf16>, vector<1x16xbf16>, vector<256x16xf32> -> vector<256x16xf32>
    %77 = arith.addf %69, %76 : vector<256x16xf32>
    %c0_i32_65 = arith.constant 0 : i32
    %78 = arith.cmpi eq, %arg0, %c0_i32_65 : i32
    %79 = arith.extui %78 : i1 to i32
    %c0_i32_66 = arith.constant 0 : i32
    %80 = arith.cmpi ne, %79, %c0_i32_66 : i32
    scf.if %80 {
      %c0_68 = arith.constant 0 : index
      %c0_69 = arith.constant 0 : index
      %84 = vector.load %arg7[%c0_68, %c0_69] : memref<1x16xf32, #tpu.memory_space<vmem>>, vector<1x16xf32>
      %cst_70 = arith.constant dense<0.000000e+00> : vector<16xf32>
      %85 = vector.multi_reduction <add>, %77, %cst_70 [0] : vector<256x16xf32> to vector<16xf32>
      %86 = vector.shape_cast %85 : vector<16xf32> to vector<1x16xf32>
      %87 = arith.addf %84, %86 : vector<1x16xf32>
      %c0_71 = arith.constant 0 : index
      %c0_72 = arith.constant 0 : index
      %88 = vector.load %arg7[%c0_71, %c0_72] : memref<1x16xf32, #tpu.memory_space<vmem>>, vector<1x16xf32>
      tpu.vector_store %arg7[%c0_71, %c0_72], %87 {strides = array<i32>} : memref<1x16xf32, #tpu.memory_space<vmem>>, vector<1x16xf32>,
      %c0_73 = arith.constant 0 : index
      %c0_74 = arith.constant 0 : index
      %89 = vector.load %arg8[%c0_73, %c0_74] : memref<1x16xf32, #tpu.memory_space<vmem>>, vector<1x16xf32>
      %90 = arith.mulf %77, %77 : vector<256x16xf32>
      %cst_75 = arith.constant dense<0.000000e+00> : vector<16xf32>
      %91 = vector.multi_reduction <add>, %90, %cst_75 [0] : vector<256x16xf32> to vector<16xf32>
      %92 = vector.shape_cast %91 : vector<16xf32> to vector<1x16xf32>
      %93 = arith.addf %89, %92 : vector<1x16xf32>
      %c0_76 = arith.constant 0 : index
      %c0_77 = arith.constant 0 : index
      %94 = vector.load %arg8[%c0_76, %c0_77] : memref<1x16xf32, #tpu.memory_space<vmem>>, vector<1x16xf32>
      tpu.vector_store %arg8[%c0_76, %c0_77], %93 {strides = array<i32>} : memref<1x16xf32, #tpu.memory_space<vmem>>, vector<1x16xf32>,
      %c0_78 = arith.constant 0 : index
      %c0_79 = arith.constant 0 : index
      %c0_80 = arith.constant 0 : index
      %95 = vector.load %arg6[%c0_78, %c0_79, %c0_80] : memref<1x256x16xf32, #tpu.memory_space<vmem>>, vector<1x256x16xf32>
      %96 = vector.shape_cast %95 : vector<1x256x16xf32> to vector<256x16xf32>
      %97 = vector.shape_cast %77 : vector<256x16xf32> to vector<1x256x16xf32>
      tpu.vector_store %arg6[%c0_78, %c0_79, %c0_80], %97 {strides = array<i32>} : memref<1x256x16xf32, #tpu.memory_space<vmem>>, vector<1x256x16xf32>,
    } else {
    }
    %c1_i32 = arith.constant 1 : i32
    %81 = arith.cmpi eq, %arg0, %c1_i32 : i32
    %82 = arith.extui %81 : i1 to i32
    %c0_i32_67 = arith.constant 0 : i32
    %83 = arith.cmpi ne, %82, %c0_i32_67 : i32
    scf.if %83 {
      %c0_68 = arith.constant 0 : index
      %c0_69 = arith.constant 0 : index
      %84 = vector.load %arg7[%c0_68, %c0_69] : memref<1x16xf32, #tpu.memory_space<vmem>>, vector<1x16xf32>
      %cst_70 = arith.constant 0.001953125 : f32
      %85 = vector.broadcast %cst_70 : f32 to vector<1x16xf32>
      %86 = arith.mulf %84, %85 : vector<1x16xf32>
      %c0_71 = arith.constant 0 : index
      %c0_72 = arith.constant 0 : index
      %87 = vector.load %arg8[%c0_71, %c0_72] : memref<1x16xf32, #tpu.memory_space<vmem>>, vector<1x16xf32>
      %cst_73 = arith.constant 0.001953125 : f32
      %88 = vector.broadcast %cst_73 : f32 to vector<1x16xf32>
      %89 = arith.mulf %87, %88 : vector<1x16xf32>
      %90 = arith.mulf %86, %86 : vector<1x16xf32>
      %91 = arith.subf %89, %90 : vector<1x16xf32>
      %cst_74 = arith.constant 9.99999974E-6 : f32
      %92 = vector.broadcast %cst_74 : f32 to vector<1x16xf32>
      %93 = arith.addf %91, %92 : vector<1x16xf32>
      %94 = math.rsqrt %93 : vector<1x16xf32>
      %c0_75 = arith.constant 0 : index
      %c0_76 = arith.constant 0 : index
      %95 = vector.load %arg4[%c0_75, %c0_76] : memref<1x16xf32, #tpu.memory_space<vmem>>, vector<1x16xf32>
      %96 = arith.mulf %94, %95 : vector<1x16xf32>
      %97 = vector.broadcast %86 : vector<1x16xf32> to vector<256x16xf32>
      %98 = arith.subf %77, %97 : vector<256x16xf32>
      %99 = vector.broadcast %96 : vector<1x16xf32> to vector<256x16xf32>
      %100 = arith.mulf %98, %99 : vector<256x16xf32>
      %c0_77 = arith.constant 0 : index
      %c0_78 = arith.constant 0 : index
      %101 = vector.load %arg5[%c0_77, %c0_78] : memref<1x16xf32, #tpu.memory_space<vmem>>, vector<1x16xf32>
      %102 = vector.broadcast %101 : vector<1x16xf32> to vector<256x16xf32>
      %103 = arith.addf %100, %102 : vector<256x16xf32>
      %cst_79 = arith.constant 0.000000e+00 : f32
      %104 = vector.broadcast %cst_79 : f32 to vector<256x16xf32>
      %105 = arith.maximumf %103, %104 : vector<256x16xf32>
      %c0_80 = arith.constant 0 : index
      %c0_81 = arith.constant 0 : index
      %c0_82 = arith.constant 0 : index
      %106 = vector.load %arg6[%c0_80, %c0_81, %c0_82] : memref<1x256x16xf32, #tpu.memory_space<vmem>>, vector<1x256x16xf32>
      %107 = vector.shape_cast %106 : vector<1x256x16xf32> to vector<256x16xf32>
      %108 = vector.shape_cast %105 : vector<256x16xf32> to vector<1x256x16xf32>
      tpu.vector_store %arg6[%c0_80, %c0_81, %c0_82], %108 {strides = array<i32>} : memref<1x256x16xf32, #tpu.memory_space<vmem>>, vector<1x256x16xf32>,
    } else {
    }
    return
  }
  func.func @transform_0(%arg0: i32, %arg1: i32) -> (i32, i32, i32, i32) {
    %c0_i32 = arith.constant 0 : i32
    %c0_i32_0 = arith.constant 0 : i32
    %c0_i32_1 = arith.constant 0 : i32
    %c0_i32_2 = arith.constant 0 : i32
    return %arg1, %c0_i32, %c0_i32_0, %c0_i32_1 : i32, i32, i32, i32
  }
  func.func @transform_1(%arg0: i32, %arg1: i32) -> (i32, i32, i32) {
    %c0_i32 = arith.constant 0 : i32
    %c0_i32_0 = arith.constant 0 : i32
    %c0_i32_1 = arith.constant 0 : i32
    %c0_i32_2 = arith.constant 0 : i32
    return %c0_i32, %c0_i32_0, %c0_i32_1 : i32, i32, i32
  }
  func.func @transform_2(%arg0: i32, %arg1: i32) -> (i32, i32) {
    %c0_i32 = arith.constant 0 : i32
    %c0_i32_0 = arith.constant 0 : i32
    %c0_i32_1 = arith.constant 0 : i32
    return %c0_i32, %c0_i32_0 : i32, i32
  }
  func.func @transform_3(%arg0: i32, %arg1: i32) -> (i32, i32) {
    %c0_i32 = arith.constant 0 : i32
    %c0_i32_0 = arith.constant 0 : i32
    %c0_i32_1 = arith.constant 0 : i32
    return %c0_i32, %c0_i32_0 : i32, i32
  }
  func.func @transform_4(%arg0: i32, %arg1: i32) -> (i32, i32, i32) {
    %c0_i32 = arith.constant 0 : i32
    %c0_i32_0 = arith.constant 0 : i32
    %c0_i32_1 = arith.constant 0 : i32
    return %arg1, %c0_i32, %c0_i32_0 : i32, i32, i32
  }
}

module attributes {stable_mosaic.version = 11 : i64} {
  func.func @kernel(%arg0: i32, %arg1: memref<1x8x2x8x2x8xf32, #tpu.memory_space<vmem>>, %arg2: memref<1x8x8x8xf32, #tpu.memory_space<vmem>>) attributes {dimension_semantics = [#tpu.dimension_semantics<parallel>], iteration_bounds = array<i64: 2>, scalar_prefetch = 0 : i64, scratch_operands = 0 : i64, tpu.core_type = #tpu.core_type<tc>, window_params = [{transform_indices = @transform_0, window_bounds = array<i64: 1, 8, 2, 8, 2, 8>}, {transform_indices = @transform_1, window_bounds = array<i64: 1, 8, 8, 8>}]} {
    %c0 = arith.constant 0 : index
    %c0_0 = arith.constant 0 : index
    %c0_1 = arith.constant 0 : index
    %c0_2 = arith.constant 0 : index
    %c0_3 = arith.constant 0 : index
    %c0_4 = arith.constant 0 : index
    %0 = vector.load %arg1[%c0, %c0_0, %c0_1, %c0_2, %c0_3, %c0_4] : memref<1x8x2x8x2x8xf32, #tpu.memory_space<vmem>>, vector<1x8x2x8x2x8xf32>
    %1 = vector.shape_cast %0 : vector<1x8x2x8x2x8xf32> to vector<8x2x8x2x8xf32>
    %cst = arith.constant dense<0xFF800000> : vector<8x2x8x8xf32>
    %2 = vector.multi_reduction <maximumf>, %1, %cst [3] : vector<8x2x8x2x8xf32> to vector<8x2x8x8xf32>
    %cst_5 = arith.constant dense<0xFF800000> : vector<8x8x8xf32>
    %3 = vector.multi_reduction <maximumf>, %2, %cst_5 [1] : vector<8x2x8x8xf32> to vector<8x8x8xf32>
    %c0_6 = arith.constant 0 : index
    %c0_7 = arith.constant 0 : index
    %c0_8 = arith.constant 0 : index
    %c0_9 = arith.constant 0 : index
    %4 = vector.load %arg2[%c0_6, %c0_7, %c0_8, %c0_9] : memref<1x8x8x8xf32, #tpu.memory_space<vmem>>, vector<1x8x8x8xf32>
    %5 = vector.shape_cast %4 : vector<1x8x8x8xf32> to vector<8x8x8xf32>
    %6 = vector.shape_cast %3 : vector<8x8x8xf32> to vector<1x8x8x8xf32>
    tpu.vector_store %arg2[%c0_6, %c0_7, %c0_8, %c0_9], %6 {strides = array<i32>} : memref<1x8x8x8xf32, #tpu.memory_space<vmem>>, vector<1x8x8x8xf32>,
    return
  }
  func.func @transform_0(%arg0: i32) -> (i32, i32, i32, i32, i32, i32) {
    %c0_i32 = arith.constant 0 : i32
    %c0_i32_0 = arith.constant 0 : i32
    %c0_i32_1 = arith.constant 0 : i32
    %c0_i32_2 = arith.constant 0 : i32
    %c0_i32_3 = arith.constant 0 : i32
    %c0_i32_4 = arith.constant 0 : i32
    return %arg0, %c0_i32, %c0_i32_0, %c0_i32_1, %c0_i32_2, %c0_i32_3 : i32, i32, i32, i32, i32, i32
  }
  func.func @transform_1(%arg0: i32) -> (i32, i32, i32, i32) {
    %c0_i32 = arith.constant 0 : i32
    %c0_i32_0 = arith.constant 0 : i32
    %c0_i32_1 = arith.constant 0 : i32
    %c0_i32_2 = arith.constant 0 : i32
    return %arg0, %c0_i32, %c0_i32_0, %c0_i32_1 : i32, i32, i32, i32
  }
}

module attributes {stable_mosaic.version = 11 : i64} {
  func.func @kernel(%arg0: i32, %arg1: i32, %arg2: memref<1x18x18x8xf32, #tpu.memory_space<vmem>>, %arg3: memref<9x8x8xbf16, #tpu.memory_space<vmem>>, %arg4: memref<1x8xf32, #tpu.memory_space<vmem>>, %arg5: memref<1x8xf32, #tpu.memory_space<vmem>>, %arg6: memref<1x256x8xf32, #tpu.memory_space<vmem>>, %arg7: memref<1x8xf32, #tpu.memory_space<vmem>>, %arg8: memref<1x8xf32, #tpu.memory_space<vmem>>) attributes {dimension_semantics = [#tpu.dimension_semantics<arbitrary>, #tpu.dimension_semantics<arbitrary>], iteration_bounds = array<i64: 2, 2>, scalar_prefetch = 0 : i64, scratch_operands = 2 : i64, tpu.core_type = #tpu.core_type<tc>, window_params = [{transform_indices = @transform_0, window_bounds = array<i64: 1, 18, 18, 8>}, {pipeline_mode = #tpu.pipeline_mode<synchronous>, transform_indices = @transform_1, window_bounds = array<i64: 9, 8, 8>}, {pipeline_mode = #tpu.pipeline_mode<synchronous>, transform_indices = @transform_2, window_bounds = array<i64: 1, 8>}, {pipeline_mode = #tpu.pipeline_mode<synchronous>, transform_indices = @transform_3, window_bounds = array<i64: 1, 8>}, {transform_indices = @transform_4, window_bounds = array<i64: 1, 256, 8>}]} {
    %c0_i32 = arith.constant 0 : i32
    %0 = arith.cmpi eq, %arg0, %c0_i32 : i32
    %c0_i32_0 = arith.constant 0 : i32
    %1 = arith.cmpi eq, %arg1, %c0_i32_0 : i32
    %2 = arith.andi %0, %1 : i1
    %3 = arith.extui %2 : i1 to i32
    %c0_i32_1 = arith.constant 0 : i32
    %4 = arith.cmpi ne, %3, %c0_i32_1 : i32
    scf.if %4 {
      %cst_68 = arith.constant 0.000000e+00 : f32
      %84 = vector.broadcast %cst_68 : f32 to vector<1x8xf32>
      %c0_69 = arith.constant 0 : index
      %c0_70 = arith.constant 0 : index
      %85 = vector.load %arg7[%c0_69, %c0_70] : memref<1x8xf32, #tpu.memory_space<vmem>>, vector<1x8xf32>
      tpu.vector_store %arg7[%c0_69, %c0_70], %84 {strides = array<i32>} : memref<1x8xf32, #tpu.memory_space<vmem>>, vector<1x8xf32>,
      %cst_71 = arith.constant 0.000000e+00 : f32
      %86 = vector.broadcast %cst_71 : f32 to vector<1x8xf32>
      %c0_72 = arith.constant 0 : index
      %c0_73 = arith.constant 0 : index
      %87 = vector.load %arg8[%c0_72, %c0_73] : memref<1x8xf32, #tpu.memory_space<vmem>>, vector<1x8xf32>
      tpu.vector_store %arg8[%c0_72, %c0_73], %86 {strides = array<i32>} : memref<1x8xf32, #tpu.memory_space<vmem>>, vector<1x8xf32>,
    } else {
    }
    %cst = arith.constant 0.000000e+00 : f32
    %5 = vector.broadcast %cst : f32 to vector<256x8xf32>
    %c0 = arith.constant 0 : index
    %c0_2 = arith.constant 0 : index
    %c0_3 = arith.constant 0 : index
    %c0_4 = arith.constant 0 : index
    %6 = vector.load %arg2[%c0, %c0_2, %c0_3, %c0_4] : memref<1x18x18x8xf32, #tpu.memory_space<vmem>>, vector<1x16x16x8xf32>
    %7 = vector.shape_cast %6 : vector<1x16x16x8xf32> to vector<16x16x8xf32>
    %8 = vector.shape_cast %7 : vector<16x16x8xf32> to vector<256x8xf32>
    %9 = arith.truncf %8 : vector<256x8xf32> to vector<256x8xbf16>
    %c0_5 = arith.constant 0 : index
    %c0_6 = arith.constant 0 : index
    %c0_7 = arith.constant 0 : index
    %10 = vector.load %arg3[%c0_5, %c0_6, %c0_7] : memref<9x8x8xbf16, #tpu.memory_space<vmem>>, vector<1x8x8xbf16>
    %11 = vector.shape_cast %10 : vector<1x8x8xbf16> to vector<8x8xbf16>
    %cst_8 = arith.constant dense<0.000000e+00> : vector<256x8xf32>
    %12 = tpu.matmul %9, %11, %cst_8 {dimension_numbers = #tpu.dot_dimension_numbers<[1], [0], [0], [1], [0, 0, 1, 1], [], []>} : vector<256x8xbf16>, vector<8x8xbf16>, vector<256x8xf32> -> vector<256x8xf32>
    %13 = arith.addf %5, %12 : vector<256x8xf32>
    %c0_9 = arith.constant 0 : index
    %c0_10 = arith.constant 0 : index
    %c1 = arith.constant 1 : index
    %c0_11 = arith.constant 0 : index
    %14 = vector.load %arg2[%c0_9, %c0_10, %c1, %c0_11] : memref<1x18x18x8xf32, #tpu.memory_space<vmem>>, vector<1x16x16x8xf32>
    %15 = vector.shape_cast %14 : vector<1x16x16x8xf32> to vector<16x16x8xf32>
    %16 = vector.shape_cast %15 : vector<16x16x8xf32> to vector<256x8xf32>
    %17 = arith.truncf %16 : vector<256x8xf32> to vector<256x8xbf16>
    %c1_12 = arith.constant 1 : index
    %c0_13 = arith.constant 0 : index
    %c0_14 = arith.constant 0 : index
    %18 = vector.load %arg3[%c1_12, %c0_13, %c0_14] : memref<9x8x8xbf16, #tpu.memory_space<vmem>>, vector<1x8x8xbf16>
    %19 = vector.shape_cast %18 : vector<1x8x8xbf16> to vector<8x8xbf16>
    %cst_15 = arith.constant dense<0.000000e+00> : vector<256x8xf32>
    %20 = tpu.matmul %17, %19, %cst_15 {dimension_numbers = #tpu.dot_dimension_numbers<[1], [0], [0], [1], [0, 0, 1, 1], [], []>} : vector<256x8xbf16>, vector<8x8xbf16>, vector<256x8xf32> -> vector<256x8xf32>
    %21 = arith.addf %13, %20 : vector<256x8xf32>
    %c0_16 = arith.constant 0 : index
    %c0_17 = arith.constant 0 : index
    %c2 = arith.constant 2 : index
    %c0_18 = arith.constant 0 : index
    %22 = vector.load %arg2[%c0_16, %c0_17, %c2, %c0_18] : memref<1x18x18x8xf32, #tpu.memory_space<vmem>>, vector<1x16x16x8xf32>
    %23 = vector.shape_cast %22 : vector<1x16x16x8xf32> to vector<16x16x8xf32>
    %24 = vector.shape_cast %23 : vector<16x16x8xf32> to vector<256x8xf32>
    %25 = arith.truncf %24 : vector<256x8xf32> to vector<256x8xbf16>
    %c2_19 = arith.constant 2 : index
    %c0_20 = arith.constant 0 : index
    %c0_21 = arith.constant 0 : index
    %26 = vector.load %arg3[%c2_19, %c0_20, %c0_21] : memref<9x8x8xbf16, #tpu.memory_space<vmem>>, vector<1x8x8xbf16>
    %27 = vector.shape_cast %26 : vector<1x8x8xbf16> to vector<8x8xbf16>
    %cst_22 = arith.constant dense<0.000000e+00> : vector<256x8xf32>
    %28 = tpu.matmul %25, %27, %cst_22 {dimension_numbers = #tpu.dot_dimension_numbers<[1], [0], [0], [1], [0, 0, 1, 1], [], []>} : vector<256x8xbf16>, vector<8x8xbf16>, vector<256x8xf32> -> vector<256x8xf32>
    %29 = arith.addf %21, %28 : vector<256x8xf32>
    %c0_23 = arith.constant 0 : index
    %c1_24 = arith.constant 1 : index
    %c0_25 = arith.constant 0 : index
    %c0_26 = arith.constant 0 : index
    %30 = vector.load %arg2[%c0_23, %c1_24, %c0_25, %c0_26] : memref<1x18x18x8xf32, #tpu.memory_space<vmem>>, vector<1x16x16x8xf32>
    %31 = vector.shape_cast %30 : vector<1x16x16x8xf32> to vector<16x16x8xf32>
    %32 = vector.shape_cast %31 : vector<16x16x8xf32> to vector<256x8xf32>
    %33 = arith.truncf %32 : vector<256x8xf32> to vector<256x8xbf16>
    %c3 = arith.constant 3 : index
    %c0_27 = arith.constant 0 : index
    %c0_28 = arith.constant 0 : index
    %34 = vector.load %arg3[%c3, %c0_27, %c0_28] : memref<9x8x8xbf16, #tpu.memory_space<vmem>>, vector<1x8x8xbf16>
    %35 = vector.shape_cast %34 : vector<1x8x8xbf16> to vector<8x8xbf16>
    %cst_29 = arith.constant dense<0.000000e+00> : vector<256x8xf32>
    %36 = tpu.matmul %33, %35, %cst_29 {dimension_numbers = #tpu.dot_dimension_numbers<[1], [0], [0], [1], [0, 0, 1, 1], [], []>} : vector<256x8xbf16>, vector<8x8xbf16>, vector<256x8xf32> -> vector<256x8xf32>
    %37 = arith.addf %29, %36 : vector<256x8xf32>
    %c0_30 = arith.constant 0 : index
    %c1_31 = arith.constant 1 : index
    %c1_32 = arith.constant 1 : index
    %c0_33 = arith.constant 0 : index
    %38 = vector.load %arg2[%c0_30, %c1_31, %c1_32, %c0_33] : memref<1x18x18x8xf32, #tpu.memory_space<vmem>>, vector<1x16x16x8xf32>
    %39 = vector.shape_cast %38 : vector<1x16x16x8xf32> to vector<16x16x8xf32>
    %40 = vector.shape_cast %39 : vector<16x16x8xf32> to vector<256x8xf32>
    %41 = arith.truncf %40 : vector<256x8xf32> to vector<256x8xbf16>
    %c4 = arith.constant 4 : index
    %c0_34 = arith.constant 0 : index
    %c0_35 = arith.constant 0 : index
    %42 = vector.load %arg3[%c4, %c0_34, %c0_35] : memref<9x8x8xbf16, #tpu.memory_space<vmem>>, vector<1x8x8xbf16>
    %43 = vector.shape_cast %42 : vector<1x8x8xbf16> to vector<8x8xbf16>
    %cst_36 = arith.constant dense<0.000000e+00> : vector<256x8xf32>
    %44 = tpu.matmul %41, %43, %cst_36 {dimension_numbers = #tpu.dot_dimension_numbers<[1], [0], [0], [1], [0, 0, 1, 1], [], []>} : vector<256x8xbf16>, vector<8x8xbf16>, vector<256x8xf32> -> vector<256x8xf32>
    %45 = arith.addf %37, %44 : vector<256x8xf32>
    %c0_37 = arith.constant 0 : index
    %c1_38 = arith.constant 1 : index
    %c2_39 = arith.constant 2 : index
    %c0_40 = arith.constant 0 : index
    %46 = vector.load %arg2[%c0_37, %c1_38, %c2_39, %c0_40] : memref<1x18x18x8xf32, #tpu.memory_space<vmem>>, vector<1x16x16x8xf32>
    %47 = vector.shape_cast %46 : vector<1x16x16x8xf32> to vector<16x16x8xf32>
    %48 = vector.shape_cast %47 : vector<16x16x8xf32> to vector<256x8xf32>
    %49 = arith.truncf %48 : vector<256x8xf32> to vector<256x8xbf16>
    %c5 = arith.constant 5 : index
    %c0_41 = arith.constant 0 : index
    %c0_42 = arith.constant 0 : index
    %50 = vector.load %arg3[%c5, %c0_41, %c0_42] : memref<9x8x8xbf16, #tpu.memory_space<vmem>>, vector<1x8x8xbf16>
    %51 = vector.shape_cast %50 : vector<1x8x8xbf16> to vector<8x8xbf16>
    %cst_43 = arith.constant dense<0.000000e+00> : vector<256x8xf32>
    %52 = tpu.matmul %49, %51, %cst_43 {dimension_numbers = #tpu.dot_dimension_numbers<[1], [0], [0], [1], [0, 0, 1, 1], [], []>} : vector<256x8xbf16>, vector<8x8xbf16>, vector<256x8xf32> -> vector<256x8xf32>
    %53 = arith.addf %45, %52 : vector<256x8xf32>
    %c0_44 = arith.constant 0 : index
    %c2_45 = arith.constant 2 : index
    %c0_46 = arith.constant 0 : index
    %c0_47 = arith.constant 0 : index
    %54 = vector.load %arg2[%c0_44, %c2_45, %c0_46, %c0_47] : memref<1x18x18x8xf32, #tpu.memory_space<vmem>>, vector<1x16x16x8xf32>
    %55 = vector.shape_cast %54 : vector<1x16x16x8xf32> to vector<16x16x8xf32>
    %56 = vector.shape_cast %55 : vector<16x16x8xf32> to vector<256x8xf32>
    %57 = arith.truncf %56 : vector<256x8xf32> to vector<256x8xbf16>
    %c6 = arith.constant 6 : index
    %c0_48 = arith.constant 0 : index
    %c0_49 = arith.constant 0 : index
    %58 = vector.load %arg3[%c6, %c0_48, %c0_49] : memref<9x8x8xbf16, #tpu.memory_space<vmem>>, vector<1x8x8xbf16>
    %59 = vector.shape_cast %58 : vector<1x8x8xbf16> to vector<8x8xbf16>
    %cst_50 = arith.constant dense<0.000000e+00> : vector<256x8xf32>
    %60 = tpu.matmul %57, %59, %cst_50 {dimension_numbers = #tpu.dot_dimension_numbers<[1], [0], [0], [1], [0, 0, 1, 1], [], []>} : vector<256x8xbf16>, vector<8x8xbf16>, vector<256x8xf32> -> vector<256x8xf32>
    %61 = arith.addf %53, %60 : vector<256x8xf32>
    %c0_51 = arith.constant 0 : index
    %c2_52 = arith.constant 2 : index
    %c1_53 = arith.constant 1 : index
    %c0_54 = arith.constant 0 : index
    %62 = vector.load %arg2[%c0_51, %c2_52, %c1_53, %c0_54] : memref<1x18x18x8xf32, #tpu.memory_space<vmem>>, vector<1x16x16x8xf32>
    %63 = vector.shape_cast %62 : vector<1x16x16x8xf32> to vector<16x16x8xf32>
    %64 = vector.shape_cast %63 : vector<16x16x8xf32> to vector<256x8xf32>
    %65 = arith.truncf %64 : vector<256x8xf32> to vector<256x8xbf16>
    %c7 = arith.constant 7 : index
    %c0_55 = arith.constant 0 : index
    %c0_56 = arith.constant 0 : index
    %66 = vector.load %arg3[%c7, %c0_55, %c0_56] : memref<9x8x8xbf16, #tpu.memory_space<vmem>>, vector<1x8x8xbf16>
    %67 = vector.shape_cast %66 : vector<1x8x8xbf16> to vector<8x8xbf16>
    %cst_57 = arith.constant dense<0.000000e+00> : vector<256x8xf32>
    %68 = tpu.matmul %65, %67, %cst_57 {dimension_numbers = #tpu.dot_dimension_numbers<[1], [0], [0], [1], [0, 0, 1, 1], [], []>} : vector<256x8xbf16>, vector<8x8xbf16>, vector<256x8xf32> -> vector<256x8xf32>
    %69 = arith.addf %61, %68 : vector<256x8xf32>
    %c0_58 = arith.constant 0 : index
    %c2_59 = arith.constant 2 : index
    %c2_60 = arith.constant 2 : index
    %c0_61 = arith.constant 0 : index
    %70 = vector.load %arg2[%c0_58, %c2_59, %c2_60, %c0_61] : memref<1x18x18x8xf32, #tpu.memory_space<vmem>>, vector<1x16x16x8xf32>
    %71 = vector.shape_cast %70 : vector<1x16x16x8xf32> to vector<16x16x8xf32>
    %72 = vector.shape_cast %71 : vector<16x16x8xf32> to vector<256x8xf32>
    %73 = arith.truncf %72 : vector<256x8xf32> to vector<256x8xbf16>
    %c8 = arith.constant 8 : index
    %c0_62 = arith.constant 0 : index
    %c0_63 = arith.constant 0 : index
    %74 = vector.load %arg3[%c8, %c0_62, %c0_63] : memref<9x8x8xbf16, #tpu.memory_space<vmem>>, vector<1x8x8xbf16>
    %75 = vector.shape_cast %74 : vector<1x8x8xbf16> to vector<8x8xbf16>
    %cst_64 = arith.constant dense<0.000000e+00> : vector<256x8xf32>
    %76 = tpu.matmul %73, %75, %cst_64 {dimension_numbers = #tpu.dot_dimension_numbers<[1], [0], [0], [1], [0, 0, 1, 1], [], []>} : vector<256x8xbf16>, vector<8x8xbf16>, vector<256x8xf32> -> vector<256x8xf32>
    %77 = arith.addf %69, %76 : vector<256x8xf32>
    %c0_i32_65 = arith.constant 0 : i32
    %78 = arith.cmpi eq, %arg0, %c0_i32_65 : i32
    %79 = arith.extui %78 : i1 to i32
    %c0_i32_66 = arith.constant 0 : i32
    %80 = arith.cmpi ne, %79, %c0_i32_66 : i32
    scf.if %80 {
      %c0_68 = arith.constant 0 : index
      %c0_69 = arith.constant 0 : index
      %84 = vector.load %arg7[%c0_68, %c0_69] : memref<1x8xf32, #tpu.memory_space<vmem>>, vector<1x8xf32>
      %cst_70 = arith.constant dense<0.000000e+00> : vector<8xf32>
      %85 = vector.multi_reduction <add>, %77, %cst_70 [0] : vector<256x8xf32> to vector<8xf32>
      %86 = vector.shape_cast %85 : vector<8xf32> to vector<1x8xf32>
      %87 = arith.addf %84, %86 : vector<1x8xf32>
      %c0_71 = arith.constant 0 : index
      %c0_72 = arith.constant 0 : index
      %88 = vector.load %arg7[%c0_71, %c0_72] : memref<1x8xf32, #tpu.memory_space<vmem>>, vector<1x8xf32>
      tpu.vector_store %arg7[%c0_71, %c0_72], %87 {strides = array<i32>} : memref<1x8xf32, #tpu.memory_space<vmem>>, vector<1x8xf32>,
      %c0_73 = arith.constant 0 : index
      %c0_74 = arith.constant 0 : index
      %89 = vector.load %arg8[%c0_73, %c0_74] : memref<1x8xf32, #tpu.memory_space<vmem>>, vector<1x8xf32>
      %90 = arith.mulf %77, %77 : vector<256x8xf32>
      %cst_75 = arith.constant dense<0.000000e+00> : vector<8xf32>
      %91 = vector.multi_reduction <add>, %90, %cst_75 [0] : vector<256x8xf32> to vector<8xf32>
      %92 = vector.shape_cast %91 : vector<8xf32> to vector<1x8xf32>
      %93 = arith.addf %89, %92 : vector<1x8xf32>
      %c0_76 = arith.constant 0 : index
      %c0_77 = arith.constant 0 : index
      %94 = vector.load %arg8[%c0_76, %c0_77] : memref<1x8xf32, #tpu.memory_space<vmem>>, vector<1x8xf32>
      tpu.vector_store %arg8[%c0_76, %c0_77], %93 {strides = array<i32>} : memref<1x8xf32, #tpu.memory_space<vmem>>, vector<1x8xf32>,
      %c0_78 = arith.constant 0 : index
      %c0_79 = arith.constant 0 : index
      %c0_80 = arith.constant 0 : index
      %95 = vector.load %arg6[%c0_78, %c0_79, %c0_80] : memref<1x256x8xf32, #tpu.memory_space<vmem>>, vector<1x256x8xf32>
      %96 = vector.shape_cast %95 : vector<1x256x8xf32> to vector<256x8xf32>
      %97 = vector.shape_cast %77 : vector<256x8xf32> to vector<1x256x8xf32>
      tpu.vector_store %arg6[%c0_78, %c0_79, %c0_80], %97 {strides = array<i32>} : memref<1x256x8xf32, #tpu.memory_space<vmem>>, vector<1x256x8xf32>,
    } else {
    }
    %c1_i32 = arith.constant 1 : i32
    %81 = arith.cmpi eq, %arg0, %c1_i32 : i32
    %82 = arith.extui %81 : i1 to i32
    %c0_i32_67 = arith.constant 0 : i32
    %83 = arith.cmpi ne, %82, %c0_i32_67 : i32
    scf.if %83 {
      %c0_68 = arith.constant 0 : index
      %c0_69 = arith.constant 0 : index
      %84 = vector.load %arg7[%c0_68, %c0_69] : memref<1x8xf32, #tpu.memory_space<vmem>>, vector<1x8xf32>
      %cst_70 = arith.constant 0.001953125 : f32
      %85 = vector.broadcast %cst_70 : f32 to vector<1x8xf32>
      %86 = arith.mulf %84, %85 : vector<1x8xf32>
      %c0_71 = arith.constant 0 : index
      %c0_72 = arith.constant 0 : index
      %87 = vector.load %arg8[%c0_71, %c0_72] : memref<1x8xf32, #tpu.memory_space<vmem>>, vector<1x8xf32>
      %cst_73 = arith.constant 0.001953125 : f32
      %88 = vector.broadcast %cst_73 : f32 to vector<1x8xf32>
      %89 = arith.mulf %87, %88 : vector<1x8xf32>
      %90 = arith.mulf %86, %86 : vector<1x8xf32>
      %91 = arith.subf %89, %90 : vector<1x8xf32>
      %cst_74 = arith.constant 9.99999974E-6 : f32
      %92 = vector.broadcast %cst_74 : f32 to vector<1x8xf32>
      %93 = arith.addf %91, %92 : vector<1x8xf32>
      %94 = math.rsqrt %93 : vector<1x8xf32>
      %c0_75 = arith.constant 0 : index
      %c0_76 = arith.constant 0 : index
      %95 = vector.load %arg4[%c0_75, %c0_76] : memref<1x8xf32, #tpu.memory_space<vmem>>, vector<1x8xf32>
      %96 = arith.mulf %94, %95 : vector<1x8xf32>
      %97 = vector.broadcast %86 : vector<1x8xf32> to vector<256x8xf32>
      %98 = arith.subf %77, %97 : vector<256x8xf32>
      %99 = vector.broadcast %96 : vector<1x8xf32> to vector<256x8xf32>
      %100 = arith.mulf %98, %99 : vector<256x8xf32>
      %c0_77 = arith.constant 0 : index
      %c0_78 = arith.constant 0 : index
      %101 = vector.load %arg5[%c0_77, %c0_78] : memref<1x8xf32, #tpu.memory_space<vmem>>, vector<1x8xf32>
      %102 = vector.broadcast %101 : vector<1x8xf32> to vector<256x8xf32>
      %103 = arith.addf %100, %102 : vector<256x8xf32>
      %cst_79 = arith.constant 0.000000e+00 : f32
      %104 = vector.broadcast %cst_79 : f32 to vector<256x8xf32>
      %105 = arith.maximumf %103, %104 : vector<256x8xf32>
      %c0_80 = arith.constant 0 : index
      %c0_81 = arith.constant 0 : index
      %c0_82 = arith.constant 0 : index
      %106 = vector.load %arg6[%c0_80, %c0_81, %c0_82] : memref<1x256x8xf32, #tpu.memory_space<vmem>>, vector<1x256x8xf32>
      %107 = vector.shape_cast %106 : vector<1x256x8xf32> to vector<256x8xf32>
      %108 = vector.shape_cast %105 : vector<256x8xf32> to vector<1x256x8xf32>
      tpu.vector_store %arg6[%c0_80, %c0_81, %c0_82], %108 {strides = array<i32>} : memref<1x256x8xf32, #tpu.memory_space<vmem>>, vector<1x256x8xf32>,
    } else {
    }
    return
  }
  func.func @transform_0(%arg0: i32, %arg1: i32) -> (i32, i32, i32, i32) {
    %c0_i32 = arith.constant 0 : i32
    %c0_i32_0 = arith.constant 0 : i32
    %c0_i32_1 = arith.constant 0 : i32
    %c0_i32_2 = arith.constant 0 : i32
    return %arg1, %c0_i32, %c0_i32_0, %c0_i32_1 : i32, i32, i32, i32
  }
  func.func @transform_1(%arg0: i32, %arg1: i32) -> (i32, i32, i32) {
    %c0_i32 = arith.constant 0 : i32
    %c0_i32_0 = arith.constant 0 : i32
    %c0_i32_1 = arith.constant 0 : i32
    %c0_i32_2 = arith.constant 0 : i32
    return %c0_i32, %c0_i32_0, %c0_i32_1 : i32, i32, i32
  }
  func.func @transform_2(%arg0: i32, %arg1: i32) -> (i32, i32) {
    %c0_i32 = arith.constant 0 : i32
    %c0_i32_0 = arith.constant 0 : i32
    %c0_i32_1 = arith.constant 0 : i32
    return %c0_i32, %c0_i32_0 : i32, i32
  }
  func.func @transform_3(%arg0: i32, %arg1: i32) -> (i32, i32) {
    %c0_i32 = arith.constant 0 : i32
    %c0_i32_0 = arith.constant 0 : i32
    %c0_i32_1 = arith.constant 0 : i32
    return %c0_i32, %c0_i32_0 : i32, i32
  }
  func.func @transform_4(%arg0: i32, %arg1: i32) -> (i32, i32, i32) {
    %c0_i32 = arith.constant 0 : i32
    %c0_i32_0 = arith.constant 0 : i32
    %c0_i32_1 = arith.constant 0 : i32
    return %arg1, %c0_i32, %c0_i32_0 : i32, i32, i32
  }
}

module attributes {stable_mosaic.version = 11 : i64} {
  func.func @kernel(%arg0: i32, %arg1: memref<128x8xf32, #tpu.memory_space<vmem>>, %arg2: memref<1x8xf32, #tpu.memory_space<vmem>>, %arg3: memref<1x8xf32, #tpu.memory_space<vmem>>, %arg4: memref<128x8xf32, #tpu.memory_space<vmem>>) attributes {dimension_semantics = [#tpu.dimension_semantics<parallel>], iteration_bounds = array<i64: 3>, scalar_prefetch = 0 : i64, scratch_operands = 0 : i64, tpu.core_type = #tpu.core_type<tc>, window_params = [{transform_indices = @transform_0, window_bounds = array<i64: 128, 8>}, {pipeline_mode = #tpu.pipeline_mode<synchronous>, transform_indices = @transform_1, window_bounds = array<i64: 1, 8>}, {pipeline_mode = #tpu.pipeline_mode<synchronous>, transform_indices = @transform_2, window_bounds = array<i64: 1, 8>}, {transform_indices = @transform_3, window_bounds = array<i64: 128, 8>}]} {
    %c0 = arith.constant 0 : index
    %c0_0 = arith.constant 0 : index
    %0 = vector.load %arg1[%c0, %c0_0] : memref<128x8xf32, #tpu.memory_space<vmem>>, vector<128x8xf32>
    %cst = arith.constant dense<0.000000e+00> : vector<128xf32>
    %1 = vector.multi_reduction <add>, %0, %cst [1] : vector<128x8xf32> to vector<128xf32>
    %2 = vector.shape_cast %1 : vector<128xf32> to vector<128x1xf32>
    %cst_1 = arith.constant 8.000000e+00 : f32
    %3 = vector.broadcast %cst_1 : f32 to vector<128x1xf32>
    %4 = arith.divf %2, %3 : vector<128x1xf32>
    %5 = vector.broadcast %4 : vector<128x1xf32> to vector<128x8xf32>
    %6 = arith.subf %0, %5 : vector<128x8xf32>
    %7 = arith.mulf %6, %6 : vector<128x8xf32>
    %cst_2 = arith.constant dense<0.000000e+00> : vector<128xf32>
    %8 = vector.multi_reduction <add>, %7, %cst_2 [1] : vector<128x8xf32> to vector<128xf32>
    %9 = vector.shape_cast %8 : vector<128xf32> to vector<128x1xf32>
    %cst_3 = arith.constant 8.000000e+00 : f32
    %10 = vector.broadcast %cst_3 : f32 to vector<128x1xf32>
    %11 = arith.divf %9, %10 : vector<128x1xf32>
    %cst_4 = arith.constant 9.99999974E-6 : f32
    %12 = vector.broadcast %cst_4 : f32 to vector<128x1xf32>
    %13 = arith.addf %11, %12 : vector<128x1xf32>
    %14 = math.rsqrt %13 : vector<128x1xf32>
    %15 = vector.broadcast %14 : vector<128x1xf32> to vector<128x8xf32>
    %16 = arith.mulf %6, %15 : vector<128x8xf32>
    %c0_5 = arith.constant 0 : index
    %c0_6 = arith.constant 0 : index
    %17 = vector.load %arg2[%c0_5, %c0_6] : memref<1x8xf32, #tpu.memory_space<vmem>>, vector<1x8xf32>
    %18 = vector.broadcast %17 : vector<1x8xf32> to vector<128x8xf32>
    %19 = arith.mulf %16, %18 : vector<128x8xf32>
    %c0_7 = arith.constant 0 : index
    %c0_8 = arith.constant 0 : index
    %20 = vector.load %arg3[%c0_7, %c0_8] : memref<1x8xf32, #tpu.memory_space<vmem>>, vector<1x8xf32>
    %21 = vector.broadcast %20 : vector<1x8xf32> to vector<128x8xf32>
    %22 = arith.addf %19, %21 : vector<128x8xf32>
    %c0_9 = arith.constant 0 : index
    %c0_10 = arith.constant 0 : index
    %23 = vector.load %arg4[%c0_9, %c0_10] : memref<128x8xf32, #tpu.memory_space<vmem>>, vector<128x8xf32>
    tpu.vector_store %arg4[%c0_9, %c0_10], %22 {strides = array<i32>} : memref<128x8xf32, #tpu.memory_space<vmem>>, vector<128x8xf32>,
    return
  }
  func.func @transform_0(%arg0: i32) -> (i32, i32) {
    %c0_i32 = arith.constant 0 : i32
    %c0_i32_0 = arith.constant 0 : i32
    return %arg0, %c0_i32 : i32, i32
  }
  func.func @transform_1(%arg0: i32) -> (i32, i32) {
    %c0_i32 = arith.constant 0 : i32
    %c0_i32_0 = arith.constant 0 : i32
    %c0_i32_1 = arith.constant 0 : i32
    return %c0_i32, %c0_i32_0 : i32, i32
  }
  func.func @transform_2(%arg0: i32) -> (i32, i32) {
    %c0_i32 = arith.constant 0 : i32
    %c0_i32_0 = arith.constant 0 : i32
    %c0_i32_1 = arith.constant 0 : i32
    return %c0_i32, %c0_i32_0 : i32, i32
  }
  func.func @transform_3(%arg0: i32) -> (i32, i32) {
    %c0_i32 = arith.constant 0 : i32
    %c0_i32_0 = arith.constant 0 : i32
    return %arg0, %c0_i32 : i32, i32
  }
}

</mosaic_0001>

<llo_original>
// kernel: multires_block_forward.10
$region0: #{multires_block_forward.10}
  #allocation0 [shape = 'u32[]', space=smem, size = 0x4, offset = 0x4, fixed_abs, tag = 'smem constant byte address 0x4 - core index']
  #allocation1 [shape = 'u32[72,128]{1,0:T(1,128)}', space=vmem, size = 0x9000, scoped, tag = 'internal scratch']
  %s0 = inlined_call_operand.vmem [shape: f32[2,8,2,8,2,8], index: 0, kind: input, shape index: {}]
  %s1 = inlined_call_operand.vmem [shape: f32[2,8,8,8], index: 1, kind: output, shape index: {}]
  %s2 = sld [smem:[#allocation0]]
  $region37: #{multires_block_forward.10} parent=0
    _
  %s4 = ssub.s32 1, %s2
  %s5 = scalar_select 0, %s4, %s2
  loop: start=0, step=1, limit=4
  $region2: #{multires_block_forward.10} parent=0 // loop_pre_header
    _
  $region3: #{multires_block_forward.10} parent=0 // loop_header
    %s7 = sphi 0, %s11
    %p8 = scmp.ge.s32.totalorder %s7, 4
    %s17 = sphi 0, %s19
    %s20 = sphi 0, %s17
    %s21 = sphi 0, %s20
    %s37 = sphi 0, %s21
    %s43 = sphi 0, %s45
    %s46 = sphi 0, %s43
    %s47 = sphi 0, %s46
    %s63 = sphi 0, %s47
  $region4: #{multires_block_forward.10} parent=0 // loop_header_branch
    %10 = sbr.rel (%p8) target = $region8
  $region5: #{multires_block_forward.10} parent=0 // loop_body
    %s12 = ssub.s32 %s7, 1
    %s13 = ssub.s32 %s7, 2
    %s14 = sadd.s32 %s7, 1
    %s15 = ssub.s32 %s7, %s14
    %p16 = scmp.eq.s32.totalorder %s15, 0
    %s18 = sadd.s32 %s17, 1
    %s19 = scalar_select %p16, %s17, %s18
    %p22 = pneg %p16
    %p23 = scmp.eq.s32.totalorder %s7, 1
    %p24 = por %p22, %p23
    %p25 = scmp.ne.s32.totalorder %s17, %s20
    %p26 = scmp.eq.s32.totalorder %s7, 0
    %p27 = por %p25, %p26
    %p28 = scmp.ne.s32.totalorder %s17, %s20
    %p29 = scmp.eq.s32.totalorder %s12, 1
    %p30 = por %p28, %p29
    %p31 = scmp.ne.s32.totalorder %s20, %s21
    %p32 = scmp.eq.s32.totalorder %s12, 0
    %p33 = por %p31, %p32
    %p34 = scmp.ne.s32.totalorder %s20, %s21
    %p35 = scmp.eq.s32.totalorder %s13, 1
    %p36 = por %p34, %p35
    %p38 = scmp.ne.s32.totalorder %s21, %s37
    %p39 = scmp.eq.s32.totalorder %s13, 0
    %p40 = por %p38, %p39
    %s41 = ssub.s32 %s7, %s14
    %p42 = scmp.eq.s32.totalorder %s41, 0
    %s44 = sadd.s32 %s43, 1
    %s45 = scalar_select %p42, %s43, %s44
    %p48 = pneg %p42
    %p49 = scmp.eq.s32.totalorder %s7, 1
    %p50 = por %p48, %p49
    %p51 = scmp.ne.s32.totalorder %s43, %s46
    %p52 = scmp.eq.s32.totalorder %s7, 0
    %p53 = por %p51, %p52
    %p54 = scmp.ne.s32.totalorder %s43, %s46
    %p55 = scmp.eq.s32.totalorder %s12, 1
    %p56 = por %p54, %p55
    %p57 = scmp.ne.s32.totalorder %s46, %s47
    %p58 = scmp.eq.s32.totalorder %s12, 0
    %p59 = por %p57, %p58
    %p60 = scmp.ne.s32.totalorder %s46, %s47
    %p61 = scmp.eq.s32.totalorder %s13, 1
    %p62 = por %p60, %p61
    %p64 = scmp.ne.s32.totalorder %s47, %s63
    %p65 = scmp.eq.s32.totalorder %s13, 0
    %p66 = por %p64, %p65
    %p67 = scmp.le.s32.totalorder 1, %s7
    %p68 = scmp.lt.s32.totalorder %s7, 3
    %p69 = pnand %p67, %p68
    %p70 = pneg %p69
    // Predicated region
    $region9: #{multires_block_forward.10} parent=5 // pred_check
      _
    $region10: #{multires_block_forward.10} parent=5 // pred_check_branch
      %72 = sbr.rel (%p69) target = $region12
    $region11: #{multires_block_forward.10} parent=5 // pred_region
      %s73 = ssub.s32 %s7, 1
    $region12: #{multires_block_forward.10} parent=5 // pred_fallthru
      _
    %p74 = scmp.lt.s32.totalorder %s7, 2
    // Predicated region
    $region13: #{multires_block_forward.10} parent=5 // pred_check
      %p75 = pneg %p74
    $region14: #{multires_block_forward.10} parent=5 // pred_check_branch
      %77 = sbr.rel (%p75) target = $region16
    $region15: #{multires_block_forward.10} parent=5 // pred_region
      // Predicated region
      $region17: #{multires_block_forward.10} parent=15 // pred_check
        %p78 = pneg %p27
      $region18: #{multires_block_forward.10} parent=15 // pred_check_branch
        %80 = sbr.rel (%p78) target = $region20
      $region19: #{multires_block_forward.10} parent=15 // pred_region
        %p81 = scmp.lt.s32.totalorder %s7, 1
        %s82 = scalar_select %p81, %s7, 1
        %s83 = smul.addr %s82, 128
        %s84 = smul.addr %s83, 2
        %s85 = scalar_lea.vmem %s0, %s84
      $region20: #{multires_block_forward.10} parent=15 // pred_fallthru
        _
    $region16: #{multires_block_forward.10} parent=5 // pred_fallthru
      _
    %p86 = scmp.le.s32.totalorder 1, %s7
    %p87 = scmp.lt.s32.totalorder %s7, 3
    %p88 = pnand %p86, %p87
    %p89 = pneg %p88
    // Predicated region
    $region21: #{multires_block_forward.10} parent=5 // pred_check
      _
    $region22: #{multires_block_forward.10} parent=5 // pred_check_branch
      %91 = sbr.rel (%p88) target = $region24
    $region23: #{multires_block_forward.10} parent=5 // pred_region
      %s92 = ssub.s32 %s7, 1
      %p93 = scmp.lt.s32.totalorder %s12, 1
      %s94 = scalar_select %p93, %s12, 1
      %s95 = smul.addr %s94, 128
      %s96 = smul.addr %s95, 2
      %s97 = scalar_lea.vmem %s0, %s96
      %p98 = pneg %p33
      %p99 = pneg %p30
      %p100 = pneg %p59
      %p101 = pneg %p56
      %p102 = scmp.lt.s32.totalorder %s12, 1
      %s103 = scalar_select %p102, %s12, 1
      %s104 = smul.addr %s103, 8
      %s105 = smul.addr %s104, 8
      %s106 = scalar_lea.vmem %s1, %s105
      %p107 = scmp.lt.s32.totalorder %s12, 1
      %s108 = scalar_select %p107, %s12, 1
      %s109 = smul.addr %s108, 128
      %s110 = smul.addr %s109, 2
      %s111 = scalar_lea.vmem %s0, %s110
      %p112 = scmp.lt.s32.totalorder %s12, 1
      %s113 = scalar_select %p112, %s12, 1
      %s114 = smul.addr %s113, 8
      %s115 = smul.addr %s114, 8
      %s116 = scalar_lea.vmem %s1, %s115
      %v117 = vld [vmem:[%s111] sm:$0x3]
      %v118 = vld [vmem:[%s111 + $0x2] sm:$0x3]
      %v119 = vld [vmem:[%s111 + $0x4] sm:$0x3]
      %v120 = vld [vmem:[%s111 + $0x6] sm:$0x3]
      %v121 = vld [vmem:[%s111 + $0x8] sm:$0x3]
      %v122 = vld [vmem:[%s111 + $0xa] sm:$0x3]
      %v123 = vld [vmem:[%s111 + $0xc] sm:$0x3]
      %v124 = vld [vmem:[%s111 + $0xe] sm:$0x3]
      %v125 = vld [vmem:[%s111 + $0x10] sm:$0x3]
      %v126 = vld [vmem:[%s111 + $0x12] sm:$0x3]
      %v127 = vld [vmem:[%s111 + $0x14] sm:$0x3]
      %v128 = vld [vmem:[%s111 + $0x16] sm:$0x3]
      %v129 = vld [vmem:[%s111 + $0x18] sm:$0x3]
      %v130 = vld [vmem:[%s111 + $0x1a] sm:$0x3]
      %v131 = vld [vmem:[%s111 + $0x1c] sm:$0x3]
      %v132 = vld [vmem:[%s111 + $0x1e] sm:$0x3]
      %v133 = vld [vmem:[%s111 + $0x20] sm:$0x3]
      %v134 = vld [vmem:[%s111 + $0x22] sm:$0x3]
      %v135 = vld [vmem:[%s111 + $0x24] sm:$0x3]
      %v136 = vld [vmem:[%s111 + $0x26] sm:$0x3]
      %v137 = vld [vmem:[%s111 + $0x28] sm:$0x3]
      %v138 = vld [vmem:[%s111 + $0x2a] sm:$0x3]
      %v139 = vld [vmem:[%s111 + $0x2c] sm:$0x3]
      %v140 = vld [vmem:[%s111 + $0x2e] sm:$0x3]
      %v141 = vld [vmem:[%s111 + $0x30] sm:$0x3]
      %v142 = vld [vmem:[%s111 + $0x32] sm:$0x3]
      %v143 = vld [vmem:[%s111 + $0x34] sm:$0x3]
      %v144 = vld [vmem:[%s111 + $0x36] sm:$0x3]
      %v145 = vld [vmem:[%s111 + $0x38] sm:$0x3]
      %v146 = vld [vmem:[%s111 + $0x3a] sm:$0x3]
      %v147 = vld [vmem:[%s111 + $0x3c] sm:$0x3]
      %v148 = vld [vmem:[%s111 + $0x3e] sm:$0x3]
      %v149 = vld [vmem:[%s111 + $0x40] sm:$0x3]
      %v150 = vld [vmem:[%s111 + $0x42] sm:$0x3]
      %v151 = vld [vmem:[%s111 + $0x44] sm:$0x3]
      %v152 = vld [vmem:[%s111 + $0x46] sm:$0x3]
      %v153 = vld [vmem:[%s111 + $0x48] sm:$0x3]
      %v154 = vld [vmem:[%s111 + $0x4a] sm:$0x3]
      %v155 = vld [vmem:[%s111 + $0x4c] sm:$0x3]
      %v156 = vld [vmem:[%s111 + $0x4e] sm:$0x3]
      %v157 = vld [vmem:[%s111 + $0x50] sm:$0x3]
      %v158 = vld [vmem:[%s111 + $0x52] sm:$0x3]
      %v159 = vld [vmem:[%s111 + $0x54] sm:$0x3]
      %v160 = vld [vmem:[%s111 + $0x56] sm:$0x3]
      %v161 = vld [vmem:[%s111 + $0x58] sm:$0x3]
      %v162 = vld [vmem:[%s111 + $0x5a] sm:$0x3]
      %v163 = vld [vmem:[%s111 + $0x5c] sm:$0x3]
      %v164 = vld [vmem:[%s111 + $0x5e] sm:$0x3]
      %v165 = vld [vmem:[%s111 + $0x60] sm:$0x3]
      %v166 = vld [vmem:[%s111 + $0x62] sm:$0x3]
      %v167 = vld [vmem:[%s111 + $0x64] sm:$0x3]
      %v168 = vld [vmem:[%s111 + $0x66] sm:$0x3]
      %v169 = vld [vmem:[%s111 + $0x68] sm:$0x3]
      %v170 = vld [vmem:[%s111 + $0x6a] sm:$0x3]
      %v171 = vld [vmem:[%s111 + $0x6c] sm:$0x3]
      %v172 = vld [vmem:[%s111 + $0x6e] sm:$0x3]
      %v173 = vld [vmem:[%s111 + $0x70] sm:$0x3]
      %v174 = vld [vmem:[%s111 + $0x72] sm:$0x3]
      %v175 = vld [vmem:[%s111 + $0x74] sm:$0x3]
      %v176 = vld [vmem:[%s111 + $0x76] sm:$0x3]
      %v177 = vld [vmem:[%s111 + $0x78] sm:$0x3]
      %v178 = vld [vmem:[%s111 + $0x7a] sm:$0x3]
      %v179 = vld [vmem:[%s111 + $0x7c] sm:$0x3]
      %v180 = vld [vmem:[%s111 + $0x7e] sm:$0x3]
      %v181 = vld [vmem:[%s111 + $0x80] sm:$0x3]
      %v182 = vld [vmem:[%s111 + $0x82] sm:$0x3]
      %v183 = vld [vmem:[%s111 + $0x84] sm:$0x3]
      %v184 = vld [vmem:[%s111 + $0x86] sm:$0x3]
      %v185 = vld [vmem:[%s111 + $0x88] sm:$0x3]
      %v186 = vld [vmem:[%s111 + $0x8a] sm:$0x3]
      %v187 = vld [vmem:[%s111 + $0x8c] sm:$0x3]
      %v188 = vld [vmem:[%s111 + $0x8e] sm:$0x3]
      %v189 = vld [vmem:[%s111 + $0x90] sm:$0x3]
      %v190 = vld [vmem:[%s111 + $0x92] sm:$0x3]
      %v191 = vld [vmem:[%s111 + $0x94] sm:$0x3]
      %v192 = vld [vmem:[%s111 + $0x96] sm:$0x3]
      %v193 = vld [vmem:[%s111 + $0x98] sm:$0x3]
      %v194 = vld [vmem:[%s111 + $0x9a] sm:$0x3]
      %v195 = vld [vmem:[%s111 + $0x9c] sm:$0x3]
      %v196 = vld [vmem:[%s111 + $0x9e] sm:$0x3]
      %v197 = vld [vmem:[%s111 + $0xa0] sm:$0x3]
      %v198 = vld [vmem:[%s111 + $0xa2] sm:$0x3]
      %v199 = vld [vmem:[%s111 + $0xa4] sm:$0x3]
      %v200 = vld [vmem:[%s111 + $0xa6] sm:$0x3]
      %v201 = vld [vmem:[%s111 + $0xa8] sm:$0x3]
      %v202 = vld [vmem:[%s111 + $0xaa] sm:$0x3]
      %v203 = vld [vmem:[%s111 + $0xac] sm:$0x3]
      %v204 = vld [vmem:[%s111 + $0xae] sm:$0x3]
      %v205 = vld [vmem:[%s111 + $0xb0] sm:$0x3]
      %v206 = vld [vmem:[%s111 + $0xb2] sm:$0x3]
      %v207 = vld [vmem:[%s111 + $0xb4] sm:$0x3]
      %v208 = vld [vmem:[%s111 + $0xb6] sm:$0x3]
      %v209 = vld [vmem:[%s111 + $0xb8] sm:$0x3]
      %v210 = vld [vmem:[%s111 + $0xba] sm:$0x3]
      %v211 = vld [vmem:[%s111 + $0xbc] sm:$0x3]
      %v212 = vld [vmem:[%s111 + $0xbe] sm:$0x3]
      %v213 = vld [vmem:[%s111 + $0xc0] sm:$0x3]
      %v214 = vld [vmem:[%s111 + $0xc2] sm:$0x3]
      %v215 = vld [vmem:[%s111 + $0xc4] sm:$0x3]
      %v216 = vld [vmem:[%s111 + $0xc6] sm:$0x3]
      %v217 = vld [vmem:[%s111 + $0xc8] sm:$0x3]
      %v218 = vld [vmem:[%s111 + $0xca] sm:$0x3]
      %v219 = vld [vmem:[%s111 + $0xcc] sm:$0x3]
      %v220 = vld [vmem:[%s111 + $0xce] sm:$0x3]
      %v221 = vld [vmem:[%s111 + $0xd0] sm:$0x3]
      %v222 = vld [vmem:[%s111 + $0xd2] sm:$0x3]
      %v223 = vld [vmem:[%s111 + $0xd4] sm:$0x3]
      %v224 = vld [vmem:[%s111 + $0xd6] sm:$0x3]
      %v225 = vld [vmem:[%s111 + $0xd8] sm:$0x3]
      %v226 = vld [vmem:[%s111 + $0xda] sm:$0x3]
      %v227 = vld [vmem:[%s111 + $0xdc] sm:$0x3]
      %v228 = vld [vmem:[%s111 + $0xde] sm:$0x3]
      %v229 = vld [vmem:[%s111 + $0xe0] sm:$0x3]
      %v230 = vld [vmem:[%s111 + $0xe2] sm:$0x3]
      %v231 = vld [vmem:[%s111 + $0xe4] sm:$0x3]
      %v232 = vld [vmem:[%s111 + $0xe6] sm:$0x3]
      %v233 = vld [vmem:[%s111 + $0xe8] sm:$0x3]
      %v234 = vld [vmem:[%s111 + $0xea] sm:$0x3]
      %v235 = vld [vmem:[%s111 + $0xec] sm:$0x3]
      %v236 = vld [vmem:[%s111 + $0xee] sm:$0x3]
      %v237 = vld [vmem:[%s111 + $0xf0] sm:$0x3]
      %v238 = vld [vmem:[%s111 + $0xf2] sm:$0x3]
      %v239 = vld [vmem:[%s111 + $0xf4] sm:$0x3]
      %v240 = vld [vmem:[%s111 + $0xf6] sm:$0x3]
      %v241 = vld [vmem:[%s111 + $0xf8] sm:$0x3]
      %v242 = vld [vmem:[%s111 + $0xfa] sm:$0x3]
      %v243 = vld [vmem:[%s111 + $0xfc] sm:$0x3]
      %v244 = vld [vmem:[%s111 + $0xfe] sm:$0x3]
      %vm245 = vcmask 58368
      %v246 = vsel %vm245, %v117, -inf
      %v247 = vrot.slane %v246, 4
      %v248 = vmax.f32 %v246, %v247
      %v249 = vrot.slane %v248, 2
      %v250 = vmax.f32 %v248, %v249
      %v251 = vrot.slane %v250, 1
      %v252 = vmax.f32 %v250, %v251
      %v253 = vsel %vm245, %v118, -inf
      %v254 = vrot.slane %v253, 4
      %v255 = vmax.f32 %v253, %v254
      %v256 = vrot.slane %v255, 2
      %v257 = vmax.f32 %v255, %v256
      %v258 = vrot.slane %v257, 1
      %v259 = vmax.f32 %v257, %v258
      %v260 = vsel %vm245, %v119, -inf
      %v261 = vrot.slane %v260, 4
      %v262 = vmax.f32 %v260, %v261
      %v263 = vrot.slane %v262, 2
      %v264 = vmax.f32 %v262, %v263
      %v265 = vrot.slane %v264, 1
      %v266 = vmax.f32 %v264, %v265
      %v267 = vsel %vm245, %v120, -inf
      %v268 = vrot.slane %v267, 4
      %v269 = vmax.f32 %v267, %v268
      %v270 = vrot.slane %v269, 2
      %v271 = vmax.f32 %v269, %v270
      %v272 = vrot.slane %v271, 1
      %v273 = vmax.f32 %v271, %v272
      %v274 = vsel %vm245, %v121, -inf
      %v275 = vrot.slane %v274, 4
      %v276 = vmax.f32 %v274, %v275
      %v277 = vrot.slane %v276, 2
      %v278 = vmax.f32 %v276, %v277
      %v279 = vrot.slane %v278, 1
      %v280 = vmax.f32 %v278, %v279
      %v281 = vsel %vm245, %v122, -inf
      %v282 = vrot.slane %v281, 4
      %v283 = vmax.f32 %v281, %v282
      %v284 = vrot.slane %v283, 2
      %v285 = vmax.f32 %v283, %v284
      %v286 = vrot.slane %v285, 1
      %v287 = vmax.f32 %v285, %v286
      %v288 = vsel %vm245, %v123, -inf
      %v289 = vrot.slane %v288, 4
      %v290 = vmax.f32 %v288, %v289
      %v291 = vrot.slane %v290, 2
      %v292 = vmax.f32 %v290, %v291
      %v293 = vrot.slane %v292, 1
      %v294 = vmax.f32 %v292, %v293
      %v295 = vsel %vm245, %v124, -inf
      %v296 = vrot.slane %v295, 4
      %v297 = vmax.f32 %v295, %v296
      %v298 = vrot.slane %v297, 2
      %v299 = vmax.f32 %v297, %v298
      %v300 = vrot.slane %v299, 1
      %v301 = vmax.f32 %v299, %v300
      %v302 = vsel %vm245, %v125, -inf
      %v303 = vrot.slane %v302, 4
      %v304 = vmax.f32 %v302, %v303
      %v305 = vrot.slane %v304, 2
      %v306 = vmax.f32 %v304, %v305
      %v307 = vrot.slane %v306, 1
      %v308 = vmax.f32 %v306, %v307
      %v309 = vsel %vm245, %v126, -inf
      %v310 = vrot.slane %v309, 4
      %v311 = vmax.f32 %v309, %v310
      %v312 = vrot.slane %v311, 2
      %v313 = vmax.f32 %v311, %v312
      %v314 = vrot.slane %v313, 1
      %v315 = vmax.f32 %v313, %v314
      %v316 = vsel %vm245, %v127, -inf
      %v317 = vrot.slane %v316, 4
      %v318 = vmax.f32 %v316, %v317
      %v319 = vrot.slane %v318, 2
      %v320 = vmax.f32 %v318, %v319
      %v321 = vrot.slane %v320, 1
      %v322 = vmax.f32 %v320, %v321
      %v323 = vsel %vm245, %v128, -inf
      %v324 = vrot.slane %v323, 4
      %v325 = vmax.f32 %v323, %v324
      %v326 = vrot.slane %v325, 2
      %v327 = vmax.f32 %v325, %v326
      %v328 = vrot.slane %v327, 1
      %v329 = vmax.f32 %v327, %v328
      %v330 = vsel %vm245, %v129, -inf
      %v331 = vrot.slane %v330, 4
      %v332 = vmax.f32 %v330, %v331
      %v333 = vrot.slane %v332, 2
      %v334 = vmax.f32 %v332, %v333
      %v335 = vrot.slane %v334, 1
      %v336 = vmax.f32 %v334, %v335
      %v337 = vsel %vm245, %v130, -inf
      %v338 = vrot.slane %v337, 4
      %v339 = vmax.f32 %v337, %v338
      %v340 = vrot.slane %v339, 2
      %v341 = vmax.f32 %v339, %v340
      %v342 = vrot.slane %v341, 1
      %v343 = vmax.f32 %v341, %v342
      %v344 = vsel %vm245, %v131, -inf
      %v345 = vrot.slane %v344, 4
      %v346 = vmax.f32 %v344, %v345
      %v347 = vrot.slane %v346, 2
      %v348 = vmax.f32 %v346, %v347
      %v349 = vrot.slane %v348, 1
      %v350 = vmax.f32 %v348, %v349
      %v351 = vsel %vm245, %v132, -inf
      %v352 = vrot.slane %v351, 4
      %v353 = vmax.f32 %v351, %v352
      %v354 = vrot.slane %v353, 2
      %v355 = vmax.f32 %v353, %v354
      %v356 = vrot.slane %v355, 1
      %v357 = vmax.f32 %v355, %v356
      %v358 = vsel %vm245, %v133, -inf
      %v359 = vrot.slane %v358, 4
      %v360 = vmax.f32 %v358, %v359
      %v361 = vrot.slane %v360, 2
      %v362 = vmax.f32 %v360, %v361
      %v363 = vrot.slane %v362, 1
      %v364 = vmax.f32 %v362, %v363
      %v365 = vsel %vm245, %v134, -inf
      %v366 = vrot.slane %v365, 4
      %v367 = vmax.f32 %v365, %v366
      %v368 = vrot.slane %v367, 2
      %v369 = vmax.f32 %v367, %v368
      %v370 = vrot.slane %v369, 1
      %v371 = vmax.f32 %v369, %v370
      %v372 = vsel %vm245, %v135, -inf
      %v373 = vrot.slane %v372, 4
      %v374 = vmax.f32 %v372, %v373
      %v375 = vrot.slane %v374, 2
      %v376 = vmax.f32 %v374, %v375
      %v377 = vrot.slane %v376, 1
      %v378 = vmax.f32 %v376, %v377
      %v379 = vsel %vm245, %v136, -inf
      %v380 = vrot.slane %v379, 4
      %v381 = vmax.f32 %v379, %v380
      %v382 = vrot.slane %v381, 2
      %v383 = vmax.f32 %v381, %v382
      %v384 = vrot.slane %v383, 1
      %v385 = vmax.f32 %v383, %v384
      %v386 = vsel %vm245, %v137, -inf
      %v387 = vrot.slane %v386, 4
      %v388 = vmax.f32 %v386, %v387
      %v389 = vrot.slane %v388, 2
      %v390 = vmax.f32 %v388, %v389
      %v391 = vrot.slane %v390, 1
      %v392 = vmax.f32 %v390, %v391
      %v393 = vsel %vm245, %v138, -inf
      %v394 = vrot.slane %v393, 4
      %v395 = vmax.f32 %v393, %v394
      %v396 = vrot.slane %v395, 2
      %v397 = vmax.f32 %v395, %v396
      %v398 = vrot.slane %v397, 1
      %v399 = vmax.f32 %v397, %v398
      %v400 = vsel %vm245, %v139, -inf
      %v401 = vrot.slane %v400, 4
      %v402 = vmax.f32 %v400, %v401
      %v403 = vrot.slane %v402, 2
      %v404 = vmax.f32 %v402, %v403
      %v405 = vrot.slane %v404, 1
      %v406 = vmax.f32 %v404, %v405
      %v407 = vsel %vm245, %v140, -inf
      %v408 = vrot.slane %v407, 4
      %v409 = vmax.f32 %v407, %v408
      %v410 = vrot.slane %v409, 2
      %v411 = vmax.f32 %v409, %v410
      %v412 = vrot.slane %v411, 1
      %v413 = vmax.f32 %v411, %v412
      %v414 = vsel %vm245, %v141, -inf
      %v415 = vrot.slane %v414, 4
      %v416 = vmax.f32 %v414, %v415
      %v417 = vrot.slane %v416, 2
      %v418 = vmax.f32 %v416, %v417
      %v419 = vrot.slane %v418, 1
      %v420 = vmax.f32 %v418, %v419
      %v421 = vsel %vm245, %v142, -inf
      %v422 = vrot.slane %v421, 4
      %v423 = vmax.f32 %v421, %v422
      %v424 = vrot.slane %v423, 2
      %v425 = vmax.f32 %v423, %v424
      %v426 = vrot.slane %v425, 1
      %v427 = vmax.f32 %v425, %v426
      %v428 = vsel %vm245, %v143, -inf
      %v429 = vrot.slane %v428, 4
      %v430 = vmax.f32 %v428, %v429
      %v431 = vrot.slane %v430, 2
      %v432 = vmax.f32 %v430, %v431
      %v433 = vrot.slane %v432, 1
      %v434 = vmax.f32 %v432, %v433
      %v435 = vsel %vm245, %v144, -inf
      %v436 = vrot.slane %v435, 4
      %v437 = vmax.f32 %v435, %v436
      %v438 = vrot.slane %v437, 2
      %v439 = vmax.f32 %v437, %v438
      %v440 = vrot.slane %v439, 1
      %v441 = vmax.f32 %v439, %v440
      %v442 = vsel %vm245, %v145, -inf
      %v443 = vrot.slane %v442, 4
      %v444 = vmax.f32 %v442, %v443
      %v445 = vrot.slane %v444, 2
      %v446 = vmax.f32 %v444, %v445
      %v447 = vrot.slane %v446, 1
      %v448 = vmax.f32 %v446, %v447
      %v449 = vsel %vm245, %v146, -inf
      %v450 = vrot.slane %v449, 4
      %v451 = vmax.f32 %v449, %v450
      %v452 = vrot.slane %v451, 2
      %v453 = vmax.f32 %v451, %v452
      %v454 = vrot.slane %v453, 1
      %v455 = vmax.f32 %v453, %v454
      %v456 = vsel %vm245, %v147, -inf
      %v457 = vrot.slane %v456, 4
      %v458 = vmax.f32 %v456, %v457
      %v459 = vrot.slane %v458, 2
      %v460 = vmax.f32 %v458, %v459
      %v461 = vrot.slane %v460, 1
      %v462 = vmax.f32 %v460, %v461
      %v463 = vsel %vm245, %v148, -inf
      %v464 = vrot.slane %v463, 4
      %v465 = vmax.f32 %v463, %v464
      %v466 = vrot.slane %v465, 2
      %v467 = vmax.f32 %v465, %v466
      %v468 = vrot.slane %v467, 1
      %v469 = vmax.f32 %v467, %v468
      %v470 = vsel %vm245, %v149, -inf
      %v471 = vrot.slane %v470, 4
      %v472 = vmax.f32 %v470, %v471
      %v473 = vrot.slane %v472, 2
      %v474 = vmax.f32 %v472, %v473
      %v475 = vrot.slane %v474, 1
      %v476 = vmax.f32 %v474, %v475
      %v477 = vsel %vm245, %v150, -inf
      %v478 = vrot.slane %v477, 4
      %v479 = vmax.f32 %v477, %v478
      %v480 = vrot.slane %v479, 2
      %v481 = vmax.f32 %v479, %v480
      %v482 = vrot.slane %v481, 1
      %v483 = vmax.f32 %v481, %v482
      %v484 = vsel %vm245, %v151, -inf
      %v485 = vrot.slane %v484, 4
      %v486 = vmax.f32 %v484, %v485
      %v487 = vrot.slane %v486, 2
      %v488 = vmax.f32 %v486, %v487
      %v489 = vrot.slane %v488, 1
      %v490 = vmax.f32 %v488, %v489
      %v491 = vsel %vm245, %v152, -inf
      %v492 = vrot.slane %v491, 4
      %v493 = vmax.f32 %v491, %v492
      %v494 = vrot.slane %v493, 2
      %v495 = vmax.f32 %v493, %v494
      %v496 = vrot.slane %v495, 1
      %v497 = vmax.f32 %v495, %v496
      %v498 = vsel %vm245, %v153, -inf
      %v499 = vrot.slane %v498, 4
      %v500 = vmax.f32 %v498, %v499
      %v501 = vrot.slane %v500, 2
      %v502 = vmax.f32 %v500, %v501
      %v503 = vrot.slane %v502, 1
      %v504 = vmax.f32 %v502, %v503
      %v505 = vsel %vm245, %v154, -inf
      %v506 = vrot.slane %v505, 4
      %v507 = vmax.f32 %v505, %v506
      %v508 = vrot.slane %v507, 2
      %v509 = vmax.f32 %v507, %v508
      %v510 = vrot.slane %v509, 1
      %v511 = vmax.f32 %v509, %v510
      %v512 = vsel %vm245, %v155, -inf
      %v513 = vrot.slane %v512, 4
      %v514 = vmax.f32 %v512, %v513
      %v515 = vrot.slane %v514, 2
      %v516 = vmax.f32 %v514, %v515
      %v517 = vrot.slane %v516, 1
      %v518 = vmax.f32 %v516, %v517
      %v519 = vsel %vm245, %v156, -inf
      %v520 = vrot.slane %v519, 4
      %v521 = vmax.f32 %v519, %v520
      %v522 = vrot.slane %v521, 2
      %v523 = vmax.f32 %v521, %v522
      %v524 = vrot.slane %v523, 1
      %v525 = vmax.f32 %v523, %v524
      %v526 = vsel %vm245, %v157, -inf
      %v527 = vrot.slane %v526, 4
      %v528 = vmax.f32 %v526, %v527
      %v529 = vrot.slane %v528, 2
      %v530 = vmax.f32 %v528, %v529
      %v531 = vrot.slane %v530, 1
      %v532 = vmax.f32 %v530, %v531
      %v533 = vsel %vm245, %v158, -inf
      %v534 = vrot.slane %v533, 4
      %v535 = vmax.f32 %v533, %v534
      %v536 = vrot.slane %v535, 2
      %v537 = vmax.f32 %v535, %v536
      %v538 = vrot.slane %v537, 1
      %v539 = vmax.f32 %v537, %v538
      %v540 = vsel %vm245, %v159, -inf
      %v541 = vrot.slane %v540, 4
      %v542 = vmax.f32 %v540, %v541
      %v543 = vrot.slane %v542, 2
      %v544 = vmax.f32 %v542, %v543
      %v545 = vrot.slane %v544, 1
      %v546 = vmax.f32 %v544, %v545
      %v547 = vsel %vm245, %v160, -inf
      %v548 = vrot.slane %v547, 4
      %v549 = vmax.f32 %v547, %v548
      %v550 = vrot.slane %v549, 2
      %v551 = vmax.f32 %v549, %v550
      %v552 = vrot.slane %v551, 1
      %v553 = vmax.f32 %v551, %v552
      %v554 = vsel %vm245, %v161, -inf
      %v555 = vrot.slane %v554, 4
      %v556 = vmax.f32 %v554, %v555
      %v557 = vrot.slane %v556, 2
      %v558 = vmax.f32 %v556, %v557
      %v559 = vrot.slane %v558, 1
      %v560 = vmax.f32 %v558, %v559
      %v561 = vsel %vm245, %v162, -inf
      %v562 = vrot.slane %v561, 4
      %v563 = vmax.f32 %v561, %v562
      %v564 = vrot.slane %v563, 2
      %v565 = vmax.f32 %v563, %v564
      %v566 = vrot.slane %v565, 1
      %v567 = vmax.f32 %v565, %v566
      %v568 = vsel %vm245, %v163, -inf
      %v569 = vrot.slane %v568, 4
      %v570 = vmax.f32 %v568, %v569
      %v571 = vrot.slane %v570, 2
      %v572 = vmax.f32 %v570, %v571
      %v573 = vrot.slane %v572, 1
      %v574 = vmax.f32 %v572, %v573
      %v575 = vsel %vm245, %v164, -inf
      %v576 = vrot.slane %v575, 4
      %v577 = vmax.f32 %v575, %v576
      %v578 = vrot.slane %v577, 2
      %v579 = vmax.f32 %v577, %v578
      %v580 = vrot.slane %v579, 1
      %v581 = vmax.f32 %v579, %v580
      %v582 = vsel %vm245, %v165, -inf
      %v583 = vrot.slane %v582, 4
      %v584 = vmax.f32 %v582, %v583
      %v585 = vrot.slane %v584, 2
      %v586 = vmax.f32 %v584, %v585
      %v587 = vrot.slane %v586, 1
      %v588 = vmax.f32 %v586, %v587
      %v589 = vsel %vm245, %v166, -inf
      %v590 = vrot.slane %v589, 4
      %v591 = vmax.f32 %v589, %v590
      %v592 = vrot.slane %v591, 2
      %v593 = vmax.f32 %v591, %v592
      %v594 = vrot.slane %v593, 1
      %v595 = vmax.f32 %v593, %v594
      %v596 = vsel %vm245, %v167, -inf
      %v597 = vrot.slane %v596, 4
      %v598 = vmax.f32 %v596, %v597
      %v599 = vrot.slane %v598, 2
      %v600 = vmax.f32 %v598, %v599
      %v601 = vrot.slane %v600, 1
      %v602 = vmax.f32 %v600, %v601
      %v603 = vsel %vm245, %v168, -inf
      %v604 = vrot.slane %v603, 4
      %v605 = vmax.f32 %v603, %v604
      %v606 = vrot.slane %v605, 2
      %v607 = vmax.f32 %v605, %v606
      %v608 = vrot.slane %v607, 1
      %v609 = vmax.f32 %v607, %v608
      %v610 = vsel %vm245, %v169, -inf
      %v611 = vrot.slane %v610, 4
      %v612 = vmax.f32 %v610, %v611
      %v613 = vrot.slane %v612, 2
      %v614 = vmax.f32 %v612, %v613
      %v615 = vrot.slane %v614, 1
      %v616 = vmax.f32 %v614, %v615
      %v617 = vsel %vm245, %v170, -inf
      %v618 = vrot.slane %v617, 4
      %v619 = vmax.f32 %v617, %v618
      %v620 = vrot.slane %v619, 2
      %v621 = vmax.f32 %v619, %v620
      %v622 = vrot.slane %v621, 1
      %v623 = vmax.f32 %v621, %v622
      %v624 = vsel %vm245, %v171, -inf
      %v625 = vrot.slane %v624, 4
      %v626 = vmax.f32 %v624, %v625
      %v627 = vrot.slane %v626, 2
      %v628 = vmax.f32 %v626, %v627
      %v629 = vrot.slane %v628, 1
      %v630 = vmax.f32 %v628, %v629
      %v631 = vsel %vm245, %v172, -inf
      %v632 = vrot.slane %v631, 4
      %v633 = vmax.f32 %v631, %v632
      %v634 = vrot.slane %v633, 2
      %v635 = vmax.f32 %v633, %v634
      %v636 = vrot.slane %v635, 1
      %v637 = vmax.f32 %v635, %v636
      %v638 = vsel %vm245, %v173, -inf
      %v639 = vrot.slane %v638, 4
      %v640 = vmax.f32 %v638, %v639
      %v641 = vrot.slane %v640, 2
      %v642 = vmax.f32 %v640, %v641
      %v643 = vrot.slane %v642, 1
      %v644 = vmax.f32 %v642, %v643
      %v645 = vsel %vm245, %v174, -inf
      %v646 = vrot.slane %v645, 4
      %v647 = vmax.f32 %v645, %v646
      %v648 = vrot.slane %v647, 2
      %v649 = vmax.f32 %v647, %v648
      %v650 = vrot.slane %v649, 1
      %v651 = vmax.f32 %v649, %v650
      %v652 = vsel %vm245, %v175, -inf
      %v653 = vrot.slane %v652, 4
      %v654 = vmax.f32 %v652, %v653
      %v655 = vrot.slane %v654, 2
      %v656 = vmax.f32 %v654, %v655
      %v657 = vrot.slane %v656, 1
      %v658 = vmax.f32 %v656, %v657
      %v659 = vsel %vm245, %v176, -inf
      %v660 = vrot.slane %v659, 4
      %v661 = vmax.f32 %v659, %v660
      %v662 = vrot.slane %v661, 2
      %v663 = vmax.f32 %v661, %v662
      %v664 = vrot.slane %v663, 1
      %v665 = vmax.f32 %v663, %v664
      %v666 = vsel %vm245, %v177, -inf
      %v667 = vrot.slane %v666, 4
      %v668 = vmax.f32 %v666, %v667
      %v669 = vrot.slane %v668, 2
      %v670 = vmax.f32 %v668, %v669
      %v671 = vrot.slane %v670, 1
      %v672 = vmax.f32 %v670, %v671
      %v673 = vsel %vm245, %v178, -inf
      %v674 = vrot.slane %v673, 4
      %v675 = vmax.f32 %v673, %v674
      %v676 = vrot.slane %v675, 2
      %v677 = vmax.f32 %v675, %v676
      %v678 = vrot.slane %v677, 1
      %v679 = vmax.f32 %v677, %v678
      %v680 = vsel %vm245, %v179, -inf
      %v681 = vrot.slane %v680, 4
      %v682 = vmax.f32 %v680, %v681
      %v683 = vrot.slane %v682, 2
      %v684 = vmax.f32 %v682, %v683
      %v685 = vrot.slane %v684, 1
      %v686 = vmax.f32 %v684, %v685
      %v687 = vsel %vm245, %v180, -inf
      %v688 = vrot.slane %v687, 4
      %v689 = vmax.f32 %v687, %v688
      %v690 = vrot.slane %v689, 2
      %v691 = vmax.f32 %v689, %v690
      %v692 = vrot.slane %v691, 1
      %v693 = vmax.f32 %v691, %v692
      %v694 = vsel %vm245, %v181, -inf
      %v695 = vrot.slane %v694, 4
      %v696 = vmax.f32 %v694, %v695
      %v697 = vrot.slane %v696, 2
      %v698 = vmax.f32 %v696, %v697
      %v699 = vrot.slane %v698, 1
      %v700 = vmax.f32 %v698, %v699
      %v701 = vsel %vm245, %v182, -inf
      %v702 = vrot.slane %v701, 4
      %v703 = vmax.f32 %v701, %v702
      %v704 = vrot.slane %v703, 2
      %v705 = vmax.f32 %v703, %v704
      %v706 = vrot.slane %v705, 1
      %v707 = vmax.f32 %v705, %v706
      %v708 = vsel %vm245, %v183, -inf
      %v709 = vrot.slane %v708, 4
      %v710 = vmax.f32 %v708, %v709
      %v711 = vrot.slane %v710, 2
      %v712 = vmax.f32 %v710, %v711
      %v713 = vrot.slane %v712, 1
      %v714 = vmax.f32 %v712, %v713
      %v715 = vsel %vm245, %v184, -inf
      %v716 = vrot.slane %v715, 4
      %v717 = vmax.f32 %v715, %v716
      %v718 = vrot.slane %v717, 2
      %v719 = vmax.f32 %v717, %v718
      %v720 = vrot.slane %v719, 1
      %v721 = vmax.f32 %v719, %v720
      %v722 = vsel %vm245, %v185, -inf
      %v723 = vrot.slane %v722, 4
      %v724 = vmax.f32 %v722, %v723
      %v725 = vrot.slane %v724, 2
      %v726 = vmax.f32 %v724, %v725
      %v727 = vrot.slane %v726, 1
      %v728 = vmax.f32 %v726, %v727
      %v729 = vsel %vm245, %v186, -inf
      %v730 = vrot.slane %v729, 4
      %v731 = vmax.f32 %v729, %v730
      %v732 = vrot.slane %v731, 2
      %v733 = vmax.f32 %v731, %v732
      %v734 = vrot.slane %v733, 1
      %v735 = vmax.f32 %v733, %v734
      %v736 = vsel %vm245, %v187, -inf
      %v737 = vrot.slane %v736, 4
      %v738 = vmax.f32 %v736, %v737
      %v739 = vrot.slane %v738, 2
      %v740 = vmax.f32 %v738, %v739
      %v741 = vrot.slane %v740, 1
      %v742 = vmax.f32 %v740, %v741
      %v743 = vsel %vm245, %v188, -inf
      %v744 = vrot.slane %v743, 4
      %v745 = vmax.f32 %v743, %v744
      %v746 = vrot.slane %v745, 2
      %v747 = vmax.f32 %v745, %v746
      %v748 = vrot.slane %v747, 1
      %v749 = vmax.f32 %v747, %v748
      %v750 = vsel %vm245, %v189, -inf
      %v751 = vrot.slane %v750, 4
      %v752 = vmax.f32 %v750, %v751
      %v753 = vrot.slane %v752, 2
      %v754 = vmax.f32 %v752, %v753
      %v755 = vrot.slane %v754, 1
      %v756 = vmax.f32 %v754, %v755
      %v757 = vsel %vm245, %v190, -inf
      %v758 = vrot.slane %v757, 4
      %v759 = vmax.f32 %v757, %v758
      %v760 = vrot.slane %v759, 2
      %v761 = vmax.f32 %v759, %v760
      %v762 = vrot.slane %v761, 1
      %v763 = vmax.f32 %v761, %v762
      %v764 = vsel %vm245, %v191, -inf
      %v765 = vrot.slane %v764, 4
      %v766 = vmax.f32 %v764, %v765
      %v767 = vrot.slane %v766, 2
      %v768 = vmax.f32 %v766, %v767
      %v769 = vrot.slane %v768, 1
      %v770 = vmax.f32 %v768, %v769
      %v771 = vsel %vm245, %v192, -inf
      %v772 = vrot.slane %v771, 4
      %v773 = vmax.f32 %v771, %v772
      %v774 = vrot.slane %v773, 2
      %v775 = vmax.f32 %v773, %v774
      %v776 = vrot.slane %v775, 1
      %v777 = vmax.f32 %v775, %v776
      %v778 = vsel %vm245, %v193, -inf
      %v779 = vrot.slane %v778, 4
      %v780 = vmax.f32 %v778, %v779
      %v781 = vrot.slane %v780, 2
      %v782 = vmax.f32 %v780, %v781
      %v783 = vrot.slane %v782, 1
      %v784 = vmax.f32 %v782, %v783
      %v785 = vsel %vm245, %v194, -inf
      %v786 = vrot.slane %v785, 4
      %v787 = vmax.f32 %v785, %v786
      %v788 = vrot.slane %v787, 2
      %v789 = vmax.f32 %v787, %v788
      %v790 = vrot.slane %v789, 1
      %v791 = vmax.f32 %v789, %v790
      %v792 = vsel %vm245, %v195, -inf
      %v793 = vrot.slane %v792, 4
      %v794 = vmax.f32 %v792, %v793
      %v795 = vrot.slane %v794, 2
      %v796 = vmax.f32 %v794, %v795
      %v797 = vrot.slane %v796, 1
      %v798 = vmax.f32 %v796, %v797
      %v799 = vsel %vm245, %v196, -inf
      %v800 = vrot.slane %v799, 4
      %v801 = vmax.f32 %v799, %v800
      %v802 = vrot.slane %v801, 2
      %v803 = vmax.f32 %v801, %v802
      %v804 = vrot.slane %v803, 1
      %v805 = vmax.f32 %v803, %v804
      %v806 = vsel %vm245, %v197, -inf
      %v807 = vrot.slane %v806, 4
      %v808 = vmax.f32 %v806, %v807
      %v809 = vrot.slane %v808, 2
      %v810 = vmax.f32 %v808, %v809
      %v811 = vrot.slane %v810, 1
      %v812 = vmax.f32 %v810, %v811
      %v813 = vsel %vm245, %v198, -inf
      %v814 = vrot.slane %v813, 4
      %v815 = vmax.f32 %v813, %v814
      %v816 = vrot.slane %v815, 2
      %v817 = vmax.f32 %v815, %v816
      %v818 = vrot.slane %v817, 1
      %v819 = vmax.f32 %v817, %v818
      %v820 = vsel %vm245, %v199, -inf
      %v821 = vrot.slane %v820, 4
      %v822 = vmax.f32 %v820, %v821
      %v823 = vrot.slane %v822, 2
      %v824 = vmax.f32 %v822, %v823
      %v825 = vrot.slane %v824, 1
      %v826 = vmax.f32 %v824, %v825
      %v827 = vsel %vm245, %v200, -inf
      %v828 = vrot.slane %v827, 4
      %v829 = vmax.f32 %v827, %v828
      %v830 = vrot.slane %v829, 2
      %v831 = vmax.f32 %v829, %v830
      %v832 = vrot.slane %v831, 1
      %v833 = vmax.f32 %v831, %v832
      %v834 = vsel %vm245, %v201, -inf
      %v835 = vrot.slane %v834, 4
      %v836 = vmax.f32 %v834, %v835
      %v837 = vrot.slane %v836, 2
      %v838 = vmax.f32 %v836, %v837
      %v839 = vrot.slane %v838, 1
      %v840 = vmax.f32 %v838, %v839
      %v841 = vsel %vm245, %v202, -inf
      %v842 = vrot.slane %v841, 4
      %v843 = vmax.f32 %v841, %v842
      %v844 = vrot.slane %v843, 2
      %v845 = vmax.f32 %v843, %v844
      %v846 = vrot.slane %v845, 1
      %v847 = vmax.f32 %v845, %v846
      %v848 = vsel %vm245, %v203, -inf
      %v849 = vrot.slane %v848, 4
      %v850 = vmax.f32 %v848, %v849
      %v851 = vrot.slane %v850, 2
      %v852 = vmax.f32 %v850, %v851
      %v853 = vrot.slane %v852, 1
      %v854 = vmax.f32 %v852, %v853
      %v855 = vsel %vm245, %v204, -inf
      %v856 = vrot.slane %v855, 4
      %v857 = vmax.f32 %v855, %v856
      %v858 = vrot.slane %v857, 2
      %v859 = vmax.f32 %v857, %v858
      %v860 = vrot.slane %v859, 1
      %v861 = vmax.f32 %v859, %v860
      %v862 = vsel %vm245, %v205, -inf
      %v863 = vrot.slane %v862, 4
      %v864 = vmax.f32 %v862, %v863
      %v865 = vrot.slane %v864, 2
      %v866 = vmax.f32 %v864, %v865
      %v867 = vrot.slane %v866, 1
      %v868 = vmax.f32 %v866, %v867
      %v869 = vsel %vm245, %v206, -inf
      %v870 = vrot.slane %v869, 4
      %v871 = vmax.f32 %v869, %v870
      %v872 = vrot.slane %v871, 2
      %v873 = vmax.f32 %v871, %v872
      %v874 = vrot.slane %v873, 1
      %v875 = vmax.f32 %v873, %v874
      %v876 = vsel %vm245, %v207, -inf
      %v877 = vrot.slane %v876, 4
      %v878 = vmax.f32 %v876, %v877
      %v879 = vrot.slane %v878, 2
      %v880 = vmax.f32 %v878, %v879
      %v881 = vrot.slane %v880, 1
      %v882 = vmax.f32 %v880, %v881
      %v883 = vsel %vm245, %v208, -inf
      %v884 = vrot.slane %v883, 4
      %v885 = vmax.f32 %v883, %v884
      %v886 = vrot.slane %v885, 2
      %v887 = vmax.f32 %v885, %v886
      %v888 = vrot.slane %v887, 1
      %v889 = vmax.f32 %v887, %v888
      %v890 = vsel %vm245, %v209, -inf
      %v891 = vrot.slane %v890, 4
      %v892 = vmax.f32 %v890, %v891
      %v893 = vrot.slane %v892, 2
      %v894 = vmax.f32 %v892, %v893
      %v895 = vrot.slane %v894, 1
      %v896 = vmax.f32 %v894, %v895
      %v897 = vsel %vm245, %v210, -inf
      %v898 = vrot.slane %v897, 4
      %v899 = vmax.f32 %v897, %v898
      %v900 = vrot.slane %v899, 2
      %v901 = vmax.f32 %v899, %v900
      %v902 = vrot.slane %v901, 1
      %v903 = vmax.f32 %v901, %v902
      %v904 = vsel %vm245, %v211, -inf
      %v905 = vrot.slane %v904, 4
      %v906 = vmax.f32 %v904, %v905
      %v907 = vrot.slane %v906, 2
      %v908 = vmax.f32 %v906, %v907
      %v909 = vrot.slane %v908, 1
      %v910 = vmax.f32 %v908, %v909
      %v911 = vsel %vm245, %v212, -inf
      %v912 = vrot.slane %v911, 4
      %v913 = vmax.f32 %v911, %v912
      %v914 = vrot.slane %v913, 2
      %v915 = vmax.f32 %v913, %v914
      %v916 = vrot.slane %v915, 1
      %v917 = vmax.f32 %v915, %v916
      %v918 = vsel %vm245, %v213, -inf
      %v919 = vrot.slane %v918, 4
      %v920 = vmax.f32 %v918, %v919
      %v921 = vrot.slane %v920, 2
      %v922 = vmax.f32 %v920, %v921
      %v923 = vrot.slane %v922, 1
      %v924 = vmax.f32 %v922, %v923
      %v925 = vsel %vm245, %v214, -inf
      %v926 = vrot.slane %v925, 4
      %v927 = vmax.f32 %v925, %v926
      %v928 = vrot.slane %v927, 2
      %v929 = vmax.f32 %v927, %v928
      %v930 = vrot.slane %v929, 1
      %v931 = vmax.f32 %v929, %v930
      %v932 = vsel %vm245, %v215, -inf
      %v933 = vrot.slane %v932, 4
      %v934 = vmax.f32 %v932, %v933
      %v935 = vrot.slane %v934, 2
      %v936 = vmax.f32 %v934, %v935
      %v937 = vrot.slane %v936, 1
      %v938 = vmax.f32 %v936, %v937
      %v939 = vsel %vm245, %v216, -inf
      %v940 = vrot.slane %v939, 4
      %v941 = vmax.f32 %v939, %v940
      %v942 = vrot.slane %v941, 2
      %v943 = vmax.f32 %v941, %v942
      %v944 = vrot.slane %v943, 1
      %v945 = vmax.f32 %v943, %v944
      %v946 = vsel %vm245, %v217, -inf
      %v947 = vrot.slane %v946, 4
      %v948 = vmax.f32 %v946, %v947
      %v949 = vrot.slane %v948, 2
      %v950 = vmax.f32 %v948, %v949
      %v951 = vrot.slane %v950, 1
      %v952 = vmax.f32 %v950, %v951
      %v953 = vsel %vm245, %v218, -inf
      %v954 = vrot.slane %v953, 4
      %v955 = vmax.f32 %v953, %v954
      %v956 = vrot.slane %v955, 2
      %v957 = vmax.f32 %v955, %v956
      %v958 = vrot.slane %v957, 1
      %v959 = vmax.f32 %v957, %v958
      %v960 = vsel %vm245, %v219, -inf
      %v961 = vrot.slane %v960, 4
      %v962 = vmax.f32 %v960, %v961
      %v963 = vrot.slane %v962, 2
      %v964 = vmax.f32 %v962, %v963
      %v965 = vrot.slane %v964, 1
      %v966 = vmax.f32 %v964, %v965
      %v967 = vsel %vm245, %v220, -inf
      %v968 = vrot.slane %v967, 4
      %v969 = vmax.f32 %v967, %v968
      %v970 = vrot.slane %v969, 2
      %v971 = vmax.f32 %v969, %v970
      %v972 = vrot.slane %v971, 1
      %v973 = vmax.f32 %v971, %v972
      %v974 = vsel %vm245, %v221, -inf
      %v975 = vrot.slane %v974, 4
      %v976 = vmax.f32 %v974, %v975
      %v977 = vrot.slane %v976, 2
      %v978 = vmax.f32 %v976, %v977
      %v979 = vrot.slane %v978, 1
      %v980 = vmax.f32 %v978, %v979
      %v981 = vsel %vm245, %v222, -inf
      %v982 = vrot.slane %v981, 4
      %v983 = vmax.f32 %v981, %v982
      %v984 = vrot.slane %v983, 2
      %v985 = vmax.f32 %v983, %v984
      %v986 = vrot.slane %v985, 1
      %v987 = vmax.f32 %v985, %v986
      %v988 = vsel %vm245, %v223, -inf
      %v989 = vrot.slane %v988, 4
      %v990 = vmax.f32 %v988, %v989
      %v991 = vrot.slane %v990, 2
      %v992 = vmax.f32 %v990, %v991
      %v993 = vrot.slane %v992, 1
      %v994 = vmax.f32 %v992, %v993
      %v995 = vsel %vm245, %v224, -inf
      %v996 = vrot.slane %v995, 4
      %v997 = vmax.f32 %v995, %v996
      %v998 = vrot.slane %v997, 2
      %v999 = vmax.f32 %v997, %v998
      %v1000 = vrot.slane %v999, 1
      %v1001 = vmax.f32 %v999, %v1000
      %v1002 = vsel %vm245, %v225, -inf
      %v1003 = vrot.slane %v1002, 4
      %v1004 = vmax.f32 %v1002, %v1003
      %v1005 = vrot.slane %v1004, 2
      %v1006 = vmax.f32 %v1004, %v1005
      %v1007 = vrot.slane %v1006, 1
      %v1008 = vmax.f32 %v1006, %v1007
      %v1009 = vsel %vm245, %v226, -inf
      %v1010 = vrot.slane %v1009, 4
      %v1011 = vmax.f32 %v1009, %v1010
      %v1012 = vrot.slane %v1011, 2
      %v1013 = vmax.f32 %v1011, %v1012
      %v1014 = vrot.slane %v1013, 1
      %v1015 = vmax.f32 %v1013, %v1014
      %v1016 = vsel %vm245, %v227, -inf
      %v1017 = vrot.slane %v1016, 4
      %v1018 = vmax.f32 %v1016, %v1017
      %v1019 = vrot.slane %v1018, 2
      %v1020 = vmax.f32 %v1018, %v1019
      %v1021 = vrot.slane %v1020, 1
      %v1022 = vmax.f32 %v1020, %v1021
      %v1023 = vsel %vm245, %v228, -inf
      %v1024 = vrot.slane %v1023, 4
      %v1025 = vmax.f32 %v1023, %v1024
      %v1026 = vrot.slane %v1025, 2
      %v1027 = vmax.f32 %v1025, %v1026
      %v1028 = vrot.slane %v1027, 1
      %v1029 = vmax.f32 %v1027, %v1028
      %v1030 = vsel %vm245, %v229, -inf
      %v1031 = vrot.slane %v1030, 4
      %v1032 = vmax.f32 %v1030, %v1031
      %v1033 = vrot.slane %v1032, 2
      %v1034 = vmax.f32 %v1032, %v1033
      %v1035 = vrot.slane %v1034, 1
      %v1036 = vmax.f32 %v1034, %v1035
      %v1037 = vsel %vm245, %v230, -inf
      %v1038 = vrot.slane %v1037, 4
      %v1039 = vmax.f32 %v1037, %v1038
      %v1040 = vrot.slane %v1039, 2
      %v1041 = vmax.f32 %v1039, %v1040
      %v1042 = vrot.slane %v1041, 1
      %v1043 = vmax.f32 %v1041, %v1042
      %v1044 = vsel %vm245, %v231, -inf
      %v1045 = vrot.slane %v1044, 4
      %v1046 = vmax.f32 %v1044, %v1045
      %v1047 = vrot.slane %v1046, 2
      %v1048 = vmax.f32 %v1046, %v1047
      %v1049 = vrot.slane %v1048, 1
      %v1050 = vmax.f32 %v1048, %v1049
      %v1051 = vsel %vm245, %v232, -inf
      %v1052 = vrot.slane %v1051, 4
      %v1053 = vmax.f32 %v1051, %v1052
      %v1054 = vrot.slane %v1053, 2
      %v1055 = vmax.f32 %v1053, %v1054
      %v1056 = vrot.slane %v1055, 1
      %v1057 = vmax.f32 %v1055, %v1056
      %v1058 = vsel %vm245, %v233, -inf
      %v1059 = vrot.slane %v1058, 4
      %v1060 = vmax.f32 %v1058, %v1059
      %v1061 = vrot.slane %v1060, 2
      %v1062 = vmax.f32 %v1060, %v1061
      %v1063 = vrot.slane %v1062, 1
      %v1064 = vmax.f32 %v1062, %v1063
      %v1065 = vsel %vm245, %v234, -inf
      %v1066 = vrot.slane %v1065, 4
      %v1067 = vmax.f32 %v1065, %v1066
      %v1068 = vrot.slane %v1067, 2
      %v1069 = vmax.f32 %v1067, %v1068
      %v1070 = vrot.slane %v1069, 1
      %v1071 = vmax.f32 %v1069, %v1070
      %v1072 = vsel %vm245, %v235, -inf
      %v1073 = vrot.slane %v1072, 4
      %v1074 = vmax.f32 %v1072, %v1073
      %v1075 = vrot.slane %v1074, 2
      %v1076 = vmax.f32 %v1074, %v1075
      %v1077 = vrot.slane %v1076, 1
      %v1078 = vmax.f32 %v1076, %v1077
      %v1079 = vsel %vm245, %v236, -inf
      %v1080 = vrot.slane %v1079, 4
      %v1081 = vmax.f32 %v1079, %v1080
      %v1082 = vrot.slane %v1081, 2
      %v1083 = vmax.f32 %v1081, %v1082
      %v1084 = vrot.slane %v1083, 1
      %v1085 = vmax.f32 %v1083, %v1084
      %v1086 = vsel %vm245, %v237, -inf
      %v1087 = vrot.slane %v1086, 4
      %v1088 = vmax.f32 %v1086, %v1087
      %v1089 = vrot.slane %v1088, 2
      %v1090 = vmax.f32 %v1088, %v1089
      %v1091 = vrot.slane %v1090, 1
      %v1092 = vmax.f32 %v1090, %v1091
      %v1093 = vsel %vm245, %v238, -inf
      %v1094 = vrot.slane %v1093, 4
      %v1095 = vmax.f32 %v1093, %v1094
      %v1096 = vrot.slane %v1095, 2
      %v1097 = vmax.f32 %v1095, %v1096
      %v1098 = vrot.slane %v1097, 1
      %v1099 = vmax.f32 %v1097, %v1098
      %v1100 = vsel %vm245, %v239, -inf
      %v1101 = vrot.slane %v1100, 4
      %v1102 = vmax.f32 %v1100, %v1101
      %v1103 = vrot.slane %v1102, 2
      %v1104 = vmax.f32 %v1102, %v1103
      %v1105 = vrot.slane %v1104, 1
      %v1106 = vmax.f32 %v1104, %v1105
      %v1107 = vsel %vm245, %v240, -inf
      %v1108 = vrot.slane %v1107, 4
      %v1109 = vmax.f32 %v1107, %v1108
      %v1110 = vrot.slane %v1109, 2
      %v1111 = vmax.f32 %v1109, %v1110
      %v1112 = vrot.slane %v1111, 1
      %v1113 = vmax.f32 %v1111, %v1112
      %v1114 = vsel %vm245, %v241, -inf
      %v1115 = vrot.slane %v1114, 4
      %v1116 = vmax.f32 %v1114, %v1115
      %v1117 = vrot.slane %v1116, 2
      %v1118 = vmax.f32 %v1116, %v1117
      %v1119 = vrot.slane %v1118, 1
      %v1120 = vmax.f32 %v1118, %v1119
      %v1121 = vsel %vm245, %v242, -inf
      %v1122 = vrot.slane %v1121, 4
      %v1123 = vmax.f32 %v1121, %v1122
      %v1124 = vrot.slane %v1123, 2
      %v1125 = vmax.f32 %v1123, %v1124
      %v1126 = vrot.slane %v1125, 1
      %v1127 = vmax.f32 %v1125, %v1126
      %v1128 = vsel %vm245, %v243, -inf
      %v1129 = vrot.slane %v1128, 4
      %v1130 = vmax.f32 %v1128, %v1129
      %v1131 = vrot.slane %v1130, 2
      %v1132 = vmax.f32 %v1130, %v1131
      %v1133 = vrot.slane %v1132, 1
      %v1134 = vmax.f32 %v1132, %v1133
      %v1135 = vsel %vm245, %v244, -inf
      %v1136 = vrot.slane %v1135, 4
      %v1137 = vmax.f32 %v1135, %v1136
      %v1138 = vrot.slane %v1137, 2
      %v1139 = vmax.f32 %v1137, %v1138
      %v1140 = vrot.slane %v1139, 1
      %v1141 = vmax.f32 %v1139, %v1140
      %vm1142 = vcmask 64512
      %v1143 = vsel %vm1142, %v252, -inf
      %v1144 = vsel %vm1142, %v308, -inf
      %v1145 = vmax.f32 %v1143, %v1144
      %v1146 = vsel %vm1142, %v259, -inf
      %v1147 = vsel %vm1142, %v315, -inf
      %v1148 = vmax.f32 %v1146, %v1147
      %v1149 = vsel %vm1142, %v266, -inf
      %v1150 = vsel %vm1142, %v322, -inf
      %v1151 = vmax.f32 %v1149, %v1150
      %v1152 = vsel %vm1142, %v273, -inf
      %v1153 = vsel %vm1142, %v329, -inf
      %v1154 = vmax.f32 %v1152, %v1153
      %v1155 = vsel %vm1142, %v280, -inf
      %v1156 = vsel %vm1142, %v336, -inf
      %v1157 = vmax.f32 %v1155, %v1156
      %v1158 = vsel %vm1142, %v287, -inf
      %v1159 = vsel %vm1142, %v343, -inf
      %v1160 = vmax.f32 %v1158, %v1159
      %v1161 = vsel %vm1142, %v294, -inf
      %v1162 = vsel %vm1142, %v350, -inf
      %v1163 = vmax.f32 %v1161, %v1162
      %v1164 = vsel %vm1142, %v301, -inf
      %v1165 = vsel %vm1142, %v357, -inf
      %v1166 = vmax.f32 %v1164, %v1165
      %v1167 = vsel %vm1142, %v364, -inf
      %v1168 = vsel %vm1142, %v420, -inf
      %v1169 = vmax.f32 %v1167, %v1168
      %v1170 = vsel %vm1142, %v371, -inf
      %v1171 = vsel %vm1142, %v427, -inf
      %v1172 = vmax.f32 %v1170, %v1171
      %v1173 = vsel %vm1142, %v378, -inf
      %v1174 = vsel %vm1142, %v434, -inf
      %v1175 = vmax.f32 %v1173, %v1174
      %v1176 = vsel %vm1142, %v385, -inf
      %v1177 = vsel %vm1142, %v441, -inf
      %v1178 = vmax.f32 %v1176, %v1177
      %v1179 = vsel %vm1142, %v392, -inf
      %v1180 = vsel %vm1142, %v448, -inf
      %v1181 = vmax.f32 %v1179, %v1180
      %v1182 = vsel %vm1142, %v399, -inf
      %v1183 = vsel %vm1142, %v455, -inf
      %v1184 = vmax.f32 %v1182, %v1183
      %v1185 = vsel %vm1142, %v406, -inf
      %v1186 = vsel %vm1142, %v462, -inf
      %v1187 = vmax.f32 %v1185, %v1186
      %v1188 = vsel %vm1142, %v413, -inf
      %v1189 = vsel %vm1142, %v469, -inf
      %v1190 = vmax.f32 %v1188, %v1189
      %v1191 = vsel %vm1142, %v476, -inf
      %v1192 = vsel %vm1142, %v532, -inf
      %v1193 = vmax.f32 %v1191, %v1192
      %v1194 = vsel %vm1142, %v483, -inf
      %v1195 = vsel %vm1142, %v539, -inf
      %v1196 = vmax.f32 %v1194, %v1195
      %v1197 = vsel %vm1142, %v490, -inf
      %v1198 = vsel %vm1142, %v546, -inf
      %v1199 = vmax.f32 %v1197, %v1198
      %v1200 = vsel %vm1142, %v497, -inf
      %v1201 = vsel %vm1142, %v553, -inf
      %v1202 = vmax.f32 %v1200, %v1201
      %v1203 = vsel %vm1142, %v504, -inf
      %v1204 = vsel %vm1142, %v560, -inf
      %v1205 = vmax.f32 %v1203, %v1204
      %v1206 = vsel %vm1142, %v511, -inf
      %v1207 = vsel %vm1142, %v567, -inf
      %v1208 = vmax.f32 %v1206, %v1207
      %v1209 = vsel %vm1142, %v518, -inf
      %v1210 = vsel %vm1142, %v574, -inf
      %v1211 = vmax.f32 %v1209, %v1210
      %v1212 = vsel %vm1142, %v525, -inf
      %v1213 = vsel %vm1142, %v581, -inf
      %v1214 = vmax.f32 %v1212, %v1213
      %v1215 = vsel %vm1142, %v588, -inf
      %v1216 = vsel %vm1142, %v644, -inf
      %v1217 = vmax.f32 %v1215, %v1216
      %v1218 = vsel %vm1142, %v595, -inf
      %v1219 = vsel %vm1142, %v651, -inf
      %v1220 = vmax.f32 %v1218, %v1219
      %v1221 = vsel %vm1142, %v602, -inf
      %v1222 = vsel %vm1142, %v658, -inf
      %v1223 = vmax.f32 %v1221, %v1222
      %v1224 = vsel %vm1142, %v609, -inf
      %v1225 = vsel %vm1142, %v665, -inf
      %v1226 = vmax.f32 %v1224, %v1225
      %v1227 = vsel %vm1142, %v616, -inf
      %v1228 = vsel %vm1142, %v672, -inf
      %v1229 = vmax.f32 %v1227, %v1228
      %v1230 = vsel %vm1142, %v623, -inf
      %v1231 = vsel %vm1142, %v679, -inf
      %v1232 = vmax.f32 %v1230, %v1231
      %v1233 = vsel %vm1142, %v630, -inf
      %v1234 = vsel %vm1142, %v686, -inf
      %v1235 = vmax.f32 %v1233, %v1234
      %v1236 = vsel %vm1142, %v637, -inf
      %v1237 = vsel %vm1142, %v693, -inf
      %v1238 = vmax.f32 %v1236, %v1237
      %v1239 = vsel %vm1142, %v700, -inf
      %v1240 = vsel %vm1142, %v756, -inf
      %v1241 = vmax.f32 %v1239, %v1240
      %v1242 = vsel %vm1142, %v707, -inf
      %v1243 = vsel %vm1142, %v763, -inf
      %v1244 = vmax.f32 %v1242, %v1243
      %v1245 = vsel %vm1142, %v714, -inf
      %v1246 = vsel %vm1142, %v770, -inf
      %v1247 = vmax.f32 %v1245, %v1246
      %v1248 = vsel %vm1142, %v721, -inf
      %v1249 = vsel %vm1142, %v777, -inf
      %v1250 = vmax.f32 %v1248, %v1249
      %v1251 = vsel %vm1142, %v728, -inf
      %v1252 = vsel %vm1142, %v784, -inf
      %v1253 = vmax.f32 %v1251, %v1252
      %v1254 = vsel %vm1142, %v735, -inf
      %v1255 = vsel %vm1142, %v791, -inf
      %v1256 = vmax.f32 %v1254, %v1255
      %v1257 = vsel %vm1142, %v742, -inf
      %v1258 = vsel %vm1142, %v798, -inf
      %v1259 = vmax.f32 %v1257, %v1258
      %v1260 = vsel %vm1142, %v749, -inf
      %v1261 = vsel %vm1142, %v805, -inf
      %v1262 = vmax.f32 %v1260, %v1261
      %v1263 = vsel %vm1142, %v812, -inf
      %v1264 = vsel %vm1142, %v868, -inf
      %v1265 = vmax.f32 %v1263, %v1264
      %v1266 = vsel %vm1142, %v819, -inf
      %v1267 = vsel %vm1142, %v875, -inf
      %v1268 = vmax.f32 %v1266, %v1267
      %v1269 = vsel %vm1142, %v826, -inf
      %v1270 = vsel %vm1142, %v882, -inf
      %v1271 = vmax.f32 %v1269, %v1270
      %v1272 = vsel %vm1142, %v833, -inf
      %v1273 = vsel %vm1142, %v889, -inf
      %v1274 = vmax.f32 %v1272, %v1273
      %v1275 = vsel %vm1142, %v840, -inf
      %v1276 = vsel %vm1142, %v896, -inf
      %v1277 = vmax.f32 %v1275, %v1276
      %v1278 = vsel %vm1142, %v847, -inf
      %v1279 = vsel %vm1142, %v903, -inf
      %v1280 = vmax.f32 %v1278, %v1279
      %v1281 = vsel %vm1142, %v854, -inf
      %v1282 = vsel %vm1142, %v910, -inf
      %v1283 = vmax.f32 %v1281, %v1282
      %v1284 = vsel %vm1142, %v861, -inf
      %v1285 = vsel %vm1142, %v917, -inf
      %v1286 = vmax.f32 %v1284, %v1285
      %v1287 = vsel %vm1142, %v924, -inf
      %v1288 = vsel %vm1142, %v980, -inf
      %v1289 = vmax.f32 %v1287, %v1288
      %v1290 = vsel %vm1142, %v931, -inf
      %v1291 = vsel %vm1142, %v987, -inf
      %v1292 = vmax.f32 %v1290, %v1291
      %v1293 = vsel %vm1142, %v938, -inf
      %v1294 = vsel %vm1142, %v994, -inf
      %v1295 = vmax.f32 %v1293, %v1294
      %v1296 = vsel %vm1142, %v945, -inf
      %v1297 = vsel %vm1142, %v1001, -inf
      %v1298 = vmax.f32 %v1296, %v1297
      %v1299 = vsel %vm1142, %v952, -inf
      %v1300 = vsel %vm1142, %v1008, -inf
      %v1301 = vmax.f32 %v1299, %v1300
      %v1302 = vsel %vm1142, %v959, -inf
      %v1303 = vsel %vm1142, %v1015, -inf
      %v1304 = vmax.f32 %v1302, %v1303
      %v1305 = vsel %vm1142, %v966, -inf
      %v1306 = vsel %vm1142, %v1022, -inf
      %v1307 = vmax.f32 %v1305, %v1306
      %v1308 = vsel %vm1142, %v973, -inf
      %v1309 = vsel %vm1142, %v1029, -inf
      %v1310 = vmax.f32 %v1308, %v1309
      %v1311 = vsel %vm1142, %v1036, -inf
      %v1312 = vsel %vm1142, %v1092, -inf
      %v1313 = vmax.f32 %v1311, %v1312
      %v1314 = vsel %vm1142, %v1043, -inf
      %v1315 = vsel %vm1142, %v1099, -inf
      %v1316 = vmax.f32 %v1314, %v1315
      %v1317 = vsel %vm1142, %v1050, -inf
      %v1318 = vsel %vm1142, %v1106, -inf
      %v1319 = vmax.f32 %v1317, %v1318
      %v1320 = vsel %vm1142, %v1057, -inf
      %v1321 = vsel %vm1142, %v1113, -inf
      %v1322 = vmax.f32 %v1320, %v1321
      %v1323 = vsel %vm1142, %v1064, -inf
      %v1324 = vsel %vm1142, %v1120, -inf
      %v1325 = vmax.f32 %v1323, %v1324
      %v1326 = vsel %vm1142, %v1071, -inf
      %v1327 = vsel %vm1142, %v1127, -inf
      %v1328 = vmax.f32 %v1326, %v1327
      %v1329 = vsel %vm1142, %v1078, -inf
      %v1330 = vsel %vm1142, %v1134, -inf
      %v1331 = vmax.f32 %v1329, %v1330
      %v1332 = vsel %vm1142, %v1085, -inf
      %v1333 = vsel %vm1142, %v1141, -inf
      %v1334 = vmax.f32 %v1332, %v1333
      %vm1399 = vcmask 1041409
      %v1400 = vsel %vm1399, %v1148, %v1145
      %vm1401 = vcmask 1042434
      %v1402 = vsel %vm1401, %v1151, %v1400
      %vm1403 = vcmask 1043459
      %v1404 = vsel %vm1403, %v1154, %v1402
      %vm1405 = vcmask 1044484
      %v1406 = vsel %vm1405, %v1157, %v1404
      %vm1407 = vcmask 1045509
      %v1408 = vsel %vm1407, %v1160, %v1406
      %vm1409 = vcmask 1046534
      %v1410 = vsel %vm1409, %v1163, %v1408
      %vm1411 = vcmask 1047559
      %v1412 = vsel %vm1411, %v1166, %v1410
      %v1413 = vsel %vm1399, %v1172, %v1169
      %v1414 = vsel %vm1401, %v1175, %v1413
      %v1415 = vsel %vm1403, %v1178, %v1414
      %v1416 = vsel %vm1405, %v1181, %v1415
      %v1417 = vsel %vm1407, %v1184, %v1416
      %v1418 = vsel %vm1409, %v1187, %v1417
      %v1419 = vsel %vm1411, %v1190, %v1418
      %v1420 = vsel %vm1399, %v1196, %v1193
      %v1421 = vsel %vm1401, %v1199, %v1420
      %v1422 = vsel %vm1403, %v1202, %v1421
      %v1423 = vsel %vm1405, %v1205, %v1422
      %v1424 = vsel %vm1407, %v1208, %v1423
      %v1425 = vsel %vm1409, %v1211, %v1424
      %v1426 = vsel %vm1411, %v1214, %v1425
      %v1427 = vsel %vm1399, %v1220, %v1217
      %v1428 = vsel %vm1401, %v1223, %v1427
      %v1429 = vsel %vm1403, %v1226, %v1428
      %v1430 = vsel %vm1405, %v1229, %v1429
      %v1431 = vsel %vm1407, %v1232, %v1430
      %v1432 = vsel %vm1409, %v1235, %v1431
      %v1433 = vsel %vm1411, %v1238, %v1432
      %v1434 = vsel %vm1399, %v1244, %v1241
      %v1435 = vsel %vm1401, %v1247, %v1434
      %v1436 = vsel %vm1403, %v1250, %v1435
      %v1437 = vsel %vm1405, %v1253, %v1436
      %v1438 = vsel %vm1407, %v1256, %v1437
      %v1439 = vsel %vm1409, %v1259, %v1438
      %v1440 = vsel %vm1411, %v1262, %v1439
      %v1441 = vsel %vm1399, %v1268, %v1265
      %v1442 = vsel %vm1401, %v1271, %v1441
      %v1443 = vsel %vm1403, %v1274, %v1442
      %v1444 = vsel %vm1405, %v1277, %v1443
      %v1445 = vsel %vm1407, %v1280, %v1444
      %v1446 = vsel %vm1409, %v1283, %v1445
      %v1447 = vsel %vm1411, %v1286, %v1446
      %v1448 = vsel %vm1399, %v1292, %v1289
      %v1449 = vsel %vm1401, %v1295, %v1448
      %v1450 = vsel %vm1403, %v1298, %v1449
      %v1451 = vsel %vm1405, %v1301, %v1450
      %v1452 = vsel %vm1407, %v1304, %v1451
      %v1453 = vsel %vm1409, %v1307, %v1452
      %v1454 = vsel %vm1411, %v1310, %v1453
      %v1455 = vsel %vm1399, %v1316, %v1313
      %v1456 = vsel %vm1401, %v1319, %v1455
      %v1457 = vsel %vm1403, %v1322, %v1456
      %v1458 = vsel %vm1405, %v1325, %v1457
      %v1459 = vsel %vm1407, %v1328, %v1458
      %v1460 = vsel %vm1409, %v1331, %v1459
      %v1461 = vsel %vm1411, %v1334, %v1460
      %1470 = vst.msk [vmem:[%s116] sm:$0xff] %vm1142, %v1412
      %1471 = vst.msk [vmem:[%s116 + $0x8] sm:$0xff] %vm1142, %v1419
      %1472 = vst.msk [vmem:[%s116 + $0x10] sm:$0xff] %vm1142, %v1426
      %1473 = vst.msk [vmem:[%s116 + $0x18] sm:$0xff] %vm1142, %v1433
      %1474 = vst.msk [vmem:[%s116 + $0x20] sm:$0xff] %vm1142, %v1440
      %1475 = vst.msk [vmem:[%s116 + $0x28] sm:$0xff] %vm1142, %v1447
      %1476 = vst.msk [vmem:[%s116 + $0x30] sm:$0xff] %vm1142, %v1454
      %1477 = vst.msk [vmem:[%s116 + $0x38] sm:$0xff] %vm1142, %v1461
      %p1478 = scmp.lt.s32.totalorder %s12, 1
      %s1479 = scalar_select %p1478, %s12, 1
      %s1480 = smul.addr %s1479, 8
      %s1481 = smul.addr %s1480, 8
      %s1482 = scalar_lea.vmem %s1, %s1481
      // Predicated region
      $region25: #{multires_block_forward.10} parent=23 // pred_check
        %p1483 = pneg %p56
      $region26: #{multires_block_forward.10} parent=23 // pred_check_branch
        %1485 = sbr.rel (%p1483) target = $region28
      $region27: #{multires_block_forward.10} parent=23 // pred_region
        _
      $region28: #{multires_block_forward.10} parent=23 // pred_fallthru
        _
    $region24: #{multires_block_forward.10} parent=5 // pred_fallthru
      _
    %p1486 = scmp.le.s32.totalorder 2, %s7
    // Predicated region
    $region29: #{multires_block_forward.10} parent=5 // pred_check
      %p1487 = pneg %p1486
    $region30: #{multires_block_forward.10} parent=5 // pred_check_branch
      %1489 = sbr.rel (%p1487) target = $region32
    $region31: #{multires_block_forward.10} parent=5 // pred_region
      %s1490 = ssub.s32 %s7, 2
      // Predicated region
      $region33: #{multires_block_forward.10} parent=31 // pred_check
        %p1491 = pneg %p62
      $region34: #{multires_block_forward.10} parent=31 // pred_check_branch
        %1493 = sbr.rel (%p1491) target = $region36
      $region35: #{multires_block_forward.10} parent=31 // pred_region
        %p1494 = scmp.lt.s32.totalorder %s13, 1
        %s1495 = scalar_select %p1494, %s13, 1
        %s1496 = smul.addr %s1495, 8
        %s1497 = smul.addr %s1496, 8
        %s1498 = scalar_lea.vmem %s1, %s1497
      $region36: #{multires_block_forward.10} parent=31 // pred_fallthru
        _
    $region32: #{multires_block_forward.10} parent=5 // pred_fallthru
      _
  $region6: #{multires_block_forward.10} parent=0 // loop_footer
    %s11 = sadd.s32 1, %s7
  $region7: #{multires_block_forward.10} parent=0 // loop_footer_branch
    %6 = sbr.rel target = $region3
  $region8: #{multires_block_forward.10} parent=0 // loop_exit
    _

// kernel: multires_block_forward.8
$region0: #{multires_block_forward.8}
  #allocation0 [shape = 'u32[]', space=smem, size = 0x4, offset = 0x4, fixed_abs, tag = 'smem constant byte address 0x4 - core index']
  #allocation1 [shape = 'u32[72,128]{1,0:T(1,128)}', space=vmem, size = 0x9000, scoped, tag = 'internal scratch']
  #allocation2 [shape = 'f32[1,1]{1,0:T(1,128)}', space=vmem, size = 0x200, scoped, tag = 'scratch operand']
  #allocation3 [shape = 'f32[1,1]{1,0:T(1,128)}', space=vmem, size = 0x200, scoped, tag = 'scratch operand']
  #allocation4 [shape = 'f32[1,1]{1,0:T(1,128)S(1)}', space=vmem, size = 0x200, scoped, tag = 'scoped memory for multires_block_forward.8']
  #allocation5 [shape = 'f32[1,1]{1,0:T(1,128)S(1)}', space=vmem, size = 0x200, scoped, tag = 'scoped memory for multires_block_forward.8']
  %s0 = inlined_call_operand.vmem [shape: f32[2,18,18,4], index: 0, kind: input, shape index: {}]
  %s1 = inlined_call_operand.vmem [shape: bf16[9,4,1], index: 1, kind: input, shape index: {}]
  %s2 = inlined_call_operand.<no memory space> [shape: f32[1,1], index: 2, kind: input, shape index: {}]
  %s3 = inlined_call_operand.<no memory space> [shape: f32[1,1], index: 3, kind: input, shape index: {}]
  %s4 = inlined_call_operand.vmem [shape: f32[2,256,1], index: 4, kind: output, shape index: {}]
  %s5 = sld [smem:[#allocation0]]
  $region61: #{multires_block_forward.8} parent=0
    _
  %s7 = ssub.s32 1, %s5
  %s8 = scalar_select 0, %s7, %s5
  %v9 = vstv %s2
  %10 = vst [vmem:[#allocation4] sm:$0x1] %v9
  %v11 = vstv %s3
  %12 = vst [vmem:[#allocation5] sm:$0x1] %v11
  loop: start=0, step=1, limit=6
  $region2: #{multires_block_forward.8} parent=0 // loop_pre_header
    _
  $region3: #{multires_block_forward.8} parent=0 // loop_header
    %s14 = sphi 0, %s18
    %p15 = scmp.ge.s32.totalorder %s14, 6
    %s21 = sphi 0, %s33
    %s22 = sphi 0, %s29
    %s23 = sphi 0, %s21
    %s24 = sphi 0, %s22
    %s25 = sphi 0, %s23
    %s26 = sphi 0, %s24
    %s36 = sphi 0, %s38
    %s39 = sphi 0, %s36
    %s40 = sphi 0, %s39
    %s56 = sphi 0, %s40
    %s60 = sphi 0, %s60
    %s62 = sphi 0, %s60
    %s63 = sphi 0, %s62
    %s77 = sphi 0, %s63
    %s81 = sphi 0, %s81
    %s83 = sphi 0, %s81
    %s84 = sphi 0, %s83
    %s98 = sphi 0, %s84
    %s102 = sphi 0, %s102
    %s104 = sphi 0, %s102
    %s105 = sphi 0, %s104
    %s119 = sphi 0, %s105
    %s125 = sphi 0, %s127
    %s128 = sphi 0, %s125
    %s129 = sphi 0, %s128
    %s145 = sphi 0, %s129
  $region4: #{multires_block_forward.8} parent=0 // loop_header_branch
    %17 = sbr.rel (%p15) target = $region8
  $region5: #{multires_block_forward.8} parent=0 // loop_body
    %s19 = ssub.s32 %s14, 1
    %s20 = ssub.s32 %s14, 2
    %s27 = sadd.s32 1, %s22
    %p28 = scmp.ge.s32.totalorder %s27, 2
    %s29 = scalar_select %p28, 0, %s27
    %s30 = sadd.s32 1, %s21
    %s31 = scalar_select %p28, %s30, %s21
    %p32 = scmp.ge.s32.totalorder %s31, 2
    %s33 = scalar_select %p32, 0, %s31
    %s34 = ssub.s32 %s22, %s29
    %p35 = scmp.eq.s32.totalorder %s34, 0
    %s37 = sadd.s32 %s36, 1
    %s38 = scalar_select %p35, %s36, %s37
    %p41 = pneg %p35
    %p42 = scmp.eq.s32.totalorder %s14, 3
    %p43 = por %p41, %p42
    %p44 = scmp.ne.s32.totalorder %s36, %s39
    %p45 = scmp.eq.s32.totalorder %s14, 0
    %p46 = por %p44, %p45
    %p47 = scmp.ne.s32.totalorder %s36, %s39
    %p48 = scmp.eq.s32.totalorder %s19, 3
    %p49 = por %p47, %p48
    %p50 = scmp.ne.s32.totalorder %s39, %s40
    %p51 = scmp.eq.s32.totalorder %s19, 0
    %p52 = por %p50, %p51
    %p53 = scmp.ne.s32.totalorder %s39, %s40
    %p54 = scmp.eq.s32.totalorder %s20, 3
    %p55 = por %p53, %p54
    %p57 = scmp.ne.s32.totalorder %s40, %s56
    %p58 = scmp.eq.s32.totalorder %s20, 0
    %p59 = por %p57, %p58
    %s61 = sadd.s32 %s60, 1
    %p64 = scmp.eq.s32.totalorder %s14, 3
    %p65 = scmp.ne.s32.totalorder %s60, %s62
    %p66 = scmp.eq.s32.totalorder %s14, 0
    %p67 = por %p65, %p66
    %p68 = scmp.ne.s32.totalorder %s60, %s62
    %p69 = scmp.eq.s32.totalorder %s19, 3
    %p70 = por %p68, %p69
    %p71 = scmp.ne.s32.totalorder %s62, %s63
    %p72 = scmp.eq.s32.totalorder %s19, 0
    %p73 = por %p71, %p72
    %p74 = scmp.ne.s32.totalorder %s62, %s63
    %p75 = scmp.eq.s32.totalorder %s20, 3
    %p76 = por %p74, %p75
    %p78 = scmp.ne.s32.totalorder %s63, %s77
    %p79 = scmp.eq.s32.totalorder %s20, 0
    %p80 = por %p78, %p79
    %s82 = sadd.s32 %s81, 1
    %p85 = scmp.eq.s32.totalorder %s14, 3
    %p86 = scmp.ne.s32.totalorder %s81, %s83
    %p87 = scmp.eq.s32.totalorder %s14, 0
    %p88 = por %p86, %p87
    %p89 = scmp.ne.s32.totalorder %s81, %s83
    %p90 = scmp.eq.s32.totalorder %s19, 3
    %p91 = por %p89, %p90
    %p92 = scmp.ne.s32.totalorder %s83, %s84
    %p93 = scmp.eq.s32.totalorder %s19, 0
    %p94 = por %p92, %p93
    %p95 = scmp.ne.s32.totalorder %s83, %s84
    %p96 = scmp.eq.s32.totalorder %s20, 3
    %p97 = por %p95, %p96
    %p99 = scmp.ne.s32.totalorder %s84, %s98
    %p100 = scmp.eq.s32.totalorder %s20, 0
    %p101 = por %p99, %p100
    %s103 = sadd.s32 %s102, 1
    %p106 = scmp.eq.s32.totalorder %s14, 3
    %p107 = scmp.ne.s32.totalorder %s102, %s104
    %p108 = scmp.eq.s32.totalorder %s14, 0
    %p109 = por %p107, %p108
    %p110 = scmp.ne.s32.totalorder %s102, %s104
    %p111 = scmp.eq.s32.totalorder %s19, 3
    %p112 = por %p110, %p111
    %p113 = scmp.ne.s32.totalorder %s104, %s105
    %p114 = scmp.eq.s32.totalorder %s19, 0
    %p115 = por %p113, %p114
    %p116 = scmp.ne.s32.totalorder %s104, %s105
    %p117 = scmp.eq.s32.totalorder %s20, 3
    %p118 = por %p116, %p117
    %p120 = scmp.ne.s32.totalorder %s105, %s119
    %p121 = scmp.eq.s32.totalorder %s20, 0
    %p122 = por %p120, %p121
    %s123 = ssub.s32 %s22, %s29
    %p124 = scmp.eq.s32.totalorder %s123, 0
    %s126 = sadd.s32 %s125, 1
    %s127 = scalar_select %p124, %s125, %s126
    %p130 = pneg %p124
    %p131 = scmp.eq.s32.totalorder %s14, 3
    %p132 = por %p130, %p131
    %p133 = scmp.ne.s32.totalorder %s125, %s128
    %p134 = scmp.eq.s32.totalorder %s14, 0
    %p135 = por %p133, %p134
    %p136 = scmp.ne.s32.totalorder %s125, %s128
    %p137 = scmp.eq.s32.totalorder %s19, 3
    %p138 = por %p136, %p137
    %p139 = scmp.ne.s32.totalorder %s128, %s129
    %p140 = scmp.eq.s32.totalorder %s19, 0
    %p141 = por %p139, %p140
    %p142 = scmp.ne.s32.totalorder %s128, %s129
    %p143 = scmp.eq.s32.totalorder %s20, 3
    %p144 = por %p142, %p143
    %p146 = scmp.ne.s32.totalorder %s129, %s145
    %p147 = scmp.eq.s32.totalorder %s20, 0
    %p148 = por %p146, %p147
    %p149 = scmp.le.s32.totalorder 1, %s14
    %p150 = scmp.lt.s32.totalorder %s14, 5
    %p151 = pnand %p149, %p150
    %p152 = pneg %p151
    // Predicated region
    $region9: #{multires_block_forward.8} parent=5 // pred_check
      _
    $region10: #{multires_block_forward.8} parent=5 // pred_check_branch
      %154 = sbr.rel (%p151) target = $region12
    $region11: #{multires_block_forward.8} parent=5 // pred_region
      %s155 = ssub.s32 %s14, 1
      // Predicated region
      $region13: #{multires_block_forward.8} parent=11 // pred_check
        %p156 = pneg %p73
      $region14: #{multires_block_forward.8} parent=11 // pred_check_branch
        %158 = sbr.rel (%p156) target = $region16
      $region15: #{multires_block_forward.8} parent=11 // pred_region
        _
      $region16: #{multires_block_forward.8} parent=11 // pred_fallthru
        _
      // Predicated region
      $region17: #{multires_block_forward.8} parent=11 // pred_check
        %p159 = pneg %p94
      $region18: #{multires_block_forward.8} parent=11 // pred_check_branch
        %161 = sbr.rel (%p159) target = $region20
      $region19: #{multires_block_forward.8} parent=11 // pred_region
        _
      $region20: #{multires_block_forward.8} parent=11 // pred_fallthru
        _
      // Predicated region
      $region21: #{multires_block_forward.8} parent=11 // pred_check
        %p162 = pneg %p115
      $region22: #{multires_block_forward.8} parent=11 // pred_check_branch
        %164 = sbr.rel (%p162) target = $region24
      $region23: #{multires_block_forward.8} parent=11 // pred_region
        _
      $region24: #{multires_block_forward.8} parent=11 // pred_fallthru
        _
    $region12: #{multires_block_forward.8} parent=5 // pred_fallthru
      _
    %p165 = scmp.lt.s32.totalorder %s14, 4
    // Predicated region
    $region25: #{multires_block_forward.8} parent=5 // pred_check
      %p166 = pneg %p165
    $region26: #{multires_block_forward.8} parent=5 // pred_check_branch
      %168 = sbr.rel (%p166) target = $region28
    $region27: #{multires_block_forward.8} parent=5 // pred_region
      // Predicated region
      $region29: #{multires_block_forward.8} parent=27 // pred_check
        %p169 = pneg %p46
      $region30: #{multires_block_forward.8} parent=27 // pred_check_branch
        %171 = sbr.rel (%p169) target = $region32
      $region31: #{multires_block_forward.8} parent=27 // pred_region
        %p172 = scmp.lt.s32.totalorder %s22, 1
        %s173 = scalar_select %p172, %s22, 1
        %s174 = smul.addr %s173, 54
        %s175 = smul.addr %s174, 8
        %s176 = scalar_lea.vmem %s0, %s175
      $region32: #{multires_block_forward.8} parent=27 // pred_fallthru
        _
    $region28: #{multires_block_forward.8} parent=5 // pred_fallthru
      _
    %p177 = scmp.le.s32.totalorder 1, %s14
    %p178 = scmp.lt.s32.totalorder %s14, 5
    %p179 = pnand %p177, %p178
    %p180 = pneg %p179
    // Predicated region
    $region33: #{multires_block_forward.8} parent=5 // pred_check
      _
    $region34: #{multires_block_forward.8} parent=5 // pred_check_branch
      %182 = sbr.rel (%p179) target = $region36
    $region35: #{multires_block_forward.8} parent=5 // pred_region
      %s183 = ssub.s32 %s14, 1
      %p184 = scmp.lt.s32.totalorder %s24, 1
      %s185 = scalar_select %p184, %s24, 1
      %s186 = smul.addr %s185, 54
      %s187 = smul.addr %s186, 8
      %s188 = scalar_lea.vmem %s0, %s187
      %p189 = pneg %p52
      %p190 = pneg %p49
      %p191 = pneg %p73
      %p192 = pneg %p70
      %p193 = pneg %p94
      %p194 = pneg %p91
      %p195 = pneg %p115
      %p196 = pneg %p112
      %p197 = pneg %p141
      %p198 = pneg %p138
      %p199 = scmp.lt.s32.totalorder %s24, 1
      %s200 = scalar_select %p199, %s24, 1
      %s201 = smul.addr %s200, 32
      %s202 = smul.addr %s201, 8
      %s203 = scalar_lea.vmem %s4, %s202
      %p204 = scmp.lt.s32.totalorder %s24, 1
      %s205 = scalar_select %p204, %s24, 1
      %s206 = smul.addr %s205, 54
      %s207 = smul.addr %s206, 8
      %s208 = scalar_lea.vmem %s0, %s207
      %p209 = scmp.lt.s32.totalorder %s24, 1
      %s210 = scalar_select %p209, %s24, 1
      %s211 = smul.addr %s210, 32
      %s212 = smul.addr %s211, 8
      %s213 = scalar_lea.vmem %s4, %s212
      %p215 = scmp.eq.s32.totalorder %s23, 0
      %p216 = scmp.eq.s32.totalorder %s24, 0
      %p217 = pnand %p215, %p216
      %p218 = pneg %p217
      // Predicated region
      $region37: #{multires_block_forward.8} parent=35 // pred_check
        _
      $region38: #{multires_block_forward.8} parent=35 // pred_check_branch
        %220 = sbr.rel (%p217) target = $region40
      $region39: #{multires_block_forward.8} parent=35 // pred_region
        %vm221 = vcmask 0
        %222 = vst.msk [vmem:[#allocation2] sm:$0x1] %vm221, 0.0
        %223 = vst.msk [vmem:[#allocation3] sm:$0x1] %vm221, 0.0
      $region40: #{multires_block_forward.8} parent=35 // pred_fallthru
        _
      %v224 = vld [vmem:[%s208] sm:$0xff]
      %v225 = vld [vmem:[%s208 + $0x8] sm:$0xff]
      %v226 = vld [vmem:[%s208 + $0x18] sm:$0xff]
      %v227 = vld [vmem:[%s208 + $0x20] sm:$0xff]
      %v228 = vld [vmem:[%s208 + $0x30] sm:$0xff]
      %v229 = vld [vmem:[%s208 + $0x38] sm:$0xff]
      %v230 = vld [vmem:[%s208 + $0x48] sm:$0xff]
      %v231 = vld [vmem:[%s208 + $0x50] sm:$0xff]
      %v232 = vld [vmem:[%s208 + $0x60] sm:$0xff]
      %v233 = vld [vmem:[%s208 + $0x68] sm:$0xff]
      %v234 = vld [vmem:[%s208 + $0x78] sm:$0xff]
      %v235 = vld [vmem:[%s208 + $0x80] sm:$0xff]
      %v236 = vld [vmem:[%s208 + $0x90] sm:$0xff]
      %v237 = vld [vmem:[%s208 + $0x98] sm:$0xff]
      %v238 = vld [vmem:[%s208 + $0xa8] sm:$0xff]
      %v239 = vld [vmem:[%s208 + $0xb0] sm:$0xff]
      %v240 = vld [vmem:[%s208 + $0xc0] sm:$0xff]
      %v241 = vld [vmem:[%s208 + $0xc8] sm:$0xff]
      %v242 = vld [vmem:[%s208 + $0xd8] sm:$0xff]
      %v243 = vld [vmem:[%s208 + $0xe0] sm:$0xff]
      %v244 = vld [vmem:[%s208 + $0xf0] sm:$0xff]
      %v245 = vld [vmem:[%s208 + $0xf8] sm:$0xff]
      %v246 = vld [vmem:[%s208 + $0x108] sm:$0xff]
      %v247 = vld [vmem:[%s208 + $0x110] sm:$0xff]
      %v248 = vld [vmem:[%s208 + $0x120] sm:$0xff]
      %v249 = vld [vmem:[%s208 + $0x128] sm:$0xff]
      %v250 = vld [vmem:[%s208 + $0x138] sm:$0xff]
      %v251 = vld [vmem:[%s208 + $0x140] sm:$0xff]
      %v252 = vld [vmem:[%s208 + $0x150] sm:$0xff]
      %v253 = vld [vmem:[%s208 + $0x158] sm:$0xff]
      %v254 = vld [vmem:[%s208 + $0x168] sm:$0xff]
      %v255 = vld [vmem:[%s208 + $0x170] sm:$0xff]
      %v256 = vpack.c.bf16 %v225, %v224
      %v257 = vpack.c.bf16 %v227, %v226
      %v258 = vpack.c.bf16 %v229, %v228
      %v259 = vpack.c.bf16 %v231, %v230
      %v260 = vpack.c.bf16 %v233, %v232
      %v261 = vpack.c.bf16 %v235, %v234
      %v262 = vpack.c.bf16 %v237, %v236
      %v263 = vpack.c.bf16 %v239, %v238
      %v264 = vpack.c.bf16 %v241, %v240
      %v265 = vpack.c.bf16 %v243, %v242
      %v266 = vpack.c.bf16 %v245, %v244
      %v267 = vpack.c.bf16 %v247, %v246
      %v268 = vpack.c.bf16 %v249, %v248
      %v269 = vpack.c.bf16 %v251, %v250
      %v270 = vpack.c.bf16 %v253, %v252
      %v271 = vpack.c.bf16 %v255, %v254
      %v272 = vld [vmem:[%s1] sm:$0x3]
      %v273 = vld [vmem:[%s208 + $0x1] sm:$0xff]
      %v274 = vld [vmem:[%s208 + $0x9] sm:$0xff]
      %v275 = vld [vmem:[%s208 + $0x19] sm:$0xff]
      %v276 = vld [vmem:[%s208 + $0x21] sm:$0xff]
      %v277 = vld [vmem:[%s208 + $0x31] sm:$0xff]
      %v278 = vld [vmem:[%s208 + $0x39] sm:$0xff]
      %v279 = vld [vmem:[%s208 + $0x49] sm:$0xff]
      %v280 = vld [vmem:[%s208 + $0x51] sm:$0xff]
      %v281 = vld [vmem:[%s208 + $0x61] sm:$0xff]
      %v282 = vld [vmem:[%s208 + $0x69] sm:$0xff]
      %v283 = vld [vmem:[%s208 + $0x79] sm:$0xff]
      %v284 = vld [vmem:[%s208 + $0x81] sm:$0xff]
      %v285 = vld [vmem:[%s208 + $0x91] sm:$0xff]
      %v286 = vld [vmem:[%s208 + $0x99] sm:$0xff]
      %v287 = vld [vmem:[%s208 + $0xa9] sm:$0xff]
      %v288 = vld [vmem:[%s208 + $0xb1] sm:$0xff]
      %v289 = vld [vmem:[%s208 + $0xc1] sm:$0xff]
      %v290 = vld [vmem:[%s208 + $0xc9] sm:$0xff]
      %v291 = vld [vmem:[%s208 + $0xd9] sm:$0xff]
      %v292 = vld [vmem:[%s208 + $0xe1] sm:$0xff]
      %v293 = vld [vmem:[%s208 + $0xf1] sm:$0xff]
      %v294 = vld [vmem:[%s208 + $0xf9] sm:$0xff]
      %v295 = vld [vmem:[%s208 + $0x109] sm:$0xff]
      %v296 = vld [vmem:[%s208 + $0x111] sm:$0xff]
      %v297 = vld [vmem:[%s208 + $0x121] sm:$0xff]
      %v298 = vld [vmem:[%s208 + $0x129] sm:$0xff]
      %v299 = vld [vmem:[%s208 + $0x139] sm:$0xff]
      %v300 = vld [vmem:[%s208 + $0x141] sm:$0xff]
      %v301 = vld [vmem:[%s208 + $0x151] sm:$0xff]
      %v302 = vld [vmem:[%s208 + $0x159] sm:$0xff]
      %v303 = vld [vmem:[%s208 + $0x169] sm:$0xff]
      %v304 = vld [vmem:[%s208 + $0x171] sm:$0xff]
      %v305 = vpack.c.bf16 %v274, %v273
      %v306 = vpack.c.bf16 %v276, %v275
      %v307 = vpack.c.bf16 %v278, %v277
      %v308 = vpack.c.bf16 %v280, %v279
      %v309 = vpack.c.bf16 %v282, %v281
      %v310 = vpack.c.bf16 %v284, %v283
      %v311 = vpack.c.bf16 %v286, %v285
      %v312 = vpack.c.bf16 %v288, %v287
      %v313 = vpack.c.bf16 %v290, %v289
      %v314 = vpack.c.bf16 %v292, %v291
      %v315 = vpack.c.bf16 %v294, %v293
      %v316 = vpack.c.bf16 %v296, %v295
      %v317 = vpack.c.bf16 %v298, %v297
      %v318 = vpack.c.bf16 %v300, %v299
      %v319 = vpack.c.bf16 %v302, %v301
      %v320 = vpack.c.bf16 %v304, %v303
      %s321 = scalar_lea.vmem %s1, 2
      %v322 = vld [vmem:[%s321] sm:$0x3]
      %vm323 = vcmask 31744
      %v325 = vsel %vm323, %v305, 0
      %v328 = vsel %vm323, %v306, 0
      %v331 = vsel %vm323, %v307, 0
      %v334 = vsel %vm323, %v308, 0
      %v337 = vsel %vm323, %v309, 0
      %v340 = vsel %vm323, %v310, 0
      %v343 = vsel %vm323, %v311, 0
      %v346 = vsel %vm323, %v312, 0
      %v349 = vsel %vm323, %v313, 0
      %v352 = vsel %vm323, %v314, 0
      %v355 = vsel %vm323, %v315, 0
      %v358 = vsel %vm323, %v316, 0
      %v361 = vsel %vm323, %v317, 0
      %v364 = vsel %vm323, %v318, 0
      %v367 = vsel %vm323, %v319, 0
      %v370 = vsel %vm323, %v320, 0
      %vm372 = vcmask 1041408
      %v374 = vsel %vm372, %v322, 0
      %376 = vmatpush.bf16.msra.mxu0 0
      %377 = vmatpush.bf16.msra.mxu0 0
      %378 = vmatpush.bf16.msra.mxu0 0
      %379 = vmatpush.bf16.msra.mxu0 0
      %380 = vmatpush.bf16.msra.mxu0 0
      %381 = vmatpush.bf16.msra.mxu0 0
      %382 = vmatpush.bf16.msra.mxu0 0
      %383 = vmatpush.bf16.msra.mxu0 %v374
      %384 = vmatmul.bf16.gmra.mxu0 %v325
      %v385 = vpop.f32.mrf.mxu0
      %v386 = vadd.f32 0.0, %v385
      %v387 = vpop.f32.mrf.mxu0
      %v388 = vadd.f32 0.0, %v387
      %389 = vmatmul.bf16.gmra.mxu0 %v328
      %v390 = vpop.f32.mrf.mxu0
      %v391 = vadd.f32 0.0, %v390
      %v392 = vpop.f32.mrf.mxu0
      %v393 = vadd.f32 0.0, %v392
      %394 = vmatmul.bf16.gmra.mxu0 %v331
      %v395 = vpop.f32.mrf.mxu0
      %v396 = vadd.f32 0.0, %v395
      %v397 = vpop.f32.mrf.mxu0
      %v398 = vadd.f32 0.0, %v397
      %399 = vmatmul.bf16.gmra.mxu0 %v334
      %v400 = vpop.f32.mrf.mxu0
      %v401 = vadd.f32 0.0, %v400
      %v402 = vpop.f32.mrf.mxu0
      %v403 = vadd.f32 0.0, %v402
      %404 = vmatmul.bf16.gmra.mxu0 %v337
      %v405 = vpop.f32.mrf.mxu0
      %v406 = vadd.f32 0.0, %v405
      %v407 = vpop.f32.mrf.mxu0
      %v408 = vadd.f32 0.0, %v407
      %409 = vmatmul.bf16.gmra.mxu0 %v340
      %v410 = vpop.f32.mrf.mxu0
      %v411 = vadd.f32 0.0, %v410
      %v412 = vpop.f32.mrf.mxu0
      %v413 = vadd.f32 0.0, %v412
      %414 = vmatmul.bf16.gmra.mxu0 %v343
      %v415 = vpop.f32.mrf.mxu0
      %v416 = vadd.f32 0.0, %v415
      %v417 = vpop.f32.mrf.mxu0
      %v418 = vadd.f32 0.0, %v417
      %419 = vmatmul.bf16.gmra.mxu0 %v346
      %v420 = vpop.f32.mrf.mxu0
      %v421 = vadd.f32 0.0, %v420
      %v422 = vpop.f32.mrf.mxu0
      %v423 = vadd.f32 0.0, %v422
      %424 = vmatmul.bf16.gmra.mxu0 %v349
      %v425 = vpop.f32.mrf.mxu0
      %v426 = vadd.f32 0.0, %v425
      %v427 = vpop.f32.mrf.mxu0
      %v428 = vadd.f32 0.0, %v427
      %429 = vmatmul.bf16.gmra.mxu0 %v352
      %v430 = vpop.f32.mrf.mxu0
      %v431 = vadd.f32 0.0, %v430
      %v432 = vpop.f32.mrf.mxu0
      %v433 = vadd.f32 0.0, %v432
      %434 = vmatmul.bf16.gmra.mxu0 %v355
      %v435 = vpop.f32.mrf.mxu0
      %v436 = vadd.f32 0.0, %v435
      %v437 = vpop.f32.mrf.mxu0
      %v438 = vadd.f32 0.0, %v437
      %439 = vmatmul.bf16.gmra.mxu0 %v358
      %v440 = vpop.f32.mrf.mxu0
      %v441 = vadd.f32 0.0, %v440
      %v442 = vpop.f32.mrf.mxu0
      %v443 = vadd.f32 0.0, %v442
      %444 = vmatmul.bf16.gmra.mxu0 %v361
      %v445 = vpop.f32.mrf.mxu0
      %v446 = vadd.f32 0.0, %v445
      %v447 = vpop.f32.mrf.mxu0
      %v448 = vadd.f32 0.0, %v447
      %449 = vmatmul.bf16.gmra.mxu0 %v364
      %v450 = vpop.f32.mrf.mxu0
      %v451 = vadd.f32 0.0, %v450
      %v452 = vpop.f32.mrf.mxu0
      %v453 = vadd.f32 0.0, %v452
      %454 = vmatmul.bf16.gmra.mxu0 %v367
      %v455 = vpop.f32.mrf.mxu0
      %v456 = vadd.f32 0.0, %v455
      %v457 = vpop.f32.mrf.mxu0
      %v458 = vadd.f32 0.0, %v457
      %459 = vmatmul.bf16.gmra.mxu0 %v370
      %v460 = vpop.f32.mrf.mxu0
      %v461 = vadd.f32 0.0, %v460
      %v462 = vpop.f32.mrf.mxu0
      %v463 = vadd.f32 0.0, %v462
      %464 = vdwg.mxu0
      %v466 = vsel %vm323, %v256, 0
      %v469 = vsel %vm323, %v257, 0
      %v472 = vsel %vm323, %v258, 0
      %v475 = vsel %vm323, %v259, 0
      %v478 = vsel %vm323, %v260, 0
      %v481 = vsel %vm323, %v261, 0
      %v484 = vsel %vm323, %v262, 0
      %v487 = vsel %vm323, %v263, 0
      %v490 = vsel %vm323, %v264, 0
      %v493 = vsel %vm323, %v265, 0
      %v496 = vsel %vm323, %v266, 0
      %v499 = vsel %vm323, %v267, 0
      %v502 = vsel %vm323, %v268, 0
      %v505 = vsel %vm323, %v269, 0
      %v508 = vsel %vm323, %v270, 0
      %v511 = vsel %vm323, %v271, 0
      %v514 = vsel %vm372, %v272, 0
      %516 = vmatpush.bf16.msra.mxu0 0
      %517 = vmatpush.bf16.msra.mxu0 0
      %518 = vmatpush.bf16.msra.mxu0 0
      %519 = vmatpush.bf16.msra.mxu0 0
      %520 = vmatpush.bf16.msra.mxu0 0
      %521 = vmatpush.bf16.msra.mxu0 0
      %522 = vmatpush.bf16.msra.mxu0 0
      %523 = vmatpush.bf16.msra.mxu0 %v514
      %524 = vmatmul.bf16.gmra.mxu0 %v466
      %v525 = vpop.f32.mrf.mxu0
      %v526 = vadd.f32 %v386, %v525
      %v527 = vpop.f32.mrf.mxu0
      %v528 = vadd.f32 %v388, %v527
      %529 = vmatmul.bf16.gmra.mxu0 %v469
      %v530 = vpop.f32.mrf.mxu0
      %v531 = vadd.f32 %v391, %v530
      %v532 = vpop.f32.mrf.mxu0
      %v533 = vadd.f32 %v393, %v532
      %534 = vmatmul.bf16.gmra.mxu0 %v472
      %v535 = vpop.f32.mrf.mxu0
      %v536 = vadd.f32 %v396, %v535
      %v537 = vpop.f32.mrf.mxu0
      %v538 = vadd.f32 %v398, %v537
      %539 = vmatmul.bf16.gmra.mxu0 %v475
      %v540 = vpop.f32.mrf.mxu0
      %v541 = vadd.f32 %v401, %v540
      %v542 = vpop.f32.mrf.mxu0
      %v543 = vadd.f32 %v403, %v542
      %544 = vmatmul.bf16.gmra.mxu0 %v478
      %v545 = vpop.f32.mrf.mxu0
      %v546 = vadd.f32 %v406, %v545
      %v547 = vpop.f32.mrf.mxu0
      %v548 = vadd.f32 %v408, %v547
      %549 = vmatmul.bf16.gmra.mxu0 %v481
      %v550 = vpop.f32.mrf.mxu0
      %v551 = vadd.f32 %v411, %v550
      %v552 = vpop.f32.mrf.mxu0
      %v553 = vadd.f32 %v413, %v552
      %554 = vmatmul.bf16.gmra.mxu0 %v484
      %v555 = vpop.f32.mrf.mxu0
      %v556 = vadd.f32 %v416, %v555
      %v557 = vpop.f32.mrf.mxu0
      %v558 = vadd.f32 %v418, %v557
      %559 = vmatmul.bf16.gmra.mxu0 %v487
      %v560 = vpop.f32.mrf.mxu0
      %v561 = vadd.f32 %v421, %v560
      %v562 = vpop.f32.mrf.mxu0
      %v563 = vadd.f32 %v423, %v562
      %564 = vmatmul.bf16.gmra.mxu0 %v490
      %v565 = vpop.f32.mrf.mxu0
      %v566 = vadd.f32 %v426, %v565
      %v567 = vpop.f32.mrf.mxu0
      %v568 = vadd.f32 %v428, %v567
      %569 = vmatmul.bf16.gmra.mxu0 %v493
      %v570 = vpop.f32.mrf.mxu0
      %v571 = vadd.f32 %v431, %v570
      %v572 = vpop.f32.mrf.mxu0
      %v573 = vadd.f32 %v433, %v572
      %574 = vmatmul.bf16.gmra.mxu0 %v496
      %v575 = vpop.f32.mrf.mxu0
      %v576 = vadd.f32 %v436, %v575
      %v577 = vpop.f32.mrf.mxu0
      %v578 = vadd.f32 %v438, %v577
      %579 = vmatmul.bf16.gmra.mxu0 %v499
      %v580 = vpop.f32.mrf.mxu0
      %v581 = vadd.f32 %v441, %v580
      %v582 = vpop.f32.mrf.mxu0
      %v583 = vadd.f32 %v443, %v582
      %584 = vmatmul.bf16.gmra.mxu0 %v502
      %v585 = vpop.f32.mrf.mxu0
      %v586 = vadd.f32 %v446, %v585
      %v587 = vpop.f32.mrf.mxu0
      %v588 = vadd.f32 %v448, %v587
      %589 = vmatmul.bf16.gmra.mxu0 %v505
      %v590 = vpop.f32.mrf.mxu0
      %v591 = vadd.f32 %v451, %v590
      %v592 = vpop.f32.mrf.mxu0
      %v593 = vadd.f32 %v453, %v592
      %594 = vmatmul.bf16.gmra.mxu0 %v508
      %v595 = vpop.f32.mrf.mxu0
      %v596 = vadd.f32 %v456, %v595
      %v597 = vpop.f32.mrf.mxu0
      %v598 = vadd.f32 %v458, %v597
      %599 = vmatmul.bf16.gmra.mxu0 %v511
      %v600 = vpop.f32.mrf.mxu0
      %v601 = vadd.f32 %v461, %v600
      %v602 = vpop.f32.mrf.mxu0
      %v603 = vadd.f32 %v463, %v602
      %604 = vdwg.mxu0
      %v605 = vld [vmem:[%s208 + $0x2] sm:$0xff]
      %v606 = vld [vmem:[%s208 + $0xa] sm:$0xff]
      %v607 = vld [vmem:[%s208 + $0x1a] sm:$0xff]
      %v608 = vld [vmem:[%s208 + $0x22] sm:$0xff]
      %v609 = vld [vmem:[%s208 + $0x32] sm:$0xff]
      %v610 = vld [vmem:[%s208 + $0x3a] sm:$0xff]
      %v611 = vld [vmem:[%s208 + $0x4a] sm:$0xff]
      %v612 = vld [vmem:[%s208 + $0x52] sm:$0xff]
      %v613 = vld [vmem:[%s208 + $0x62] sm:$0xff]
      %v614 = vld [vmem:[%s208 + $0x6a] sm:$0xff]
      %v615 = vld [vmem:[%s208 + $0x7a] sm:$0xff]
      %v616 = vld [vmem:[%s208 + $0x82] sm:$0xff]
      %v617 = vld [vmem:[%s208 + $0x92] sm:$0xff]
      %v618 = vld [vmem:[%s208 + $0x9a] sm:$0xff]
      %v619 = vld [vmem:[%s208 + $0xaa] sm:$0xff]
      %v620 = vld [vmem:[%s208 + $0xb2] sm:$0xff]
      %v621 = vld [vmem:[%s208 + $0xc2] sm:$0xff]
      %v622 = vld [vmem:[%s208 + $0xca] sm:$0xff]
      %v623 = vld [vmem:[%s208 + $0xda] sm:$0xff]
      %v624 = vld [vmem:[%s208 + $0xe2] sm:$0xff]
      %v625 = vld [vmem:[%s208 + $0xf2] sm:$0xff]
      %v626 = vld [vmem:[%s208 + $0xfa] sm:$0xff]
      %v627 = vld [vmem:[%s208 + $0x10a] sm:$0xff]
      %v628 = vld [vmem:[%s208 + $0x112] sm:$0xff]
      %v629 = vld [vmem:[%s208 + $0x122] sm:$0xff]
      %v630 = vld [vmem:[%s208 + $0x12a] sm:$0xff]
      %v631 = vld [vmem:[%s208 + $0x13a] sm:$0xff]
      %v632 = vld [vmem:[%s208 + $0x142] sm:$0xff]
      %v633 = vld [vmem:[%s208 + $0x152] sm:$0xff]
      %v634 = vld [vmem:[%s208 + $0x15a] sm:$0xff]
      %v635 = vld [vmem:[%s208 + $0x16a] sm:$0xff]
      %v636 = vld [vmem:[%s208 + $0x172] sm:$0xff]
      %v637 = vpack.c.bf16 %v606, %v605
      %v638 = vpack.c.bf16 %v608, %v607
      %v639 = vpack.c.bf16 %v610, %v609
      %v640 = vpack.c.bf16 %v612, %v611
      %v641 = vpack.c.bf16 %v614, %v613
      %v642 = vpack.c.bf16 %v616, %v615
      %v643 = vpack.c.bf16 %v618, %v617
      %v644 = vpack.c.bf16 %v620, %v619
      %v645 = vpack.c.bf16 %v622, %v621
      %v646 = vpack.c.bf16 %v624, %v623
      %v647 = vpack.c.bf16 %v626, %v625
      %v648 = vpack.c.bf16 %v628, %v627
      %v649 = vpack.c.bf16 %v630, %v629
      %v650 = vpack.c.bf16 %v632, %v631
      %v651 = vpack.c.bf16 %v634, %v633
      %v652 = vpack.c.bf16 %v636, %v635
      %s653 = scalar_lea.vmem %s1, 4
      %v654 = vld [vmem:[%s653] sm:$0x3]
      %v656 = vsel %vm323, %v637, 0
      %v659 = vsel %vm323, %v638, 0
      %v662 = vsel %vm323, %v639, 0
      %v665 = vsel %vm323, %v640, 0
      %v668 = vsel %vm323, %v641, 0
      %v671 = vsel %vm323, %v642, 0
      %v674 = vsel %vm323, %v643, 0
      %v677 = vsel %vm323, %v644, 0
      %v680 = vsel %vm323, %v645, 0
      %v683 = vsel %vm323, %v646, 0
      %v686 = vsel %vm323, %v647, 0
      %v689 = vsel %vm323, %v648, 0
      %v692 = vsel %vm323, %v649, 0
      %v695 = vsel %vm323, %v650, 0
      %v698 = vsel %vm323, %v651, 0
      %v701 = vsel %vm323, %v652, 0
      %v704 = vsel %vm372, %v654, 0
      %706 = vmatpush.bf16.msra.mxu0 0
      %707 = vmatpush.bf16.msra.mxu0 0
      %708 = vmatpush.bf16.msra.mxu0 0
      %709 = vmatpush.bf16.msra.mxu0 0
      %710 = vmatpush.bf16.msra.mxu0 0
      %711 = vmatpush.bf16.msra.mxu0 0
      %712 = vmatpush.bf16.msra.mxu0 0
      %713 = vmatpush.bf16.msra.mxu0 %v704
      %714 = vmatmul.bf16.gmra.mxu0 %v656
      %v715 = vpop.f32.mrf.mxu0
      %v716 = vadd.f32 0.0, %v715
      %v717 = vpop.f32.mrf.mxu0
      %v718 = vadd.f32 0.0, %v717
      %719 = vmatmul.bf16.gmra.mxu0 %v659
      %v720 = vpop.f32.mrf.mxu0
      %v721 = vadd.f32 0.0, %v720
      %v722 = vpop.f32.mrf.mxu0
      %v723 = vadd.f32 0.0, %v722
      %724 = vmatmul.bf16.gmra.mxu0 %v662
      %v725 = vpop.f32.mrf.mxu0
      %v726 = vadd.f32 0.0, %v725
      %v727 = vpop.f32.mrf.mxu0
      %v728 = vadd.f32 0.0, %v727
      %729 = vmatmul.bf16.gmra.mxu0 %v665
      %v730 = vpop.f32.mrf.mxu0
      %v731 = vadd.f32 0.0, %v730
      %v732 = vpop.f32.mrf.mxu0
      %v733 = vadd.f32 0.0, %v732
      %734 = vmatmul.bf16.gmra.mxu0 %v668
      %v735 = vpop.f32.mrf.mxu0
      %v736 = vadd.f32 0.0, %v735
      %v737 = vpop.f32.mrf.mxu0
      %v738 = vadd.f32 0.0, %v737
      %739 = vmatmul.bf16.gmra.mxu0 %v671
      %v740 = vpop.f32.mrf.mxu0
      %v741 = vadd.f32 0.0, %v740
      %v742 = vpop.f32.mrf.mxu0
      %v743 = vadd.f32 0.0, %v742
      %744 = vmatmul.bf16.gmra.mxu0 %v674
      %v745 = vpop.f32.mrf.mxu0
      %v746 = vadd.f32 0.0, %v745
      %v747 = vpop.f32.mrf.mxu0
      %v748 = vadd.f32 0.0, %v747
      %749 = vmatmul.bf16.gmra.mxu0 %v677
      %v750 = vpop.f32.mrf.mxu0
      %v751 = vadd.f32 0.0, %v750
      %v752 = vpop.f32.mrf.mxu0
      %v753 = vadd.f32 0.0, %v752
      %754 = vmatmul.bf16.gmra.mxu0 %v680
      %v755 = vpop.f32.mrf.mxu0
      %v756 = vadd.f32 0.0, %v755
      %v757 = vpop.f32.mrf.mxu0
      %v758 = vadd.f32 0.0, %v757
      %759 = vmatmul.bf16.gmra.mxu0 %v683
      %v760 = vpop.f32.mrf.mxu0
      %v761 = vadd.f32 0.0, %v760
      %v762 = vpop.f32.mrf.mxu0
      %v763 = vadd.f32 0.0, %v762
      %764 = vmatmul.bf16.gmra.mxu0 %v686
      %v765 = vpop.f32.mrf.mxu0
      %v766 = vadd.f32 0.0, %v765
      %v767 = vpop.f32.mrf.mxu0
      %v768 = vadd.f32 0.0, %v767
      %769 = vmatmul.bf16.gmra.mxu0 %v689
      %v770 = vpop.f32.mrf.mxu0
      %v771 = vadd.f32 0.0, %v770
      %v772 = vpop.f32.mrf.mxu0
      %v773 = vadd.f32 0.0, %v772
      %774 = vmatmul.bf16.gmra.mxu0 %v692
      %v775 = vpop.f32.mrf.mxu0
      %v776 = vadd.f32 0.0, %v775
      %v777 = vpop.f32.mrf.mxu0
      %v778 = vadd.f32 0.0, %v777
      %779 = vmatmul.bf16.gmra.mxu0 %v695
      %v780 = vpop.f32.mrf.mxu0
      %v781 = vadd.f32 0.0, %v780
      %v782 = vpop.f32.mrf.mxu0
      %v783 = vadd.f32 0.0, %v782
      %784 = vmatmul.bf16.gmra.mxu0 %v698
      %v785 = vpop.f32.mrf.mxu0
      %v786 = vadd.f32 0.0, %v785
      %v787 = vpop.f32.mrf.mxu0
      %v788 = vadd.f32 0.0, %v787
      %789 = vmatmul.bf16.gmra.mxu0 %v701
      %v790 = vpop.f32.mrf.mxu0
      %v791 = vadd.f32 0.0, %v790
      %v792 = vpop.f32.mrf.mxu0
      %v793 = vadd.f32 0.0, %v792
      %794 = vdwg.mxu0
      %v795 = vadd.f32 %v526, %v716
      %v796 = vadd.f32 %v528, %v718
      %v797 = vadd.f32 %v531, %v721
      %v798 = vadd.f32 %v533, %v723
      %v799 = vadd.f32 %v536, %v726
      %v800 = vadd.f32 %v538, %v728
      %v801 = vadd.f32 %v541, %v731
      %v802 = vadd.f32 %v543, %v733
      %v803 = vadd.f32 %v546, %v736
      %v804 = vadd.f32 %v548, %v738
      %v805 = vadd.f32 %v551, %v741
      %v806 = vadd.f32 %v553, %v743
      %v807 = vadd.f32 %v556, %v746
      %v808 = vadd.f32 %v558, %v748
      %v809 = vadd.f32 %v561, %v751
      %v810 = vadd.f32 %v563, %v753
      %v811 = vadd.f32 %v566, %v756
      %v812 = vadd.f32 %v568, %v758
      %v813 = vadd.f32 %v571, %v761
      %v814 = vadd.f32 %v573, %v763
      %v815 = vadd.f32 %v576, %v766
      %v816 = vadd.f32 %v578, %v768
      %v817 = vadd.f32 %v581, %v771
      %v818 = vadd.f32 %v583, %v773
      %v819 = vadd.f32 %v586, %v776
      %v820 = vadd.f32 %v588, %v778
      %v821 = vadd.f32 %v591, %v781
      %v822 = vadd.f32 %v593, %v783
      %v823 = vadd.f32 %v596, %v786
      %v824 = vadd.f32 %v598, %v788
      %v825 = vadd.f32 %v601, %v791
      %v826 = vadd.f32 %v603, %v793
      %s827 = scalar_lea.vmem %s208, 24
      %v828 = vld [vmem:[%s827] sm:$0xff]
      %v829 = vld [vmem:[%s827 + $0x8] sm:$0xff]
      %v830 = vld [vmem:[%s827 + $0x18] sm:$0xff]
      %v831 = vld [vmem:[%s827 + $0x20] sm:$0xff]
      %v832 = vld [vmem:[%s827 + $0x30] sm:$0xff]
      %v833 = vld [vmem:[%s827 + $0x38] sm:$0xff]
      %v834 = vld [vmem:[%s827 + $0x48] sm:$0xff]
      %v835 = vld [vmem:[%s827 + $0x50] sm:$0xff]
      %v836 = vld [vmem:[%s827 + $0x60] sm:$0xff]
      %v837 = vld [vmem:[%s827 + $0x68] sm:$0xff]
      %v838 = vld [vmem:[%s827 + $0x78] sm:$0xff]
      %v839 = vld [vmem:[%s827 + $0x80] sm:$0xff]
      %v840 = vld [vmem:[%s827 + $0x90] sm:$0xff]
      %v841 = vld [vmem:[%s827 + $0x98] sm:$0xff]
      %v842 = vld [vmem:[%s827 + $0xa8] sm:$0xff]
      %v843 = vld [vmem:[%s827 + $0xb0] sm:$0xff]
      %v844 = vld [vmem:[%s827 + $0xc0] sm:$0xff]
      %v845 = vld [vmem:[%s827 + $0xc8] sm:$0xff]
      %v846 = vld [vmem:[%s827 + $0xd8] sm:$0xff]
      %v847 = vld [vmem:[%s827 + $0xe0] sm:$0xff]
      %v848 = vld [vmem:[%s827 + $0xf0] sm:$0xff]
      %v849 = vld [vmem:[%s827 + $0xf8] sm:$0xff]
      %v850 = vld [vmem:[%s827 + $0x108] sm:$0xff]
      %v851 = vld [vmem:[%s827 + $0x110] sm:$0xff]
      %v852 = vld [vmem:[%s827 + $0x120] sm:$0xff]
      %v853 = vld [vmem:[%s827 + $0x128] sm:$0xff]
      %v854 = vld [vmem:[%s827 + $0x138] sm:$0xff]
      %v855 = vld [vmem:[%s827 + $0x140] sm:$0xff]
      %v856 = vld [vmem:[%s827 + $0x150] sm:$0xff]
      %v857 = vld [vmem:[%s827 + $0x158] sm:$0xff]
      %v858 = vld [vmem:[%s827 + $0x168] sm:$0xff]
      %v859 = vld [vmem:[%s827 + $0x170] sm:$0xff]
      %v860 = vpack.c.bf16 %v829, %v828
      %v861 = vpack.c.bf16 %v831, %v830
      %v862 = vpack.c.bf16 %v833, %v832
      %v863 = vpack.c.bf16 %v835, %v834
      %v864 = vpack.c.bf16 %v837, %v836
      %v865 = vpack.c.bf16 %v839, %v838
      %v866 = vpack.c.bf16 %v841, %v840
      %v867 = vpack.c.bf16 %v843, %v842
      %v868 = vpack.c.bf16 %v845, %v844
      %v869 = vpack.c.bf16 %v847, %v846
      %v870 = vpack.c.bf16 %v849, %v848
      %v871 = vpack.c.bf16 %v851, %v850
      %v872 = vpack.c.bf16 %v853, %v852
      %v873 = vpack.c.bf16 %v855, %v854
      %v874 = vpack.c.bf16 %v857, %v856
      %v875 = vpack.c.bf16 %v859, %v858
      %s876 = scalar_lea.vmem %s1, 6
      %v877 = vld [vmem:[%s876] sm:$0x3]
      %v879 = vsel %vm323, %v860, 0
      %v882 = vsel %vm323, %v861, 0
      %v885 = vsel %vm323, %v862, 0
      %v888 = vsel %vm323, %v863, 0
      %v891 = vsel %vm323, %v864, 0
      %v894 = vsel %vm323, %v865, 0
      %v897 = vsel %vm323, %v866, 0
      %v900 = vsel %vm323, %v867, 0
      %v903 = vsel %vm323, %v868, 0
      %v906 = vsel %vm323, %v869, 0
      %v909 = vsel %vm323, %v870, 0
      %v912 = vsel %vm323, %v871, 0
      %v915 = vsel %vm323, %v872, 0
      %v918 = vsel %vm323, %v873, 0
      %v921 = vsel %vm323, %v874, 0
      %v924 = vsel %vm323, %v875, 0
      %v927 = vsel %vm372, %v877, 0
      %929 = vmatpush.bf16.msra.mxu0 0
      %930 = vmatpush.bf16.msra.mxu0 0
      %931 = vmatpush.bf16.msra.mxu0 0
      %932 = vmatpush.bf16.msra.mxu0 0
      %933 = vmatpush.bf16.msra.mxu0 0
      %934 = vmatpush.bf16.msra.mxu0 0
      %935 = vmatpush.bf16.msra.mxu0 0
      %936 = vmatpush.bf16.msra.mxu0 %v927
      %937 = vmatmul.bf16.gmra.mxu0 %v879
      %v938 = vpop.f32.mrf.mxu0
      %v939 = vadd.f32 0.0, %v938
      %v940 = vpop.f32.mrf.mxu0
      %v941 = vadd.f32 0.0, %v940
      %942 = vmatmul.bf16.gmra.mxu0 %v882
      %v943 = vpop.f32.mrf.mxu0
      %v944 = vadd.f32 0.0, %v943
      %v945 = vpop.f32.mrf.mxu0
      %v946 = vadd.f32 0.0, %v945
      %947 = vmatmul.bf16.gmra.mxu0 %v885
      %v948 = vpop.f32.mrf.mxu0
      %v949 = vadd.f32 0.0, %v948
      %v950 = vpop.f32.mrf.mxu0
      %v951 = vadd.f32 0.0, %v950
      %952 = vmatmul.bf16.gmra.mxu0 %v888
      %v953 = vpop.f32.mrf.mxu0
      %v954 = vadd.f32 0.0, %v953
      %v955 = vpop.f32.mrf.mxu0
      %v956 = vadd.f32 0.0, %v955
      %957 = vmatmul.bf16.gmra.mxu0 %v891
      %v958 = vpop.f32.mrf.mxu0
      %v959 = vadd.f32 0.0, %v958
      %v960 = vpop.f32.mrf.mxu0
      %v961 = vadd.f32 0.0, %v960
      %962 = vmatmul.bf16.gmra.mxu0 %v894
      %v963 = vpop.f32.mrf.mxu0
      %v964 = vadd.f32 0.0, %v963
      %v965 = vpop.f32.mrf.mxu0
      %v966 = vadd.f32 0.0, %v965
      %967 = vmatmul.bf16.gmra.mxu0 %v897
      %v968 = vpop.f32.mrf.mxu0
      %v969 = vadd.f32 0.0, %v968
      %v970 = vpop.f32.mrf.mxu0
      %v971 = vadd.f32 0.0, %v970
      %972 = vmatmul.bf16.gmra.mxu0 %v900
      %v973 = vpop.f32.mrf.mxu0
      %v974 = vadd.f32 0.0, %v973
      %v975 = vpop.f32.mrf.mxu0
      %v976 = vadd.f32 0.0, %v975
      %977 = vmatmul.bf16.gmra.mxu0 %v903
      %v978 = vpop.f32.mrf.mxu0
      %v979 = vadd.f32 0.0, %v978
      %v980 = vpop.f32.mrf.mxu0
      %v981 = vadd.f32 0.0, %v980
      %982 = vmatmul.bf16.gmra.mxu0 %v906
      %v983 = vpop.f32.mrf.mxu0
      %v984 = vadd.f32 0.0, %v983
      %v985 = vpop.f32.mrf.mxu0
      %v986 = vadd.f32 0.0, %v985
      %987 = vmatmul.bf16.gmra.mxu0 %v909
      %v988 = vpop.f32.mrf.mxu0
      %v989 = vadd.f32 0.0, %v988
      %v990 = vpop.f32.mrf.mxu0
      %v991 = vadd.f32 0.0, %v990
      %992 = vmatmul.bf16.gmra.mxu0 %v912
      %v993 = vpop.f32.mrf.mxu0
      %v994 = vadd.f32 0.0, %v993
      %v995 = vpop.f32.mrf.mxu0
      %v996 = vadd.f32 0.0, %v995
      %997 = vmatmul.bf16.gmra.mxu0 %v915
      %v998 = vpop.f32.mrf.mxu0
      %v999 = vadd.f32 0.0, %v998
      %v1000 = vpop.f32.mrf.mxu0
      %v1001 = vadd.f32 0.0, %v1000
      %1002 = vmatmul.bf16.gmra.mxu0 %v918
      %v1003 = vpop.f32.mrf.mxu0
      %v1004 = vadd.f32 0.0, %v1003
      %v1005 = vpop.f32.mrf.mxu0
      %v1006 = vadd.f32 0.0, %v1005
      %1007 = vmatmul.bf16.gmra.mxu0 %v921
      %v1008 = vpop.f32.mrf.mxu0
      %v1009 = vadd.f32 0.0, %v1008
      %v1010 = vpop.f32.mrf.mxu0
      %v1011 = vadd.f32 0.0, %v1010
      %1012 = vmatmul.bf16.gmra.mxu0 %v924
      %v1013 = vpop.f32.mrf.mxu0
      %v1014 = vadd.f32 0.0, %v1013
      %v1015 = vpop.f32.mrf.mxu0
      %v1016 = vadd.f32 0.0, %v1015
      %1017 = vdwg.mxu0
      %v1018 = vadd.f32 %v795, %v939
      %v1019 = vadd.f32 %v796, %v941
      %v1020 = vadd.f32 %v797, %v944
      %v1021 = vadd.f32 %v798, %v946
      %v1022 = vadd.f32 %v799, %v949
      %v1023 = vadd.f32 %v800, %v951
      %v1024 = vadd.f32 %v801, %v954
      %v1025 = vadd.f32 %v802, %v956
      %v1026 = vadd.f32 %v803, %v959
      %v1027 = vadd.f32 %v804, %v961
      %v1028 = vadd.f32 %v805, %v964
      %v1029 = vadd.f32 %v806, %v966
      %v1030 = vadd.f32 %v807, %v969
      %v1031 = vadd.f32 %v808, %v971
      %v1032 = vadd.f32 %v809, %v974
      %v1033 = vadd.f32 %v810, %v976
      %v1034 = vadd.f32 %v811, %v979
      %v1035 = vadd.f32 %v812, %v981
      %v1036 = vadd.f32 %v813, %v984
      %v1037 = vadd.f32 %v814, %v986
      %v1038 = vadd.f32 %v815, %v989
      %v1039 = vadd.f32 %v816, %v991
      %v1040 = vadd.f32 %v817, %v994
      %v1041 = vadd.f32 %v818, %v996
      %v1042 = vadd.f32 %v819, %v999
      %v1043 = vadd.f32 %v820, %v1001
      %v1044 = vadd.f32 %v821, %v1004
      %v1045 = vadd.f32 %v822, %v1006
      %v1046 = vadd.f32 %v823, %v1009
      %v1047 = vadd.f32 %v824, %v1011
      %v1048 = vadd.f32 %v825, %v1014
      %v1049 = vadd.f32 %v826, %v1016
      %v1050 = vld [vmem:[%s827 + $0x1] sm:$0xff]
      %v1051 = vld [vmem:[%s827 + $0x9] sm:$0xff]
      %v1052 = vld [vmem:[%s827 + $0x19] sm:$0xff]
      %v1053 = vld [vmem:[%s827 + $0x21] sm:$0xff]
      %v1054 = vld [vmem:[%s827 + $0x31] sm:$0xff]
      %v1055 = vld [vmem:[%s827 + $0x39] sm:$0xff]
      %v1056 = vld [vmem:[%s827 + $0x49] sm:$0xff]
      %v1057 = vld [vmem:[%s827 + $0x51] sm:$0xff]
      %v1058 = vld [vmem:[%s827 + $0x61] sm:$0xff]
      %v1059 = vld [vmem:[%s827 + $0x69] sm:$0xff]
      %v1060 = vld [vmem:[%s827 + $0x79] sm:$0xff]
      %v1061 = vld [vmem:[%s827 + $0x81] sm:$0xff]
      %v1062 = vld [vmem:[%s827 + $0x91] sm:$0xff]
      %v1063 = vld [vmem:[%s827 + $0x99] sm:$0xff]
      %v1064 = vld [vmem:[%s827 + $0xa9] sm:$0xff]
      %v1065 = vld [vmem:[%s827 + $0xb1] sm:$0xff]
      %v1066 = vld [vmem:[%s827 + $0xc1] sm:$0xff]
      %v1067 = vld [vmem:[%s827 + $0xc9] sm:$0xff]
      %v1068 = vld [vmem:[%s827 + $0xd9] sm:$0xff]
      %v1069 = vld [vmem:[%s827 + $0xe1] sm:$0xff]
      %v1070 = vld [vmem:[%s827 + $0xf1] sm:$0xff]
      %v1071 = vld [vmem:[%s827 + $0xf9] sm:$0xff]
      %v1072 = vld [vmem:[%s827 + $0x109] sm:$0xff]
      %v1073 = vld [vmem:[%s827 + $0x111] sm:$0xff]
      %v1074 = vld [vmem:[%s827 + $0x121] sm:$0xff]
      %v1075 = vld [vmem:[%s827 + $0x129] sm:$0xff]
      %v1076 = vld [vmem:[%s827 + $0x139] sm:$0xff]
      %v1077 = vld [vmem:[%s827 + $0x141] sm:$0xff]
      %v1078 = vld [vmem:[%s827 + $0x151] sm:$0xff]
      %v1079 = vld [vmem:[%s827 + $0x159] sm:$0xff]
      %v1080 = vld [vmem:[%s827 + $0x169] sm:$0xff]
      %v1081 = vld [vmem:[%s827 + $0x171] sm:$0xff]
      %v1082 = vpack.c.bf16 %v1051, %v1050
      %v1083 = vpack.c.bf16 %v1053, %v1052
      %v1084 = vpack.c.bf16 %v1055, %v1054
      %v1085 = vpack.c.bf16 %v1057, %v1056
      %v1086 = vpack.c.bf16 %v1059, %v1058
      %v1087 = vpack.c.bf16 %v1061, %v1060
      %v1088 = vpack.c.bf16 %v1063, %v1062
      %v1089 = vpack.c.bf16 %v1065, %v1064
      %v1090 = vpack.c.bf16 %v1067, %v1066
      %v1091 = vpack.c.bf16 %v1069, %v1068
      %v1092 = vpack.c.bf16 %v1071, %v1070
      %v1093 = vpack.c.bf16 %v1073, %v1072
      %v1094 = vpack.c.bf16 %v1075, %v1074
      %v1095 = vpack.c.bf16 %v1077, %v1076
      %v1096 = vpack.c.bf16 %v1079, %v1078
      %v1097 = vpack.c.bf16 %v1081, %v1080
      %s1098 = scalar_lea.vmem %s1, 8
      %v1099 = vld [vmem:[%s1098] sm:$0x3]
      %v1101 = vsel %vm323, %v1082, 0
      %v1104 = vsel %vm323, %v1083, 0
      %v1107 = vsel %vm323, %v1084, 0
      %v1110 = vsel %vm323, %v1085, 0
      %v1113 = vsel %vm323, %v1086, 0
      %v1116 = vsel %vm323, %v1087, 0
      %v1119 = vsel %vm323, %v1088, 0
      %v1122 = vsel %vm323, %v1089, 0
      %v1125 = vsel %vm323, %v1090, 0
      %v1128 = vsel %vm323, %v1091, 0
      %v1131 = vsel %vm323, %v1092, 0
      %v1134 = vsel %vm323, %v1093, 0
      %v1137 = vsel %vm323, %v1094, 0
      %v1140 = vsel %vm323, %v1095, 0
      %v1143 = vsel %vm323, %v1096, 0
      %v1146 = vsel %vm323, %v1097, 0
      %v1149 = vsel %vm372, %v1099, 0
      %1151 = vmatpush.bf16.msra.mxu0 0
      %1152 = vmatpush.bf16.msra.mxu0 0
      %1153 = vmatpush.bf16.msra.mxu0 0
      %1154 = vmatpush.bf16.msra.mxu0 0
      %1155 = vmatpush.bf16.msra.mxu0 0
      %1156 = vmatpush.bf16.msra.mxu0 0
      %1157 = vmatpush.bf16.msra.mxu0 0
      %1158 = vmatpush.bf16.msra.mxu0 %v1149
      %1159 = vmatmul.bf16.gmra.mxu0 %v1101
      %v1160 = vpop.f32.mrf.mxu0
      %v1161 = vadd.f32 0.0, %v1160
      %v1162 = vpop.f32.mrf.mxu0
      %v1163 = vadd.f32 0.0, %v1162
      %1164 = vmatmul.bf16.gmra.mxu0 %v1104
      %v1165 = vpop.f32.mrf.mxu0
      %v1166 = vadd.f32 0.0, %v1165
      %v1167 = vpop.f32.mrf.mxu0
      %v1168 = vadd.f32 0.0, %v1167
      %1169 = vmatmul.bf16.gmra.mxu0 %v1107
      %v1170 = vpop.f32.mrf.mxu0
      %v1171 = vadd.f32 0.0, %v1170
      %v1172 = vpop.f32.mrf.mxu0
      %v1173 = vadd.f32 0.0, %v1172
      %1174 = vmatmul.bf16.gmra.mxu0 %v1110
      %v1175 = vpop.f32.mrf.mxu0
      %v1176 = vadd.f32 0.0, %v1175
      %v1177 = vpop.f32.mrf.mxu0
      %v1178 = vadd.f32 0.0, %v1177
      %1179 = vmatmul.bf16.gmra.mxu0 %v1113
      %v1180 = vpop.f32.mrf.mxu0
      %v1181 = vadd.f32 0.0, %v1180
      %v1182 = vpop.f32.mrf.mxu0
      %v1183 = vadd.f32 0.0, %v1182
      %1184 = vmatmul.bf16.gmra.mxu0 %v1116
      %v1185 = vpop.f32.mrf.mxu0
      %v1186 = vadd.f32 0.0, %v1185
      %v1187 = vpop.f32.mrf.mxu0
      %v1188 = vadd.f32 0.0, %v1187
      %1189 = vmatmul.bf16.gmra.mxu0 %v1119
      %v1190 = vpop.f32.mrf.mxu0
      %v1191 = vadd.f32 0.0, %v1190
      %v1192 = vpop.f32.mrf.mxu0
      %v1193 = vadd.f32 0.0, %v1192
      %1194 = vmatmul.bf16.gmra.mxu0 %v1122
      %v1195 = vpop.f32.mrf.mxu0
      %v1196 = vadd.f32 0.0, %v1195
      %v1197 = vpop.f32.mrf.mxu0
      %v1198 = vadd.f32 0.0, %v1197
      %1199 = vmatmul.bf16.gmra.mxu0 %v1125
      %v1200 = vpop.f32.mrf.mxu0
      %v1201 = vadd.f32 0.0, %v1200
      %v1202 = vpop.f32.mrf.mxu0
      %v1203 = vadd.f32 0.0, %v1202
      %1204 = vmatmul.bf16.gmra.mxu0 %v1128
      %v1205 = vpop.f32.mrf.mxu0
      %v1206 = vadd.f32 0.0, %v1205
      %v1207 = vpop.f32.mrf.mxu0
      %v1208 = vadd.f32 0.0, %v1207
      %1209 = vmatmul.bf16.gmra.mxu0 %v1131
      %v1210 = vpop.f32.mrf.mxu0
      %v1211 = vadd.f32 0.0, %v1210
      %v1212 = vpop.f32.mrf.mxu0
      %v1213 = vadd.f32 0.0, %v1212
      %1214 = vmatmul.bf16.gmra.mxu0 %v1134
      %v1215 = vpop.f32.mrf.mxu0
      %v1216 = vadd.f32 0.0, %v1215
      %v1217 = vpop.f32.mrf.mxu0
      %v1218 = vadd.f32 0.0, %v1217
      %1219 = vmatmul.bf16.gmra.mxu0 %v1137
      %v1220 = vpop.f32.mrf.mxu0
      %v1221 = vadd.f32 0.0, %v1220
      %v1222 = vpop.f32.mrf.mxu0
      %v1223 = vadd.f32 0.0, %v1222
      %1224 = vmatmul.bf16.gmra.mxu0 %v1140
      %v1225 = vpop.f32.mrf.mxu0
      %v1226 = vadd.f32 0.0, %v1225
      %v1227 = vpop.f32.mrf.mxu0
      %v1228 = vadd.f32 0.0, %v1227
      %1229 = vmatmul.bf16.gmra.mxu0 %v1143
      %v1230 = vpop.f32.mrf.mxu0
      %v1231 = vadd.f32 0.0, %v1230
      %v1232 = vpop.f32.mrf.mxu0
      %v1233 = vadd.f32 0.0, %v1232
      %1234 = vmatmul.bf16.gmra.mxu0 %v1146
      %v1235 = vpop.f32.mrf.mxu0
      %v1236 = vadd.f32 0.0, %v1235
      %v1237 = vpop.f32.mrf.mxu0
      %v1238 = vadd.f32 0.0, %v1237
      %1239 = vdwg.mxu0
      %v1240 = vadd.f32 %v1018, %v1161
      %v1241 = vadd.f32 %v1019, %v1163
      %v1242 = vadd.f32 %v1020, %v1166
      %v1243 = vadd.f32 %v1021, %v1168
      %v1244 = vadd.f32 %v1022, %v1171
      %v1245 = vadd.f32 %v1023, %v1173
      %v1246 = vadd.f32 %v1024, %v1176
      %v1247 = vadd.f32 %v1025, %v1178
      %v1248 = vadd.f32 %v1026, %v1181
      %v1249 = vadd.f32 %v1027, %v1183
      %v1250 = vadd.f32 %v1028, %v1186
      %v1251 = vadd.f32 %v1029, %v1188
      %v1252 = vadd.f32 %v1030, %v1191
      %v1253 = vadd.f32 %v1031, %v1193
      %v1254 = vadd.f32 %v1032, %v1196
      %v1255 = vadd.f32 %v1033, %v1198
      %v1256 = vadd.f32 %v1034, %v1201
      %v1257 = vadd.f32 %v1035, %v1203
      %v1258 = vadd.f32 %v1036, %v1206
      %v1259 = vadd.f32 %v1037, %v1208
      %v1260 = vadd.f32 %v1038, %v1211
      %v1261 = vadd.f32 %v1039, %v1213
      %v1262 = vadd.f32 %v1040, %v1216
      %v1263 = vadd.f32 %v1041, %v1218
      %v1264 = vadd.f32 %v1042, %v1221
      %v1265 = vadd.f32 %v1043, %v1223
      %v1266 = vadd.f32 %v1044, %v1226
      %v1267 = vadd.f32 %v1045, %v1228
      %v1268 = vadd.f32 %v1046, %v1231
      %v1269 = vadd.f32 %v1047, %v1233
      %v1270 = vadd.f32 %v1048, %v1236
      %v1271 = vadd.f32 %v1049, %v1238
      %v1272 = vld [vmem:[%s827 + $0x2] sm:$0xff]
      %v1273 = vld [vmem:[%s827 + $0xa] sm:$0xff]
      %v1274 = vld [vmem:[%s827 + $0x1a] sm:$0xff]
      %v1275 = vld [vmem:[%s827 + $0x22] sm:$0xff]
      %v1276 = vld [vmem:[%s827 + $0x32] sm:$0xff]
      %v1277 = vld [vmem:[%s827 + $0x3a] sm:$0xff]
      %v1278 = vld [vmem:[%s827 + $0x4a] sm:$0xff]
      %v1279 = vld [vmem:[%s827 + $0x52] sm:$0xff]
      %v1280 = vld [vmem:[%s827 + $0x62] sm:$0xff]
      %v1281 = vld [vmem:[%s827 + $0x6a] sm:$0xff]
      %v1282 = vld [vmem:[%s827 + $0x7a] sm:$0xff]
      %v1283 = vld [vmem:[%s827 + $0x82] sm:$0xff]
      %v1284 = vld [vmem:[%s827 + $0x92] sm:$0xff]
      %v1285 = vld [vmem:[%s827 + $0x9a] sm:$0xff]
      %v1286 = vld [vmem:[%s827 + $0xaa] sm:$0xff]
      %v1287 = vld [vmem:[%s827 + $0xb2] sm:$0xff]
      %v1288 = vld [vmem:[%s827 + $0xc2] sm:$0xff]
      %v1289 = vld [vmem:[%s827 + $0xca] sm:$0xff]
      %v1290 = vld [vmem:[%s827 + $0xda] sm:$0xff]
      %v1291 = vld [vmem:[%s827 + $0xe2] sm:$0xff]
      %v1292 = vld [vmem:[%s827 + $0xf2] sm:$0xff]
      %v1293 = vld [vmem:[%s827 + $0xfa] sm:$0xff]
      %v1294 = vld [vmem:[%s827 + $0x10a] sm:$0xff]
      %v1295 = vld [vmem:[%s827 + $0x112] sm:$0xff]
      %v1296 = vld [vmem:[%s827 + $0x122] sm:$0xff]
      %v1297 = vld [vmem:[%s827 + $0x12a] sm:$0xff]
      %v1298 = vld [vmem:[%s827 + $0x13a] sm:$0xff]
      %v1299 = vld [vmem:[%s827 + $0x142] sm:$0xff]
      %v1300 = vld [vmem:[%s827 + $0x152] sm:$0xff]
      %v1301 = vld [vmem:[%s827 + $0x15a] sm:$0xff]
      %v1302 = vld [vmem:[%s827 + $0x16a] sm:$0xff]
      %v1303 = vld [vmem:[%s827 + $0x172] sm:$0xff]
      %v1304 = vpack.c.bf16 %v1273, %v1272
      %v1305 = vpack.c.bf16 %v1275, %v1274
      %v1306 = vpack.c.bf16 %v1277, %v1276
      %v1307 = vpack.c.bf16 %v1279, %v1278
      %v1308 = vpack.c.bf16 %v1281, %v1280
      %v1309 = vpack.c.bf16 %v1283, %v1282
      %v1310 = vpack.c.bf16 %v1285, %v1284
      %v1311 = vpack.c.bf16 %v1287, %v1286
      %v1312 = vpack.c.bf16 %v1289, %v1288
      %v1313 = vpack.c.bf16 %v1291, %v1290
      %v1314 = vpack.c.bf16 %v1293, %v1292
      %v1315 = vpack.c.bf16 %v1295, %v1294
      %v1316 = vpack.c.bf16 %v1297, %v1296
      %v1317 = vpack.c.bf16 %v1299, %v1298
      %v1318 = vpack.c.bf16 %v1301, %v1300
      %v1319 = vpack.c.bf16 %v1303, %v1302
      %s1320 = scalar_lea.vmem %s1, 10
      %v1321 = vld [vmem:[%s1320] sm:$0x3]
      %v1323 = vsel %vm323, %v1304, 0
      %v1326 = vsel %vm323, %v1305, 0
      %v1329 = vsel %vm323, %v1306, 0
      %v1332 = vsel %vm323, %v1307, 0
      %v1335 = vsel %vm323, %v1308, 0
      %v1338 = vsel %vm323, %v1309, 0
      %v1341 = vsel %vm323, %v1310, 0
      %v1344 = vsel %vm323, %v1311, 0
      %v1347 = vsel %vm323, %v1312, 0
      %v1350 = vsel %vm323, %v1313, 0
      %v1353 = vsel %vm323, %v1314, 0
      %v1356 = vsel %vm323, %v1315, 0
      %v1359 = vsel %vm323, %v1316, 0
      %v1362 = vsel %vm323, %v1317, 0
      %v1365 = vsel %vm323, %v1318, 0
      %v1368 = vsel %vm323, %v1319, 0
      %v1371 = vsel %vm372, %v1321, 0
      %1373 = vmatpush.bf16.msra.mxu0 0
      %1374 = vmatpush.bf16.msra.mxu0 0
      %1375 = vmatpush.bf16.msra.mxu0 0
      %1376 = vmatpush.bf16.msra.mxu0 0
      %1377 = vmatpush.bf16.msra.mxu0 0
      %1378 = vmatpush.bf16.msra.mxu0 0
      %1379 = vmatpush.bf16.msra.mxu0 0
      %1380 = vmatpush.bf16.msra.mxu0 %v1371
      %1381 = vmatmul.bf16.gmra.mxu0 %v1323
      %v1382 = vpop.f32.mrf.mxu0
      %v1383 = vadd.f32 0.0, %v1382
      %v1384 = vpop.f32.mrf.mxu0
      %v1385 = vadd.f32 0.0, %v1384
      %1386 = vmatmul.bf16.gmra.mxu0 %v1326
      %v1387 = vpop.f32.mrf.mxu0
      %v1388 = vadd.f32 0.0, %v1387
      %v1389 = vpop.f32.mrf.mxu0
      %v1390 = vadd.f32 0.0, %v1389
      %1391 = vmatmul.bf16.gmra.mxu0 %v1329
      %v1392 = vpop.f32.mrf.mxu0
      %v1393 = vadd.f32 0.0, %v1392
      %v1394 = vpop.f32.mrf.mxu0
      %v1395 = vadd.f32 0.0, %v1394
      %1396 = vmatmul.bf16.gmra.mxu0 %v1332
      %v1397 = vpop.f32.mrf.mxu0
      %v1398 = vadd.f32 0.0, %v1397
      %v1399 = vpop.f32.mrf.mxu0
      %v1400 = vadd.f32 0.0, %v1399
      %1401 = vmatmul.bf16.gmra.mxu0 %v1335
      %v1402 = vpop.f32.mrf.mxu0
      %v1403 = vadd.f32 0.0, %v1402
      %v1404 = vpop.f32.mrf.mxu0
      %v1405 = vadd.f32 0.0, %v1404
      %1406 = vmatmul.bf16.gmra.mxu0 %v1338
      %v1407 = vpop.f32.mrf.mxu0
      %v1408 = vadd.f32 0.0, %v1407
      %v1409 = vpop.f32.mrf.mxu0
      %v1410 = vadd.f32 0.0, %v1409
      %1411 = vmatmul.bf16.gmra.mxu0 %v1341
      %v1412 = vpop.f32.mrf.mxu0
      %v1413 = vadd.f32 0.0, %v1412
      %v1414 = vpop.f32.mrf.mxu0
      %v1415 = vadd.f32 0.0, %v1414
      %1416 = vmatmul.bf16.gmra.mxu0 %v1344
      %v1417 = vpop.f32.mrf.mxu0
      %v1418 = vadd.f32 0.0, %v1417
      %v1419 = vpop.f32.mrf.mxu0
      %v1420 = vadd.f32 0.0, %v1419
      %1421 = vmatmul.bf16.gmra.mxu0 %v1347
      %v1422 = vpop.f32.mrf.mxu0
      %v1423 = vadd.f32 0.0, %v1422
      %v1424 = vpop.f32.mrf.mxu0
      %v1425 = vadd.f32 0.0, %v1424
      %1426 = vmatmul.bf16.gmra.mxu0 %v1350
      %v1427 = vpop.f32.mrf.mxu0
      %v1428 = vadd.f32 0.0, %v1427
      %v1429 = vpop.f32.mrf.mxu0
      %v1430 = vadd.f32 0.0, %v1429
      %1431 = vmatmul.bf16.gmra.mxu0 %v1353
      %v1432 = vpop.f32.mrf.mxu0
      %v1433 = vadd.f32 0.0, %v1432
      %v1434 = vpop.f32.mrf.mxu0
      %v1435 = vadd.f32 0.0, %v1434
      %1436 = vmatmul.bf16.gmra.mxu0 %v1356
      %v1437 = vpop.f32.mrf.mxu0
      %v1438 = vadd.f32 0.0, %v1437
      %v1439 = vpop.f32.mrf.mxu0
      %v1440 = vadd.f32 0.0, %v1439
      %1441 = vmatmul.bf16.gmra.mxu0 %v1359
      %v1442 = vpop.f32.mrf.mxu0
      %v1443 = vadd.f32 0.0, %v1442
      %v1444 = vpop.f32.mrf.mxu0
      %v1445 = vadd.f32 0.0, %v1444
      %1446 = vmatmul.bf16.gmra.mxu0 %v1362
      %v1447 = vpop.f32.mrf.mxu0
      %v1448 = vadd.f32 0.0, %v1447
      %v1449 = vpop.f32.mrf.mxu0
      %v1450 = vadd.f32 0.0, %v1449
      %1451 = vmatmul.bf16.gmra.mxu0 %v1365
      %v1452 = vpop.f32.mrf.mxu0
      %v1453 = vadd.f32 0.0, %v1452
      %v1454 = vpop.f32.mrf.mxu0
      %v1455 = vadd.f32 0.0, %v1454
      %1456 = vmatmul.bf16.gmra.mxu0 %v1368
      %v1457 = vpop.f32.mrf.mxu0
      %v1458 = vadd.f32 0.0, %v1457
      %v1459 = vpop.f32.mrf.mxu0
      %v1460 = vadd.f32 0.0, %v1459
      %1461 = vdwg.mxu0
      %v1462 = vadd.f32 %v1240, %v1383
      %v1463 = vadd.f32 %v1241, %v1385
      %v1464 = vadd.f32 %v1242, %v1388
      %v1465 = vadd.f32 %v1243, %v1390
      %v1466 = vadd.f32 %v1244, %v1393
      %v1467 = vadd.f32 %v1245, %v1395
      %v1468 = vadd.f32 %v1246, %v1398
      %v1469 = vadd.f32 %v1247, %v1400
      %v1470 = vadd.f32 %v1248, %v1403
      %v1471 = vadd.f32 %v1249, %v1405
      %v1472 = vadd.f32 %v1250, %v1408
      %v1473 = vadd.f32 %v1251, %v1410
      %v1474 = vadd.f32 %v1252, %v1413
      %v1475 = vadd.f32 %v1253, %v1415
      %v1476 = vadd.f32 %v1254, %v1418
      %v1477 = vadd.f32 %v1255, %v1420
      %v1478 = vadd.f32 %v1256, %v1423
      %v1479 = vadd.f32 %v1257, %v1425
      %v1480 = vadd.f32 %v1258, %v1428
      %v1481 = vadd.f32 %v1259, %v1430
      %v1482 = vadd.f32 %v1260, %v1433
      %v1483 = vadd.f32 %v1261, %v1435
      %v1484 = vadd.f32 %v1262, %v1438
      %v1485 = vadd.f32 %v1263, %v1440
      %v1486 = vadd.f32 %v1264, %v1443
      %v1487 = vadd.f32 %v1265, %v1445
      %v1488 = vadd.f32 %v1266, %v1448
      %v1489 = vadd.f32 %v1267, %v1450
      %v1490 = vadd.f32 %v1268, %v1453
      %v1491 = vadd.f32 %v1269, %v1455
      %v1492 = vadd.f32 %v1270, %v1458
      %v1493 = vadd.f32 %v1271, %v1460
      %s1494 = scalar_lea.vmem %s208, 48
      %v1495 = vld [vmem:[%s1494] sm:$0xff]
      %v1496 = vld [vmem:[%s1494 + $0x8] sm:$0xff]
      %v1497 = vld [vmem:[%s1494 + $0x18] sm:$0xff]
      %v1498 = vld [vmem:[%s1494 + $0x20] sm:$0xff]
      %v1499 = vld [vmem:[%s1494 + $0x30] sm:$0xff]
      %v1500 = vld [vmem:[%s1494 + $0x38] sm:$0xff]
      %v1501 = vld [vmem:[%s1494 + $0x48] sm:$0xff]
      %v1502 = vld [vmem:[%s1494 + $0x50] sm:$0xff]
      %v1503 = vld [vmem:[%s1494 + $0x60] sm:$0xff]
      %v1504 = vld [vmem:[%s1494 + $0x68] sm:$0xff]
      %v1505 = vld [vmem:[%s1494 + $0x78] sm:$0xff]
      %v1506 = vld [vmem:[%s1494 + $0x80] sm:$0xff]
      %v1507 = vld [vmem:[%s1494 + $0x90] sm:$0xff]
      %v1508 = vld [vmem:[%s1494 + $0x98] sm:$0xff]
      %v1509 = vld [vmem:[%s1494 + $0xa8] sm:$0xff]
      %v1510 = vld [vmem:[%s1494 + $0xb0] sm:$0xff]
      %v1511 = vld [vmem:[%s1494 + $0xc0] sm:$0xff]
      %v1512 = vld [vmem:[%s1494 + $0xc8] sm:$0xff]
      %v1513 = vld [vmem:[%s1494 + $0xd8] sm:$0xff]
      %v1514 = vld [vmem:[%s1494 + $0xe0] sm:$0xff]
      %v1515 = vld [vmem:[%s1494 + $0xf0] sm:$0xff]
      %v1516 = vld [vmem:[%s1494 + $0xf8] sm:$0xff]
      %v1517 = vld [vmem:[%s1494 + $0x108] sm:$0xff]
      %v1518 = vld [vmem:[%s1494 + $0x110] sm:$0xff]
      %v1519 = vld [vmem:[%s1494 + $0x120] sm:$0xff]
      %v1520 = vld [vmem:[%s1494 + $0x128] sm:$0xff]
      %v1521 = vld [vmem:[%s1494 + $0x138] sm:$0xff]
      %v1522 = vld [vmem:[%s1494 + $0x140] sm:$0xff]
      %v1523 = vld [vmem:[%s1494 + $0x150] sm:$0xff]
      %v1524 = vld [vmem:[%s1494 + $0x158] sm:$0xff]
      %v1525 = vld [vmem:[%s1494 + $0x168] sm:$0xff]
      %v1526 = vld [vmem:[%s1494 + $0x170] sm:$0xff]
      %v1527 = vpack.c.bf16 %v1496, %v1495
      %v1528 = vpack.c.bf16 %v1498, %v1497
      %v1529 = vpack.c.bf16 %v1500, %v1499
      %v1530 = vpack.c.bf16 %v1502, %v1501
      %v1531 = vpack.c.bf16 %v1504, %v1503
      %v1532 = vpack.c.bf16 %v1506, %v1505
      %v1533 = vpack.c.bf16 %v1508, %v1507
      %v1534 = vpack.c.bf16 %v1510, %v1509
      %v1535 = vpack.c.bf16 %v1512, %v1511
      %v1536 = vpack.c.bf16 %v1514, %v1513
      %v1537 = vpack.c.bf16 %v1516, %v1515
      %v1538 = vpack.c.bf16 %v1518, %v1517
      %v1539 = vpack.c.bf16 %v1520, %v1519
      %v1540 = vpack.c.bf16 %v1522, %v1521
      %v1541 = vpack.c.bf16 %v1524, %v1523
      %v1542 = vpack.c.bf16 %v1526, %v1525
      %s1543 = scalar_lea.vmem %s1, 12
      %v1544 = vld [vmem:[%s1543] sm:$0x3]
      %v1546 = vsel %vm323, %v1527, 0
      %v1549 = vsel %vm323, %v1528, 0
      %v1552 = vsel %vm323, %v1529, 0
      %v1555 = vsel %vm323, %v1530, 0
      %v1558 = vsel %vm323, %v1531, 0
      %v1561 = vsel %vm323, %v1532, 0
      %v1564 = vsel %vm323, %v1533, 0
      %v1567 = vsel %vm323, %v1534, 0
      %v1570 = vsel %vm323, %v1535, 0
      %v1573 = vsel %vm323, %v1536, 0
      %v1576 = vsel %vm323, %v1537, 0
      %v1579 = vsel %vm323, %v1538, 0
      %v1582 = vsel %vm323, %v1539, 0
      %v1585 = vsel %vm323, %v1540, 0
      %v1588 = vsel %vm323, %v1541, 0
      %v1591 = vsel %vm323, %v1542, 0
      %v1594 = vsel %vm372, %v1544, 0
      %1596 = vmatpush.bf16.msra.mxu0 0
      %1597 = vmatpush.bf16.msra.mxu0 0
      %1598 = vmatpush.bf16.msra.mxu0 0
      %1599 = vmatpush.bf16.msra.mxu0 0
      %1600 = vmatpush.bf16.msra.mxu0 0
      %1601 = vmatpush.bf16.msra.mxu0 0
      %1602 = vmatpush.bf16.msra.mxu0 0
      %1603 = vmatpush.bf16.msra.mxu0 %v1594
      %1604 = vmatmul.bf16.gmra.mxu0 %v1546
      %v1605 = vpop.f32.mrf.mxu0
      %v1606 = vadd.f32 0.0, %v1605
      %v1607 = vpop.f32.mrf.mxu0
      %v1608 = vadd.f32 0.0, %v1607
      %1609 = vmatmul.bf16.gmra.mxu0 %v1549
      %v1610 = vpop.f32.mrf.mxu0
      %v1611 = vadd.f32 0.0, %v1610
      %v1612 = vpop.f32.mrf.mxu0
      %v1613 = vadd.f32 0.0, %v1612
      %1614 = vmatmul.bf16.gmra.mxu0 %v1552
      %v1615 = vpop.f32.mrf.mxu0
      %v1616 = vadd.f32 0.0, %v1615
      %v1617 = vpop.f32.mrf.mxu0
      %v1618 = vadd.f32 0.0, %v1617
      %1619 = vmatmul.bf16.gmra.mxu0 %v1555
      %v1620 = vpop.f32.mrf.mxu0
      %v1621 = vadd.f32 0.0, %v1620
      %v1622 = vpop.f32.mrf.mxu0
      %v1623 = vadd.f32 0.0, %v1622
      %1624 = vmatmul.bf16.gmra.mxu0 %v1558
      %v1625 = vpop.f32.mrf.mxu0
      %v1626 = vadd.f32 0.0, %v1625
      %v1627 = vpop.f32.mrf.mxu0
      %v1628 = vadd.f32 0.0, %v1627
      %1629 = vmatmul.bf16.gmra.mxu0 %v1561
      %v1630 = vpop.f32.mrf.mxu0
      %v1631 = vadd.f32 0.0, %v1630
      %v1632 = vpop.f32.mrf.mxu0
      %v1633 = vadd.f32 0.0, %v1632
      %1634 = vmatmul.bf16.gmra.mxu0 %v1564
      %v1635 = vpop.f32.mrf.mxu0
      %v1636 = vadd.f32 0.0, %v1635
      %v1637 = vpop.f32.mrf.mxu0
      %v1638 = vadd.f32 0.0, %v1637
      %1639 = vmatmul.bf16.gmra.mxu0 %v1567
      %v1640 = vpop.f32.mrf.mxu0
      %v1641 = vadd.f32 0.0, %v1640
      %v1642 = vpop.f32.mrf.mxu0
      %v1643 = vadd.f32 0.0, %v1642
      %1644 = vmatmul.bf16.gmra.mxu0 %v1570
      %v1645 = vpop.f32.mrf.mxu0
      %v1646 = vadd.f32 0.0, %v1645
      %v1647 = vpop.f32.mrf.mxu0
      %v1648 = vadd.f32 0.0, %v1647
      %1649 = vmatmul.bf16.gmra.mxu0 %v1573
      %v1650 = vpop.f32.mrf.mxu0
      %v1651 = vadd.f32 0.0, %v1650
      %v1652 = vpop.f32.mrf.mxu0
      %v1653 = vadd.f32 0.0, %v1652
      %1654 = vmatmul.bf16.gmra.mxu0 %v1576
      %v1655 = vpop.f32.mrf.mxu0
      %v1656 = vadd.f32 0.0, %v1655
      %v1657 = vpop.f32.mrf.mxu0
      %v1658 = vadd.f32 0.0, %v1657
      %1659 = vmatmul.bf16.gmra.mxu0 %v1579
      %v1660 = vpop.f32.mrf.mxu0
      %v1661 = vadd.f32 0.0, %v1660
      %v1662 = vpop.f32.mrf.mxu0
      %v1663 = vadd.f32 0.0, %v1662
      %1664 = vmatmul.bf16.gmra.mxu0 %v1582
      %v1665 = vpop.f32.mrf.mxu0
      %v1666 = vadd.f32 0.0, %v1665
      %v1667 = vpop.f32.mrf.mxu0
      %v1668 = vadd.f32 0.0, %v1667
      %1669 = vmatmul.bf16.gmra.mxu0 %v1585
      %v1670 = vpop.f32.mrf.mxu0
      %v1671 = vadd.f32 0.0, %v1670
      %v1672 = vpop.f32.mrf.mxu0
      %v1673 = vadd.f32 0.0, %v1672
      %1674 = vmatmul.bf16.gmra.mxu0 %v1588
      %v1675 = vpop.f32.mrf.mxu0
      %v1676 = vadd.f32 0.0, %v1675
      %v1677 = vpop.f32.mrf.mxu0
      %v1678 = vadd.f32 0.0, %v1677
      %1679 = vmatmul.bf16.gmra.mxu0 %v1591
      %v1680 = vpop.f32.mrf.mxu0
      %v1681 = vadd.f32 0.0, %v1680
      %v1682 = vpop.f32.mrf.mxu0
      %v1683 = vadd.f32 0.0, %v1682
      %1684 = vdwg.mxu0
      %v1685 = vadd.f32 %v1462, %v1606
      %v1686 = vadd.f32 %v1463, %v1608
      %v1687 = vadd.f32 %v1464, %v1611
      %v1688 = vadd.f32 %v1465, %v1613
      %v1689 = vadd.f32 %v1466, %v1616
      %v1690 = vadd.f32 %v1467, %v1618
      %v1691 = vadd.f32 %v1468, %v1621
      %v1692 = vadd.f32 %v1469, %v1623
      %v1693 = vadd.f32 %v1470, %v1626
      %v1694 = vadd.f32 %v1471, %v1628
      %v1695 = vadd.f32 %v1472, %v1631
      %v1696 = vadd.f32 %v1473, %v1633
      %v1697 = vadd.f32 %v1474, %v1636
      %v1698 = vadd.f32 %v1475, %v1638
      %v1699 = vadd.f32 %v1476, %v1641
      %v1700 = vadd.f32 %v1477, %v1643
      %v1701 = vadd.f32 %v1478, %v1646
      %v1702 = vadd.f32 %v1479, %v1648
      %v1703 = vadd.f32 %v1480, %v1651
      %v1704 = vadd.f32 %v1481, %v1653
      %v1705 = vadd.f32 %v1482, %v1656
      %v1706 = vadd.f32 %v1483, %v1658
      %v1707 = vadd.f32 %v1484, %v1661
      %v1708 = vadd.f32 %v1485, %v1663
      %v1709 = vadd.f32 %v1486, %v1666
      %v1710 = vadd.f32 %v1487, %v1668
      %v1711 = vadd.f32 %v1488, %v1671
      %v1712 = vadd.f32 %v1489, %v1673
      %v1713 = vadd.f32 %v1490, %v1676
      %v1714 = vadd.f32 %v1491, %v1678
      %v1715 = vadd.f32 %v1492, %v1681
      %v1716 = vadd.f32 %v1493, %v1683
      %v1717 = vld [vmem:[%s1494 + $0x1] sm:$0xff]
      %v1718 = vld [vmem:[%s1494 + $0x9] sm:$0xff]
      %v1719 = vld [vmem:[%s1494 + $0x19] sm:$0xff]
      %v1720 = vld [vmem:[%s1494 + $0x21] sm:$0xff]
      %v1721 = vld [vmem:[%s1494 + $0x31] sm:$0xff]
      %v1722 = vld [vmem:[%s1494 + $0x39] sm:$0xff]
      %v1723 = vld [vmem:[%s1494 + $0x49] sm:$0xff]
      %v1724 = vld [vmem:[%s1494 + $0x51] sm:$0xff]
      %v1725 = vld [vmem:[%s1494 + $0x61] sm:$0xff]
      %v1726 = vld [vmem:[%s1494 + $0x69] sm:$0xff]
      %v1727 = vld [vmem:[%s1494 + $0x79] sm:$0xff]
      %v1728 = vld [vmem:[%s1494 + $0x81] sm:$0xff]
      %v1729 = vld [vmem:[%s1494 + $0x91] sm:$0xff]
      %v1730 = vld [vmem:[%s1494 + $0x99] sm:$0xff]
      %v1731 = vld [vmem:[%s1494 + $0xa9] sm:$0xff]
      %v1732 = vld [vmem:[%s1494 + $0xb1] sm:$0xff]
      %v1733 = vld [vmem:[%s1494 + $0xc1] sm:$0xff]
      %v1734 = vld [vmem:[%s1494 + $0xc9] sm:$0xff]
      %v1735 = vld [vmem:[%s1494 + $0xd9] sm:$0xff]
      %v1736 = vld [vmem:[%s1494 + $0xe1] sm:$0xff]
      %v1737 = vld [vmem:[%s1494 + $0xf1] sm:$0xff]
      %v1738 = vld [vmem:[%s1494 + $0xf9] sm:$0xff]
      %v1739 = vld [vmem:[%s1494 + $0x109] sm:$0xff]
      %v1740 = vld [vmem:[%s1494 + $0x111] sm:$0xff]
      %v1741 = vld [vmem:[%s1494 + $0x121] sm:$0xff]
      %v1742 = vld [vmem:[%s1494 + $0x129] sm:$0xff]
      %v1743 = vld [vmem:[%s1494 + $0x139] sm:$0xff]
      %v1744 = vld [vmem:[%s1494 + $0x141] sm:$0xff]
      %v1745 = vld [vmem:[%s1494 + $0x151] sm:$0xff]
      %v1746 = vld [vmem:[%s1494 + $0x159] sm:$0xff]
      %v1747 = vld [vmem:[%s1494 + $0x169] sm:$0xff]
      %v1748 = vld [vmem:[%s1494 + $0x171] sm:$0xff]
      %v1749 = vpack.c.bf16 %v1718, %v1717
      %v1750 = vpack.c.bf16 %v1720, %v1719
      %v1751 = vpack.c.bf16 %v1722, %v1721
      %v1752 = vpack.c.bf16 %v1724, %v1723
      %v1753 = vpack.c.bf16 %v1726, %v1725
      %v1754 = vpack.c.bf16 %v1728, %v1727
      %v1755 = vpack.c.bf16 %v1730, %v1729
      %v1756 = vpack.c.bf16 %v1732, %v1731
      %v1757 = vpack.c.bf16 %v1734, %v1733
      %v1758 = vpack.c.bf16 %v1736, %v1735
      %v1759 = vpack.c.bf16 %v1738, %v1737
      %v1760 = vpack.c.bf16 %v1740, %v1739
      %v1761 = vpack.c.bf16 %v1742, %v1741
      %v1762 = vpack.c.bf16 %v1744, %v1743
      %v1763 = vpack.c.bf16 %v1746, %v1745
      %v1764 = vpack.c.bf16 %v1748, %v1747
      %s1765 = scalar_lea.vmem %s1, 14
      %v1766 = vld [vmem:[%s1765] sm:$0x3]
      %v1768 = vsel %vm323, %v1749, 0
      %v1771 = vsel %vm323, %v1750, 0
      %v1774 = vsel %vm323, %v1751, 0
      %v1777 = vsel %vm323, %v1752, 0
      %v1780 = vsel %vm323, %v1753, 0
      %v1783 = vsel %vm323, %v1754, 0
      %v1786 = vsel %vm323, %v1755, 0
      %v1789 = vsel %vm323, %v1756, 0
      %v1792 = vsel %vm323, %v1757, 0
      %v1795 = vsel %vm323, %v1758, 0
      %v1798 = vsel %vm323, %v1759, 0
      %v1801 = vsel %vm323, %v1760, 0
      %v1804 = vsel %vm323, %v1761, 0
      %v1807 = vsel %vm323, %v1762, 0
      %v1810 = vsel %vm323, %v1763, 0
      %v1813 = vsel %vm323, %v1764, 0
      %v1816 = vsel %vm372, %v1766, 0
      %1818 = vmatpush.bf16.msra.mxu0 0
      %1819 = vmatpush.bf16.msra.mxu0 0
      %1820 = vmatpush.bf16.msra.mxu0 0
      %1821 = vmatpush.bf16.msra.mxu0 0
      %1822 = vmatpush.bf16.msra.mxu0 0
      %1823 = vmatpush.bf16.msra.mxu0 0
      %1824 = vmatpush.bf16.msra.mxu0 0
      %1825 = vmatpush.bf16.msra.mxu0 %v1816
      %1826 = vmatmul.bf16.gmra.mxu0 %v1768
      %v1827 = vpop.f32.mrf.mxu0
      %v1828 = vadd.f32 0.0, %v1827
      %v1829 = vpop.f32.mrf.mxu0
      %v1830 = vadd.f32 0.0, %v1829
      %1831 = vmatmul.bf16.gmra.mxu0 %v1771
      %v1832 = vpop.f32.mrf.mxu0
      %v1833 = vadd.f32 0.0, %v1832
      %v1834 = vpop.f32.mrf.mxu0
      %v1835 = vadd.f32 0.0, %v1834
      %1836 = vmatmul.bf16.gmra.mxu0 %v1774
      %v1837 = vpop.f32.mrf.mxu0
      %v1838 = vadd.f32 0.0, %v1837
      %v1839 = vpop.f32.mrf.mxu0
      %v1840 = vadd.f32 0.0, %v1839
      %1841 = vmatmul.bf16.gmra.mxu0 %v1777
      %v1842 = vpop.f32.mrf.mxu0
      %v1843 = vadd.f32 0.0, %v1842
      %v1844 = vpop.f32.mrf.mxu0
      %v1845 = vadd.f32 0.0, %v1844
      %1846 = vmatmul.bf16.gmra.mxu0 %v1780
      %v1847 = vpop.f32.mrf.mxu0
      %v1848 = vadd.f32 0.0, %v1847
      %v1849 = vpop.f32.mrf.mxu0
      %v1850 = vadd.f32 0.0, %v1849
      %1851 = vmatmul.bf16.gmra.mxu0 %v1783
      %v1852 = vpop.f32.mrf.mxu0
      %v1853 = vadd.f32 0.0, %v1852
      %v1854 = vpop.f32.mrf.mxu0
      %v1855 = vadd.f32 0.0, %v1854
      %1856 = vmatmul.bf16.gmra.mxu0 %v1786
      %v1857 = vpop.f32.mrf.mxu0
      %v1858 = vadd.f32 0.0, %v1857
      %v1859 = vpop.f32.mrf.mxu0
      %v1860 = vadd.f32 0.0, %v1859
      %1861 = vmatmul.bf16.gmra.mxu0 %v1789
      %v1862 = vpop.f32.mrf.mxu0
      %v1863 = vadd.f32 0.0, %v1862
      %v1864 = vpop.f32.mrf.mxu0
      %v1865 = vadd.f32 0.0, %v1864
      %1866 = vmatmul.bf16.gmra.mxu0 %v1792
      %v1867 = vpop.f32.mrf.mxu0
      %v1868 = vadd.f32 0.0, %v1867
      %v1869 = vpop.f32.mrf.mxu0
      %v1870 = vadd.f32 0.0, %v1869
      %1871 = vmatmul.bf16.gmra.mxu0 %v1795
      %v1872 = vpop.f32.mrf.mxu0
      %v1873 = vadd.f32 0.0, %v1872
      %v1874 = vpop.f32.mrf.mxu0
      %v1875 = vadd.f32 0.0, %v1874
      %1876 = vmatmul.bf16.gmra.mxu0 %v1798
      %v1877 = vpop.f32.mrf.mxu0
      %v1878 = vadd.f32 0.0, %v1877
      %v1879 = vpop.f32.mrf.mxu0
      %v1880 = vadd.f32 0.0, %v1879
      %1881 = vmatmul.bf16.gmra.mxu0 %v1801
      %v1882 = vpop.f32.mrf.mxu0
      %v1883 = vadd.f32 0.0, %v1882
      %v1884 = vpop.f32.mrf.mxu0
      %v1885 = vadd.f32 0.0, %v1884
      %1886 = vmatmul.bf16.gmra.mxu0 %v1804
      %v1887 = vpop.f32.mrf.mxu0
      %v1888 = vadd.f32 0.0, %v1887
      %v1889 = vpop.f32.mrf.mxu0
      %v1890 = vadd.f32 0.0, %v1889
      %1891 = vmatmul.bf16.gmra.mxu0 %v1807
      %v1892 = vpop.f32.mrf.mxu0
      %v1893 = vadd.f32 0.0, %v1892
      %v1894 = vpop.f32.mrf.mxu0
      %v1895 = vadd.f32 0.0, %v1894
      %1896 = vmatmul.bf16.gmra.mxu0 %v1810
      %v1897 = vpop.f32.mrf.mxu0
      %v1898 = vadd.f32 0.0, %v1897
      %v1899 = vpop.f32.mrf.mxu0
      %v1900 = vadd.f32 0.0, %v1899
      %1901 = vmatmul.bf16.gmra.mxu0 %v1813
      %v1902 = vpop.f32.mrf.mxu0
      %v1903 = vadd.f32 0.0, %v1902
      %v1904 = vpop.f32.mrf.mxu0
      %v1905 = vadd.f32 0.0, %v1904
      %1906 = vdwg.mxu0
      %v1907 = vadd.f32 %v1685, %v1828
      %v1908 = vadd.f32 %v1686, %v1830
      %v1909 = vadd.f32 %v1687, %v1833
      %v1910 = vadd.f32 %v1688, %v1835
      %v1911 = vadd.f32 %v1689, %v1838
      %v1912 = vadd.f32 %v1690, %v1840
      %v1913 = vadd.f32 %v1691, %v1843
      %v1914 = vadd.f32 %v1692, %v1845
      %v1915 = vadd.f32 %v1693, %v1848
      %v1916 = vadd.f32 %v1694, %v1850
      %v1917 = vadd.f32 %v1695, %v1853
      %v1918 = vadd.f32 %v1696, %v1855
      %v1919 = vadd.f32 %v1697, %v1858
      %v1920 = vadd.f32 %v1698, %v1860
      %v1921 = vadd.f32 %v1699, %v1863
      %v1922 = vadd.f32 %v1700, %v1865
      %v1923 = vadd.f32 %v1701, %v1868
      %v1924 = vadd.f32 %v1702, %v1870
      %v1925 = vadd.f32 %v1703, %v1873
      %v1926 = vadd.f32 %v1704, %v1875
      %v1927 = vadd.f32 %v1705, %v1878
      %v1928 = vadd.f32 %v1706, %v1880
      %v1929 = vadd.f32 %v1707, %v1883
      %v1930 = vadd.f32 %v1708, %v1885
      %v1931 = vadd.f32 %v1709, %v1888
      %v1932 = vadd.f32 %v1710, %v1890
      %v1933 = vadd.f32 %v1711, %v1893
      %v1934 = vadd.f32 %v1712, %v1895
      %v1935 = vadd.f32 %v1713, %v1898
      %v1936 = vadd.f32 %v1714, %v1900
      %v1937 = vadd.f32 %v1715, %v1903
      %v1938 = vadd.f32 %v1716, %v1905
      %v1939 = vld [vmem:[%s1494 + $0x2] sm:$0xff]
      %v1940 = vld [vmem:[%s1494 + $0xa] sm:$0xff]
      %v1941 = vld [vmem:[%s1494 + $0x1a] sm:$0xff]
      %v1942 = vld [vmem:[%s1494 + $0x22] sm:$0xff]
      %v1943 = vld [vmem:[%s1494 + $0x32] sm:$0xff]
      %v1944 = vld [vmem:[%s1494 + $0x3a] sm:$0xff]
      %v1945 = vld [vmem:[%s1494 + $0x4a] sm:$0xff]
      %v1946 = vld [vmem:[%s1494 + $0x52] sm:$0xff]
      %v1947 = vld [vmem:[%s1494 + $0x62] sm:$0xff]
      %v1948 = vld [vmem:[%s1494 + $0x6a] sm:$0xff]
      %v1949 = vld [vmem:[%s1494 + $0x7a] sm:$0xff]
      %v1950 = vld [vmem:[%s1494 + $0x82] sm:$0xff]
      %v1951 = vld [vmem:[%s1494 + $0x92] sm:$0xff]
      %v1952 = vld [vmem:[%s1494 + $0x9a] sm:$0xff]
      %v1953 = vld [vmem:[%s1494 + $0xaa] sm:$0xff]
      %v1954 = vld [vmem:[%s1494 + $0xb2] sm:$0xff]
      %v1955 = vld [vmem:[%s1494 + $0xc2] sm:$0xff]
      %v1956 = vld [vmem:[%s1494 + $0xca] sm:$0xff]
      %v1957 = vld [vmem:[%s1494 + $0xda] sm:$0xff]
      %v1958 = vld [vmem:[%s1494 + $0xe2] sm:$0xff]
      %v1959 = vld [vmem:[%s1494 + $0xf2] sm:$0xff]
      %v1960 = vld [vmem:[%s1494 + $0xfa] sm:$0xff]
      %v1961 = vld [vmem:[%s1494 + $0x10a] sm:$0xff]
      %v1962 = vld [vmem:[%s1494 + $0x112] sm:$0xff]
      %v1963 = vld [vmem:[%s1494 + $0x122] sm:$0xff]
      %v1964 = vld [vmem:[%s1494 + $0x12a] sm:$0xff]
      %v1965 = vld [vmem:[%s1494 + $0x13a] sm:$0xff]
      %v1966 = vld [vmem:[%s1494 + $0x142] sm:$0xff]
      %v1967 = vld [vmem:[%s1494 + $0x152] sm:$0xff]
      %v1968 = vld [vmem:[%s1494 + $0x15a] sm:$0xff]
      %v1969 = vld [vmem:[%s1494 + $0x16a] sm:$0xff]
      %v1970 = vld [vmem:[%s1494 + $0x172] sm:$0xff]
      %v1971 = vpack.c.bf16 %v1940, %v1939
      %v1972 = vpack.c.bf16 %v1942, %v1941
      %v1973 = vpack.c.bf16 %v1944, %v1943
      %v1974 = vpack.c.bf16 %v1946, %v1945
      %v1975 = vpack.c.bf16 %v1948, %v1947
      %v1976 = vpack.c.bf16 %v1950, %v1949
      %v1977 = vpack.c.bf16 %v1952, %v1951
      %v1978 = vpack.c.bf16 %v1954, %v1953
      %v1979 = vpack.c.bf16 %v1956, %v1955
      %v1980 = vpack.c.bf16 %v1958, %v1957
      %v1981 = vpack.c.bf16 %v1960, %v1959
      %v1982 = vpack.c.bf16 %v1962, %v1961
      %v1983 = vpack.c.bf16 %v1964, %v1963
      %v1984 = vpack.c.bf16 %v1966, %v1965
      %v1985 = vpack.c.bf16 %v1968, %v1967
      %v1986 = vpack.c.bf16 %v1970, %v1969
      %s1987 = scalar_lea.vmem %s1, 16
      %v1988 = vld [vmem:[%s1987] sm:$0x3]
      %v1990 = vsel %vm323, %v1971, 0
      %v1993 = vsel %vm323, %v1972, 0
      %v1996 = vsel %vm323, %v1973, 0
      %v1999 = vsel %vm323, %v1974, 0
      %v2002 = vsel %vm323, %v1975, 0
      %v2005 = vsel %vm323, %v1976, 0
      %v2008 = vsel %vm323, %v1977, 0
      %v2011 = vsel %vm323, %v1978, 0
      %v2014 = vsel %vm323, %v1979, 0
      %v2017 = vsel %vm323, %v1980, 0
      %v2020 = vsel %vm323, %v1981, 0
      %v2023 = vsel %vm323, %v1982, 0
      %v2026 = vsel %vm323, %v1983, 0
      %v2029 = vsel %vm323, %v1984, 0
      %v2032 = vsel %vm323, %v1985, 0
      %v2035 = vsel %vm323, %v1986, 0
      %v2038 = vsel %vm372, %v1988, 0
      %2040 = vmatpush.bf16.msra.mxu0 0
      %2041 = vmatpush.bf16.msra.mxu0 0
      %2042 = vmatpush.bf16.msra.mxu0 0
      %2043 = vmatpush.bf16.msra.mxu0 0
      %2044 = vmatpush.bf16.msra.mxu0 0
      %2045 = vmatpush.bf16.msra.mxu0 0
      %2046 = vmatpush.bf16.msra.mxu0 0
      %2047 = vmatpush.bf16.msra.mxu0 %v2038
      %2048 = vmatmul.bf16.gmra.mxu0 %v1990
      %v2049 = vpop.f32.mrf.mxu0
      %v2050 = vadd.f32 0.0, %v2049
      %v2051 = vpop.f32.mrf.mxu0
      %v2052 = vadd.f32 0.0, %v2051
      %2053 = vmatmul.bf16.gmra.mxu0 %v1993
      %v2054 = vpop.f32.mrf.mxu0
      %v2055 = vadd.f32 0.0, %v2054
      %v2056 = vpop.f32.mrf.mxu0
      %v2057 = vadd.f32 0.0, %v2056
      %2058 = vmatmul.bf16.gmra.mxu0 %v1996
      %v2059 = vpop.f32.mrf.mxu0
      %v2060 = vadd.f32 0.0, %v2059
      %v2061 = vpop.f32.mrf.mxu0
      %v2062 = vadd.f32 0.0, %v2061
      %2063 = vmatmul.bf16.gmra.mxu0 %v1999
      %v2064 = vpop.f32.mrf.mxu0
      %v2065 = vadd.f32 0.0, %v2064
      %v2066 = vpop.f32.mrf.mxu0
      %v2067 = vadd.f32 0.0, %v2066
      %2068 = vmatmul.bf16.gmra.mxu0 %v2002
      %v2069 = vpop.f32.mrf.mxu0
      %v2070 = vadd.f32 0.0, %v2069
      %v2071 = vpop.f32.mrf.mxu0
      %v2072 = vadd.f32 0.0, %v2071
      %2073 = vmatmul.bf16.gmra.mxu0 %v2005
      %v2074 = vpop.f32.mrf.mxu0
      %v2075 = vadd.f32 0.0, %v2074
      %v2076 = vpop.f32.mrf.mxu0
      %v2077 = vadd.f32 0.0, %v2076
      %2078 = vmatmul.bf16.gmra.mxu0 %v2008
      %v2079 = vpop.f32.mrf.mxu0
      %v2080 = vadd.f32 0.0, %v2079
      %v2081 = vpop.f32.mrf.mxu0
      %v2082 = vadd.f32 0.0, %v2081
      %2083 = vmatmul.bf16.gmra.mxu0 %v2011
      %v2084 = vpop.f32.mrf.mxu0
      %v2085 = vadd.f32 0.0, %v2084
      %v2086 = vpop.f32.mrf.mxu0
      %v2087 = vadd.f32 0.0, %v2086
      %2088 = vmatmul.bf16.gmra.mxu0 %v2014
      %v2089 = vpop.f32.mrf.mxu0
      %v2090 = vadd.f32 0.0, %v2089
      %v2091 = vpop.f32.mrf.mxu0
      %v2092 = vadd.f32 0.0, %v2091
      %2093 = vmatmul.bf16.gmra.mxu0 %v2017
      %v2094 = vpop.f32.mrf.mxu0
      %v2095 = vadd.f32 0.0, %v2094
      %v2096 = vpop.f32.mrf.mxu0
      %v2097 = vadd.f32 0.0, %v2096
      %2098 = vmatmul.bf16.gmra.mxu0 %v2020
      %v2099 = vpop.f32.mrf.mxu0
      %v2100 = vadd.f32 0.0, %v2099
      %v2101 = vpop.f32.mrf.mxu0
      %v2102 = vadd.f32 0.0, %v2101
      %2103 = vmatmul.bf16.gmra.mxu0 %v2023
      %v2104 = vpop.f32.mrf.mxu0
      %v2105 = vadd.f32 0.0, %v2104
      %v2106 = vpop.f32.mrf.mxu0
      %v2107 = vadd.f32 0.0, %v2106
      %2108 = vmatmul.bf16.gmra.mxu0 %v2026
      %v2109 = vpop.f32.mrf.mxu0
      %v2110 = vadd.f32 0.0, %v2109
      %v2111 = vpop.f32.mrf.mxu0
      %v2112 = vadd.f32 0.0, %v2111
      %2113 = vmatmul.bf16.gmra.mxu0 %v2029
      %v2114 = vpop.f32.mrf.mxu0
      %v2115 = vadd.f32 0.0, %v2114
      %v2116 = vpop.f32.mrf.mxu0
      %v2117 = vadd.f32 0.0, %v2116
      %2118 = vmatmul.bf16.gmra.mxu0 %v2032
      %v2119 = vpop.f32.mrf.mxu0
      %v2120 = vadd.f32 0.0, %v2119
      %v2121 = vpop.f32.mrf.mxu0
      %v2122 = vadd.f32 0.0, %v2121
      %2123 = vmatmul.bf16.gmra.mxu0 %v2035
      %v2124 = vpop.f32.mrf.mxu0
      %v2125 = vadd.f32 0.0, %v2124
      %v2126 = vpop.f32.mrf.mxu0
      %v2127 = vadd.f32 0.0, %v2126
      %2128 = vdwg.mxu0
      %v2129 = vadd.f32 %v1907, %v2050
      %v2130 = vadd.f32 %v1908, %v2052
      %v2131 = vadd.f32 %v1909, %v2055
      %v2132 = vadd.f32 %v1910, %v2057
      %v2133 = vadd.f32 %v1911, %v2060
      %v2134 = vadd.f32 %v1912, %v2062
      %v2135 = vadd.f32 %v1913, %v2065
      %v2136 = vadd.f32 %v1914, %v2067
      %v2137 = vadd.f32 %v1915, %v2070
      %v2138 = vadd.f32 %v1916, %v2072
      %v2139 = vadd.f32 %v1917, %v2075
      %v2140 = vadd.f32 %v1918, %v2077
      %v2141 = vadd.f32 %v1919, %v2080
      %v2142 = vadd.f32 %v1920, %v2082
      %v2143 = vadd.f32 %v1921, %v2085
      %v2144 = vadd.f32 %v1922, %v2087
      %v2145 = vadd.f32 %v1923, %v2090
      %v2146 = vadd.f32 %v1924, %v2092
      %v2147 = vadd.f32 %v1925, %v2095
      %v2148 = vadd.f32 %v1926, %v2097
      %v2149 = vadd.f32 %v1927, %v2100
      %v2150 = vadd.f32 %v1928, %v2102
      %v2151 = vadd.f32 %v1929, %v2105
      %v2152 = vadd.f32 %v1930, %v2107
      %v2153 = vadd.f32 %v1931, %v2110
      %v2154 = vadd.f32 %v1932, %v2112
      %v2155 = vadd.f32 %v1933, %v2115
      %v2156 = vadd.f32 %v1934, %v2117
      %v2157 = vadd.f32 %v1935, %v2120
      %v2158 = vadd.f32 %v1936, %v2122
      %v2159 = vadd.f32 %v1937, %v2125
      %v2160 = vadd.f32 %v1938, %v2127
      // Predicated region
      $region41: #{multires_block_forward.8} parent=35 // pred_check
        %p2161 = pneg %p215
      $region42: #{multires_block_forward.8} parent=35 // pred_check_branch
        %2163 = sbr.rel (%p2161) target = $region44
      $region43: #{multires_block_forward.8} parent=35 // pred_region
        %v2164 = vld [vmem:[#allocation2] sm:$0x1]
        %vm2165 = vcmask 7168
        %v2166 = vsel %vm2165, %v2129, 0.0
        %v2167 = vsel %vm2165, %v2130, 0.0
        %v2168 = vadd.f32 %v2166, %v2167
        %v2169 = vsel %vm2165, %v2131, 0.0
        %v2170 = vadd.f32 %v2168, %v2169
        %v2171 = vsel %vm2165, %v2132, 0.0
        %v2172 = vadd.f32 %v2170, %v2171
        %v2173 = vsel %vm2165, %v2133, 0.0
        %v2174 = vadd.f32 %v2172, %v2173
        %v2175 = vsel %vm2165, %v2134, 0.0
        %v2176 = vadd.f32 %v2174, %v2175
        %v2177 = vsel %vm2165, %v2135, 0.0
        %v2178 = vadd.f32 %v2176, %v2177
        %v2179 = vsel %vm2165, %v2136, 0.0
        %v2180 = vadd.f32 %v2178, %v2179
        %v2181 = vsel %vm2165, %v2137, 0.0
        %v2182 = vadd.f32 %v2180, %v2181
        %v2183 = vsel %vm2165, %v2138, 0.0
        %v2184 = vadd.f32 %v2182, %v2183
        %v2185 = vsel %vm2165, %v2139, 0.0
        %v2186 = vadd.f32 %v2184, %v2185
        %v2187 = vsel %vm2165, %v2140, 0.0
        %v2188 = vadd.f32 %v2186, %v2187
        %v2189 = vsel %vm2165, %v2141, 0.0
        %v2190 = vadd.f32 %v2188, %v2189
        %v2191 = vsel %vm2165, %v2142, 0.0
        %v2192 = vadd.f32 %v2190, %v2191
        %v2193 = vsel %vm2165, %v2143, 0.0
        %v2194 = vadd.f32 %v2192, %v2193
        %v2195 = vsel %vm2165, %v2144, 0.0
        %v2196 = vadd.f32 %v2194, %v2195
        %v2197 = vsel %vm2165, %v2145, 0.0
        %v2198 = vadd.f32 %v2196, %v2197
        %v2199 = vsel %vm2165, %v2146, 0.0
        %v2200 = vadd.f32 %v2198, %v2199
        %v2201 = vsel %vm2165, %v2147, 0.0
        %v2202 = vadd.f32 %v2200, %v2201
        %v2203 = vsel %vm2165, %v2148, 0.0
        %v2204 = vadd.f32 %v2202, %v2203
        %v2205 = vsel %vm2165, %v2149, 0.0
        %v2206 = vadd.f32 %v2204, %v2205
        %v2207 = vsel %vm2165, %v2150, 0.0
        %v2208 = vadd.f32 %v2206, %v2207
        %v2209 = vsel %vm2165, %v2151, 0.0
        %v2210 = vadd.f32 %v2208, %v2209
        %v2211 = vsel %vm2165, %v2152, 0.0
        %v2212 = vadd.f32 %v2210, %v2211
        %v2213 = vsel %vm2165, %v2153, 0.0
        %v2214 = vadd.f32 %v2212, %v2213
        %v2215 = vsel %vm2165, %v2154, 0.0
        %v2216 = vadd.f32 %v2214, %v2215
        %v2217 = vsel %vm2165, %v2155, 0.0
        %v2218 = vadd.f32 %v2216, %v2217
        %v2219 = vsel %vm2165, %v2156, 0.0
        %v2220 = vadd.f32 %v2218, %v2219
        %v2221 = vsel %vm2165, %v2157, 0.0
        %v2222 = vadd.f32 %v2220, %v2221
        %v2223 = vsel %vm2165, %v2158, 0.0
        %v2224 = vadd.f32 %v2222, %v2223
        %v2225 = vsel %vm2165, %v2159, 0.0
        %v2226 = vadd.f32 %v2224, %v2225
        %v2227 = vsel %vm2165, %v2160, 0.0
        %v2228 = vadd.f32 %v2226, %v2227
        %v2229 = vrot.slane %v2228, 4
        %v2230 = vadd.f32 %v2228, %v2229
        %v2231 = vrot.slane %v2230, 2
        %v2232 = vadd.f32 %v2230, %v2231
        %v2233 = vrot.slane %v2232, 1
        %v2234 = vadd.f32 %v2232, %v2233
        %v2235 = vadd.f32 %v2164, %v2234
        %vm2236 = vcmask 0
        %2237 = vst.msk [vmem:[#allocation2] sm:$0x1] %vm2236, %v2235
        %v2238 = vld [vmem:[#allocation3] sm:$0x1]
        %v2239 = vmul.f32 %v2129, %v2129
        %v2240 = vmul.f32 %v2130, %v2130
        %v2241 = vmul.f32 %v2131, %v2131
        %v2242 = vmul.f32 %v2132, %v2132
        %v2243 = vmul.f32 %v2133, %v2133
        %v2244 = vmul.f32 %v2134, %v2134
        %v2245 = vmul.f32 %v2135, %v2135
        %v2246 = vmul.f32 %v2136, %v2136
        %v2247 = vmul.f32 %v2137, %v2137
        %v2248 = vmul.f32 %v2138, %v2138
        %v2249 = vmul.f32 %v2139, %v2139
        %v2250 = vmul.f32 %v2140, %v2140
        %v2251 = vmul.f32 %v2141, %v2141
        %v2252 = vmul.f32 %v2142, %v2142
        %v2253 = vmul.f32 %v2143, %v2143
        %v2254 = vmul.f32 %v2144, %v2144
        %v2255 = vmul.f32 %v2145, %v2145
        %v2256 = vmul.f32 %v2146, %v2146
        %v2257 = vmul.f32 %v2147, %v2147
        %v2258 = vmul.f32 %v2148, %v2148
        %v2259 = vmul.f32 %v2149, %v2149
        %v2260 = vmul.f32 %v2150, %v2150
        %v2261 = vmul.f32 %v2151, %v2151
        %v2262 = vmul.f32 %v2152, %v2152
        %v2263 = vmul.f32 %v2153, %v2153
        %v2264 = vmul.f32 %v2154, %v2154
        %v2265 = vmul.f32 %v2155, %v2155
        %v2266 = vmul.f32 %v2156, %v2156
        %v2267 = vmul.f32 %v2157, %v2157
        %v2268 = vmul.f32 %v2158, %v2158
        %v2269 = vmul.f32 %v2159, %v2159
        %v2270 = vmul.f32 %v2160, %v2160
        %v2271 = vsel %vm2165, %v2239, 0.0
        %v2272 = vsel %vm2165, %v2240, 0.0
        %v2273 = vadd.f32 %v2271, %v2272
        %v2274 = vsel %vm2165, %v2241, 0.0
        %v2275 = vadd.f32 %v2273, %v2274
        %v2276 = vsel %vm2165, %v2242, 0.0
        %v2277 = vadd.f32 %v2275, %v2276
        %v2278 = vsel %vm2165, %v2243, 0.0
        %v2279 = vadd.f32 %v2277, %v2278
        %v2280 = vsel %vm2165, %v2244, 0.0
        %v2281 = vadd.f32 %v2279, %v2280
        %v2282 = vsel %vm2165, %v2245, 0.0
        %v2283 = vadd.f32 %v2281, %v2282
        %v2284 = vsel %vm2165, %v2246, 0.0
        %v2285 = vadd.f32 %v2283, %v2284
        %v2286 = vsel %vm2165, %v2247, 0.0
        %v2287 = vadd.f32 %v2285, %v2286
        %v2288 = vsel %vm2165, %v2248, 0.0
        %v2289 = vadd.f32 %v2287, %v2288
        %v2290 = vsel %vm2165, %v2249, 0.0
        %v2291 = vadd.f32 %v2289, %v2290
        %v2292 = vsel %vm2165, %v2250, 0.0
        %v2293 = vadd.f32 %v2291, %v2292
        %v2294 = vsel %vm2165, %v2251, 0.0
        %v2295 = vadd.f32 %v2293, %v2294
        %v2296 = vsel %vm2165, %v2252, 0.0
        %v2297 = vadd.f32 %v2295, %v2296
        %v2298 = vsel %vm2165, %v2253, 0.0
        %v2299 = vadd.f32 %v2297, %v2298
        %v2300 = vsel %vm2165, %v2254, 0.0
        %v2301 = vadd.f32 %v2299, %v2300
        %v2302 = vsel %vm2165, %v2255, 0.0
        %v2303 = vadd.f32 %v2301, %v2302
        %v2304 = vsel %vm2165, %v2256, 0.0
        %v2305 = vadd.f32 %v2303, %v2304
        %v2306 = vsel %vm2165, %v2257, 0.0
        %v2307 = vadd.f32 %v2305, %v2306
        %v2308 = vsel %vm2165, %v2258, 0.0
        %v2309 = vadd.f32 %v2307, %v2308
        %v2310 = vsel %vm2165, %v2259, 0.0
        %v2311 = vadd.f32 %v2309, %v2310
        %v2312 = vsel %vm2165, %v2260, 0.0
        %v2313 = vadd.f32 %v2311, %v2312
        %v2314 = vsel %vm2165, %v2261, 0.0
        %v2315 = vadd.f32 %v2313, %v2314
        %v2316 = vsel %vm2165, %v2262, 0.0
        %v2317 = vadd.f32 %v2315, %v2316
        %v2318 = vsel %vm2165, %v2263, 0.0
        %v2319 = vadd.f32 %v2317, %v2318
        %v2320 = vsel %vm2165, %v2264, 0.0
        %v2321 = vadd.f32 %v2319, %v2320
        %v2322 = vsel %vm2165, %v2265, 0.0
        %v2323 = vadd.f32 %v2321, %v2322
        %v2324 = vsel %vm2165, %v2266, 0.0
        %v2325 = vadd.f32 %v2323, %v2324
        %v2326 = vsel %vm2165, %v2267, 0.0
        %v2327 = vadd.f32 %v2325, %v2326
        %v2328 = vsel %vm2165, %v2268, 0.0
        %v2329 = vadd.f32 %v2327, %v2328
        %v2330 = vsel %vm2165, %v2269, 0.0
        %v2331 = vadd.f32 %v2329, %v2330
        %v2332 = vsel %vm2165, %v2270, 0.0
        %v2333 = vadd.f32 %v2331, %v2332
        %v2334 = vrot.slane %v2333, 4
        %v2335 = vadd.f32 %v2333, %v2334
        %v2336 = vrot.slane %v2335, 2
        %v2337 = vadd.f32 %v2335, %v2336
        %v2338 = vrot.slane %v2337, 1
        %v2339 = vadd.f32 %v2337, %v2338
        %v2340 = vadd.f32 %v2238, %v2339
        %2341 = vst.msk [vmem:[#allocation3] sm:$0x1] %vm2236, %v2340
        %2342 = vst.msk [vmem:[%s213] sm:$0xff] %vm2165, %v2129
        %2343 = vst.msk [vmem:[%s213 + $0x8] sm:$0xff] %vm2165, %v2130
        %2344 = vst.msk [vmem:[%s213 + $0x10] sm:$0xff] %vm2165, %v2131
        %2345 = vst.msk [vmem:[%s213 + $0x18] sm:$0xff] %vm2165, %v2132
        %2346 = vst.msk [vmem:[%s213 + $0x20] sm:$0xff] %vm2165, %v2133
        %2347 = vst.msk [vmem:[%s213 + $0x28] sm:$0xff] %vm2165, %v2134
        %2348 = vst.msk [vmem:[%s213 + $0x30] sm:$0xff] %vm2165, %v2135
        %2349 = vst.msk [vmem:[%s213 + $0x38] sm:$0xff] %vm2165, %v2136
        %2350 = vst.msk [vmem:[%s213 + $0x40] sm:$0xff] %vm2165, %v2137
        %2351 = vst.msk [vmem:[%s213 + $0x48] sm:$0xff] %vm2165, %v2138
        %2352 = vst.msk [vmem:[%s213 + $0x50] sm:$0xff] %vm2165, %v2139
        %2353 = vst.msk [vmem:[%s213 + $0x58] sm:$0xff] %vm2165, %v2140
        %2354 = vst.msk [vmem:[%s213 + $0x60] sm:$0xff] %vm2165, %v2141
        %2355 = vst.msk [vmem:[%s213 + $0x68] sm:$0xff] %vm2165, %v2142
        %2356 = vst.msk [vmem:[%s213 + $0x70] sm:$0xff] %vm2165, %v2143
        %2357 = vst.msk [vmem:[%s213 + $0x78] sm:$0xff] %vm2165, %v2144
        %2358 = vst.msk [vmem:[%s213 + $0x80] sm:$0xff] %vm2165, %v2145
        %2359 = vst.msk [vmem:[%s213 + $0x88] sm:$0xff] %vm2165, %v2146
        %2360 = vst.msk [vmem:[%s213 + $0x90] sm:$0xff] %vm2165, %v2147
        %2361 = vst.msk [vmem:[%s213 + $0x98] sm:$0xff] %vm2165, %v2148
        %2362 = vst.msk [vmem:[%s213 + $0xa0] sm:$0xff] %vm2165, %v2149
        %2363 = vst.msk [vmem:[%s213 + $0xa8] sm:$0xff] %vm2165, %v2150
        %2364 = vst.msk [vmem:[%s213 + $0xb0] sm:$0xff] %vm2165, %v2151
        %2365 = vst.msk [vmem:[%s213 + $0xb8] sm:$0xff] %vm2165, %v2152
        %2366 = vst.msk [vmem:[%s213 + $0xc0] sm:$0xff] %vm2165, %v2153
        %2367 = vst.msk [vmem:[%s213 + $0xc8] sm:$0xff] %vm2165, %v2154
        %2368 = vst.msk [vmem:[%s213 + $0xd0] sm:$0xff] %vm2165, %v2155
        %2369 = vst.msk [vmem:[%s213 + $0xd8] sm:$0xff] %vm2165, %v2156
        %2370 = vst.msk [vmem:[%s213 + $0xe0] sm:$0xff] %vm2165, %v2157
        %2371 = vst.msk [vmem:[%s213 + $0xe8] sm:$0xff] %vm2165, %v2158
        %2372 = vst.msk [vmem:[%s213 + $0xf0] sm:$0xff] %vm2165, %v2159
        %2373 = vst.msk [vmem:[%s213 + $0xf8] sm:$0xff] %vm2165, %v2160
      $region44: #{multires_block_forward.8} parent=35 // pred_fallthru
        _
      %p2374 = scmp.eq.s32.totalorder %s23, 1
      // Predicated region
      $region45: #{multires_block_forward.8} parent=35 // pred_check
        %p2375 = pneg %p2374
      $region46: #{multires_block_forward.8} parent=35 // pred_check_branch
        %2377 = sbr.rel (%p2375) target = $region48
      $region47: #{multires_block_forward.8} parent=35 // pred_region
        %v2378 = vld [vmem:[#allocation2] sm:$0x1]
        %v2379 = vmul.f32 %v2378, 0.001953125
        %v2380 = vld [vmem:[#allocation3] sm:$0x1]
        %v2381 = vmul.f32 %v2380, 0.001953125
        %v2382 = vmul.f32 %v2379, %v2379
        %v2383 = vsub.f32 %v2381, %v2382
        %v2384 = vadd.f32 %v2383, 1e-05
        %v2385 = vrsqrt.pop %v2384
        %v2386 = vmul.f32 %v2385, %v2384
        %v2387 = vmul.f32 %v2386, %v2385
        %v2388 = vmul.f32 0.5, %v2387
        %v2389 = vsub.f32 1.5, %v2388
        %v2390 = vmul.f32 %v2385, %v2389
        %vm2391 = vweird.f32 %v2384
        %vm2392 = vweird.f32 %v2385
        %vm2393 = vmor %vm2391, %vm2392
        %v2394 = vsel %vm2393, %v2385, %v2390
        %v2395 = vld [vmem:[#allocation4] sm:$0x1]
        %v2396 = vmul.f32 %v2394, %v2395
        %v2398 = vperm.slane %v2379, 0
        %v2400 = vsub.f32 %v2129, %v2398
        %v2401 = vsub.f32 %v2130, %v2398
        %v2402 = vsub.f32 %v2131, %v2398
        %v2403 = vsub.f32 %v2132, %v2398
        %v2404 = vsub.f32 %v2133, %v2398
        %v2405 = vsub.f32 %v2134, %v2398
        %v2406 = vsub.f32 %v2135, %v2398
        %v2407 = vsub.f32 %v2136, %v2398
        %v2408 = vsub.f32 %v2137, %v2398
        %v2409 = vsub.f32 %v2138, %v2398
        %v2410 = vsub.f32 %v2139, %v2398
        %v2411 = vsub.f32 %v2140, %v2398
        %v2412 = vsub.f32 %v2141, %v2398
        %v2413 = vsub.f32 %v2142, %v2398
        %v2414 = vsub.f32 %v2143, %v2398
        %v2415 = vsub.f32 %v2144, %v2398
        %v2416 = vsub.f32 %v2145, %v2398
        %v2417 = vsub.f32 %v2146, %v2398
        %v2418 = vsub.f32 %v2147, %v2398
        %v2419 = vsub.f32 %v2148, %v2398
        %v2420 = vsub.f32 %v2149, %v2398
        %v2421 = vsub.f32 %v2150, %v2398
        %v2422 = vsub.f32 %v2151, %v2398
        %v2423 = vsub.f32 %v2152, %v2398
        %v2424 = vsub.f32 %v2153, %v2398
        %v2425 = vsub.f32 %v2154, %v2398
        %v2426 = vsub.f32 %v2155, %v2398
        %v2427 = vsub.f32 %v2156, %v2398
        %v2428 = vsub.f32 %v2157, %v2398
        %v2429 = vsub.f32 %v2158, %v2398
        %v2430 = vsub.f32 %v2159, %v2398
        %v2431 = vsub.f32 %v2160, %v2398
        %v2433 = vperm.slane %v2396, 0
        %v2435 = vmul.f32 %v2400, %v2433
        %v2436 = vmul.f32 %v2401, %v2433
        %v2437 = vmul.f32 %v2402, %v2433
        %v2438 = vmul.f32 %v2403, %v2433
        %v2439 = vmul.f32 %v2404, %v2433
        %v2440 = vmul.f32 %v2405, %v2433
        %v2441 = vmul.f32 %v2406, %v2433
        %v2442 = vmul.f32 %v2407, %v2433
        %v2443 = vmul.f32 %v2408, %v2433
        %v2444 = vmul.f32 %v2409, %v2433
        %v2445 = vmul.f32 %v2410, %v2433
        %v2446 = vmul.f32 %v2411, %v2433
        %v2447 = vmul.f32 %v2412, %v2433
        %v2448 = vmul.f32 %v2413, %v2433
        %v2449 = vmul.f32 %v2414, %v2433
        %v2450 = vmul.f32 %v2415, %v2433
        %v2451 = vmul.f32 %v2416, %v2433
        %v2452 = vmul.f32 %v2417, %v2433
        %v2453 = vmul.f32 %v2418, %v2433
        %v2454 = vmul.f32 %v2419, %v2433
        %v2455 = vmul.f32 %v2420, %v2433
        %v2456 = vmul.f32 %v2421, %v2433
        %v2457 = vmul.f32 %v2422, %v2433
        %v2458 = vmul.f32 %v2423, %v2433
        %v2459 = vmul.f32 %v2424, %v2433
        %v2460 = vmul.f32 %v2425, %v2433
        %v2461 = vmul.f32 %v2426, %v2433
        %v2462 = vmul.f32 %v2427, %v2433
        %v2463 = vmul.f32 %v2428, %v2433
        %v2464 = vmul.f32 %v2429, %v2433
        %v2465 = vmul.f32 %v2430, %v2433
        %v2466 = vmul.f32 %v2431, %v2433
        %v2467 = vld [vmem:[#allocation5] sm:$0x1]
        %v2469 = vperm.slane %v2467, 0
        %v2471 = vadd.f32 %v2435, %v2469
        %v2472 = vadd.f32 %v2436, %v2469
        %v2473 = vadd.f32 %v2437, %v2469
        %v2474 = vadd.f32 %v2438, %v2469
        %v2475 = vadd.f32 %v2439, %v2469
        %v2476 = vadd.f32 %v2440, %v2469
        %v2477 = vadd.f32 %v2441, %v2469
        %v2478 = vadd.f32 %v2442, %v2469
        %v2479 = vadd.f32 %v2443, %v2469
        %v2480 = vadd.f32 %v2444, %v2469
        %v2481 = vadd.f32 %v2445, %v2469
        %v2482 = vadd.f32 %v2446, %v2469
        %v2483 = vadd.f32 %v2447, %v2469
        %v2484 = vadd.f32 %v2448, %v2469
        %v2485 = vadd.f32 %v2449, %v2469
        %v2486 = vadd.f32 %v2450, %v2469
        %v2487 = vadd.f32 %v2451, %v2469
        %v2488 = vadd.f32 %v2452, %v2469
        %v2489 = vadd.f32 %v2453, %v2469
        %v2490 = vadd.f32 %v2454, %v2469
        %v2491 = vadd.f32 %v2455, %v2469
        %v2492 = vadd.f32 %v2456, %v2469
        %v2493 = vadd.f32 %v2457, %v2469
        %v2494 = vadd.f32 %v2458, %v2469
        %v2495 = vadd.f32 %v2459, %v2469
        %v2496 = vadd.f32 %v2460, %v2469
        %v2497 = vadd.f32 %v2461, %v2469
        %v2498 = vadd.f32 %v2462, %v2469
        %v2499 = vadd.f32 %v2463, %v2469
        %v2500 = vadd.f32 %v2464, %v2469
        %v2501 = vadd.f32 %v2465, %v2469
        %v2502 = vadd.f32 %v2466, %v2469
        %v2503 = vmax.f32 %v2471, 0.0
        %v2504 = vmax.f32 %v2472, 0.0
        %v2505 = vmax.f32 %v2473, 0.0
        %v2506 = vmax.f32 %v2474, 0.0
        %v2507 = vmax.f32 %v2475, 0.0
        %v2508 = vmax.f32 %v2476, 0.0
        %v2509 = vmax.f32 %v2477, 0.0
        %v2510 = vmax.f32 %v2478, 0.0
        %v2511 = vmax.f32 %v2479, 0.0
        %v2512 = vmax.f32 %v2480, 0.0
        %v2513 = vmax.f32 %v2481, 0.0
        %v2514 = vmax.f32 %v2482, 0.0
        %v2515 = vmax.f32 %v2483, 0.0
        %v2516 = vmax.f32 %v2484, 0.0
        %v2517 = vmax.f32 %v2485, 0.0
        %v2518 = vmax.f32 %v2486, 0.0
        %v2519 = vmax.f32 %v2487, 0.0
        %v2520 = vmax.f32 %v2488, 0.0
        %v2521 = vmax.f32 %v2489, 0.0
        %v2522 = vmax.f32 %v2490, 0.0
        %v2523 = vmax.f32 %v2491, 0.0
        %v2524 = vmax.f32 %v2492, 0.0
        %v2525 = vmax.f32 %v2493, 0.0
        %v2526 = vmax.f32 %v2494, 0.0
        %v2527 = vmax.f32 %v2495, 0.0
        %v2528 = vmax.f32 %v2496, 0.0
        %v2529 = vmax.f32 %v2497, 0.0
        %v2530 = vmax.f32 %v2498, 0.0
        %v2531 = vmax.f32 %v2499, 0.0
        %v2532 = vmax.f32 %v2500, 0.0
        %v2533 = vmax.f32 %v2501, 0.0
        %v2534 = vmax.f32 %v2502, 0.0
        %vm2535 = vcmask 7168
        %2536 = vst.msk [vmem:[%s213] sm:$0xff] %vm2535, %v2503
        %2537 = vst.msk [vmem:[%s213 + $0x8] sm:$0xff] %vm2535, %v2504
        %2538 = vst.msk [vmem:[%s213 + $0x10] sm:$0xff] %vm2535, %v2505
        %2539 = vst.msk [vmem:[%s213 + $0x18] sm:$0xff] %vm2535, %v2506
        %2540 = vst.msk [vmem:[%s213 + $0x20] sm:$0xff] %vm2535, %v2507
        %2541 = vst.msk [vmem:[%s213 + $0x28] sm:$0xff] %vm2535, %v2508
        %2542 = vst.msk [vmem:[%s213 + $0x30] sm:$0xff] %vm2535, %v2509
        %2543 = vst.msk [vmem:[%s213 + $0x38] sm:$0xff] %vm2535, %v2510
        %2544 = vst.msk [vmem:[%s213 + $0x40] sm:$0xff] %vm2535, %v2511
        %2545 = vst.msk [vmem:[%s213 + $0x48] sm:$0xff] %vm2535, %v2512
        %2546 = vst.msk [vmem:[%s213 + $0x50] sm:$0xff] %vm2535, %v2513
        %2547 = vst.msk [vmem:[%s213 + $0x58] sm:$0xff] %vm2535, %v2514
        %2548 = vst.msk [vmem:[%s213 + $0x60] sm:$0xff] %vm2535, %v2515
        %2549 = vst.msk [vmem:[%s213 + $0x68] sm:$0xff] %vm2535, %v2516
        %2550 = vst.msk [vmem:[%s213 + $0x70] sm:$0xff] %vm2535, %v2517
        %2551 = vst.msk [vmem:[%s213 + $0x78] sm:$0xff] %vm2535, %v2518
        %2552 = vst.msk [vmem:[%s213 + $0x80] sm:$0xff] %vm2535, %v2519
        %2553 = vst.msk [vmem:[%s213 + $0x88] sm:$0xff] %vm2535, %v2520
        %2554 = vst.msk [vmem:[%s213 + $0x90] sm:$0xff] %vm2535, %v2521
        %2555 = vst.msk [vmem:[%s213 + $0x98] sm:$0xff] %vm2535, %v2522
        %2556 = vst.msk [vmem:[%s213 + $0xa0] sm:$0xff] %vm2535, %v2523
        %2557 = vst.msk [vmem:[%s213 + $0xa8] sm:$0xff] %vm2535, %v2524
        %2558 = vst.msk [vmem:[%s213 + $0xb0] sm:$0xff] %vm2535, %v2525
        %2559 = vst.msk [vmem:[%s213 + $0xb8] sm:$0xff] %vm2535, %v2526
        %2560 = vst.msk [vmem:[%s213 + $0xc0] sm:$0xff] %vm2535, %v2527
        %2561 = vst.msk [vmem:[%s213 + $0xc8] sm:$0xff] %vm2535, %v2528
        %2562 = vst.msk [vmem:[%s213 + $0xd0] sm:$0xff] %vm2535, %v2529
        %2563 = vst.msk [vmem:[%s213 + $0xd8] sm:$0xff] %vm2535, %v2530
        %2564 = vst.msk [vmem:[%s213 + $0xe0] sm:$0xff] %vm2535, %v2531
        %2565 = vst.msk [vmem:[%s213 + $0xe8] sm:$0xff] %vm2535, %v2532
        %2566 = vst.msk [vmem:[%s213 + $0xf0] sm:$0xff] %vm2535, %v2533
        %2567 = vst.msk [vmem:[%s213 + $0xf8] sm:$0xff] %vm2535, %v2534
      $region48: #{multires_block_forward.8} parent=35 // pred_fallthru
        _
      %p2568 = scmp.lt.s32.totalorder %s24, 1
      %s2569 = scalar_select %p2568, %s24, 1
      %s2570 = smul.addr %s2569, 32
      %s2571 = smul.addr %s2570, 8
      %s2572 = scalar_lea.vmem %s4, %s2571
      // Predicated region
      $region49: #{multires_block_forward.8} parent=35 // pred_check
        %p2573 = pneg %p138
      $region50: #{multires_block_forward.8} parent=35 // pred_check_branch
        %2575 = sbr.rel (%p2573) target = $region52
      $region51: #{multires_block_forward.8} parent=35 // pred_region
        _
      $region52: #{multires_block_forward.8} parent=35 // pred_fallthru
        _
    $region36: #{multires_block_forward.8} parent=5 // pred_fallthru
      _
    %p2576 = scmp.le.s32.totalorder 2, %s14
    // Predicated region
    $region53: #{multires_block_forward.8} parent=5 // pred_check
      %p2577 = pneg %p2576
    $region54: #{multires_block_forward.8} parent=5 // pred_check_branch
      %2579 = sbr.rel (%p2577) target = $region56
    $region55: #{multires_block_forward.8} parent=5 // pred_region
      %s2580 = ssub.s32 %s14, 2
      // Predicated region
      $region57: #{multires_block_forward.8} parent=55 // pred_check
        %p2581 = pneg %p144
      $region58: #{multires_block_forward.8} parent=55 // pred_check_branch
        %2583 = sbr.rel (%p2581) target = $region60
      $region59: #{multires_block_forward.8} parent=55 // pred_region
        %p2584 = scmp.lt.s32.totalorder %s26, 1
        %s2585 = scalar_select %p2584, %s26, 1
        %s2586 = smul.addr %s2585, 32
        %s2587 = smul.addr %s2586, 8
        %s2588 = scalar_lea.vmem %s4, %s2587
      $region60: #{multires_block_forward.8} parent=55 // pred_fallthru
        _
    $region56: #{multires_block_forward.8} parent=5 // pred_fallthru
      _
  $region6: #{multires_block_forward.8} parent=0 // loop_footer
    %s18 = sadd.s32 1, %s14
  $region7: #{multires_block_forward.8} parent=0 // loop_footer_branch
    %13 = sbr.rel target = $region3
  $region8: #{multires_block_forward.8} parent=0 // loop_exit
    _

// kernel: multires_block_forward.9
$region0: #{multires_block_forward.9}
  #allocation0 [shape = 'u32[]', space=smem, size = 0x4, offset = 0x4, fixed_abs, tag = 'smem constant byte address 0x4 - core index']
  #allocation1 [shape = 'u32[72,128]{1,0:T(1,128)}', space=vmem, size = 0x9000, scoped, tag = 'internal scratch']
  #allocation2 [shape = 'f32[1,16]{1,0:T(1,128)}', space=vmem, size = 0x200, scoped, tag = 'scratch operand']
  #allocation3 [shape = 'f32[1,16]{1,0:T(1,128)}', space=vmem, size = 0x200, scoped, tag = 'scratch operand']
  %s0 = inlined_call_operand.vmem [shape: f32[2,18,18,1], index: 0, kind: input, shape index: {}]
  %s1 = inlined_call_operand.vmem [shape: bf16[9,1,16], index: 1, kind: input, shape index: {}]
  %s2 = inlined_call_operand.vmem [shape: f32[1,16], index: 2, kind: input, shape index: {}]
  %s3 = inlined_call_operand.vmem [shape: f32[1,16], index: 3, kind: input, shape index: {}]
  %s4 = inlined_call_operand.vmem [shape: f32[2,256,16], index: 4, kind: output, shape index: {}]
  %s5 = sld [smem:[#allocation0]]
  $region61: #{multires_block_forward.9} parent=0
    _
  %s7 = ssub.s32 1, %s5
  %s8 = scalar_select 0, %s7, %s5
  loop: start=0, step=1, limit=6
  $region2: #{multires_block_forward.9} parent=0 // loop_pre_header
    _
  $region3: #{multires_block_forward.9} parent=0 // loop_header
    %s10 = sphi 0, %s14
    %p11 = scmp.ge.s32.totalorder %s10, 6
    %s17 = sphi 0, %s29
    %s18 = sphi 0, %s25
    %s19 = sphi 0, %s17
    %s20 = sphi 0, %s18
    %s21 = sphi 0, %s19
    %s22 = sphi 0, %s20
    %s32 = sphi 0, %s34
    %s35 = sphi 0, %s32
    %s36 = sphi 0, %s35
    %s52 = sphi 0, %s36
    %s56 = sphi 0, %s56
    %s58 = sphi 0, %s56
    %s59 = sphi 0, %s58
    %s73 = sphi 0, %s59
    %s77 = sphi 0, %s77
    %s79 = sphi 0, %s77
    %s80 = sphi 0, %s79
    %s94 = sphi 0, %s80
    %s98 = sphi 0, %s98
    %s100 = sphi 0, %s98
    %s101 = sphi 0, %s100
    %s115 = sphi 0, %s101
    %s121 = sphi 0, %s123
    %s124 = sphi 0, %s121
    %s125 = sphi 0, %s124
    %s141 = sphi 0, %s125
  $region4: #{multires_block_forward.9} parent=0 // loop_header_branch
    %13 = sbr.rel (%p11) target = $region8
  $region5: #{multires_block_forward.9} parent=0 // loop_body
    %s15 = ssub.s32 %s10, 1
    %s16 = ssub.s32 %s10, 2
    %s23 = sadd.s32 1, %s18
    %p24 = scmp.ge.s32.totalorder %s23, 2
    %s25 = scalar_select %p24, 0, %s23
    %s26 = sadd.s32 1, %s17
    %s27 = scalar_select %p24, %s26, %s17
    %p28 = scmp.ge.s32.totalorder %s27, 2
    %s29 = scalar_select %p28, 0, %s27
    %s30 = ssub.s32 %s18, %s25
    %p31 = scmp.eq.s32.totalorder %s30, 0
    %s33 = sadd.s32 %s32, 1
    %s34 = scalar_select %p31, %s32, %s33
    %p37 = pneg %p31
    %p38 = scmp.eq.s32.totalorder %s10, 3
    %p39 = por %p37, %p38
    %p40 = scmp.ne.s32.totalorder %s32, %s35
    %p41 = scmp.eq.s32.totalorder %s10, 0
    %p42 = por %p40, %p41
    %p43 = scmp.ne.s32.totalorder %s32, %s35
    %p44 = scmp.eq.s32.totalorder %s15, 3
    %p45 = por %p43, %p44
    %p46 = scmp.ne.s32.totalorder %s35, %s36
    %p47 = scmp.eq.s32.totalorder %s15, 0
    %p48 = por %p46, %p47
    %p49 = scmp.ne.s32.totalorder %s35, %s36
    %p50 = scmp.eq.s32.totalorder %s16, 3
    %p51 = por %p49, %p50
    %p53 = scmp.ne.s32.totalorder %s36, %s52
    %p54 = scmp.eq.s32.totalorder %s16, 0
    %p55 = por %p53, %p54
    %s57 = sadd.s32 %s56, 1
    %p60 = scmp.eq.s32.totalorder %s10, 3
    %p61 = scmp.ne.s32.totalorder %s56, %s58
    %p62 = scmp.eq.s32.totalorder %s10, 0
    %p63 = por %p61, %p62
    %p64 = scmp.ne.s32.totalorder %s56, %s58
    %p65 = scmp.eq.s32.totalorder %s15, 3
    %p66 = por %p64, %p65
    %p67 = scmp.ne.s32.totalorder %s58, %s59
    %p68 = scmp.eq.s32.totalorder %s15, 0
    %p69 = por %p67, %p68
    %p70 = scmp.ne.s32.totalorder %s58, %s59
    %p71 = scmp.eq.s32.totalorder %s16, 3
    %p72 = por %p70, %p71
    %p74 = scmp.ne.s32.totalorder %s59, %s73
    %p75 = scmp.eq.s32.totalorder %s16, 0
    %p76 = por %p74, %p75
    %s78 = sadd.s32 %s77, 1
    %p81 = scmp.eq.s32.totalorder %s10, 3
    %p82 = scmp.ne.s32.totalorder %s77, %s79
    %p83 = scmp.eq.s32.totalorder %s10, 0
    %p84 = por %p82, %p83
    %p85 = scmp.ne.s32.totalorder %s77, %s79
    %p86 = scmp.eq.s32.totalorder %s15, 3
    %p87 = por %p85, %p86
    %p88 = scmp.ne.s32.totalorder %s79, %s80
    %p89 = scmp.eq.s32.totalorder %s15, 0
    %p90 = por %p88, %p89
    %p91 = scmp.ne.s32.totalorder %s79, %s80
    %p92 = scmp.eq.s32.totalorder %s16, 3
    %p93 = por %p91, %p92
    %p95 = scmp.ne.s32.totalorder %s80, %s94
    %p96 = scmp.eq.s32.totalorder %s16, 0
    %p97 = por %p95, %p96
    %s99 = sadd.s32 %s98, 1
    %p102 = scmp.eq.s32.totalorder %s10, 3
    %p103 = scmp.ne.s32.totalorder %s98, %s100
    %p104 = scmp.eq.s32.totalorder %s10, 0
    %p105 = por %p103, %p104
    %p106 = scmp.ne.s32.totalorder %s98, %s100
    %p107 = scmp.eq.s32.totalorder %s15, 3
    %p108 = por %p106, %p107
    %p109 = scmp.ne.s32.totalorder %s100, %s101
    %p110 = scmp.eq.s32.totalorder %s15, 0
    %p111 = por %p109, %p110
    %p112 = scmp.ne.s32.totalorder %s100, %s101
    %p113 = scmp.eq.s32.totalorder %s16, 3
    %p114 = por %p112, %p113
    %p116 = scmp.ne.s32.totalorder %s101, %s115
    %p117 = scmp.eq.s32.totalorder %s16, 0
    %p118 = por %p116, %p117
    %s119 = ssub.s32 %s18, %s25
    %p120 = scmp.eq.s32.totalorder %s119, 0
    %s122 = sadd.s32 %s121, 1
    %s123 = scalar_select %p120, %s121, %s122
    %p126 = pneg %p120
    %p127 = scmp.eq.s32.totalorder %s10, 3
    %p128 = por %p126, %p127
    %p129 = scmp.ne.s32.totalorder %s121, %s124
    %p130 = scmp.eq.s32.totalorder %s10, 0
    %p131 = por %p129, %p130
    %p132 = scmp.ne.s32.totalorder %s121, %s124
    %p133 = scmp.eq.s32.totalorder %s15, 3
    %p134 = por %p132, %p133
    %p135 = scmp.ne.s32.totalorder %s124, %s125
    %p136 = scmp.eq.s32.totalorder %s15, 0
    %p137 = por %p135, %p136
    %p138 = scmp.ne.s32.totalorder %s124, %s125
    %p139 = scmp.eq.s32.totalorder %s16, 3
    %p140 = por %p138, %p139
    %p142 = scmp.ne.s32.totalorder %s125, %s141
    %p143 = scmp.eq.s32.totalorder %s16, 0
    %p144 = por %p142, %p143
    %p145 = scmp.le.s32.totalorder 1, %s10
    %p146 = scmp.lt.s32.totalorder %s10, 5
    %p147 = pnand %p145, %p146
    %p148 = pneg %p147
    // Predicated region
    $region9: #{multires_block_forward.9} parent=5 // pred_check
      _
    $region10: #{multires_block_forward.9} parent=5 // pred_check_branch
      %150 = sbr.rel (%p147) target = $region12
    $region11: #{multires_block_forward.9} parent=5 // pred_region
      %s151 = ssub.s32 %s10, 1
      // Predicated region
      $region13: #{multires_block_forward.9} parent=11 // pred_check
        %p152 = pneg %p69
      $region14: #{multires_block_forward.9} parent=11 // pred_check_branch
        %154 = sbr.rel (%p152) target = $region16
      $region15: #{multires_block_forward.9} parent=11 // pred_region
        _
      $region16: #{multires_block_forward.9} parent=11 // pred_fallthru
        _
      // Predicated region
      $region17: #{multires_block_forward.9} parent=11 // pred_check
        %p155 = pneg %p90
      $region18: #{multires_block_forward.9} parent=11 // pred_check_branch
        %157 = sbr.rel (%p155) target = $region20
      $region19: #{multires_block_forward.9} parent=11 // pred_region
        _
      $region20: #{multires_block_forward.9} parent=11 // pred_fallthru
        _
      // Predicated region
      $region21: #{multires_block_forward.9} parent=11 // pred_check
        %p158 = pneg %p111
      $region22: #{multires_block_forward.9} parent=11 // pred_check_branch
        %160 = sbr.rel (%p158) target = $region24
      $region23: #{multires_block_forward.9} parent=11 // pred_region
        _
      $region24: #{multires_block_forward.9} parent=11 // pred_fallthru
        _
    $region12: #{multires_block_forward.9} parent=5 // pred_fallthru
      _
    %p161 = scmp.lt.s32.totalorder %s10, 4
    // Predicated region
    $region25: #{multires_block_forward.9} parent=5 // pred_check
      %p162 = pneg %p161
    $region26: #{multires_block_forward.9} parent=5 // pred_check_branch
      %164 = sbr.rel (%p162) target = $region28
    $region27: #{multires_block_forward.9} parent=5 // pred_region
      // Predicated region
      $region29: #{multires_block_forward.9} parent=27 // pred_check
        %p165 = pneg %p42
      $region30: #{multires_block_forward.9} parent=27 // pred_check_branch
        %167 = sbr.rel (%p165) target = $region32
      $region31: #{multires_block_forward.9} parent=27 // pred_region
        %p168 = scmp.lt.s32.totalorder %s18, 1
        %s169 = scalar_select %p168, %s18, 1
        %s170 = smul.addr %s169, 54
        %s171 = smul.addr %s170, 8
        %s172 = scalar_lea.vmem %s0, %s171
      $region32: #{multires_block_forward.9} parent=27 // pred_fallthru
        _
    $region28: #{multires_block_forward.9} parent=5 // pred_fallthru
      _
    %p173 = scmp.le.s32.totalorder 1, %s10
    %p174 = scmp.lt.s32.totalorder %s10, 5
    %p175 = pnand %p173, %p174
    %p176 = pneg %p175
    // Predicated region
    $region33: #{multires_block_forward.9} parent=5 // pred_check
      _
    $region34: #{multires_block_forward.9} parent=5 // pred_check_branch
      %178 = sbr.rel (%p175) target = $region36
    $region35: #{multires_block_forward.9} parent=5 // pred_region
      %s179 = ssub.s32 %s10, 1
      %p180 = scmp.lt.s32.totalorder %s20, 1
      %s181 = scalar_select %p180, %s20, 1
      %s182 = smul.addr %s181, 54
      %s183 = smul.addr %s182, 8
      %s184 = scalar_lea.vmem %s0, %s183
      %p185 = pneg %p48
      %p186 = pneg %p45
      %p187 = pneg %p69
      %p188 = pneg %p66
      %p189 = pneg %p90
      %p190 = pneg %p87
      %p191 = pneg %p111
      %p192 = pneg %p108
      %p193 = pneg %p137
      %p194 = pneg %p134
      %p195 = scmp.lt.s32.totalorder %s20, 1
      %s196 = scalar_select %p195, %s20, 1
      %s197 = smul.addr %s196, 32
      %s198 = smul.addr %s197, 8
      %s199 = scalar_lea.vmem %s4, %s198
      %p200 = scmp.lt.s32.totalorder %s20, 1
      %s201 = scalar_select %p200, %s20, 1
      %s202 = smul.addr %s201, 54
      %s203 = smul.addr %s202, 8
      %s204 = scalar_lea.vmem %s0, %s203
      %p205 = scmp.lt.s32.totalorder %s20, 1
      %s206 = scalar_select %p205, %s20, 1
      %s207 = smul.addr %s206, 32
      %s208 = smul.addr %s207, 8
      %s209 = scalar_lea.vmem %s4, %s208
      %p211 = scmp.eq.s32.totalorder %s19, 0
      %p212 = scmp.eq.s32.totalorder %s20, 0
      %p213 = pnand %p211, %p212
      %p214 = pneg %p213
      // Predicated region
      $region37: #{multires_block_forward.9} parent=35 // pred_check
        _
      $region38: #{multires_block_forward.9} parent=35 // pred_check_branch
        %216 = sbr.rel (%p213) target = $region40
      $region39: #{multires_block_forward.9} parent=35 // pred_region
        %vm217 = vcmask 122880
        %218 = vst.msk [vmem:[#allocation2] sm:$0x1] %vm217, 0.0
        %219 = vst.msk [vmem:[#allocation3] sm:$0x1] %vm217, 0.0
      $region40: #{multires_block_forward.9} parent=35 // pred_fallthru
        _
      %v220 = vld [vmem:[%s204] sm:$0xff]
      %v221 = vld [vmem:[%s204 + $0x8] sm:$0xff]
      %v222 = vld [vmem:[%s204 + $0x18] sm:$0xff]
      %v223 = vld [vmem:[%s204 + $0x20] sm:$0xff]
      %v224 = vld [vmem:[%s204 + $0x30] sm:$0xff]
      %v225 = vld [vmem:[%s204 + $0x38] sm:$0xff]
      %v226 = vld [vmem:[%s204 + $0x48] sm:$0xff]
      %v227 = vld [vmem:[%s204 + $0x50] sm:$0xff]
      %v228 = vld [vmem:[%s204 + $0x60] sm:$0xff]
      %v229 = vld [vmem:[%s204 + $0x68] sm:$0xff]
      %v230 = vld [vmem:[%s204 + $0x78] sm:$0xff]
      %v231 = vld [vmem:[%s204 + $0x80] sm:$0xff]
      %v232 = vld [vmem:[%s204 + $0x90] sm:$0xff]
      %v233 = vld [vmem:[%s204 + $0x98] sm:$0xff]
      %v234 = vld [vmem:[%s204 + $0xa8] sm:$0xff]
      %v235 = vld [vmem:[%s204 + $0xb0] sm:$0xff]
      %v236 = vld [vmem:[%s204 + $0xc0] sm:$0xff]
      %v237 = vld [vmem:[%s204 + $0xc8] sm:$0xff]
      %v238 = vld [vmem:[%s204 + $0xd8] sm:$0xff]
      %v239 = vld [vmem:[%s204 + $0xe0] sm:$0xff]
      %v240 = vld [vmem:[%s204 + $0xf0] sm:$0xff]
      %v241 = vld [vmem:[%s204 + $0xf8] sm:$0xff]
      %v242 = vld [vmem:[%s204 + $0x108] sm:$0xff]
      %v243 = vld [vmem:[%s204 + $0x110] sm:$0xff]
      %v244 = vld [vmem:[%s204 + $0x120] sm:$0xff]
      %v245 = vld [vmem:[%s204 + $0x128] sm:$0xff]
      %v246 = vld [vmem:[%s204 + $0x138] sm:$0xff]
      %v247 = vld [vmem:[%s204 + $0x140] sm:$0xff]
      %v248 = vld [vmem:[%s204 + $0x150] sm:$0xff]
      %v249 = vld [vmem:[%s204 + $0x158] sm:$0xff]
      %v250 = vld [vmem:[%s204 + $0x168] sm:$0xff]
      %v251 = vld [vmem:[%s204 + $0x170] sm:$0xff]
      %v252 = vpack.c.bf16 %v221, %v220
      %v253 = vpack.c.bf16 %v223, %v222
      %v254 = vpack.c.bf16 %v225, %v224
      %v255 = vpack.c.bf16 %v227, %v226
      %v256 = vpack.c.bf16 %v229, %v228
      %v257 = vpack.c.bf16 %v231, %v230
      %v258 = vpack.c.bf16 %v233, %v232
      %v259 = vpack.c.bf16 %v235, %v234
      %v260 = vpack.c.bf16 %v237, %v236
      %v261 = vpack.c.bf16 %v239, %v238
      %v262 = vpack.c.bf16 %v241, %v240
      %v263 = vpack.c.bf16 %v243, %v242
      %v264 = vpack.c.bf16 %v245, %v244
      %v265 = vpack.c.bf16 %v247, %v246
      %v266 = vpack.c.bf16 %v249, %v248
      %v267 = vpack.c.bf16 %v251, %v250
      %v268 = vld [vmem:[%s1] sm:$0x1]
      %v269 = vld [vmem:[%s204 + $0x1] sm:$0xff]
      %v270 = vld [vmem:[%s204 + $0x9] sm:$0xff]
      %v271 = vld [vmem:[%s204 + $0x19] sm:$0xff]
      %v272 = vld [vmem:[%s204 + $0x21] sm:$0xff]
      %v273 = vld [vmem:[%s204 + $0x31] sm:$0xff]
      %v274 = vld [vmem:[%s204 + $0x39] sm:$0xff]
      %v275 = vld [vmem:[%s204 + $0x49] sm:$0xff]
      %v276 = vld [vmem:[%s204 + $0x51] sm:$0xff]
      %v277 = vld [vmem:[%s204 + $0x61] sm:$0xff]
      %v278 = vld [vmem:[%s204 + $0x69] sm:$0xff]
      %v279 = vld [vmem:[%s204 + $0x79] sm:$0xff]
      %v280 = vld [vmem:[%s204 + $0x81] sm:$0xff]
      %v281 = vld [vmem:[%s204 + $0x91] sm:$0xff]
      %v282 = vld [vmem:[%s204 + $0x99] sm:$0xff]
      %v283 = vld [vmem:[%s204 + $0xa9] sm:$0xff]
      %v284 = vld [vmem:[%s204 + $0xb1] sm:$0xff]
      %v285 = vld [vmem:[%s204 + $0xc1] sm:$0xff]
      %v286 = vld [vmem:[%s204 + $0xc9] sm:$0xff]
      %v287 = vld [vmem:[%s204 + $0xd9] sm:$0xff]
      %v288 = vld [vmem:[%s204 + $0xe1] sm:$0xff]
      %v289 = vld [vmem:[%s204 + $0xf1] sm:$0xff]
      %v290 = vld [vmem:[%s204 + $0xf9] sm:$0xff]
      %v291 = vld [vmem:[%s204 + $0x109] sm:$0xff]
      %v292 = vld [vmem:[%s204 + $0x111] sm:$0xff]
      %v293 = vld [vmem:[%s204 + $0x121] sm:$0xff]
      %v294 = vld [vmem:[%s204 + $0x129] sm:$0xff]
      %v295 = vld [vmem:[%s204 + $0x139] sm:$0xff]
      %v296 = vld [vmem:[%s204 + $0x141] sm:$0xff]
      %v297 = vld [vmem:[%s204 + $0x151] sm:$0xff]
      %v298 = vld [vmem:[%s204 + $0x159] sm:$0xff]
      %v299 = vld [vmem:[%s204 + $0x169] sm:$0xff]
      %v300 = vld [vmem:[%s204 + $0x171] sm:$0xff]
      %v301 = vpack.c.bf16 %v270, %v269
      %v302 = vpack.c.bf16 %v272, %v271
      %v303 = vpack.c.bf16 %v274, %v273
      %v304 = vpack.c.bf16 %v276, %v275
      %v305 = vpack.c.bf16 %v278, %v277
      %v306 = vpack.c.bf16 %v280, %v279
      %v307 = vpack.c.bf16 %v282, %v281
      %v308 = vpack.c.bf16 %v284, %v283
      %v309 = vpack.c.bf16 %v286, %v285
      %v310 = vpack.c.bf16 %v288, %v287
      %v311 = vpack.c.bf16 %v290, %v289
      %v312 = vpack.c.bf16 %v292, %v291
      %v313 = vpack.c.bf16 %v294, %v293
      %v314 = vpack.c.bf16 %v296, %v295
      %v315 = vpack.c.bf16 %v298, %v297
      %v316 = vpack.c.bf16 %v300, %v299
      %s317 = scalar_lea.vmem %s1, 1
      %v318 = vld [vmem:[%s317] sm:$0x1]
      %vm319 = vcmask 7168
      %v321 = vsel %vm319, %v301, 0
      %v324 = vsel %vm319, %v302, 0
      %v327 = vsel %vm319, %v303, 0
      %v330 = vsel %vm319, %v304, 0
      %v333 = vsel %vm319, %v305, 0
      %v336 = vsel %vm319, %v306, 0
      %v339 = vsel %vm319, %v307, 0
      %v342 = vsel %vm319, %v308, 0
      %v345 = vsel %vm319, %v309, 0
      %v348 = vsel %vm319, %v310, 0
      %v351 = vsel %vm319, %v311, 0
      %v354 = vsel %vm319, %v312, 0
      %v357 = vsel %vm319, %v313, 0
      %v360 = vsel %vm319, %v314, 0
      %v363 = vsel %vm319, %v315, 0
      %v366 = vsel %vm319, %v316, 0
      %vm368 = vcmask 1040384
      %v369 = vsel 0, 4294967295, 65535
      %v370 = vsel %vm368, %v369, 0
      %v372 = vand.u32 %v318, %v370
      %374 = vmatpush.bf16.msra.mxu0 0
      %375 = vmatpush.bf16.msra.mxu0 0
      %376 = vmatpush.bf16.msra.mxu0 0
      %377 = vmatpush.bf16.msra.mxu0 0
      %378 = vmatpush.bf16.msra.mxu0 0
      %379 = vmatpush.bf16.msra.mxu0 0
      %380 = vmatpush.bf16.msra.mxu0 0
      %381 = vmatpush.bf16.msra.mxu0 %v372
      %382 = vmatmul.bf16.gmra.mxu0 %v321
      %v383 = vpop.f32.mrf.mxu0
      %v384 = vadd.f32 0.0, %v383
      %v385 = vpop.f32.mrf.mxu0
      %v386 = vadd.f32 0.0, %v385
      %387 = vmatmul.bf16.gmra.mxu0 %v324
      %v388 = vpop.f32.mrf.mxu0
      %v389 = vadd.f32 0.0, %v388
      %v390 = vpop.f32.mrf.mxu0
      %v391 = vadd.f32 0.0, %v390
      %392 = vmatmul.bf16.gmra.mxu0 %v327
      %v393 = vpop.f32.mrf.mxu0
      %v394 = vadd.f32 0.0, %v393
      %v395 = vpop.f32.mrf.mxu0
      %v396 = vadd.f32 0.0, %v395
      %397 = vmatmul.bf16.gmra.mxu0 %v330
      %v398 = vpop.f32.mrf.mxu0
      %v399 = vadd.f32 0.0, %v398
      %v400 = vpop.f32.mrf.mxu0
      %v401 = vadd.f32 0.0, %v400
      %402 = vmatmul.bf16.gmra.mxu0 %v333
      %v403 = vpop.f32.mrf.mxu0
      %v404 = vadd.f32 0.0, %v403
      %v405 = vpop.f32.mrf.mxu0
      %v406 = vadd.f32 0.0, %v405
      %407 = vmatmul.bf16.gmra.mxu0 %v336
      %v408 = vpop.f32.mrf.mxu0
      %v409 = vadd.f32 0.0, %v408
      %v410 = vpop.f32.mrf.mxu0
      %v411 = vadd.f32 0.0, %v410
      %412 = vmatmul.bf16.gmra.mxu0 %v339
      %v413 = vpop.f32.mrf.mxu0
      %v414 = vadd.f32 0.0, %v413
      %v415 = vpop.f32.mrf.mxu0
      %v416 = vadd.f32 0.0, %v415
      %417 = vmatmul.bf16.gmra.mxu0 %v342
      %v418 = vpop.f32.mrf.mxu0
      %v419 = vadd.f32 0.0, %v418
      %v420 = vpop.f32.mrf.mxu0
      %v421 = vadd.f32 0.0, %v420
      %422 = vmatmul.bf16.gmra.mxu0 %v345
      %v423 = vpop.f32.mrf.mxu0
      %v424 = vadd.f32 0.0, %v423
      %v425 = vpop.f32.mrf.mxu0
      %v426 = vadd.f32 0.0, %v425
      %427 = vmatmul.bf16.gmra.mxu0 %v348
      %v428 = vpop.f32.mrf.mxu0
      %v429 = vadd.f32 0.0, %v428
      %v430 = vpop.f32.mrf.mxu0
      %v431 = vadd.f32 0.0, %v430
      %432 = vmatmul.bf16.gmra.mxu0 %v351
      %v433 = vpop.f32.mrf.mxu0
      %v434 = vadd.f32 0.0, %v433
      %v435 = vpop.f32.mrf.mxu0
      %v436 = vadd.f32 0.0, %v435
      %437 = vmatmul.bf16.gmra.mxu0 %v354
      %v438 = vpop.f32.mrf.mxu0
      %v439 = vadd.f32 0.0, %v438
      %v440 = vpop.f32.mrf.mxu0
      %v441 = vadd.f32 0.0, %v440
      %442 = vmatmul.bf16.gmra.mxu0 %v357
      %v443 = vpop.f32.mrf.mxu0
      %v444 = vadd.f32 0.0, %v443
      %v445 = vpop.f32.mrf.mxu0
      %v446 = vadd.f32 0.0, %v445
      %447 = vmatmul.bf16.gmra.mxu0 %v360
      %v448 = vpop.f32.mrf.mxu0
      %v449 = vadd.f32 0.0, %v448
      %v450 = vpop.f32.mrf.mxu0
      %v451 = vadd.f32 0.0, %v450
      %452 = vmatmul.bf16.gmra.mxu0 %v363
      %v453 = vpop.f32.mrf.mxu0
      %v454 = vadd.f32 0.0, %v453
      %v455 = vpop.f32.mrf.mxu0
      %v456 = vadd.f32 0.0, %v455
      %457 = vmatmul.bf16.gmra.mxu0 %v366
      %v458 = vpop.f32.mrf.mxu0
      %v459 = vadd.f32 0.0, %v458
      %v460 = vpop.f32.mrf.mxu0
      %v461 = vadd.f32 0.0, %v460
      %462 = vdwg.mxu0
      %v464 = vsel %vm319, %v252, 0
      %v467 = vsel %vm319, %v253, 0
      %v470 = vsel %vm319, %v254, 0
      %v473 = vsel %vm319, %v255, 0
      %v476 = vsel %vm319, %v256, 0
      %v479 = vsel %vm319, %v257, 0
      %v482 = vsel %vm319, %v258, 0
      %v485 = vsel %vm319, %v259, 0
      %v488 = vsel %vm319, %v260, 0
      %v491 = vsel %vm319, %v261, 0
      %v494 = vsel %vm319, %v262, 0
      %v497 = vsel %vm319, %v263, 0
      %v500 = vsel %vm319, %v264, 0
      %v503 = vsel %vm319, %v265, 0
      %v506 = vsel %vm319, %v266, 0
      %v509 = vsel %vm319, %v267, 0
      %v512 = vand.u32 %v268, %v370
      %514 = vmatpush.bf16.msra.mxu0 0
      %515 = vmatpush.bf16.msra.mxu0 0
      %516 = vmatpush.bf16.msra.mxu0 0
      %517 = vmatpush.bf16.msra.mxu0 0
      %518 = vmatpush.bf16.msra.mxu0 0
      %519 = vmatpush.bf16.msra.mxu0 0
      %520 = vmatpush.bf16.msra.mxu0 0
      %521 = vmatpush.bf16.msra.mxu0 %v512
      %522 = vmatmul.bf16.gmra.mxu0 %v464
      %v523 = vpop.f32.mrf.mxu0
      %v524 = vadd.f32 %v384, %v523
      %v525 = vpop.f32.mrf.mxu0
      %v526 = vadd.f32 %v386, %v525
      %527 = vmatmul.bf16.gmra.mxu0 %v467
      %v528 = vpop.f32.mrf.mxu0
      %v529 = vadd.f32 %v389, %v528
      %v530 = vpop.f32.mrf.mxu0
      %v531 = vadd.f32 %v391, %v530
      %532 = vmatmul.bf16.gmra.mxu0 %v470
      %v533 = vpop.f32.mrf.mxu0
      %v534 = vadd.f32 %v394, %v533
      %v535 = vpop.f32.mrf.mxu0
      %v536 = vadd.f32 %v396, %v535
      %537 = vmatmul.bf16.gmra.mxu0 %v473
      %v538 = vpop.f32.mrf.mxu0
      %v539 = vadd.f32 %v399, %v538
      %v540 = vpop.f32.mrf.mxu0
      %v541 = vadd.f32 %v401, %v540
      %542 = vmatmul.bf16.gmra.mxu0 %v476
      %v543 = vpop.f32.mrf.mxu0
      %v544 = vadd.f32 %v404, %v543
      %v545 = vpop.f32.mrf.mxu0
      %v546 = vadd.f32 %v406, %v545
      %547 = vmatmul.bf16.gmra.mxu0 %v479
      %v548 = vpop.f32.mrf.mxu0
      %v549 = vadd.f32 %v409, %v548
      %v550 = vpop.f32.mrf.mxu0
      %v551 = vadd.f32 %v411, %v550
      %552 = vmatmul.bf16.gmra.mxu0 %v482
      %v553 = vpop.f32.mrf.mxu0
      %v554 = vadd.f32 %v414, %v553
      %v555 = vpop.f32.mrf.mxu0
      %v556 = vadd.f32 %v416, %v555
      %557 = vmatmul.bf16.gmra.mxu0 %v485
      %v558 = vpop.f32.mrf.mxu0
      %v559 = vadd.f32 %v419, %v558
      %v560 = vpop.f32.mrf.mxu0
      %v561 = vadd.f32 %v421, %v560
      %562 = vmatmul.bf16.gmra.mxu0 %v488
      %v563 = vpop.f32.mrf.mxu0
      %v564 = vadd.f32 %v424, %v563
      %v565 = vpop.f32.mrf.mxu0
      %v566 = vadd.f32 %v426, %v565
      %567 = vmatmul.bf16.gmra.mxu0 %v491
      %v568 = vpop.f32.mrf.mxu0
      %v569 = vadd.f32 %v429, %v568
      %v570 = vpop.f32.mrf.mxu0
      %v571 = vadd.f32 %v431, %v570
      %572 = vmatmul.bf16.gmra.mxu0 %v494
      %v573 = vpop.f32.mrf.mxu0
      %v574 = vadd.f32 %v434, %v573
      %v575 = vpop.f32.mrf.mxu0
      %v576 = vadd.f32 %v436, %v575
      %577 = vmatmul.bf16.gmra.mxu0 %v497
      %v578 = vpop.f32.mrf.mxu0
      %v579 = vadd.f32 %v439, %v578
      %v580 = vpop.f32.mrf.mxu0
      %v581 = vadd.f32 %v441, %v580
      %582 = vmatmul.bf16.gmra.mxu0 %v500
      %v583 = vpop.f32.mrf.mxu0
      %v584 = vadd.f32 %v444, %v583
      %v585 = vpop.f32.mrf.mxu0
      %v586 = vadd.f32 %v446, %v585
      %587 = vmatmul.bf16.gmra.mxu0 %v503
      %v588 = vpop.f32.mrf.mxu0
      %v589 = vadd.f32 %v449, %v588
      %v590 = vpop.f32.mrf.mxu0
      %v591 = vadd.f32 %v451, %v590
      %592 = vmatmul.bf16.gmra.mxu0 %v506
      %v593 = vpop.f32.mrf.mxu0
      %v594 = vadd.f32 %v454, %v593
      %v595 = vpop.f32.mrf.mxu0
      %v596 = vadd.f32 %v456, %v595
      %597 = vmatmul.bf16.gmra.mxu0 %v509
      %v598 = vpop.f32.mrf.mxu0
      %v599 = vadd.f32 %v459, %v598
      %v600 = vpop.f32.mrf.mxu0
      %v601 = vadd.f32 %v461, %v600
      %602 = vdwg.mxu0
      %v603 = vld [vmem:[%s204 + $0x2] sm:$0xff]
      %v604 = vld [vmem:[%s204 + $0xa] sm:$0xff]
      %v605 = vld [vmem:[%s204 + $0x1a] sm:$0xff]
      %v606 = vld [vmem:[%s204 + $0x22] sm:$0xff]
      %v607 = vld [vmem:[%s204 + $0x32] sm:$0xff]
      %v608 = vld [vmem:[%s204 + $0x3a] sm:$0xff]
      %v609 = vld [vmem:[%s204 + $0x4a] sm:$0xff]
      %v610 = vld [vmem:[%s204 + $0x52] sm:$0xff]
      %v611 = vld [vmem:[%s204 + $0x62] sm:$0xff]
      %v612 = vld [vmem:[%s204 + $0x6a] sm:$0xff]
      %v613 = vld [vmem:[%s204 + $0x7a] sm:$0xff]
      %v614 = vld [vmem:[%s204 + $0x82] sm:$0xff]
      %v615 = vld [vmem:[%s204 + $0x92] sm:$0xff]
      %v616 = vld [vmem:[%s204 + $0x9a] sm:$0xff]
      %v617 = vld [vmem:[%s204 + $0xaa] sm:$0xff]
      %v618 = vld [vmem:[%s204 + $0xb2] sm:$0xff]
      %v619 = vld [vmem:[%s204 + $0xc2] sm:$0xff]
      %v620 = vld [vmem:[%s204 + $0xca] sm:$0xff]
      %v621 = vld [vmem:[%s204 + $0xda] sm:$0xff]
      %v622 = vld [vmem:[%s204 + $0xe2] sm:$0xff]
      %v623 = vld [vmem:[%s204 + $0xf2] sm:$0xff]
      %v624 = vld [vmem:[%s204 + $0xfa] sm:$0xff]
      %v625 = vld [vmem:[%s204 + $0x10a] sm:$0xff]
      %v626 = vld [vmem:[%s204 + $0x112] sm:$0xff]
      %v627 = vld [vmem:[%s204 + $0x122] sm:$0xff]
      %v628 = vld [vmem:[%s204 + $0x12a] sm:$0xff]
      %v629 = vld [vmem:[%s204 + $0x13a] sm:$0xff]
      %v630 = vld [vmem:[%s204 + $0x142] sm:$0xff]
      %v631 = vld [vmem:[%s204 + $0x152] sm:$0xff]
      %v632 = vld [vmem:[%s204 + $0x15a] sm:$0xff]
      %v633 = vld [vmem:[%s204 + $0x16a] sm:$0xff]
      %v634 = vld [vmem:[%s204 + $0x172] sm:$0xff]
      %v635 = vpack.c.bf16 %v604, %v603
      %v636 = vpack.c.bf16 %v606, %v605
      %v637 = vpack.c.bf16 %v608, %v607
      %v638 = vpack.c.bf16 %v610, %v609
      %v639 = vpack.c.bf16 %v612, %v611
      %v640 = vpack.c.bf16 %v614, %v613
      %v641 = vpack.c.bf16 %v616, %v615
      %v642 = vpack.c.bf16 %v618, %v617
      %v643 = vpack.c.bf16 %v620, %v619
      %v644 = vpack.c.bf16 %v622, %v621
      %v645 = vpack.c.bf16 %v624, %v623
      %v646 = vpack.c.bf16 %v626, %v625
      %v647 = vpack.c.bf16 %v628, %v627
      %v648 = vpack.c.bf16 %v630, %v629
      %v649 = vpack.c.bf16 %v632, %v631
      %v650 = vpack.c.bf16 %v634, %v633
      %s651 = scalar_lea.vmem %s1, 2
      %v652 = vld [vmem:[%s651] sm:$0x1]
      %v654 = vsel %vm319, %v635, 0
      %v657 = vsel %vm319, %v636, 0
      %v660 = vsel %vm319, %v637, 0
      %v663 = vsel %vm319, %v638, 0
      %v666 = vsel %vm319, %v639, 0
      %v669 = vsel %vm319, %v640, 0
      %v672 = vsel %vm319, %v641, 0
      %v675 = vsel %vm319, %v642, 0
      %v678 = vsel %vm319, %v643, 0
      %v681 = vsel %vm319, %v644, 0
      %v684 = vsel %vm319, %v645, 0
      %v687 = vsel %vm319, %v646, 0
      %v690 = vsel %vm319, %v647, 0
      %v693 = vsel %vm319, %v648, 0
      %v696 = vsel %vm319, %v649, 0
      %v699 = vsel %vm319, %v650, 0
      %v702 = vand.u32 %v652, %v370
      %704 = vmatpush.bf16.msra.mxu0 0
      %705 = vmatpush.bf16.msra.mxu0 0
      %706 = vmatpush.bf16.msra.mxu0 0
      %707 = vmatpush.bf16.msra.mxu0 0
      %708 = vmatpush.bf16.msra.mxu0 0
      %709 = vmatpush.bf16.msra.mxu0 0
      %710 = vmatpush.bf16.msra.mxu0 0
      %711 = vmatpush.bf16.msra.mxu0 %v702
      %712 = vmatmul.bf16.gmra.mxu0 %v654
      %v713 = vpop.f32.mrf.mxu0
      %v714 = vadd.f32 0.0, %v713
      %v715 = vpop.f32.mrf.mxu0
      %v716 = vadd.f32 0.0, %v715
      %717 = vmatmul.bf16.gmra.mxu0 %v657
      %v718 = vpop.f32.mrf.mxu0
      %v719 = vadd.f32 0.0, %v718
      %v720 = vpop.f32.mrf.mxu0
      %v721 = vadd.f32 0.0, %v720
      %722 = vmatmul.bf16.gmra.mxu0 %v660
      %v723 = vpop.f32.mrf.mxu0
      %v724 = vadd.f32 0.0, %v723
      %v725 = vpop.f32.mrf.mxu0
      %v726 = vadd.f32 0.0, %v725
      %727 = vmatmul.bf16.gmra.mxu0 %v663
      %v728 = vpop.f32.mrf.mxu0
      %v729 = vadd.f32 0.0, %v728
      %v730 = vpop.f32.mrf.mxu0
      %v731 = vadd.f32 0.0, %v730
      %732 = vmatmul.bf16.gmra.mxu0 %v666
      %v733 = vpop.f32.mrf.mxu0
      %v734 = vadd.f32 0.0, %v733
      %v735 = vpop.f32.mrf.mxu0
      %v736 = vadd.f32 0.0, %v735
      %737 = vmatmul.bf16.gmra.mxu0 %v669
      %v738 = vpop.f32.mrf.mxu0
      %v739 = vadd.f32 0.0, %v738
      %v740 = vpop.f32.mrf.mxu0
      %v741 = vadd.f32 0.0, %v740
      %742 = vmatmul.bf16.gmra.mxu0 %v672
      %v743 = vpop.f32.mrf.mxu0
      %v744 = vadd.f32 0.0, %v743
      %v745 = vpop.f32.mrf.mxu0
      %v746 = vadd.f32 0.0, %v745
      %747 = vmatmul.bf16.gmra.mxu0 %v675
      %v748 = vpop.f32.mrf.mxu0
      %v749 = vadd.f32 0.0, %v748
      %v750 = vpop.f32.mrf.mxu0
      %v751 = vadd.f32 0.0, %v750
      %752 = vmatmul.bf16.gmra.mxu0 %v678
      %v753 = vpop.f32.mrf.mxu0
      %v754 = vadd.f32 0.0, %v753
      %v755 = vpop.f32.mrf.mxu0
      %v756 = vadd.f32 0.0, %v755
      %757 = vmatmul.bf16.gmra.mxu0 %v681
      %v758 = vpop.f32.mrf.mxu0
      %v759 = vadd.f32 0.0, %v758
      %v760 = vpop.f32.mrf.mxu0
      %v761 = vadd.f32 0.0, %v760
      %762 = vmatmul.bf16.gmra.mxu0 %v684
      %v763 = vpop.f32.mrf.mxu0
      %v764 = vadd.f32 0.0, %v763
      %v765 = vpop.f32.mrf.mxu0
      %v766 = vadd.f32 0.0, %v765
      %767 = vmatmul.bf16.gmra.mxu0 %v687
      %v768 = vpop.f32.mrf.mxu0
      %v769 = vadd.f32 0.0, %v768
      %v770 = vpop.f32.mrf.mxu0
      %v771 = vadd.f32 0.0, %v770
      %772 = vmatmul.bf16.gmra.mxu0 %v690
      %v773 = vpop.f32.mrf.mxu0
      %v774 = vadd.f32 0.0, %v773
      %v775 = vpop.f32.mrf.mxu0
      %v776 = vadd.f32 0.0, %v775
      %777 = vmatmul.bf16.gmra.mxu0 %v693
      %v778 = vpop.f32.mrf.mxu0
      %v779 = vadd.f32 0.0, %v778
      %v780 = vpop.f32.mrf.mxu0
      %v781 = vadd.f32 0.0, %v780
      %782 = vmatmul.bf16.gmra.mxu0 %v696
      %v783 = vpop.f32.mrf.mxu0
      %v784 = vadd.f32 0.0, %v783
      %v785 = vpop.f32.mrf.mxu0
      %v786 = vadd.f32 0.0, %v785
      %787 = vmatmul.bf16.gmra.mxu0 %v699
      %v788 = vpop.f32.mrf.mxu0
      %v789 = vadd.f32 0.0, %v788
      %v790 = vpop.f32.mrf.mxu0
      %v791 = vadd.f32 0.0, %v790
      %792 = vdwg.mxu0
      %v793 = vadd.f32 %v524, %v714
      %v794 = vadd.f32 %v526, %v716
      %v795 = vadd.f32 %v529, %v719
      %v796 = vadd.f32 %v531, %v721
      %v797 = vadd.f32 %v534, %v724
      %v798 = vadd.f32 %v536, %v726
      %v799 = vadd.f32 %v539, %v729
      %v800 = vadd.f32 %v541, %v731
      %v801 = vadd.f32 %v544, %v734
      %v802 = vadd.f32 %v546, %v736
      %v803 = vadd.f32 %v549, %v739
      %v804 = vadd.f32 %v551, %v741
      %v805 = vadd.f32 %v554, %v744
      %v806 = vadd.f32 %v556, %v746
      %v807 = vadd.f32 %v559, %v749
      %v808 = vadd.f32 %v561, %v751
      %v809 = vadd.f32 %v564, %v754
      %v810 = vadd.f32 %v566, %v756
      %v811 = vadd.f32 %v569, %v759
      %v812 = vadd.f32 %v571, %v761
      %v813 = vadd.f32 %v574, %v764
      %v814 = vadd.f32 %v576, %v766
      %v815 = vadd.f32 %v579, %v769
      %v816 = vadd.f32 %v581, %v771
      %v817 = vadd.f32 %v584, %v774
      %v818 = vadd.f32 %v586, %v776
      %v819 = vadd.f32 %v589, %v779
      %v820 = vadd.f32 %v591, %v781
      %v821 = vadd.f32 %v594, %v784
      %v822 = vadd.f32 %v596, %v786
      %v823 = vadd.f32 %v599, %v789
      %v824 = vadd.f32 %v601, %v791
      %s825 = scalar_lea.vmem %s204, 24
      %v826 = vld [vmem:[%s825] sm:$0xff]
      %v827 = vld [vmem:[%s825 + $0x8] sm:$0xff]
      %v828 = vld [vmem:[%s825 + $0x18] sm:$0xff]
      %v829 = vld [vmem:[%s825 + $0x20] sm:$0xff]
      %v830 = vld [vmem:[%s825 + $0x30] sm:$0xff]
      %v831 = vld [vmem:[%s825 + $0x38] sm:$0xff]
      %v832 = vld [vmem:[%s825 + $0x48] sm:$0xff]
      %v833 = vld [vmem:[%s825 + $0x50] sm:$0xff]
      %v834 = vld [vmem:[%s825 + $0x60] sm:$0xff]
      %v835 = vld [vmem:[%s825 + $0x68] sm:$0xff]
      %v836 = vld [vmem:[%s825 + $0x78] sm:$0xff]
      %v837 = vld [vmem:[%s825 + $0x80] sm:$0xff]
      %v838 = vld [vmem:[%s825 + $0x90] sm:$0xff]
      %v839 = vld [vmem:[%s825 + $0x98] sm:$0xff]
      %v840 = vld [vmem:[%s825 + $0xa8] sm:$0xff]
      %v841 = vld [vmem:[%s825 + $0xb0] sm:$0xff]
      %v842 = vld [vmem:[%s825 + $0xc0] sm:$0xff]
      %v843 = vld [vmem:[%s825 + $0xc8] sm:$0xff]
      %v844 = vld [vmem:[%s825 + $0xd8] sm:$0xff]
      %v845 = vld [vmem:[%s825 + $0xe0] sm:$0xff]
      %v846 = vld [vmem:[%s825 + $0xf0] sm:$0xff]
      %v847 = vld [vmem:[%s825 + $0xf8] sm:$0xff]
      %v848 = vld [vmem:[%s825 + $0x108] sm:$0xff]
      %v849 = vld [vmem:[%s825 + $0x110] sm:$0xff]
      %v850 = vld [vmem:[%s825 + $0x120] sm:$0xff]
      %v851 = vld [vmem:[%s825 + $0x128] sm:$0xff]
      %v852 = vld [vmem:[%s825 + $0x138] sm:$0xff]
      %v853 = vld [vmem:[%s825 + $0x140] sm:$0xff]
      %v854 = vld [vmem:[%s825 + $0x150] sm:$0xff]
      %v855 = vld [vmem:[%s825 + $0x158] sm:$0xff]
      %v856 = vld [vmem:[%s825 + $0x168] sm:$0xff]
      %v857 = vld [vmem:[%s825 + $0x170] sm:$0xff]
      %v858 = vpack.c.bf16 %v827, %v826
      %v859 = vpack.c.bf16 %v829, %v828
      %v860 = vpack.c.bf16 %v831, %v830
      %v861 = vpack.c.bf16 %v833, %v832
      %v862 = vpack.c.bf16 %v835, %v834
      %v863 = vpack.c.bf16 %v837, %v836
      %v864 = vpack.c.bf16 %v839, %v838
      %v865 = vpack.c.bf16 %v841, %v840
      %v866 = vpack.c.bf16 %v843, %v842
      %v867 = vpack.c.bf16 %v845, %v844
      %v868 = vpack.c.bf16 %v847, %v846
      %v869 = vpack.c.bf16 %v849, %v848
      %v870 = vpack.c.bf16 %v851, %v850
      %v871 = vpack.c.bf16 %v853, %v852
      %v872 = vpack.c.bf16 %v855, %v854
      %v873 = vpack.c.bf16 %v857, %v856
      %s874 = scalar_lea.vmem %s1, 3
      %v875 = vld [vmem:[%s874] sm:$0x1]
      %v877 = vsel %vm319, %v858, 0
      %v880 = vsel %vm319, %v859, 0
      %v883 = vsel %vm319, %v860, 0
      %v886 = vsel %vm319, %v861, 0
      %v889 = vsel %vm319, %v862, 0
      %v892 = vsel %vm319, %v863, 0
      %v895 = vsel %vm319, %v864, 0
      %v898 = vsel %vm319, %v865, 0
      %v901 = vsel %vm319, %v866, 0
      %v904 = vsel %vm319, %v867, 0
      %v907 = vsel %vm319, %v868, 0
      %v910 = vsel %vm319, %v869, 0
      %v913 = vsel %vm319, %v870, 0
      %v916 = vsel %vm319, %v871, 0
      %v919 = vsel %vm319, %v872, 0
      %v922 = vsel %vm319, %v873, 0
      %v925 = vand.u32 %v875, %v370
      %927 = vmatpush.bf16.msra.mxu0 0
      %928 = vmatpush.bf16.msra.mxu0 0
      %929 = vmatpush.bf16.msra.mxu0 0
      %930 = vmatpush.bf16.msra.mxu0 0
      %931 = vmatpush.bf16.msra.mxu0 0
      %932 = vmatpush.bf16.msra.mxu0 0
      %933 = vmatpush.bf16.msra.mxu0 0
      %934 = vmatpush.bf16.msra.mxu0 %v925
      %935 = vmatmul.bf16.gmra.mxu0 %v877
      %v936 = vpop.f32.mrf.mxu0
      %v937 = vadd.f32 0.0, %v936
      %v938 = vpop.f32.mrf.mxu0
      %v939 = vadd.f32 0.0, %v938
      %940 = vmatmul.bf16.gmra.mxu0 %v880
      %v941 = vpop.f32.mrf.mxu0
      %v942 = vadd.f32 0.0, %v941
      %v943 = vpop.f32.mrf.mxu0
      %v944 = vadd.f32 0.0, %v943
      %945 = vmatmul.bf16.gmra.mxu0 %v883
      %v946 = vpop.f32.mrf.mxu0
      %v947 = vadd.f32 0.0, %v946
      %v948 = vpop.f32.mrf.mxu0
      %v949 = vadd.f32 0.0, %v948
      %950 = vmatmul.bf16.gmra.mxu0 %v886
      %v951 = vpop.f32.mrf.mxu0
      %v952 = vadd.f32 0.0, %v951
      %v953 = vpop.f32.mrf.mxu0
      %v954 = vadd.f32 0.0, %v953
      %955 = vmatmul.bf16.gmra.mxu0 %v889
      %v956 = vpop.f32.mrf.mxu0
      %v957 = vadd.f32 0.0, %v956
      %v958 = vpop.f32.mrf.mxu0
      %v959 = vadd.f32 0.0, %v958
      %960 = vmatmul.bf16.gmra.mxu0 %v892
      %v961 = vpop.f32.mrf.mxu0
      %v962 = vadd.f32 0.0, %v961
      %v963 = vpop.f32.mrf.mxu0
      %v964 = vadd.f32 0.0, %v963
      %965 = vmatmul.bf16.gmra.mxu0 %v895
      %v966 = vpop.f32.mrf.mxu0
      %v967 = vadd.f32 0.0, %v966
      %v968 = vpop.f32.mrf.mxu0
      %v969 = vadd.f32 0.0, %v968
      %970 = vmatmul.bf16.gmra.mxu0 %v898
      %v971 = vpop.f32.mrf.mxu0
      %v972 = vadd.f32 0.0, %v971
      %v973 = vpop.f32.mrf.mxu0
      %v974 = vadd.f32 0.0, %v973
      %975 = vmatmul.bf16.gmra.mxu0 %v901
      %v976 = vpop.f32.mrf.mxu0
      %v977 = vadd.f32 0.0, %v976
      %v978 = vpop.f32.mrf.mxu0
      %v979 = vadd.f32 0.0, %v978
      %980 = vmatmul.bf16.gmra.mxu0 %v904
      %v981 = vpop.f32.mrf.mxu0
      %v982 = vadd.f32 0.0, %v981
      %v983 = vpop.f32.mrf.mxu0
      %v984 = vadd.f32 0.0, %v983
      %985 = vmatmul.bf16.gmra.mxu0 %v907
      %v986 = vpop.f32.mrf.mxu0
      %v987 = vadd.f32 0.0, %v986
      %v988 = vpop.f32.mrf.mxu0
      %v989 = vadd.f32 0.0, %v988
      %990 = vmatmul.bf16.gmra.mxu0 %v910
      %v991 = vpop.f32.mrf.mxu0
      %v992 = vadd.f32 0.0, %v991
      %v993 = vpop.f32.mrf.mxu0
      %v994 = vadd.f32 0.0, %v993
      %995 = vmatmul.bf16.gmra.mxu0 %v913
      %v996 = vpop.f32.mrf.mxu0
      %v997 = vadd.f32 0.0, %v996
      %v998 = vpop.f32.mrf.mxu0
      %v999 = vadd.f32 0.0, %v998
      %1000 = vmatmul.bf16.gmra.mxu0 %v916
      %v1001 = vpop.f32.mrf.mxu0
      %v1002 = vadd.f32 0.0, %v1001
      %v1003 = vpop.f32.mrf.mxu0
      %v1004 = vadd.f32 0.0, %v1003
      %1005 = vmatmul.bf16.gmra.mxu0 %v919
      %v1006 = vpop.f32.mrf.mxu0
      %v1007 = vadd.f32 0.0, %v1006
      %v1008 = vpop.f32.mrf.mxu0
      %v1009 = vadd.f32 0.0, %v1008
      %1010 = vmatmul.bf16.gmra.mxu0 %v922
      %v1011 = vpop.f32.mrf.mxu0
      %v1012 = vadd.f32 0.0, %v1011
      %v1013 = vpop.f32.mrf.mxu0
      %v1014 = vadd.f32 0.0, %v1013
      %1015 = vdwg.mxu0
      %v1016 = vadd.f32 %v793, %v937
      %v1017 = vadd.f32 %v794, %v939
      %v1018 = vadd.f32 %v795, %v942
      %v1019 = vadd.f32 %v796, %v944
      %v1020 = vadd.f32 %v797, %v947
      %v1021 = vadd.f32 %v798, %v949
      %v1022 = vadd.f32 %v799, %v952
      %v1023 = vadd.f32 %v800, %v954
      %v1024 = vadd.f32 %v801, %v957
      %v1025 = vadd.f32 %v802, %v959
      %v1026 = vadd.f32 %v803, %v962
      %v1027 = vadd.f32 %v804, %v964
      %v1028 = vadd.f32 %v805, %v967
      %v1029 = vadd.f32 %v806, %v969
      %v1030 = vadd.f32 %v807, %v972
      %v1031 = vadd.f32 %v808, %v974
      %v1032 = vadd.f32 %v809, %v977
      %v1033 = vadd.f32 %v810, %v979
      %v1034 = vadd.f32 %v811, %v982
      %v1035 = vadd.f32 %v812, %v984
      %v1036 = vadd.f32 %v813, %v987
      %v1037 = vadd.f32 %v814, %v989
      %v1038 = vadd.f32 %v815, %v992
      %v1039 = vadd.f32 %v816, %v994
      %v1040 = vadd.f32 %v817, %v997
      %v1041 = vadd.f32 %v818, %v999
      %v1042 = vadd.f32 %v819, %v1002
      %v1043 = vadd.f32 %v820, %v1004
      %v1044 = vadd.f32 %v821, %v1007
      %v1045 = vadd.f32 %v822, %v1009
      %v1046 = vadd.f32 %v823, %v1012
      %v1047 = vadd.f32 %v824, %v1014
      %v1048 = vld [vmem:[%s825 + $0x1] sm:$0xff]
      %v1049 = vld [vmem:[%s825 + $0x9] sm:$0xff]
      %v1050 = vld [vmem:[%s825 + $0x19] sm:$0xff]
      %v1051 = vld [vmem:[%s825 + $0x21] sm:$0xff]
      %v1052 = vld [vmem:[%s825 + $0x31] sm:$0xff]
      %v1053 = vld [vmem:[%s825 + $0x39] sm:$0xff]
      %v1054 = vld [vmem:[%s825 + $0x49] sm:$0xff]
      %v1055 = vld [vmem:[%s825 + $0x51] sm:$0xff]
      %v1056 = vld [vmem:[%s825 + $0x61] sm:$0xff]
      %v1057 = vld [vmem:[%s825 + $0x69] sm:$0xff]
      %v1058 = vld [vmem:[%s825 + $0x79] sm:$0xff]
      %v1059 = vld [vmem:[%s825 + $0x81] sm:$0xff]
      %v1060 = vld [vmem:[%s825 + $0x91] sm:$0xff]
      %v1061 = vld [vmem:[%s825 + $0x99] sm:$0xff]
      %v1062 = vld [vmem:[%s825 + $0xa9] sm:$0xff]
      %v1063 = vld [vmem:[%s825 + $0xb1] sm:$0xff]
      %v1064 = vld [vmem:[%s825 + $0xc1] sm:$0xff]
      %v1065 = vld [vmem:[%s825 + $0xc9] sm:$0xff]
      %v1066 = vld [vmem:[%s825 + $0xd9] sm:$0xff]
      %v1067 = vld [vmem:[%s825 + $0xe1] sm:$0xff]
      %v1068 = vld [vmem:[%s825 + $0xf1] sm:$0xff]
      %v1069 = vld [vmem:[%s825 + $0xf9] sm:$0xff]
      %v1070 = vld [vmem:[%s825 + $0x109] sm:$0xff]
      %v1071 = vld [vmem:[%s825 + $0x111] sm:$0xff]
      %v1072 = vld [vmem:[%s825 + $0x121] sm:$0xff]
      %v1073 = vld [vmem:[%s825 + $0x129] sm:$0xff]
      %v1074 = vld [vmem:[%s825 + $0x139] sm:$0xff]
      %v1075 = vld [vmem:[%s825 + $0x141] sm:$0xff]
      %v1076 = vld [vmem:[%s825 + $0x151] sm:$0xff]
      %v1077 = vld [vmem:[%s825 + $0x159] sm:$0xff]
      %v1078 = vld [vmem:[%s825 + $0x169] sm:$0xff]
      %v1079 = vld [vmem:[%s825 + $0x171] sm:$0xff]
      %v1080 = vpack.c.bf16 %v1049, %v1048
      %v1081 = vpack.c.bf16 %v1051, %v1050
      %v1082 = vpack.c.bf16 %v1053, %v1052
      %v1083 = vpack.c.bf16 %v1055, %v1054
      %v1084 = vpack.c.bf16 %v1057, %v1056
      %v1085 = vpack.c.bf16 %v1059, %v1058
      %v1086 = vpack.c.bf16 %v1061, %v1060
      %v1087 = vpack.c.bf16 %v1063, %v1062
      %v1088 = vpack.c.bf16 %v1065, %v1064
      %v1089 = vpack.c.bf16 %v1067, %v1066
      %v1090 = vpack.c.bf16 %v1069, %v1068
      %v1091 = vpack.c.bf16 %v1071, %v1070
      %v1092 = vpack.c.bf16 %v1073, %v1072
      %v1093 = vpack.c.bf16 %v1075, %v1074
      %v1094 = vpack.c.bf16 %v1077, %v1076
      %v1095 = vpack.c.bf16 %v1079, %v1078
      %s1096 = scalar_lea.vmem %s1, 4
      %v1097 = vld [vmem:[%s1096] sm:$0x1]
      %v1099 = vsel %vm319, %v1080, 0
      %v1102 = vsel %vm319, %v1081, 0
      %v1105 = vsel %vm319, %v1082, 0
      %v1108 = vsel %vm319, %v1083, 0
      %v1111 = vsel %vm319, %v1084, 0
      %v1114 = vsel %vm319, %v1085, 0
      %v1117 = vsel %vm319, %v1086, 0
      %v1120 = vsel %vm319, %v1087, 0
      %v1123 = vsel %vm319, %v1088, 0
      %v1126 = vsel %vm319, %v1089, 0
      %v1129 = vsel %vm319, %v1090, 0
      %v1132 = vsel %vm319, %v1091, 0
      %v1135 = vsel %vm319, %v1092, 0
      %v1138 = vsel %vm319, %v1093, 0
      %v1141 = vsel %vm319, %v1094, 0
      %v1144 = vsel %vm319, %v1095, 0
      %v1147 = vand.u32 %v1097, %v370
      %1149 = vmatpush.bf16.msra.mxu0 0
      %1150 = vmatpush.bf16.msra.mxu0 0
      %1151 = vmatpush.bf16.msra.mxu0 0
      %1152 = vmatpush.bf16.msra.mxu0 0
      %1153 = vmatpush.bf16.msra.mxu0 0
      %1154 = vmatpush.bf16.msra.mxu0 0
      %1155 = vmatpush.bf16.msra.mxu0 0
      %1156 = vmatpush.bf16.msra.mxu0 %v1147
      %1157 = vmatmul.bf16.gmra.mxu0 %v1099
      %v1158 = vpop.f32.mrf.mxu0
      %v1159 = vadd.f32 0.0, %v1158
      %v1160 = vpop.f32.mrf.mxu0
      %v1161 = vadd.f32 0.0, %v1160
      %1162 = vmatmul.bf16.gmra.mxu0 %v1102
      %v1163 = vpop.f32.mrf.mxu0
      %v1164 = vadd.f32 0.0, %v1163
      %v1165 = vpop.f32.mrf.mxu0
      %v1166 = vadd.f32 0.0, %v1165
      %1167 = vmatmul.bf16.gmra.mxu0 %v1105
      %v1168 = vpop.f32.mrf.mxu0
      %v1169 = vadd.f32 0.0, %v1168
      %v1170 = vpop.f32.mrf.mxu0
      %v1171 = vadd.f32 0.0, %v1170
      %1172 = vmatmul.bf16.gmra.mxu0 %v1108
      %v1173 = vpop.f32.mrf.mxu0
      %v1174 = vadd.f32 0.0, %v1173
      %v1175 = vpop.f32.mrf.mxu0
      %v1176 = vadd.f32 0.0, %v1175
      %1177 = vmatmul.bf16.gmra.mxu0 %v1111
      %v1178 = vpop.f32.mrf.mxu0
      %v1179 = vadd.f32 0.0, %v1178
      %v1180 = vpop.f32.mrf.mxu0
      %v1181 = vadd.f32 0.0, %v1180
      %1182 = vmatmul.bf16.gmra.mxu0 %v1114
      %v1183 = vpop.f32.mrf.mxu0
      %v1184 = vadd.f32 0.0, %v1183
      %v1185 = vpop.f32.mrf.mxu0
      %v1186 = vadd.f32 0.0, %v1185
      %1187 = vmatmul.bf16.gmra.mxu0 %v1117
      %v1188 = vpop.f32.mrf.mxu0
      %v1189 = vadd.f32 0.0, %v1188
      %v1190 = vpop.f32.mrf.mxu0
      %v1191 = vadd.f32 0.0, %v1190
      %1192 = vmatmul.bf16.gmra.mxu0 %v1120
      %v1193 = vpop.f32.mrf.mxu0
      %v1194 = vadd.f32 0.0, %v1193
      %v1195 = vpop.f32.mrf.mxu0
      %v1196 = vadd.f32 0.0, %v1195
      %1197 = vmatmul.bf16.gmra.mxu0 %v1123
      %v1198 = vpop.f32.mrf.mxu0
      %v1199 = vadd.f32 0.0, %v1198
      %v1200 = vpop.f32.mrf.mxu0
      %v1201 = vadd.f32 0.0, %v1200
      %1202 = vmatmul.bf16.gmra.mxu0 %v1126
      %v1203 = vpop.f32.mrf.mxu0
      %v1204 = vadd.f32 0.0, %v1203
      %v1205 = vpop.f32.mrf.mxu0
      %v1206 = vadd.f32 0.0, %v1205
      %1207 = vmatmul.bf16.gmra.mxu0 %v1129
      %v1208 = vpop.f32.mrf.mxu0
      %v1209 = vadd.f32 0.0, %v1208
      %v1210 = vpop.f32.mrf.mxu0
      %v1211 = vadd.f32 0.0, %v1210
      %1212 = vmatmul.bf16.gmra.mxu0 %v1132
      %v1213 = vpop.f32.mrf.mxu0
      %v1214 = vadd.f32 0.0, %v1213
      %v1215 = vpop.f32.mrf.mxu0
      %v1216 = vadd.f32 0.0, %v1215
      %1217 = vmatmul.bf16.gmra.mxu0 %v1135
      %v1218 = vpop.f32.mrf.mxu0
      %v1219 = vadd.f32 0.0, %v1218
      %v1220 = vpop.f32.mrf.mxu0
      %v1221 = vadd.f32 0.0, %v1220
      %1222 = vmatmul.bf16.gmra.mxu0 %v1138
      %v1223 = vpop.f32.mrf.mxu0
      %v1224 = vadd.f32 0.0, %v1223
      %v1225 = vpop.f32.mrf.mxu0
      %v1226 = vadd.f32 0.0, %v1225
      %1227 = vmatmul.bf16.gmra.mxu0 %v1141
      %v1228 = vpop.f32.mrf.mxu0
      %v1229 = vadd.f32 0.0, %v1228
      %v1230 = vpop.f32.mrf.mxu0
      %v1231 = vadd.f32 0.0, %v1230
      %1232 = vmatmul.bf16.gmra.mxu0 %v1144
      %v1233 = vpop.f32.mrf.mxu0
      %v1234 = vadd.f32 0.0, %v1233
      %v1235 = vpop.f32.mrf.mxu0
      %v1236 = vadd.f32 0.0, %v1235
      %1237 = vdwg.mxu0
      %v1238 = vadd.f32 %v1016, %v1159
      %v1239 = vadd.f32 %v1017, %v1161
      %v1240 = vadd.f32 %v1018, %v1164
      %v1241 = vadd.f32 %v1019, %v1166
      %v1242 = vadd.f32 %v1020, %v1169
      %v1243 = vadd.f32 %v1021, %v1171
      %v1244 = vadd.f32 %v1022, %v1174
      %v1245 = vadd.f32 %v1023, %v1176
      %v1246 = vadd.f32 %v1024, %v1179
      %v1247 = vadd.f32 %v1025, %v1181
      %v1248 = vadd.f32 %v1026, %v1184
      %v1249 = vadd.f32 %v1027, %v1186
      %v1250 = vadd.f32 %v1028, %v1189
      %v1251 = vadd.f32 %v1029, %v1191
      %v1252 = vadd.f32 %v1030, %v1194
      %v1253 = vadd.f32 %v1031, %v1196
      %v1254 = vadd.f32 %v1032, %v1199
      %v1255 = vadd.f32 %v1033, %v1201
      %v1256 = vadd.f32 %v1034, %v1204
      %v1257 = vadd.f32 %v1035, %v1206
      %v1258 = vadd.f32 %v1036, %v1209
      %v1259 = vadd.f32 %v1037, %v1211
      %v1260 = vadd.f32 %v1038, %v1214
      %v1261 = vadd.f32 %v1039, %v1216
      %v1262 = vadd.f32 %v1040, %v1219
      %v1263 = vadd.f32 %v1041, %v1221
      %v1264 = vadd.f32 %v1042, %v1224
      %v1265 = vadd.f32 %v1043, %v1226
      %v1266 = vadd.f32 %v1044, %v1229
      %v1267 = vadd.f32 %v1045, %v1231
      %v1268 = vadd.f32 %v1046, %v1234
      %v1269 = vadd.f32 %v1047, %v1236
      %v1270 = vld [vmem:[%s825 + $0x2] sm:$0xff]
      %v1271 = vld [vmem:[%s825 + $0xa] sm:$0xff]
      %v1272 = vld [vmem:[%s825 + $0x1a] sm:$0xff]
      %v1273 = vld [vmem:[%s825 + $0x22] sm:$0xff]
      %v1274 = vld [vmem:[%s825 + $0x32] sm:$0xff]
      %v1275 = vld [vmem:[%s825 + $0x3a] sm:$0xff]
      %v1276 = vld [vmem:[%s825 + $0x4a] sm:$0xff]
      %v1277 = vld [vmem:[%s825 + $0x52] sm:$0xff]
      %v1278 = vld [vmem:[%s825 + $0x62] sm:$0xff]
      %v1279 = vld [vmem:[%s825 + $0x6a] sm:$0xff]
      %v1280 = vld [vmem:[%s825 + $0x7a] sm:$0xff]
      %v1281 = vld [vmem:[%s825 + $0x82] sm:$0xff]
      %v1282 = vld [vmem:[%s825 + $0x92] sm:$0xff]
      %v1283 = vld [vmem:[%s825 + $0x9a] sm:$0xff]
      %v1284 = vld [vmem:[%s825 + $0xaa] sm:$0xff]
      %v1285 = vld [vmem:[%s825 + $0xb2] sm:$0xff]
      %v1286 = vld [vmem:[%s825 + $0xc2] sm:$0xff]
      %v1287 = vld [vmem:[%s825 + $0xca] sm:$0xff]
      %v1288 = vld [vmem:[%s825 + $0xda] sm:$0xff]
      %v1289 = vld [vmem:[%s825 + $0xe2] sm:$0xff]
      %v1290 = vld [vmem:[%s825 + $0xf2] sm:$0xff]
      %v1291 = vld [vmem:[%s825 + $0xfa] sm:$0xff]
      %v1292 = vld [vmem:[%s825 + $0x10a] sm:$0xff]
      %v1293 = vld [vmem:[%s825 + $0x112] sm:$0xff]
      %v1294 = vld [vmem:[%s825 + $0x122] sm:$0xff]
      %v1295 = vld [vmem:[%s825 + $0x12a] sm:$0xff]
      %v1296 = vld [vmem:[%s825 + $0x13a] sm:$0xff]
      %v1297 = vld [vmem:[%s825 + $0x142] sm:$0xff]
      %v1298 = vld [vmem:[%s825 + $0x152] sm:$0xff]
      %v1299 = vld [vmem:[%s825 + $0x15a] sm:$0xff]
      %v1300 = vld [vmem:[%s825 + $0x16a] sm:$0xff]
      %v1301 = vld [vmem:[%s825 + $0x172] sm:$0xff]
      %v1302 = vpack.c.bf16 %v1271, %v1270
      %v1303 = vpack.c.bf16 %v1273, %v1272
      %v1304 = vpack.c.bf16 %v1275, %v1274
      %v1305 = vpack.c.bf16 %v1277, %v1276
      %v1306 = vpack.c.bf16 %v1279, %v1278
      %v1307 = vpack.c.bf16 %v1281, %v1280
      %v1308 = vpack.c.bf16 %v1283, %v1282
      %v1309 = vpack.c.bf16 %v1285, %v1284
      %v1310 = vpack.c.bf16 %v1287, %v1286
      %v1311 = vpack.c.bf16 %v1289, %v1288
      %v1312 = vpack.c.bf16 %v1291, %v1290
      %v1313 = vpack.c.bf16 %v1293, %v1292
      %v1314 = vpack.c.bf16 %v1295, %v1294
      %v1315 = vpack.c.bf16 %v1297, %v1296
      %v1316 = vpack.c.bf16 %v1299, %v1298
      %v1317 = vpack.c.bf16 %v1301, %v1300
      %s1318 = scalar_lea.vmem %s1, 5
      %v1319 = vld [vmem:[%s1318] sm:$0x1]
      %v1321 = vsel %vm319, %v1302, 0
      %v1324 = vsel %vm319, %v1303, 0
      %v1327 = vsel %vm319, %v1304, 0
      %v1330 = vsel %vm319, %v1305, 0
      %v1333 = vsel %vm319, %v1306, 0
      %v1336 = vsel %vm319, %v1307, 0
      %v1339 = vsel %vm319, %v1308, 0
      %v1342 = vsel %vm319, %v1309, 0
      %v1345 = vsel %vm319, %v1310, 0
      %v1348 = vsel %vm319, %v1311, 0
      %v1351 = vsel %vm319, %v1312, 0
      %v1354 = vsel %vm319, %v1313, 0
      %v1357 = vsel %vm319, %v1314, 0
      %v1360 = vsel %vm319, %v1315, 0
      %v1363 = vsel %vm319, %v1316, 0
      %v1366 = vsel %vm319, %v1317, 0
      %v1369 = vand.u32 %v1319, %v370
      %1371 = vmatpush.bf16.msra.mxu0 0
      %1372 = vmatpush.bf16.msra.mxu0 0
      %1373 = vmatpush.bf16.msra.mxu0 0
      %1374 = vmatpush.bf16.msra.mxu0 0
      %1375 = vmatpush.bf16.msra.mxu0 0
      %1376 = vmatpush.bf16.msra.mxu0 0
      %1377 = vmatpush.bf16.msra.mxu0 0
      %1378 = vmatpush.bf16.msra.mxu0 %v1369
      %1379 = vmatmul.bf16.gmra.mxu0 %v1321
      %v1380 = vpop.f32.mrf.mxu0
      %v1381 = vadd.f32 0.0, %v1380
      %v1382 = vpop.f32.mrf.mxu0
      %v1383 = vadd.f32 0.0, %v1382
      %1384 = vmatmul.bf16.gmra.mxu0 %v1324
      %v1385 = vpop.f32.mrf.mxu0
      %v1386 = vadd.f32 0.0, %v1385
      %v1387 = vpop.f32.mrf.mxu0
      %v1388 = vadd.f32 0.0, %v1387
      %1389 = vmatmul.bf16.gmra.mxu0 %v1327
      %v1390 = vpop.f32.mrf.mxu0
      %v1391 = vadd.f32 0.0, %v1390
      %v1392 = vpop.f32.mrf.mxu0
      %v1393 = vadd.f32 0.0, %v1392
      %1394 = vmatmul.bf16.gmra.mxu0 %v1330
      %v1395 = vpop.f32.mrf.mxu0
      %v1396 = vadd.f32 0.0, %v1395
      %v1397 = vpop.f32.mrf.mxu0
      %v1398 = vadd.f32 0.0, %v1397
      %1399 = vmatmul.bf16.gmra.mxu0 %v1333
      %v1400 = vpop.f32.mrf.mxu0
      %v1401 = vadd.f32 0.0, %v1400
      %v1402 = vpop.f32.mrf.mxu0
      %v1403 = vadd.f32 0.0, %v1402
      %1404 = vmatmul.bf16.gmra.mxu0 %v1336
      %v1405 = vpop.f32.mrf.mxu0
      %v1406 = vadd.f32 0.0, %v1405
      %v1407 = vpop.f32.mrf.mxu0
      %v1408 = vadd.f32 0.0, %v1407
      %1409 = vmatmul.bf16.gmra.mxu0 %v1339
      %v1410 = vpop.f32.mrf.mxu0
      %v1411 = vadd.f32 0.0, %v1410
      %v1412 = vpop.f32.mrf.mxu0
      %v1413 = vadd.f32 0.0, %v1412
      %1414 = vmatmul.bf16.gmra.mxu0 %v1342
      %v1415 = vpop.f32.mrf.mxu0
      %v1416 = vadd.f32 0.0, %v1415
      %v1417 = vpop.f32.mrf.mxu0
      %v1418 = vadd.f32 0.0, %v1417
      %1419 = vmatmul.bf16.gmra.mxu0 %v1345
      %v1420 = vpop.f32.mrf.mxu0
      %v1421 = vadd.f32 0.0, %v1420
      %v1422 = vpop.f32.mrf.mxu0
      %v1423 = vadd.f32 0.0, %v1422
      %1424 = vmatmul.bf16.gmra.mxu0 %v1348
      %v1425 = vpop.f32.mrf.mxu0
      %v1426 = vadd.f32 0.0, %v1425
      %v1427 = vpop.f32.mrf.mxu0
      %v1428 = vadd.f32 0.0, %v1427
      %1429 = vmatmul.bf16.gmra.mxu0 %v1351
      %v1430 = vpop.f32.mrf.mxu0
      %v1431 = vadd.f32 0.0, %v1430
      %v1432 = vpop.f32.mrf.mxu0
      %v1433 = vadd.f32 0.0, %v1432
      %1434 = vmatmul.bf16.gmra.mxu0 %v1354
      %v1435 = vpop.f32.mrf.mxu0
      %v1436 = vadd.f32 0.0, %v1435
      %v1437 = vpop.f32.mrf.mxu0
      %v1438 = vadd.f32 0.0, %v1437
      %1439 = vmatmul.bf16.gmra.mxu0 %v1357
      %v1440 = vpop.f32.mrf.mxu0
      %v1441 = vadd.f32 0.0, %v1440
      %v1442 = vpop.f32.mrf.mxu0
      %v1443 = vadd.f32 0.0, %v1442
      %1444 = vmatmul.bf16.gmra.mxu0 %v1360
      %v1445 = vpop.f32.mrf.mxu0
      %v1446 = vadd.f32 0.0, %v1445
      %v1447 = vpop.f32.mrf.mxu0
      %v1448 = vadd.f32 0.0, %v1447
      %1449 = vmatmul.bf16.gmra.mxu0 %v1363
      %v1450 = vpop.f32.mrf.mxu0
      %v1451 = vadd.f32 0.0, %v1450
      %v1452 = vpop.f32.mrf.mxu0
      %v1453 = vadd.f32 0.0, %v1452
      %1454 = vmatmul.bf16.gmra.mxu0 %v1366
      %v1455 = vpop.f32.mrf.mxu0
      %v1456 = vadd.f32 0.0, %v1455
      %v1457 = vpop.f32.mrf.mxu0
      %v1458 = vadd.f32 0.0, %v1457
      %1459 = vdwg.mxu0
      %v1460 = vadd.f32 %v1238, %v1381
      %v1461 = vadd.f32 %v1239, %v1383
      %v1462 = vadd.f32 %v1240, %v1386
      %v1463 = vadd.f32 %v1241, %v1388
      %v1464 = vadd.f32 %v1242, %v1391
      %v1465 = vadd.f32 %v1243, %v1393
      %v1466 = vadd.f32 %v1244, %v1396
      %v1467 = vadd.f32 %v1245, %v1398
      %v1468 = vadd.f32 %v1246, %v1401
      %v1469 = vadd.f32 %v1247, %v1403
      %v1470 = vadd.f32 %v1248, %v1406
      %v1471 = vadd.f32 %v1249, %v1408
      %v1472 = vadd.f32 %v1250, %v1411
      %v1473 = vadd.f32 %v1251, %v1413
      %v1474 = vadd.f32 %v1252, %v1416
      %v1475 = vadd.f32 %v1253, %v1418
      %v1476 = vadd.f32 %v1254, %v1421
      %v1477 = vadd.f32 %v1255, %v1423
      %v1478 = vadd.f32 %v1256, %v1426
      %v1479 = vadd.f32 %v1257, %v1428
      %v1480 = vadd.f32 %v1258, %v1431
      %v1481 = vadd.f32 %v1259, %v1433
      %v1482 = vadd.f32 %v1260, %v1436
      %v1483 = vadd.f32 %v1261, %v1438
      %v1484 = vadd.f32 %v1262, %v1441
      %v1485 = vadd.f32 %v1263, %v1443
      %v1486 = vadd.f32 %v1264, %v1446
      %v1487 = vadd.f32 %v1265, %v1448
      %v1488 = vadd.f32 %v1266, %v1451
      %v1489 = vadd.f32 %v1267, %v1453
      %v1490 = vadd.f32 %v1268, %v1456
      %v1491 = vadd.f32 %v1269, %v1458
      %s1492 = scalar_lea.vmem %s204, 48
      %v1493 = vld [vmem:[%s1492] sm:$0xff]
      %v1494 = vld [vmem:[%s1492 + $0x8] sm:$0xff]
      %v1495 = vld [vmem:[%s1492 + $0x18] sm:$0xff]
      %v1496 = vld [vmem:[%s1492 + $0x20] sm:$0xff]
      %v1497 = vld [vmem:[%s1492 + $0x30] sm:$0xff]
      %v1498 = vld [vmem:[%s1492 + $0x38] sm:$0xff]
      %v1499 = vld [vmem:[%s1492 + $0x48] sm:$0xff]
      %v1500 = vld [vmem:[%s1492 + $0x50] sm:$0xff]
      %v1501 = vld [vmem:[%s1492 + $0x60] sm:$0xff]
      %v1502 = vld [vmem:[%s1492 + $0x68] sm:$0xff]
      %v1503 = vld [vmem:[%s1492 + $0x78] sm:$0xff]
      %v1504 = vld [vmem:[%s1492 + $0x80] sm:$0xff]
      %v1505 = vld [vmem:[%s1492 + $0x90] sm:$0xff]
      %v1506 = vld [vmem:[%s1492 + $0x98] sm:$0xff]
      %v1507 = vld [vmem:[%s1492 + $0xa8] sm:$0xff]
      %v1508 = vld [vmem:[%s1492 + $0xb0] sm:$0xff]
      %v1509 = vld [vmem:[%s1492 + $0xc0] sm:$0xff]
      %v1510 = vld [vmem:[%s1492 + $0xc8] sm:$0xff]
      %v1511 = vld [vmem:[%s1492 + $0xd8] sm:$0xff]
      %v1512 = vld [vmem:[%s1492 + $0xe0] sm:$0xff]
      %v1513 = vld [vmem:[%s1492 + $0xf0] sm:$0xff]
      %v1514 = vld [vmem:[%s1492 + $0xf8] sm:$0xff]
      %v1515 = vld [vmem:[%s1492 + $0x108] sm:$0xff]
      %v1516 = vld [vmem:[%s1492 + $0x110] sm:$0xff]
      %v1517 = vld [vmem:[%s1492 + $0x120] sm:$0xff]
      %v1518 = vld [vmem:[%s1492 + $0x128] sm:$0xff]
      %v1519 = vld [vmem:[%s1492 + $0x138] sm:$0xff]
      %v1520 = vld [vmem:[%s1492 + $0x140] sm:$0xff]
      %v1521 = vld [vmem:[%s1492 + $0x150] sm:$0xff]
      %v1522 = vld [vmem:[%s1492 + $0x158] sm:$0xff]
      %v1523 = vld [vmem:[%s1492 + $0x168] sm:$0xff]
      %v1524 = vld [vmem:[%s1492 + $0x170] sm:$0xff]
      %v1525 = vpack.c.bf16 %v1494, %v1493
      %v1526 = vpack.c.bf16 %v1496, %v1495
      %v1527 = vpack.c.bf16 %v1498, %v1497
      %v1528 = vpack.c.bf16 %v1500, %v1499
      %v1529 = vpack.c.bf16 %v1502, %v1501
      %v1530 = vpack.c.bf16 %v1504, %v1503
      %v1531 = vpack.c.bf16 %v1506, %v1505
      %v1532 = vpack.c.bf16 %v1508, %v1507
      %v1533 = vpack.c.bf16 %v1510, %v1509
      %v1534 = vpack.c.bf16 %v1512, %v1511
      %v1535 = vpack.c.bf16 %v1514, %v1513
      %v1536 = vpack.c.bf16 %v1516, %v1515
      %v1537 = vpack.c.bf16 %v1518, %v1517
      %v1538 = vpack.c.bf16 %v1520, %v1519
      %v1539 = vpack.c.bf16 %v1522, %v1521
      %v1540 = vpack.c.bf16 %v1524, %v1523
      %s1541 = scalar_lea.vmem %s1, 6
      %v1542 = vld [vmem:[%s1541] sm:$0x1]
      %v1544 = vsel %vm319, %v1525, 0
      %v1547 = vsel %vm319, %v1526, 0
      %v1550 = vsel %vm319, %v1527, 0
      %v1553 = vsel %vm319, %v1528, 0
      %v1556 = vsel %vm319, %v1529, 0
      %v1559 = vsel %vm319, %v1530, 0
      %v1562 = vsel %vm319, %v1531, 0
      %v1565 = vsel %vm319, %v1532, 0
      %v1568 = vsel %vm319, %v1533, 0
      %v1571 = vsel %vm319, %v1534, 0
      %v1574 = vsel %vm319, %v1535, 0
      %v1577 = vsel %vm319, %v1536, 0
      %v1580 = vsel %vm319, %v1537, 0
      %v1583 = vsel %vm319, %v1538, 0
      %v1586 = vsel %vm319, %v1539, 0
      %v1589 = vsel %vm319, %v1540, 0
      %v1592 = vand.u32 %v1542, %v370
      %1594 = vmatpush.bf16.msra.mxu0 0
      %1595 = vmatpush.bf16.msra.mxu0 0
      %1596 = vmatpush.bf16.msra.mxu0 0
      %1597 = vmatpush.bf16.msra.mxu0 0
      %1598 = vmatpush.bf16.msra.mxu0 0
      %1599 = vmatpush.bf16.msra.mxu0 0
      %1600 = vmatpush.bf16.msra.mxu0 0
      %1601 = vmatpush.bf16.msra.mxu0 %v1592
      %1602 = vmatmul.bf16.gmra.mxu0 %v1544
      %v1603 = vpop.f32.mrf.mxu0
      %v1604 = vadd.f32 0.0, %v1603
      %v1605 = vpop.f32.mrf.mxu0
      %v1606 = vadd.f32 0.0, %v1605
      %1607 = vmatmul.bf16.gmra.mxu0 %v1547
      %v1608 = vpop.f32.mrf.mxu0
      %v1609 = vadd.f32 0.0, %v1608
      %v1610 = vpop.f32.mrf.mxu0
      %v1611 = vadd.f32 0.0, %v1610
      %1612 = vmatmul.bf16.gmra.mxu0 %v1550
      %v1613 = vpop.f32.mrf.mxu0
      %v1614 = vadd.f32 0.0, %v1613
      %v1615 = vpop.f32.mrf.mxu0
      %v1616 = vadd.f32 0.0, %v1615
      %1617 = vmatmul.bf16.gmra.mxu0 %v1553
      %v1618 = vpop.f32.mrf.mxu0
      %v1619 = vadd.f32 0.0, %v1618
      %v1620 = vpop.f32.mrf.mxu0
      %v1621 = vadd.f32 0.0, %v1620
      %1622 = vmatmul.bf16.gmra.mxu0 %v1556
      %v1623 = vpop.f32.mrf.mxu0
      %v1624 = vadd.f32 0.0, %v1623
      %v1625 = vpop.f32.mrf.mxu0
      %v1626 = vadd.f32 0.0, %v1625
      %1627 = vmatmul.bf16.gmra.mxu0 %v1559
      %v1628 = vpop.f32.mrf.mxu0
      %v1629 = vadd.f32 0.0, %v1628
      %v1630 = vpop.f32.mrf.mxu0
      %v1631 = vadd.f32 0.0, %v1630
      %1632 = vmatmul.bf16.gmra.mxu0 %v1562
      %v1633 = vpop.f32.mrf.mxu0
      %v1634 = vadd.f32 0.0, %v1633
      %v1635 = vpop.f32.mrf.mxu0
      %v1636 = vadd.f32 0.0, %v1635
      %1637 = vmatmul.bf16.gmra.mxu0 %v1565
      %v1638 = vpop.f32.mrf.mxu0
      %v1639 = vadd.f32 0.0, %v1638
      %v1640 = vpop.f32.mrf.mxu0
      %v1641 = vadd.f32 0.0, %v1640
      %1642 = vmatmul.bf16.gmra.mxu0 %v1568
      %v1643 = vpop.f32.mrf.mxu0
      %v1644 = vadd.f32 0.0, %v1643
      %v1645 = vpop.f32.mrf.mxu0
      %v1646 = vadd.f32 0.0, %v1645
      %1647 = vmatmul.bf16.gmra.mxu0 %v1571
      %v1648 = vpop.f32.mrf.mxu0
      %v1649 = vadd.f32 0.0, %v1648
      %v1650 = vpop.f32.mrf.mxu0
      %v1651 = vadd.f32 0.0, %v1650
      %1652 = vmatmul.bf16.gmra.mxu0 %v1574
      %v1653 = vpop.f32.mrf.mxu0
      %v1654 = vadd.f32 0.0, %v1653
      %v1655 = vpop.f32.mrf.mxu0
      %v1656 = vadd.f32 0.0, %v1655
      %1657 = vmatmul.bf16.gmra.mxu0 %v1577
      %v1658 = vpop.f32.mrf.mxu0
      %v1659 = vadd.f32 0.0, %v1658
      %v1660 = vpop.f32.mrf.mxu0
      %v1661 = vadd.f32 0.0, %v1660
      %1662 = vmatmul.bf16.gmra.mxu0 %v1580
      %v1663 = vpop.f32.mrf.mxu0
      %v1664 = vadd.f32 0.0, %v1663
      %v1665 = vpop.f32.mrf.mxu0
      %v1666 = vadd.f32 0.0, %v1665
      %1667 = vmatmul.bf16.gmra.mxu0 %v1583
      %v1668 = vpop.f32.mrf.mxu0
      %v1669 = vadd.f32 0.0, %v1668
      %v1670 = vpop.f32.mrf.mxu0
      %v1671 = vadd.f32 0.0, %v1670
      %1672 = vmatmul.bf16.gmra.mxu0 %v1586
      %v1673 = vpop.f32.mrf.mxu0
      %v1674 = vadd.f32 0.0, %v1673
      %v1675 = vpop.f32.mrf.mxu0
      %v1676 = vadd.f32 0.0, %v1675
      %1677 = vmatmul.bf16.gmra.mxu0 %v1589
      %v1678 = vpop.f32.mrf.mxu0
      %v1679 = vadd.f32 0.0, %v1678
      %v1680 = vpop.f32.mrf.mxu0
      %v1681 = vadd.f32 0.0, %v1680
      %1682 = vdwg.mxu0
      %v1683 = vadd.f32 %v1460, %v1604
      %v1684 = vadd.f32 %v1461, %v1606
      %v1685 = vadd.f32 %v1462, %v1609
      %v1686 = vadd.f32 %v1463, %v1611
      %v1687 = vadd.f32 %v1464, %v1614
      %v1688 = vadd.f32 %v1465, %v1616
      %v1689 = vadd.f32 %v1466, %v1619
      %v1690 = vadd.f32 %v1467, %v1621
      %v1691 = vadd.f32 %v1468, %v1624
      %v1692 = vadd.f32 %v1469, %v1626
      %v1693 = vadd.f32 %v1470, %v1629
      %v1694 = vadd.f32 %v1471, %v1631
      %v1695 = vadd.f32 %v1472, %v1634
      %v1696 = vadd.f32 %v1473, %v1636
      %v1697 = vadd.f32 %v1474, %v1639
      %v1698 = vadd.f32 %v1475, %v1641
      %v1699 = vadd.f32 %v1476, %v1644
      %v1700 = vadd.f32 %v1477, %v1646
      %v1701 = vadd.f32 %v1478, %v1649
      %v1702 = vadd.f32 %v1479, %v1651
      %v1703 = vadd.f32 %v1480, %v1654
      %v1704 = vadd.f32 %v1481, %v1656
      %v1705 = vadd.f32 %v1482, %v1659
      %v1706 = vadd.f32 %v1483, %v1661
      %v1707 = vadd.f32 %v1484, %v1664
      %v1708 = vadd.f32 %v1485, %v1666
      %v1709 = vadd.f32 %v1486, %v1669
      %v1710 = vadd.f32 %v1487, %v1671
      %v1711 = vadd.f32 %v1488, %v1674
      %v1712 = vadd.f32 %v1489, %v1676
      %v1713 = vadd.f32 %v1490, %v1679
      %v1714 = vadd.f32 %v1491, %v1681
      %v1715 = vld [vmem:[%s1492 + $0x1] sm:$0xff]
      %v1716 = vld [vmem:[%s1492 + $0x9] sm:$0xff]
      %v1717 = vld [vmem:[%s1492 + $0x19] sm:$0xff]
      %v1718 = vld [vmem:[%s1492 + $0x21] sm:$0xff]
      %v1719 = vld [vmem:[%s1492 + $0x31] sm:$0xff]
      %v1720 = vld [vmem:[%s1492 + $0x39] sm:$0xff]
      %v1721 = vld [vmem:[%s1492 + $0x49] sm:$0xff]
      %v1722 = vld [vmem:[%s1492 + $0x51] sm:$0xff]
      %v1723 = vld [vmem:[%s1492 + $0x61] sm:$0xff]
      %v1724 = vld [vmem:[%s1492 + $0x69] sm:$0xff]
      %v1725 = vld [vmem:[%s1492 + $0x79] sm:$0xff]
      %v1726 = vld [vmem:[%s1492 + $0x81] sm:$0xff]
      %v1727 = vld [vmem:[%s1492 + $0x91] sm:$0xff]
      %v1728 = vld [vmem:[%s1492 + $0x99] sm:$0xff]
      %v1729 = vld [vmem:[%s1492 + $0xa9] sm:$0xff]
      %v1730 = vld [vmem:[%s1492 + $0xb1] sm:$0xff]
      %v1731 = vld [vmem:[%s1492 + $0xc1] sm:$0xff]
      %v1732 = vld [vmem:[%s1492 + $0xc9] sm:$0xff]
      %v1733 = vld [vmem:[%s1492 + $0xd9] sm:$0xff]
      %v1734 = vld [vmem:[%s1492 + $0xe1] sm:$0xff]
      %v1735 = vld [vmem:[%s1492 + $0xf1] sm:$0xff]
      %v1736 = vld [vmem:[%s1492 + $0xf9] sm:$0xff]
      %v1737 = vld [vmem:[%s1492 + $0x109] sm:$0xff]
      %v1738 = vld [vmem:[%s1492 + $0x111] sm:$0xff]
      %v1739 = vld [vmem:[%s1492 + $0x121] sm:$0xff]
      %v1740 = vld [vmem:[%s1492 + $0x129] sm:$0xff]
      %v1741 = vld [vmem:[%s1492 + $0x139] sm:$0xff]
      %v1742 = vld [vmem:[%s1492 + $0x141] sm:$0xff]
      %v1743 = vld [vmem:[%s1492 + $0x151] sm:$0xff]
      %v1744 = vld [vmem:[%s1492 + $0x159] sm:$0xff]
      %v1745 = vld [vmem:[%s1492 + $0x169] sm:$0xff]
      %v1746 = vld [vmem:[%s1492 + $0x171] sm:$0xff]
      %v1747 = vpack.c.bf16 %v1716, %v1715
      %v1748 = vpack.c.bf16 %v1718, %v1717
      %v1749 = vpack.c.bf16 %v1720, %v1719
      %v1750 = vpack.c.bf16 %v1722, %v1721
      %v1751 = vpack.c.bf16 %v1724, %v1723
      %v1752 = vpack.c.bf16 %v1726, %v1725
      %v1753 = vpack.c.bf16 %v1728, %v1727
      %v1754 = vpack.c.bf16 %v1730, %v1729
      %v1755 = vpack.c.bf16 %v1732, %v1731
      %v1756 = vpack.c.bf16 %v1734, %v1733
      %v1757 = vpack.c.bf16 %v1736, %v1735
      %v1758 = vpack.c.bf16 %v1738, %v1737
      %v1759 = vpack.c.bf16 %v1740, %v1739
      %v1760 = vpack.c.bf16 %v1742, %v1741
      %v1761 = vpack.c.bf16 %v1744, %v1743
      %v1762 = vpack.c.bf16 %v1746, %v1745
      %s1763 = scalar_lea.vmem %s1, 7
      %v1764 = vld [vmem:[%s1763] sm:$0x1]
      %v1766 = vsel %vm319, %v1747, 0
      %v1769 = vsel %vm319, %v1748, 0
      %v1772 = vsel %vm319, %v1749, 0
      %v1775 = vsel %vm319, %v1750, 0
      %v1778 = vsel %vm319, %v1751, 0
      %v1781 = vsel %vm319, %v1752, 0
      %v1784 = vsel %vm319, %v1753, 0
      %v1787 = vsel %vm319, %v1754, 0
      %v1790 = vsel %vm319, %v1755, 0
      %v1793 = vsel %vm319, %v1756, 0
      %v1796 = vsel %vm319, %v1757, 0
      %v1799 = vsel %vm319, %v1758, 0
      %v1802 = vsel %vm319, %v1759, 0
      %v1805 = vsel %vm319, %v1760, 0
      %v1808 = vsel %vm319, %v1761, 0
      %v1811 = vsel %vm319, %v1762, 0
      %v1814 = vand.u32 %v1764, %v370
      %1816 = vmatpush.bf16.msra.mxu0 0
      %1817 = vmatpush.bf16.msra.mxu0 0
      %1818 = vmatpush.bf16.msra.mxu0 0
      %1819 = vmatpush.bf16.msra.mxu0 0
      %1820 = vmatpush.bf16.msra.mxu0 0
      %1821 = vmatpush.bf16.msra.mxu0 0
      %1822 = vmatpush.bf16.msra.mxu0 0
      %1823 = vmatpush.bf16.msra.mxu0 %v1814
      %1824 = vmatmul.bf16.gmra.mxu0 %v1766
      %v1825 = vpop.f32.mrf.mxu0
      %v1826 = vadd.f32 0.0, %v1825
      %v1827 = vpop.f32.mrf.mxu0
      %v1828 = vadd.f32 0.0, %v1827
      %1829 = vmatmul.bf16.gmra.mxu0 %v1769
      %v1830 = vpop.f32.mrf.mxu0
      %v1831 = vadd.f32 0.0, %v1830
      %v1832 = vpop.f32.mrf.mxu0
      %v1833 = vadd.f32 0.0, %v1832
      %1834 = vmatmul.bf16.gmra.mxu0 %v1772
      %v1835 = vpop.f32.mrf.mxu0
      %v1836 = vadd.f32 0.0, %v1835
      %v1837 = vpop.f32.mrf.mxu0
      %v1838 = vadd.f32 0.0, %v1837
      %1839 = vmatmul.bf16.gmra.mxu0 %v1775
      %v1840 = vpop.f32.mrf.mxu0
      %v1841 = vadd.f32 0.0, %v1840
      %v1842 = vpop.f32.mrf.mxu0
      %v1843 = vadd.f32 0.0, %v1842
      %1844 = vmatmul.bf16.gmra.mxu0 %v1778
      %v1845 = vpop.f32.mrf.mxu0
      %v1846 = vadd.f32 0.0, %v1845
      %v1847 = vpop.f32.mrf.mxu0
      %v1848 = vadd.f32 0.0, %v1847
      %1849 = vmatmul.bf16.gmra.mxu0 %v1781
      %v1850 = vpop.f32.mrf.mxu0
      %v1851 = vadd.f32 0.0, %v1850
      %v1852 = vpop.f32.mrf.mxu0
      %v1853 = vadd.f32 0.0, %v1852
      %1854 = vmatmul.bf16.gmra.mxu0 %v1784
      %v1855 = vpop.f32.mrf.mxu0
      %v1856 = vadd.f32 0.0, %v1855
      %v1857 = vpop.f32.mrf.mxu0
      %v1858 = vadd.f32 0.0, %v1857
      %1859 = vmatmul.bf16.gmra.mxu0 %v1787
      %v1860 = vpop.f32.mrf.mxu0
      %v1861 = vadd.f32 0.0, %v1860
      %v1862 = vpop.f32.mrf.mxu0
      %v1863 = vadd.f32 0.0, %v1862
      %1864 = vmatmul.bf16.gmra.mxu0 %v1790
      %v1865 = vpop.f32.mrf.mxu0
      %v1866 = vadd.f32 0.0, %v1865
      %v1867 = vpop.f32.mrf.mxu0
      %v1868 = vadd.f32 0.0, %v1867
      %1869 = vmatmul.bf16.gmra.mxu0 %v1793
      %v1870 = vpop.f32.mrf.mxu0
      %v1871 = vadd.f32 0.0, %v1870
      %v1872 = vpop.f32.mrf.mxu0
      %v1873 = vadd.f32 0.0, %v1872
      %1874 = vmatmul.bf16.gmra.mxu0 %v1796
      %v1875 = vpop.f32.mrf.mxu0
      %v1876 = vadd.f32 0.0, %v1875
      %v1877 = vpop.f32.mrf.mxu0
      %v1878 = vadd.f32 0.0, %v1877
      %1879 = vmatmul.bf16.gmra.mxu0 %v1799
      %v1880 = vpop.f32.mrf.mxu0
      %v1881 = vadd.f32 0.0, %v1880
      %v1882 = vpop.f32.mrf.mxu0
      %v1883 = vadd.f32 0.0, %v1882
      %1884 = vmatmul.bf16.gmra.mxu0 %v1802
      %v1885 = vpop.f32.mrf.mxu0
      %v1886 = vadd.f32 0.0, %v1885
      %v1887 = vpop.f32.mrf.mxu0
      %v1888 = vadd.f32 0.0, %v1887
      %1889 = vmatmul.bf16.gmra.mxu0 %v1805
      %v1890 = vpop.f32.mrf.mxu0
      %v1891 = vadd.f32 0.0, %v1890
      %v1892 = vpop.f32.mrf.mxu0
      %v1893 = vadd.f32 0.0, %v1892
      %1894 = vmatmul.bf16.gmra.mxu0 %v1808
      %v1895 = vpop.f32.mrf.mxu0
      %v1896 = vadd.f32 0.0, %v1895
      %v1897 = vpop.f32.mrf.mxu0
      %v1898 = vadd.f32 0.0, %v1897
      %1899 = vmatmul.bf16.gmra.mxu0 %v1811
      %v1900 = vpop.f32.mrf.mxu0
      %v1901 = vadd.f32 0.0, %v1900
      %v1902 = vpop.f32.mrf.mxu0
      %v1903 = vadd.f32 0.0, %v1902
      %1904 = vdwg.mxu0
      %v1905 = vadd.f32 %v1683, %v1826
      %v1906 = vadd.f32 %v1684, %v1828
      %v1907 = vadd.f32 %v1685, %v1831
      %v1908 = vadd.f32 %v1686, %v1833
      %v1909 = vadd.f32 %v1687, %v1836
      %v1910 = vadd.f32 %v1688, %v1838
      %v1911 = vadd.f32 %v1689, %v1841
      %v1912 = vadd.f32 %v1690, %v1843
      %v1913 = vadd.f32 %v1691, %v1846
      %v1914 = vadd.f32 %v1692, %v1848
      %v1915 = vadd.f32 %v1693, %v1851
      %v1916 = vadd.f32 %v1694, %v1853
      %v1917 = vadd.f32 %v1695, %v1856
      %v1918 = vadd.f32 %v1696, %v1858
      %v1919 = vadd.f32 %v1697, %v1861
      %v1920 = vadd.f32 %v1698, %v1863
      %v1921 = vadd.f32 %v1699, %v1866
      %v1922 = vadd.f32 %v1700, %v1868
      %v1923 = vadd.f32 %v1701, %v1871
      %v1924 = vadd.f32 %v1702, %v1873
      %v1925 = vadd.f32 %v1703, %v1876
      %v1926 = vadd.f32 %v1704, %v1878
      %v1927 = vadd.f32 %v1705, %v1881
      %v1928 = vadd.f32 %v1706, %v1883
      %v1929 = vadd.f32 %v1707, %v1886
      %v1930 = vadd.f32 %v1708, %v1888
      %v1931 = vadd.f32 %v1709, %v1891
      %v1932 = vadd.f32 %v1710, %v1893
      %v1933 = vadd.f32 %v1711, %v1896
      %v1934 = vadd.f32 %v1712, %v1898
      %v1935 = vadd.f32 %v1713, %v1901
      %v1936 = vadd.f32 %v1714, %v1903
      %v1937 = vld [vmem:[%s1492 + $0x2] sm:$0xff]
      %v1938 = vld [vmem:[%s1492 + $0xa] sm:$0xff]
      %v1939 = vld [vmem:[%s1492 + $0x1a] sm:$0xff]
      %v1940 = vld [vmem:[%s1492 + $0x22] sm:$0xff]
      %v1941 = vld [vmem:[%s1492 + $0x32] sm:$0xff]
      %v1942 = vld [vmem:[%s1492 + $0x3a] sm:$0xff]
      %v1943 = vld [vmem:[%s1492 + $0x4a] sm:$0xff]
      %v1944 = vld [vmem:[%s1492 + $0x52] sm:$0xff]
      %v1945 = vld [vmem:[%s1492 + $0x62] sm:$0xff]
      %v1946 = vld [vmem:[%s1492 + $0x6a] sm:$0xff]
      %v1947 = vld [vmem:[%s1492 + $0x7a] sm:$0xff]
      %v1948 = vld [vmem:[%s1492 + $0x82] sm:$0xff]
      %v1949 = vld [vmem:[%s1492 + $0x92] sm:$0xff]
      %v1950 = vld [vmem:[%s1492 + $0x9a] sm:$0xff]
      %v1951 = vld [vmem:[%s1492 + $0xaa] sm:$0xff]
      %v1952 = vld [vmem:[%s1492 + $0xb2] sm:$0xff]
      %v1953 = vld [vmem:[%s1492 + $0xc2] sm:$0xff]
      %v1954 = vld [vmem:[%s1492 + $0xca] sm:$0xff]
      %v1955 = vld [vmem:[%s1492 + $0xda] sm:$0xff]
      %v1956 = vld [vmem:[%s1492 + $0xe2] sm:$0xff]
      %v1957 = vld [vmem:[%s1492 + $0xf2] sm:$0xff]
      %v1958 = vld [vmem:[%s1492 + $0xfa] sm:$0xff]
      %v1959 = vld [vmem:[%s1492 + $0x10a] sm:$0xff]
      %v1960 = vld [vmem:[%s1492 + $0x112] sm:$0xff]
      %v1961 = vld [vmem:[%s1492 + $0x122] sm:$0xff]
      %v1962 = vld [vmem:[%s1492 + $0x12a] sm:$0xff]
      %v1963 = vld [vmem:[%s1492 + $0x13a] sm:$0xff]
      %v1964 = vld [vmem:[%s1492 + $0x142] sm:$0xff]
      %v1965 = vld [vmem:[%s1492 + $0x152] sm:$0xff]
      %v1966 = vld [vmem:[%s1492 + $0x15a] sm:$0xff]
      %v1967 = vld [vmem:[%s1492 + $0x16a] sm:$0xff]
      %v1968 = vld [vmem:[%s1492 + $0x172] sm:$0xff]
      %v1969 = vpack.c.bf16 %v1938, %v1937
      %v1970 = vpack.c.bf16 %v1940, %v1939
      %v1971 = vpack.c.bf16 %v1942, %v1941
      %v1972 = vpack.c.bf16 %v1944, %v1943
      %v1973 = vpack.c.bf16 %v1946, %v1945
      %v1974 = vpack.c.bf16 %v1948, %v1947
      %v1975 = vpack.c.bf16 %v1950, %v1949
      %v1976 = vpack.c.bf16 %v1952, %v1951
      %v1977 = vpack.c.bf16 %v1954, %v1953
      %v1978 = vpack.c.bf16 %v1956, %v1955
      %v1979 = vpack.c.bf16 %v1958, %v1957
      %v1980 = vpack.c.bf16 %v1960, %v1959
      %v1981 = vpack.c.bf16 %v1962, %v1961
      %v1982 = vpack.c.bf16 %v1964, %v1963
      %v1983 = vpack.c.bf16 %v1966, %v1965
      %v1984 = vpack.c.bf16 %v1968, %v1967
      %s1985 = scalar_lea.vmem %s1, 8
      %v1986 = vld [vmem:[%s1985] sm:$0x1]
      %v1988 = vsel %vm319, %v1969, 0
      %v1991 = vsel %vm319, %v1970, 0
      %v1994 = vsel %vm319, %v1971, 0
      %v1997 = vsel %vm319, %v1972, 0
      %v2000 = vsel %vm319, %v1973, 0
      %v2003 = vsel %vm319, %v1974, 0
      %v2006 = vsel %vm319, %v1975, 0
      %v2009 = vsel %vm319, %v1976, 0
      %v2012 = vsel %vm319, %v1977, 0
      %v2015 = vsel %vm319, %v1978, 0
      %v2018 = vsel %vm319, %v1979, 0
      %v2021 = vsel %vm319, %v1980, 0
      %v2024 = vsel %vm319, %v1981, 0
      %v2027 = vsel %vm319, %v1982, 0
      %v2030 = vsel %vm319, %v1983, 0
      %v2033 = vsel %vm319, %v1984, 0
      %v2036 = vand.u32 %v1986, %v370
      %2038 = vmatpush.bf16.msra.mxu0 0
      %2039 = vmatpush.bf16.msra.mxu0 0
      %2040 = vmatpush.bf16.msra.mxu0 0
      %2041 = vmatpush.bf16.msra.mxu0 0
      %2042 = vmatpush.bf16.msra.mxu0 0
      %2043 = vmatpush.bf16.msra.mxu0 0
      %2044 = vmatpush.bf16.msra.mxu0 0
      %2045 = vmatpush.bf16.msra.mxu0 %v2036
      %2046 = vmatmul.bf16.gmra.mxu0 %v1988
      %v2047 = vpop.f32.mrf.mxu0
      %v2048 = vadd.f32 0.0, %v2047
      %v2049 = vpop.f32.mrf.mxu0
      %v2050 = vadd.f32 0.0, %v2049
      %2051 = vmatmul.bf16.gmra.mxu0 %v1991
      %v2052 = vpop.f32.mrf.mxu0
      %v2053 = vadd.f32 0.0, %v2052
      %v2054 = vpop.f32.mrf.mxu0
      %v2055 = vadd.f32 0.0, %v2054
      %2056 = vmatmul.bf16.gmra.mxu0 %v1994
      %v2057 = vpop.f32.mrf.mxu0
      %v2058 = vadd.f32 0.0, %v2057
      %v2059 = vpop.f32.mrf.mxu0
      %v2060 = vadd.f32 0.0, %v2059
      %2061 = vmatmul.bf16.gmra.mxu0 %v1997
      %v2062 = vpop.f32.mrf.mxu0
      %v2063 = vadd.f32 0.0, %v2062
      %v2064 = vpop.f32.mrf.mxu0
      %v2065 = vadd.f32 0.0, %v2064
      %2066 = vmatmul.bf16.gmra.mxu0 %v2000
      %v2067 = vpop.f32.mrf.mxu0
      %v2068 = vadd.f32 0.0, %v2067
      %v2069 = vpop.f32.mrf.mxu0
      %v2070 = vadd.f32 0.0, %v2069
      %2071 = vmatmul.bf16.gmra.mxu0 %v2003
      %v2072 = vpop.f32.mrf.mxu0
      %v2073 = vadd.f32 0.0, %v2072
      %v2074 = vpop.f32.mrf.mxu0
      %v2075 = vadd.f32 0.0, %v2074
      %2076 = vmatmul.bf16.gmra.mxu0 %v2006
      %v2077 = vpop.f32.mrf.mxu0
      %v2078 = vadd.f32 0.0, %v2077
      %v2079 = vpop.f32.mrf.mxu0
      %v2080 = vadd.f32 0.0, %v2079
      %2081 = vmatmul.bf16.gmra.mxu0 %v2009
      %v2082 = vpop.f32.mrf.mxu0
      %v2083 = vadd.f32 0.0, %v2082
      %v2084 = vpop.f32.mrf.mxu0
      %v2085 = vadd.f32 0.0, %v2084
      %2086 = vmatmul.bf16.gmra.mxu0 %v2012
      %v2087 = vpop.f32.mrf.mxu0
      %v2088 = vadd.f32 0.0, %v2087
      %v2089 = vpop.f32.mrf.mxu0
      %v2090 = vadd.f32 0.0, %v2089
      %2091 = vmatmul.bf16.gmra.mxu0 %v2015
      %v2092 = vpop.f32.mrf.mxu0
      %v2093 = vadd.f32 0.0, %v2092
      %v2094 = vpop.f32.mrf.mxu0
      %v2095 = vadd.f32 0.0, %v2094
      %2096 = vmatmul.bf16.gmra.mxu0 %v2018
      %v2097 = vpop.f32.mrf.mxu0
      %v2098 = vadd.f32 0.0, %v2097
      %v2099 = vpop.f32.mrf.mxu0
      %v2100 = vadd.f32 0.0, %v2099
      %2101 = vmatmul.bf16.gmra.mxu0 %v2021
      %v2102 = vpop.f32.mrf.mxu0
      %v2103 = vadd.f32 0.0, %v2102
      %v2104 = vpop.f32.mrf.mxu0
      %v2105 = vadd.f32 0.0, %v2104
      %2106 = vmatmul.bf16.gmra.mxu0 %v2024
      %v2107 = vpop.f32.mrf.mxu0
      %v2108 = vadd.f32 0.0, %v2107
      %v2109 = vpop.f32.mrf.mxu0
      %v2110 = vadd.f32 0.0, %v2109
      %2111 = vmatmul.bf16.gmra.mxu0 %v2027
      %v2112 = vpop.f32.mrf.mxu0
      %v2113 = vadd.f32 0.0, %v2112
      %v2114 = vpop.f32.mrf.mxu0
      %v2115 = vadd.f32 0.0, %v2114
      %2116 = vmatmul.bf16.gmra.mxu0 %v2030
      %v2117 = vpop.f32.mrf.mxu0
      %v2118 = vadd.f32 0.0, %v2117
      %v2119 = vpop.f32.mrf.mxu0
      %v2120 = vadd.f32 0.0, %v2119
      %2121 = vmatmul.bf16.gmra.mxu0 %v2033
      %v2122 = vpop.f32.mrf.mxu0
      %v2123 = vadd.f32 0.0, %v2122
      %v2124 = vpop.f32.mrf.mxu0
      %v2125 = vadd.f32 0.0, %v2124
      %2126 = vdwg.mxu0
      %v2127 = vadd.f32 %v1905, %v2048
      %v2128 = vadd.f32 %v1906, %v2050
      %v2129 = vadd.f32 %v1907, %v2053
      %v2130 = vadd.f32 %v1908, %v2055
      %v2131 = vadd.f32 %v1909, %v2058
      %v2132 = vadd.f32 %v1910, %v2060
      %v2133 = vadd.f32 %v1911, %v2063
      %v2134 = vadd.f32 %v1912, %v2065
      %v2135 = vadd.f32 %v1913, %v2068
      %v2136 = vadd.f32 %v1914, %v2070
      %v2137 = vadd.f32 %v1915, %v2073
      %v2138 = vadd.f32 %v1916, %v2075
      %v2139 = vadd.f32 %v1917, %v2078
      %v2140 = vadd.f32 %v1918, %v2080
      %v2141 = vadd.f32 %v1919, %v2083
      %v2142 = vadd.f32 %v1920, %v2085
      %v2143 = vadd.f32 %v1921, %v2088
      %v2144 = vadd.f32 %v1922, %v2090
      %v2145 = vadd.f32 %v1923, %v2093
      %v2146 = vadd.f32 %v1924, %v2095
      %v2147 = vadd.f32 %v1925, %v2098
      %v2148 = vadd.f32 %v1926, %v2100
      %v2149 = vadd.f32 %v1927, %v2103
      %v2150 = vadd.f32 %v1928, %v2105
      %v2151 = vadd.f32 %v1929, %v2108
      %v2152 = vadd.f32 %v1930, %v2110
      %v2153 = vadd.f32 %v1931, %v2113
      %v2154 = vadd.f32 %v1932, %v2115
      %v2155 = vadd.f32 %v1933, %v2118
      %v2156 = vadd.f32 %v1934, %v2120
      %v2157 = vadd.f32 %v1935, %v2123
      %v2158 = vadd.f32 %v1936, %v2125
      // Predicated region
      $region41: #{multires_block_forward.9} parent=35 // pred_check
        %p2159 = pneg %p211
      $region42: #{multires_block_forward.9} parent=35 // pred_check_branch
        %2161 = sbr.rel (%p2159) target = $region44
      $region43: #{multires_block_forward.9} parent=35 // pred_region
        %v2162 = vld [vmem:[#allocation2] sm:$0x1]
        %vm2163 = vcmask 130048
        %v2164 = vsel %vm2163, %v2127, 0.0
        %v2165 = vsel %vm2163, %v2128, 0.0
        %v2166 = vadd.f32 %v2164, %v2165
        %v2167 = vsel %vm2163, %v2129, 0.0
        %v2168 = vadd.f32 %v2166, %v2167
        %v2169 = vsel %vm2163, %v2130, 0.0
        %v2170 = vadd.f32 %v2168, %v2169
        %v2171 = vsel %vm2163, %v2131, 0.0
        %v2172 = vadd.f32 %v2170, %v2171
        %v2173 = vsel %vm2163, %v2132, 0.0
        %v2174 = vadd.f32 %v2172, %v2173
        %v2175 = vsel %vm2163, %v2133, 0.0
        %v2176 = vadd.f32 %v2174, %v2175
        %v2177 = vsel %vm2163, %v2134, 0.0
        %v2178 = vadd.f32 %v2176, %v2177
        %v2179 = vsel %vm2163, %v2135, 0.0
        %v2180 = vadd.f32 %v2178, %v2179
        %v2181 = vsel %vm2163, %v2136, 0.0
        %v2182 = vadd.f32 %v2180, %v2181
        %v2183 = vsel %vm2163, %v2137, 0.0
        %v2184 = vadd.f32 %v2182, %v2183
        %v2185 = vsel %vm2163, %v2138, 0.0
        %v2186 = vadd.f32 %v2184, %v2185
        %v2187 = vsel %vm2163, %v2139, 0.0
        %v2188 = vadd.f32 %v2186, %v2187
        %v2189 = vsel %vm2163, %v2140, 0.0
        %v2190 = vadd.f32 %v2188, %v2189
        %v2191 = vsel %vm2163, %v2141, 0.0
        %v2192 = vadd.f32 %v2190, %v2191
        %v2193 = vsel %vm2163, %v2142, 0.0
        %v2194 = vadd.f32 %v2192, %v2193
        %v2195 = vsel %vm2163, %v2143, 0.0
        %v2196 = vadd.f32 %v2194, %v2195
        %v2197 = vsel %vm2163, %v2144, 0.0
        %v2198 = vadd.f32 %v2196, %v2197
        %v2199 = vsel %vm2163, %v2145, 0.0
        %v2200 = vadd.f32 %v2198, %v2199
        %v2201 = vsel %vm2163, %v2146, 0.0
        %v2202 = vadd.f32 %v2200, %v2201
        %v2203 = vsel %vm2163, %v2147, 0.0
        %v2204 = vadd.f32 %v2202, %v2203
        %v2205 = vsel %vm2163, %v2148, 0.0
        %v2206 = vadd.f32 %v2204, %v2205
        %v2207 = vsel %vm2163, %v2149, 0.0
        %v2208 = vadd.f32 %v2206, %v2207
        %v2209 = vsel %vm2163, %v2150, 0.0
        %v2210 = vadd.f32 %v2208, %v2209
        %v2211 = vsel %vm2163, %v2151, 0.0
        %v2212 = vadd.f32 %v2210, %v2211
        %v2213 = vsel %vm2163, %v2152, 0.0
        %v2214 = vadd.f32 %v2212, %v2213
        %v2215 = vsel %vm2163, %v2153, 0.0
        %v2216 = vadd.f32 %v2214, %v2215
        %v2217 = vsel %vm2163, %v2154, 0.0
        %v2218 = vadd.f32 %v2216, %v2217
        %v2219 = vsel %vm2163, %v2155, 0.0
        %v2220 = vadd.f32 %v2218, %v2219
        %v2221 = vsel %vm2163, %v2156, 0.0
        %v2222 = vadd.f32 %v2220, %v2221
        %v2223 = vsel %vm2163, %v2157, 0.0
        %v2224 = vadd.f32 %v2222, %v2223
        %v2225 = vsel %vm2163, %v2158, 0.0
        %v2226 = vadd.f32 %v2224, %v2225
        %v2227 = vrot.slane %v2226, 4
        %v2228 = vadd.f32 %v2226, %v2227
        %v2229 = vrot.slane %v2228, 2
        %v2230 = vadd.f32 %v2228, %v2229
        %v2231 = vrot.slane %v2230, 1
        %v2232 = vadd.f32 %v2230, %v2231
        %v2233 = vadd.f32 %v2162, %v2232
        %vm2234 = vcmask 122880
        %2235 = vst.msk [vmem:[#allocation2] sm:$0x1] %vm2234, %v2233
        %v2236 = vld [vmem:[#allocation3] sm:$0x1]
        %v2237 = vmul.f32 %v2127, %v2127
        %v2238 = vmul.f32 %v2128, %v2128
        %v2239 = vmul.f32 %v2129, %v2129
        %v2240 = vmul.f32 %v2130, %v2130
        %v2241 = vmul.f32 %v2131, %v2131
        %v2242 = vmul.f32 %v2132, %v2132
        %v2243 = vmul.f32 %v2133, %v2133
        %v2244 = vmul.f32 %v2134, %v2134
        %v2245 = vmul.f32 %v2135, %v2135
        %v2246 = vmul.f32 %v2136, %v2136
        %v2247 = vmul.f32 %v2137, %v2137
        %v2248 = vmul.f32 %v2138, %v2138
        %v2249 = vmul.f32 %v2139, %v2139
        %v2250 = vmul.f32 %v2140, %v2140
        %v2251 = vmul.f32 %v2141, %v2141
        %v2252 = vmul.f32 %v2142, %v2142
        %v2253 = vmul.f32 %v2143, %v2143
        %v2254 = vmul.f32 %v2144, %v2144
        %v2255 = vmul.f32 %v2145, %v2145
        %v2256 = vmul.f32 %v2146, %v2146
        %v2257 = vmul.f32 %v2147, %v2147
        %v2258 = vmul.f32 %v2148, %v2148
        %v2259 = vmul.f32 %v2149, %v2149
        %v2260 = vmul.f32 %v2150, %v2150
        %v2261 = vmul.f32 %v2151, %v2151
        %v2262 = vmul.f32 %v2152, %v2152
        %v2263 = vmul.f32 %v2153, %v2153
        %v2264 = vmul.f32 %v2154, %v2154
        %v2265 = vmul.f32 %v2155, %v2155
        %v2266 = vmul.f32 %v2156, %v2156
        %v2267 = vmul.f32 %v2157, %v2157
        %v2268 = vmul.f32 %v2158, %v2158
        %v2269 = vsel %vm2163, %v2237, 0.0
        %v2270 = vsel %vm2163, %v2238, 0.0
        %v2271 = vadd.f32 %v2269, %v2270
        %v2272 = vsel %vm2163, %v2239, 0.0
        %v2273 = vadd.f32 %v2271, %v2272
        %v2274 = vsel %vm2163, %v2240, 0.0
        %v2275 = vadd.f32 %v2273, %v2274
        %v2276 = vsel %vm2163, %v2241, 0.0
        %v2277 = vadd.f32 %v2275, %v2276
        %v2278 = vsel %vm2163, %v2242, 0.0
        %v2279 = vadd.f32 %v2277, %v2278
        %v2280 = vsel %vm2163, %v2243, 0.0
        %v2281 = vadd.f32 %v2279, %v2280
        %v2282 = vsel %vm2163, %v2244, 0.0
        %v2283 = vadd.f32 %v2281, %v2282
        %v2284 = vsel %vm2163, %v2245, 0.0
        %v2285 = vadd.f32 %v2283, %v2284
        %v2286 = vsel %vm2163, %v2246, 0.0
        %v2287 = vadd.f32 %v2285, %v2286
        %v2288 = vsel %vm2163, %v2247, 0.0
        %v2289 = vadd.f32 %v2287, %v2288
        %v2290 = vsel %vm2163, %v2248, 0.0
        %v2291 = vadd.f32 %v2289, %v2290
        %v2292 = vsel %vm2163, %v2249, 0.0
        %v2293 = vadd.f32 %v2291, %v2292
        %v2294 = vsel %vm2163, %v2250, 0.0
        %v2295 = vadd.f32 %v2293, %v2294
        %v2296 = vsel %vm2163, %v2251, 0.0
        %v2297 = vadd.f32 %v2295, %v2296
        %v2298 = vsel %vm2163, %v2252, 0.0
        %v2299 = vadd.f32 %v2297, %v2298
        %v2300 = vsel %vm2163, %v2253, 0.0
        %v2301 = vadd.f32 %v2299, %v2300
        %v2302 = vsel %vm2163, %v2254, 0.0
        %v2303 = vadd.f32 %v2301, %v2302
        %v2304 = vsel %vm2163, %v2255, 0.0
        %v2305 = vadd.f32 %v2303, %v2304
        %v2306 = vsel %vm2163, %v2256, 0.0
        %v2307 = vadd.f32 %v2305, %v2306
        %v2308 = vsel %vm2163, %v2257, 0.0
        %v2309 = vadd.f32 %v2307, %v2308
        %v2310 = vsel %vm2163, %v2258, 0.0
        %v2311 = vadd.f32 %v2309, %v2310
        %v2312 = vsel %vm2163, %v2259, 0.0
        %v2313 = vadd.f32 %v2311, %v2312
        %v2314 = vsel %vm2163, %v2260, 0.0
        %v2315 = vadd.f32 %v2313, %v2314
        %v2316 = vsel %vm2163, %v2261, 0.0
        %v2317 = vadd.f32 %v2315, %v2316
        %v2318 = vsel %vm2163, %v2262, 0.0
        %v2319 = vadd.f32 %v2317, %v2318
        %v2320 = vsel %vm2163, %v2263, 0.0
        %v2321 = vadd.f32 %v2319, %v2320
        %v2322 = vsel %vm2163, %v2264, 0.0
        %v2323 = vadd.f32 %v2321, %v2322
        %v2324 = vsel %vm2163, %v2265, 0.0
        %v2325 = vadd.f32 %v2323, %v2324
        %v2326 = vsel %vm2163, %v2266, 0.0
        %v2327 = vadd.f32 %v2325, %v2326
        %v2328 = vsel %vm2163, %v2267, 0.0
        %v2329 = vadd.f32 %v2327, %v2328
        %v2330 = vsel %vm2163, %v2268, 0.0
        %v2331 = vadd.f32 %v2329, %v2330
        %v2332 = vrot.slane %v2331, 4
        %v2333 = vadd.f32 %v2331, %v2332
        %v2334 = vrot.slane %v2333, 2
        %v2335 = vadd.f32 %v2333, %v2334
        %v2336 = vrot.slane %v2335, 1
        %v2337 = vadd.f32 %v2335, %v2336
        %v2338 = vadd.f32 %v2236, %v2337
        %2339 = vst.msk [vmem:[#allocation3] sm:$0x1] %vm2234, %v2338
        %2340 = vst.msk [vmem:[%s209] sm:$0xff] %vm2163, %v2127
        %2341 = vst.msk [vmem:[%s209 + $0x8] sm:$0xff] %vm2163, %v2128
        %2342 = vst.msk [vmem:[%s209 + $0x10] sm:$0xff] %vm2163, %v2129
        %2343 = vst.msk [vmem:[%s209 + $0x18] sm:$0xff] %vm2163, %v2130
        %2344 = vst.msk [vmem:[%s209 + $0x20] sm:$0xff] %vm2163, %v2131
        %2345 = vst.msk [vmem:[%s209 + $0x28] sm:$0xff] %vm2163, %v2132
        %2346 = vst.msk [vmem:[%s209 + $0x30] sm:$0xff] %vm2163, %v2133
        %2347 = vst.msk [vmem:[%s209 + $0x38] sm:$0xff] %vm2163, %v2134
        %2348 = vst.msk [vmem:[%s209 + $0x40] sm:$0xff] %vm2163, %v2135
        %2349 = vst.msk [vmem:[%s209 + $0x48] sm:$0xff] %vm2163, %v2136
        %2350 = vst.msk [vmem:[%s209 + $0x50] sm:$0xff] %vm2163, %v2137
        %2351 = vst.msk [vmem:[%s209 + $0x58] sm:$0xff] %vm2163, %v2138
        %2352 = vst.msk [vmem:[%s209 + $0x60] sm:$0xff] %vm2163, %v2139
        %2353 = vst.msk [vmem:[%s209 + $0x68] sm:$0xff] %vm2163, %v2140
        %2354 = vst.msk [vmem:[%s209 + $0x70] sm:$0xff] %vm2163, %v2141
        %2355 = vst.msk [vmem:[%s209 + $0x78] sm:$0xff] %vm2163, %v2142
        %2356 = vst.msk [vmem:[%s209 + $0x80] sm:$0xff] %vm2163, %v2143
        %2357 = vst.msk [vmem:[%s209 + $0x88] sm:$0xff] %vm2163, %v2144
        %2358 = vst.msk [vmem:[%s209 + $0x90] sm:$0xff] %vm2163, %v2145
        %2359 = vst.msk [vmem:[%s209 + $0x98] sm:$0xff] %vm2163, %v2146
        %2360 = vst.msk [vmem:[%s209 + $0xa0] sm:$0xff] %vm2163, %v2147
        %2361 = vst.msk [vmem:[%s209 + $0xa8] sm:$0xff] %vm2163, %v2148
        %2362 = vst.msk [vmem:[%s209 + $0xb0] sm:$0xff] %vm2163, %v2149
        %2363 = vst.msk [vmem:[%s209 + $0xb8] sm:$0xff] %vm2163, %v2150
        %2364 = vst.msk [vmem:[%s209 + $0xc0] sm:$0xff] %vm2163, %v2151
        %2365 = vst.msk [vmem:[%s209 + $0xc8] sm:$0xff] %vm2163, %v2152
        %2366 = vst.msk [vmem:[%s209 + $0xd0] sm:$0xff] %vm2163, %v2153
        %2367 = vst.msk [vmem:[%s209 + $0xd8] sm:$0xff] %vm2163, %v2154
        %2368 = vst.msk [vmem:[%s209 + $0xe0] sm:$0xff] %vm2163, %v2155
        %2369 = vst.msk [vmem:[%s209 + $0xe8] sm:$0xff] %vm2163, %v2156
        %2370 = vst.msk [vmem:[%s209 + $0xf0] sm:$0xff] %vm2163, %v2157
        %2371 = vst.msk [vmem:[%s209 + $0xf8] sm:$0xff] %vm2163, %v2158
      $region44: #{multires_block_forward.9} parent=35 // pred_fallthru
        _
      %p2372 = scmp.eq.s32.totalorder %s19, 1
      // Predicated region
      $region45: #{multires_block_forward.9} parent=35 // pred_check
        %p2373 = pneg %p2372
      $region46: #{multires_block_forward.9} parent=35 // pred_check_branch
        %2375 = sbr.rel (%p2373) target = $region48
      $region47: #{multires_block_forward.9} parent=35 // pred_region
        %v2376 = vld [vmem:[#allocation2] sm:$0x1]
        %v2377 = vmul.f32 %v2376, 0.001953125
        %v2378 = vld [vmem:[#allocation3] sm:$0x1]
        %v2379 = vmul.f32 %v2378, 0.001953125
        %v2380 = vmul.f32 %v2377, %v2377
        %v2381 = vsub.f32 %v2379, %v2380
        %v2382 = vadd.f32 %v2381, 1e-05
        %v2383 = vrsqrt.pop %v2382
        %v2384 = vmul.f32 %v2383, %v2382
        %v2385 = vmul.f32 %v2384, %v2383
        %v2386 = vmul.f32 0.5, %v2385
        %v2387 = vsub.f32 1.5, %v2386
        %v2388 = vmul.f32 %v2383, %v2387
        %vm2389 = vweird.f32 %v2382
        %vm2390 = vweird.f32 %v2383
        %vm2391 = vmor %vm2389, %vm2390
        %v2392 = vsel %vm2391, %v2383, %v2388
        %v2393 = vld [vmem:[%s2] sm:$0x1]
        %v2394 = vmul.f32 %v2392, %v2393
        %v2396 = vperm.slane %v2377, 0
        %v2398 = vsub.f32 %v2127, %v2396
        %v2399 = vsub.f32 %v2128, %v2396
        %v2400 = vsub.f32 %v2129, %v2396
        %v2401 = vsub.f32 %v2130, %v2396
        %v2402 = vsub.f32 %v2131, %v2396
        %v2403 = vsub.f32 %v2132, %v2396
        %v2404 = vsub.f32 %v2133, %v2396
        %v2405 = vsub.f32 %v2134, %v2396
        %v2406 = vsub.f32 %v2135, %v2396
        %v2407 = vsub.f32 %v2136, %v2396
        %v2408 = vsub.f32 %v2137, %v2396
        %v2409 = vsub.f32 %v2138, %v2396
        %v2410 = vsub.f32 %v2139, %v2396
        %v2411 = vsub.f32 %v2140, %v2396
        %v2412 = vsub.f32 %v2141, %v2396
        %v2413 = vsub.f32 %v2142, %v2396
        %v2414 = vsub.f32 %v2143, %v2396
        %v2415 = vsub.f32 %v2144, %v2396
        %v2416 = vsub.f32 %v2145, %v2396
        %v2417 = vsub.f32 %v2146, %v2396
        %v2418 = vsub.f32 %v2147, %v2396
        %v2419 = vsub.f32 %v2148, %v2396
        %v2420 = vsub.f32 %v2149, %v2396
        %v2421 = vsub.f32 %v2150, %v2396
        %v2422 = vsub.f32 %v2151, %v2396
        %v2423 = vsub.f32 %v2152, %v2396
        %v2424 = vsub.f32 %v2153, %v2396
        %v2425 = vsub.f32 %v2154, %v2396
        %v2426 = vsub.f32 %v2155, %v2396
        %v2427 = vsub.f32 %v2156, %v2396
        %v2428 = vsub.f32 %v2157, %v2396
        %v2429 = vsub.f32 %v2158, %v2396
        %v2431 = vperm.slane %v2394, 0
        %v2433 = vmul.f32 %v2398, %v2431
        %v2434 = vmul.f32 %v2399, %v2431
        %v2435 = vmul.f32 %v2400, %v2431
        %v2436 = vmul.f32 %v2401, %v2431
        %v2437 = vmul.f32 %v2402, %v2431
        %v2438 = vmul.f32 %v2403, %v2431
        %v2439 = vmul.f32 %v2404, %v2431
        %v2440 = vmul.f32 %v2405, %v2431
        %v2441 = vmul.f32 %v2406, %v2431
        %v2442 = vmul.f32 %v2407, %v2431
        %v2443 = vmul.f32 %v2408, %v2431
        %v2444 = vmul.f32 %v2409, %v2431
        %v2445 = vmul.f32 %v2410, %v2431
        %v2446 = vmul.f32 %v2411, %v2431
        %v2447 = vmul.f32 %v2412, %v2431
        %v2448 = vmul.f32 %v2413, %v2431
        %v2449 = vmul.f32 %v2414, %v2431
        %v2450 = vmul.f32 %v2415, %v2431
        %v2451 = vmul.f32 %v2416, %v2431
        %v2452 = vmul.f32 %v2417, %v2431
        %v2453 = vmul.f32 %v2418, %v2431
        %v2454 = vmul.f32 %v2419, %v2431
        %v2455 = vmul.f32 %v2420, %v2431
        %v2456 = vmul.f32 %v2421, %v2431
        %v2457 = vmul.f32 %v2422, %v2431
        %v2458 = vmul.f32 %v2423, %v2431
        %v2459 = vmul.f32 %v2424, %v2431
        %v2460 = vmul.f32 %v2425, %v2431
        %v2461 = vmul.f32 %v2426, %v2431
        %v2462 = vmul.f32 %v2427, %v2431
        %v2463 = vmul.f32 %v2428, %v2431
        %v2464 = vmul.f32 %v2429, %v2431
        %v2465 = vld [vmem:[%s3] sm:$0x1]
        %v2467 = vperm.slane %v2465, 0
        %v2469 = vadd.f32 %v2433, %v2467
        %v2470 = vadd.f32 %v2434, %v2467
        %v2471 = vadd.f32 %v2435, %v2467
        %v2472 = vadd.f32 %v2436, %v2467
        %v2473 = vadd.f32 %v2437, %v2467
        %v2474 = vadd.f32 %v2438, %v2467
        %v2475 = vadd.f32 %v2439, %v2467
        %v2476 = vadd.f32 %v2440, %v2467
        %v2477 = vadd.f32 %v2441, %v2467
        %v2478 = vadd.f32 %v2442, %v2467
        %v2479 = vadd.f32 %v2443, %v2467
        %v2480 = vadd.f32 %v2444, %v2467
        %v2481 = vadd.f32 %v2445, %v2467
        %v2482 = vadd.f32 %v2446, %v2467
        %v2483 = vadd.f32 %v2447, %v2467
        %v2484 = vadd.f32 %v2448, %v2467
        %v2485 = vadd.f32 %v2449, %v2467
        %v2486 = vadd.f32 %v2450, %v2467
        %v2487 = vadd.f32 %v2451, %v2467
        %v2488 = vadd.f32 %v2452, %v2467
        %v2489 = vadd.f32 %v2453, %v2467
        %v2490 = vadd.f32 %v2454, %v2467
        %v2491 = vadd.f32 %v2455, %v2467
        %v2492 = vadd.f32 %v2456, %v2467
        %v2493 = vadd.f32 %v2457, %v2467
        %v2494 = vadd.f32 %v2458, %v2467
        %v2495 = vadd.f32 %v2459, %v2467
        %v2496 = vadd.f32 %v2460, %v2467
        %v2497 = vadd.f32 %v2461, %v2467
        %v2498 = vadd.f32 %v2462, %v2467
        %v2499 = vadd.f32 %v2463, %v2467
        %v2500 = vadd.f32 %v2464, %v2467
        %v2501 = vmax.f32 %v2469, 0.0
        %v2502 = vmax.f32 %v2470, 0.0
        %v2503 = vmax.f32 %v2471, 0.0
        %v2504 = vmax.f32 %v2472, 0.0
        %v2505 = vmax.f32 %v2473, 0.0
        %v2506 = vmax.f32 %v2474, 0.0
        %v2507 = vmax.f32 %v2475, 0.0
        %v2508 = vmax.f32 %v2476, 0.0
        %v2509 = vmax.f32 %v2477, 0.0
        %v2510 = vmax.f32 %v2478, 0.0
        %v2511 = vmax.f32 %v2479, 0.0
        %v2512 = vmax.f32 %v2480, 0.0
        %v2513 = vmax.f32 %v2481, 0.0
        %v2514 = vmax.f32 %v2482, 0.0
        %v2515 = vmax.f32 %v2483, 0.0
        %v2516 = vmax.f32 %v2484, 0.0
        %v2517 = vmax.f32 %v2485, 0.0
        %v2518 = vmax.f32 %v2486, 0.0
        %v2519 = vmax.f32 %v2487, 0.0
        %v2520 = vmax.f32 %v2488, 0.0
        %v2521 = vmax.f32 %v2489, 0.0
        %v2522 = vmax.f32 %v2490, 0.0
        %v2523 = vmax.f32 %v2491, 0.0
        %v2524 = vmax.f32 %v2492, 0.0
        %v2525 = vmax.f32 %v2493, 0.0
        %v2526 = vmax.f32 %v2494, 0.0
        %v2527 = vmax.f32 %v2495, 0.0
        %v2528 = vmax.f32 %v2496, 0.0
        %v2529 = vmax.f32 %v2497, 0.0
        %v2530 = vmax.f32 %v2498, 0.0
        %v2531 = vmax.f32 %v2499, 0.0
        %v2532 = vmax.f32 %v2500, 0.0
        %vm2533 = vcmask 130048
        %2534 = vst.msk [vmem:[%s209] sm:$0xff] %vm2533, %v2501
        %2535 = vst.msk [vmem:[%s209 + $0x8] sm:$0xff] %vm2533, %v2502
        %2536 = vst.msk [vmem:[%s209 + $0x10] sm:$0xff] %vm2533, %v2503
        %2537 = vst.msk [vmem:[%s209 + $0x18] sm:$0xff] %vm2533, %v2504
        %2538 = vst.msk [vmem:[%s209 + $0x20] sm:$0xff] %vm2533, %v2505
        %2539 = vst.msk [vmem:[%s209 + $0x28] sm:$0xff] %vm2533, %v2506
        %2540 = vst.msk [vmem:[%s209 + $0x30] sm:$0xff] %vm2533, %v2507
        %2541 = vst.msk [vmem:[%s209 + $0x38] sm:$0xff] %vm2533, %v2508
        %2542 = vst.msk [vmem:[%s209 + $0x40] sm:$0xff] %vm2533, %v2509
        %2543 = vst.msk [vmem:[%s209 + $0x48] sm:$0xff] %vm2533, %v2510
        %2544 = vst.msk [vmem:[%s209 + $0x50] sm:$0xff] %vm2533, %v2511
        %2545 = vst.msk [vmem:[%s209 + $0x58] sm:$0xff] %vm2533, %v2512
        %2546 = vst.msk [vmem:[%s209 + $0x60] sm:$0xff] %vm2533, %v2513
        %2547 = vst.msk [vmem:[%s209 + $0x68] sm:$0xff] %vm2533, %v2514
        %2548 = vst.msk [vmem:[%s209 + $0x70] sm:$0xff] %vm2533, %v2515
        %2549 = vst.msk [vmem:[%s209 + $0x78] sm:$0xff] %vm2533, %v2516
        %2550 = vst.msk [vmem:[%s209 + $0x80] sm:$0xff] %vm2533, %v2517
        %2551 = vst.msk [vmem:[%s209 + $0x88] sm:$0xff] %vm2533, %v2518
        %2552 = vst.msk [vmem:[%s209 + $0x90] sm:$0xff] %vm2533, %v2519
        %2553 = vst.msk [vmem:[%s209 + $0x98] sm:$0xff] %vm2533, %v2520
        %2554 = vst.msk [vmem:[%s209 + $0xa0] sm:$0xff] %vm2533, %v2521
        %2555 = vst.msk [vmem:[%s209 + $0xa8] sm:$0xff] %vm2533, %v2522
        %2556 = vst.msk [vmem:[%s209 + $0xb0] sm:$0xff] %vm2533, %v2523
        %2557 = vst.msk [vmem:[%s209 + $0xb8] sm:$0xff] %vm2533, %v2524
        %2558 = vst.msk [vmem:[%s209 + $0xc0] sm:$0xff] %vm2533, %v2525
        %2559 = vst.msk [vmem:[%s209 + $0xc8] sm:$0xff] %vm2533, %v2526
        %2560 = vst.msk [vmem:[%s209 + $0xd0] sm:$0xff] %vm2533, %v2527
        %2561 = vst.msk [vmem:[%s209 + $0xd8] sm:$0xff] %vm2533, %v2528
        %2562 = vst.msk [vmem:[%s209 + $0xe0] sm:$0xff] %vm2533, %v2529
        %2563 = vst.msk [vmem:[%s209 + $0xe8] sm:$0xff] %vm2533, %v2530
        %2564 = vst.msk [vmem:[%s209 + $0xf0] sm:$0xff] %vm2533, %v2531
        %2565 = vst.msk [vmem:[%s209 + $0xf8] sm:$0xff] %vm2533, %v2532
      $region48: #{multires_block_forward.9} parent=35 // pred_fallthru
        _
      %p2566 = scmp.lt.s32.totalorder %s20, 1
      %s2567 = scalar_select %p2566, %s20, 1
      %s2568 = smul.addr %s2567, 32
      %s2569 = smul.addr %s2568, 8
      %s2570 = scalar_lea.vmem %s4, %s2569
      // Predicated region
      $region49: #{multires_block_forward.9} parent=35 // pred_check
        %p2571 = pneg %p134
      $region50: #{multires_block_forward.9} parent=35 // pred_check_branch
        %2573 = sbr.rel (%p2571) target = $region52
      $region51: #{multires_block_forward.9} parent=35 // pred_region
        _
      $region52: #{multires_block_forward.9} parent=35 // pred_fallthru
        _
    $region36: #{multires_block_forward.9} parent=5 // pred_fallthru
      _
    %p2574 = scmp.le.s32.totalorder 2, %s10
    // Predicated region
    $region53: #{multires_block_forward.9} parent=5 // pred_check
      %p2575 = pneg %p2574
    $region54: #{multires_block_forward.9} parent=5 // pred_check_branch
      %2577 = sbr.rel (%p2575) target = $region56
    $region55: #{multires_block_forward.9} parent=5 // pred_region
      %s2578 = ssub.s32 %s10, 2
      // Predicated region
      $region57: #{multires_block_forward.9} parent=55 // pred_check
        %p2579 = pneg %p140
      $region58: #{multires_block_forward.9} parent=55 // pred_check_branch
        %2581 = sbr.rel (%p2579) target = $region60
      $region59: #{multires_block_forward.9} parent=55 // pred_region
        %p2582 = scmp.lt.s32.totalorder %s22, 1
        %s2583 = scalar_select %p2582, %s22, 1
        %s2584 = smul.addr %s2583, 32
        %s2585 = smul.addr %s2584, 8
        %s2586 = scalar_lea.vmem %s4, %s2585
      $region60: #{multires_block_forward.9} parent=55 // pred_fallthru
        _
    $region56: #{multires_block_forward.9} parent=5 // pred_fallthru
      _
  $region6: #{multires_block_forward.9} parent=0 // loop_footer
    %s14 = sadd.s32 1, %s10
  $region7: #{multires_block_forward.9} parent=0 // loop_footer_branch
    %9 = sbr.rel target = $region3
  $region8: #{multires_block_forward.9} parent=0 // loop_exit
    _

// kernel: multires_block_forward.11
$region0: #{multires_block_forward.11}
  #allocation0 [shape = 'u32[]', space=smem, size = 0x4, offset = 0x4, fixed_abs, tag = 'smem constant byte address 0x4 - core index']
  #allocation1 [shape = 'u32[72,128]{1,0:T(1,128)}', space=vmem, size = 0x9000, scoped, tag = 'internal scratch']
  #allocation2 [shape = 'f32[1,8]{1,0:T(1,128)}', space=vmem, size = 0x200, scoped, tag = 'scratch operand']
  #allocation3 [shape = 'f32[1,8]{1,0:T(1,128)}', space=vmem, size = 0x200, scoped, tag = 'scratch operand']
  %s0 = inlined_call_operand.vmem [shape: f32[2,18,18,8], index: 0, kind: input, shape index: {}]
  %s1 = inlined_call_operand.vmem [shape: bf16[9,8,8], index: 1, kind: input, shape index: {}]
  %s2 = inlined_call_operand.vmem [shape: f32[1,8], index: 2, kind: input, shape index: {}]
  %s3 = inlined_call_operand.vmem [shape: f32[1,8], index: 3, kind: input, shape index: {}]
  %s4 = inlined_call_operand.vmem [shape: f32[2,256,8], index: 4, kind: output, shape index: {}]
  %s5 = sld [smem:[#allocation0]]
  $region61: #{multires_block_forward.11} parent=0
    _
  %s7 = ssub.s32 1, %s5
  %s8 = scalar_select 0, %s7, %s5
  loop: start=0, step=1, limit=6
  $region2: #{multires_block_forward.11} parent=0 // loop_pre_header
    _
  $region3: #{multires_block_forward.11} parent=0 // loop_header
    %s10 = sphi 0, %s14
    %p11 = scmp.ge.s32.totalorder %s10, 6
    %s17 = sphi 0, %s29
    %s18 = sphi 0, %s25
    %s19 = sphi 0, %s17
    %s20 = sphi 0, %s18
    %s21 = sphi 0, %s19
    %s22 = sphi 0, %s20
    %s32 = sphi 0, %s34
    %s35 = sphi 0, %s32
    %s36 = sphi 0, %s35
    %s52 = sphi 0, %s36
    %s56 = sphi 0, %s56
    %s58 = sphi 0, %s56
    %s59 = sphi 0, %s58
    %s73 = sphi 0, %s59
    %s77 = sphi 0, %s77
    %s79 = sphi 0, %s77
    %s80 = sphi 0, %s79
    %s94 = sphi 0, %s80
    %s98 = sphi 0, %s98
    %s100 = sphi 0, %s98
    %s101 = sphi 0, %s100
    %s115 = sphi 0, %s101
    %s121 = sphi 0, %s123
    %s124 = sphi 0, %s121
    %s125 = sphi 0, %s124
    %s141 = sphi 0, %s125
  $region4: #{multires_block_forward.11} parent=0 // loop_header_branch
    %13 = sbr.rel (%p11) target = $region8
  $region5: #{multires_block_forward.11} parent=0 // loop_body
    %s15 = ssub.s32 %s10, 1
    %s16 = ssub.s32 %s10, 2
    %s23 = sadd.s32 1, %s18
    %p24 = scmp.ge.s32.totalorder %s23, 2
    %s25 = scalar_select %p24, 0, %s23
    %s26 = sadd.s32 1, %s17
    %s27 = scalar_select %p24, %s26, %s17
    %p28 = scmp.ge.s32.totalorder %s27, 2
    %s29 = scalar_select %p28, 0, %s27
    %s30 = ssub.s32 %s18, %s25
    %p31 = scmp.eq.s32.totalorder %s30, 0
    %s33 = sadd.s32 %s32, 1
    %s34 = scalar_select %p31, %s32, %s33
    %p37 = pneg %p31
    %p38 = scmp.eq.s32.totalorder %s10, 3
    %p39 = por %p37, %p38
    %p40 = scmp.ne.s32.totalorder %s32, %s35
    %p41 = scmp.eq.s32.totalorder %s10, 0
    %p42 = por %p40, %p41
    %p43 = scmp.ne.s32.totalorder %s32, %s35
    %p44 = scmp.eq.s32.totalorder %s15, 3
    %p45 = por %p43, %p44
    %p46 = scmp.ne.s32.totalorder %s35, %s36
    %p47 = scmp.eq.s32.totalorder %s15, 0
    %p48 = por %p46, %p47
    %p49 = scmp.ne.s32.totalorder %s35, %s36
    %p50 = scmp.eq.s32.totalorder %s16, 3
    %p51 = por %p49, %p50
    %p53 = scmp.ne.s32.totalorder %s36, %s52
    %p54 = scmp.eq.s32.totalorder %s16, 0
    %p55 = por %p53, %p54
    %s57 = sadd.s32 %s56, 1
    %p60 = scmp.eq.s32.totalorder %s10, 3
    %p61 = scmp.ne.s32.totalorder %s56, %s58
    %p62 = scmp.eq.s32.totalorder %s10, 0
    %p63 = por %p61, %p62
    %p64 = scmp.ne.s32.totalorder %s56, %s58
    %p65 = scmp.eq.s32.totalorder %s15, 3
    %p66 = por %p64, %p65
    %p67 = scmp.ne.s32.totalorder %s58, %s59
    %p68 = scmp.eq.s32.totalorder %s15, 0
    %p69 = por %p67, %p68
    %p70 = scmp.ne.s32.totalorder %s58, %s59
    %p71 = scmp.eq.s32.totalorder %s16, 3
    %p72 = por %p70, %p71
    %p74 = scmp.ne.s32.totalorder %s59, %s73
    %p75 = scmp.eq.s32.totalorder %s16, 0
    %p76 = por %p74, %p75
    %s78 = sadd.s32 %s77, 1
    %p81 = scmp.eq.s32.totalorder %s10, 3
    %p82 = scmp.ne.s32.totalorder %s77, %s79
    %p83 = scmp.eq.s32.totalorder %s10, 0
    %p84 = por %p82, %p83
    %p85 = scmp.ne.s32.totalorder %s77, %s79
    %p86 = scmp.eq.s32.totalorder %s15, 3
    %p87 = por %p85, %p86
    %p88 = scmp.ne.s32.totalorder %s79, %s80
    %p89 = scmp.eq.s32.totalorder %s15, 0
    %p90 = por %p88, %p89
    %p91 = scmp.ne.s32.totalorder %s79, %s80
    %p92 = scmp.eq.s32.totalorder %s16, 3
    %p93 = por %p91, %p92
    %p95 = scmp.ne.s32.totalorder %s80, %s94
    %p96 = scmp.eq.s32.totalorder %s16, 0
    %p97 = por %p95, %p96
    %s99 = sadd.s32 %s98, 1
    %p102 = scmp.eq.s32.totalorder %s10, 3
    %p103 = scmp.ne.s32.totalorder %s98, %s100
    %p104 = scmp.eq.s32.totalorder %s10, 0
    %p105 = por %p103, %p104
    %p106 = scmp.ne.s32.totalorder %s98, %s100
    %p107 = scmp.eq.s32.totalorder %s15, 3
    %p108 = por %p106, %p107
    %p109 = scmp.ne.s32.totalorder %s100, %s101
    %p110 = scmp.eq.s32.totalorder %s15, 0
    %p111 = por %p109, %p110
    %p112 = scmp.ne.s32.totalorder %s100, %s101
    %p113 = scmp.eq.s32.totalorder %s16, 3
    %p114 = por %p112, %p113
    %p116 = scmp.ne.s32.totalorder %s101, %s115
    %p117 = scmp.eq.s32.totalorder %s16, 0
    %p118 = por %p116, %p117
    %s119 = ssub.s32 %s18, %s25
    %p120 = scmp.eq.s32.totalorder %s119, 0
    %s122 = sadd.s32 %s121, 1
    %s123 = scalar_select %p120, %s121, %s122
    %p126 = pneg %p120
    %p127 = scmp.eq.s32.totalorder %s10, 3
    %p128 = por %p126, %p127
    %p129 = scmp.ne.s32.totalorder %s121, %s124
    %p130 = scmp.eq.s32.totalorder %s10, 0
    %p131 = por %p129, %p130
    %p132 = scmp.ne.s32.totalorder %s121, %s124
    %p133 = scmp.eq.s32.totalorder %s15, 3
    %p134 = por %p132, %p133
    %p135 = scmp.ne.s32.totalorder %s124, %s125
    %p136 = scmp.eq.s32.totalorder %s15, 0
    %p137 = por %p135, %p136
    %p138 = scmp.ne.s32.totalorder %s124, %s125
    %p139 = scmp.eq.s32.totalorder %s16, 3
    %p140 = por %p138, %p139
    %p142 = scmp.ne.s32.totalorder %s125, %s141
    %p143 = scmp.eq.s32.totalorder %s16, 0
    %p144 = por %p142, %p143
    %p145 = scmp.le.s32.totalorder 1, %s10
    %p146 = scmp.lt.s32.totalorder %s10, 5
    %p147 = pnand %p145, %p146
    %p148 = pneg %p147
    // Predicated region
    $region9: #{multires_block_forward.11} parent=5 // pred_check
      _
    $region10: #{multires_block_forward.11} parent=5 // pred_check_branch
      %150 = sbr.rel (%p147) target = $region12
    $region11: #{multires_block_forward.11} parent=5 // pred_region
      %s151 = ssub.s32 %s10, 1
      // Predicated region
      $region13: #{multires_block_forward.11} parent=11 // pred_check
        %p152 = pneg %p69
      $region14: #{multires_block_forward.11} parent=11 // pred_check_branch
        %154 = sbr.rel (%p152) target = $region16
      $region15: #{multires_block_forward.11} parent=11 // pred_region
        _
      $region16: #{multires_block_forward.11} parent=11 // pred_fallthru
        _
      // Predicated region
      $region17: #{multires_block_forward.11} parent=11 // pred_check
        %p155 = pneg %p90
      $region18: #{multires_block_forward.11} parent=11 // pred_check_branch
        %157 = sbr.rel (%p155) target = $region20
      $region19: #{multires_block_forward.11} parent=11 // pred_region
        _
      $region20: #{multires_block_forward.11} parent=11 // pred_fallthru
        _
      // Predicated region
      $region21: #{multires_block_forward.11} parent=11 // pred_check
        %p158 = pneg %p111
      $region22: #{multires_block_forward.11} parent=11 // pred_check_branch
        %160 = sbr.rel (%p158) target = $region24
      $region23: #{multires_block_forward.11} parent=11 // pred_region
        _
      $region24: #{multires_block_forward.11} parent=11 // pred_fallthru
        _
    $region12: #{multires_block_forward.11} parent=5 // pred_fallthru
      _
    %p161 = scmp.lt.s32.totalorder %s10, 4
    // Predicated region
    $region25: #{multires_block_forward.11} parent=5 // pred_check
      %p162 = pneg %p161
    $region26: #{multires_block_forward.11} parent=5 // pred_check_branch
      %164 = sbr.rel (%p162) target = $region28
    $region27: #{multires_block_forward.11} parent=5 // pred_region
      // Predicated region
      $region29: #{multires_block_forward.11} parent=27 // pred_check
        %p165 = pneg %p42
      $region30: #{multires_block_forward.11} parent=27 // pred_check_branch
        %167 = sbr.rel (%p165) target = $region32
      $region31: #{multires_block_forward.11} parent=27 // pred_region
        %p168 = scmp.lt.s32.totalorder %s18, 1
        %s169 = scalar_select %p168, %s18, 1
        %s170 = smul.addr %s169, 54
        %s171 = smul.addr %s170, 8
        %s172 = scalar_lea.vmem %s0, %s171
      $region32: #{multires_block_forward.11} parent=27 // pred_fallthru
        _
    $region28: #{multires_block_forward.11} parent=5 // pred_fallthru
      _
    %p173 = scmp.le.s32.totalorder 1, %s10
    %p174 = scmp.lt.s32.totalorder %s10, 5
    %p175 = pnand %p173, %p174
    %p176 = pneg %p175
    // Predicated region
    $region33: #{multires_block_forward.11} parent=5 // pred_check
      _
    $region34: #{multires_block_forward.11} parent=5 // pred_check_branch
      %178 = sbr.rel (%p175) target = $region36
    $region35: #{multires_block_forward.11} parent=5 // pred_region
      %s179 = ssub.s32 %s10, 1
      %p180 = scmp.lt.s32.totalorder %s20, 1
      %s181 = scalar_select %p180, %s20, 1
      %s182 = smul.addr %s181, 54
      %s183 = smul.addr %s182, 8
      %s184 = scalar_lea.vmem %s0, %s183
      %p185 = pneg %p48
      %p186 = pneg %p45
      %p187 = pneg %p69
      %p188 = pneg %p66
      %p189 = pneg %p90
      %p190 = pneg %p87
      %p191 = pneg %p111
      %p192 = pneg %p108
      %p193 = pneg %p137
      %p194 = pneg %p134
      %p195 = scmp.lt.s32.totalorder %s20, 1
      %s196 = scalar_select %p195, %s20, 1
      %s197 = smul.addr %s196, 32
      %s198 = smul.addr %s197, 8
      %s199 = scalar_lea.vmem %s4, %s198
      %p200 = scmp.lt.s32.totalorder %s20, 1
      %s201 = scalar_select %p200, %s20, 1
      %s202 = smul.addr %s201, 54
      %s203 = smul.addr %s202, 8
      %s204 = scalar_lea.vmem %s0, %s203
      %p205 = scmp.lt.s32.totalorder %s20, 1
      %s206 = scalar_select %p205, %s20, 1
      %s207 = smul.addr %s206, 32
      %s208 = smul.addr %s207, 8
      %s209 = scalar_lea.vmem %s4, %s208
      %p211 = scmp.eq.s32.totalorder %s19, 0
      %p212 = scmp.eq.s32.totalorder %s20, 0
      %p213 = pnand %p211, %p212
      %p214 = pneg %p213
      // Predicated region
      $region37: #{multires_block_forward.11} parent=35 // pred_check
        _
      $region38: #{multires_block_forward.11} parent=35 // pred_check_branch
        %216 = sbr.rel (%p213) target = $region40
      $region39: #{multires_block_forward.11} parent=35 // pred_region
        %vm217 = vcmask 57344
        %218 = vst.msk [vmem:[#allocation2] sm:$0x1] %vm217, 0.0
        %219 = vst.msk [vmem:[#allocation3] sm:$0x1] %vm217, 0.0
      $region40: #{multires_block_forward.11} parent=35 // pred_fallthru
        _
      %v220 = vld [vmem:[%s204] sm:$0xff]
      %v221 = vld [vmem:[%s204 + $0x8] sm:$0xff]
      %v222 = vld [vmem:[%s204 + $0x18] sm:$0xff]
      %v223 = vld [vmem:[%s204 + $0x20] sm:$0xff]
      %v224 = vld [vmem:[%s204 + $0x30] sm:$0xff]
      %v225 = vld [vmem:[%s204 + $0x38] sm:$0xff]
      %v226 = vld [vmem:[%s204 + $0x48] sm:$0xff]
      %v227 = vld [vmem:[%s204 + $0x50] sm:$0xff]
      %v228 = vld [vmem:[%s204 + $0x60] sm:$0xff]
      %v229 = vld [vmem:[%s204 + $0x68] sm:$0xff]
      %v230 = vld [vmem:[%s204 + $0x78] sm:$0xff]
      %v231 = vld [vmem:[%s204 + $0x80] sm:$0xff]
      %v232 = vld [vmem:[%s204 + $0x90] sm:$0xff]
      %v233 = vld [vmem:[%s204 + $0x98] sm:$0xff]
      %v234 = vld [vmem:[%s204 + $0xa8] sm:$0xff]
      %v235 = vld [vmem:[%s204 + $0xb0] sm:$0xff]
      %v236 = vld [vmem:[%s204 + $0xc0] sm:$0xff]
      %v237 = vld [vmem:[%s204 + $0xc8] sm:$0xff]
      %v238 = vld [vmem:[%s204 + $0xd8] sm:$0xff]
      %v239 = vld [vmem:[%s204 + $0xe0] sm:$0xff]
      %v240 = vld [vmem:[%s204 + $0xf0] sm:$0xff]
      %v241 = vld [vmem:[%s204 + $0xf8] sm:$0xff]
      %v242 = vld [vmem:[%s204 + $0x108] sm:$0xff]
      %v243 = vld [vmem:[%s204 + $0x110] sm:$0xff]
      %v244 = vld [vmem:[%s204 + $0x120] sm:$0xff]
      %v245 = vld [vmem:[%s204 + $0x128] sm:$0xff]
      %v246 = vld [vmem:[%s204 + $0x138] sm:$0xff]
      %v247 = vld [vmem:[%s204 + $0x140] sm:$0xff]
      %v248 = vld [vmem:[%s204 + $0x150] sm:$0xff]
      %v249 = vld [vmem:[%s204 + $0x158] sm:$0xff]
      %v250 = vld [vmem:[%s204 + $0x168] sm:$0xff]
      %v251 = vld [vmem:[%s204 + $0x170] sm:$0xff]
      %v252 = vpack.c.bf16 %v221, %v220
      %v253 = vpack.c.bf16 %v223, %v222
      %v254 = vpack.c.bf16 %v225, %v224
      %v255 = vpack.c.bf16 %v227, %v226
      %v256 = vpack.c.bf16 %v229, %v228
      %v257 = vpack.c.bf16 %v231, %v230
      %v258 = vpack.c.bf16 %v233, %v232
      %v259 = vpack.c.bf16 %v235, %v234
      %v260 = vpack.c.bf16 %v237, %v236
      %v261 = vpack.c.bf16 %v239, %v238
      %v262 = vpack.c.bf16 %v241, %v240
      %v263 = vpack.c.bf16 %v243, %v242
      %v264 = vpack.c.bf16 %v245, %v244
      %v265 = vpack.c.bf16 %v247, %v246
      %v266 = vpack.c.bf16 %v249, %v248
      %v267 = vpack.c.bf16 %v251, %v250
      %v268 = vld [vmem:[%s1] sm:$0xf]
      %v269 = vld [vmem:[%s204 + $0x1] sm:$0xff]
      %v270 = vld [vmem:[%s204 + $0x9] sm:$0xff]
      %v271 = vld [vmem:[%s204 + $0x19] sm:$0xff]
      %v272 = vld [vmem:[%s204 + $0x21] sm:$0xff]
      %v273 = vld [vmem:[%s204 + $0x31] sm:$0xff]
      %v274 = vld [vmem:[%s204 + $0x39] sm:$0xff]
      %v275 = vld [vmem:[%s204 + $0x49] sm:$0xff]
      %v276 = vld [vmem:[%s204 + $0x51] sm:$0xff]
      %v277 = vld [vmem:[%s204 + $0x61] sm:$0xff]
      %v278 = vld [vmem:[%s204 + $0x69] sm:$0xff]
      %v279 = vld [vmem:[%s204 + $0x79] sm:$0xff]
      %v280 = vld [vmem:[%s204 + $0x81] sm:$0xff]
      %v281 = vld [vmem:[%s204 + $0x91] sm:$0xff]
      %v282 = vld [vmem:[%s204 + $0x99] sm:$0xff]
      %v283 = vld [vmem:[%s204 + $0xa9] sm:$0xff]
      %v284 = vld [vmem:[%s204 + $0xb1] sm:$0xff]
      %v285 = vld [vmem:[%s204 + $0xc1] sm:$0xff]
      %v286 = vld [vmem:[%s204 + $0xc9] sm:$0xff]
      %v287 = vld [vmem:[%s204 + $0xd9] sm:$0xff]
      %v288 = vld [vmem:[%s204 + $0xe1] sm:$0xff]
      %v289 = vld [vmem:[%s204 + $0xf1] sm:$0xff]
      %v290 = vld [vmem:[%s204 + $0xf9] sm:$0xff]
      %v291 = vld [vmem:[%s204 + $0x109] sm:$0xff]
      %v292 = vld [vmem:[%s204 + $0x111] sm:$0xff]
      %v293 = vld [vmem:[%s204 + $0x121] sm:$0xff]
      %v294 = vld [vmem:[%s204 + $0x129] sm:$0xff]
      %v295 = vld [vmem:[%s204 + $0x139] sm:$0xff]
      %v296 = vld [vmem:[%s204 + $0x141] sm:$0xff]
      %v297 = vld [vmem:[%s204 + $0x151] sm:$0xff]
      %v298 = vld [vmem:[%s204 + $0x159] sm:$0xff]
      %v299 = vld [vmem:[%s204 + $0x169] sm:$0xff]
      %v300 = vld [vmem:[%s204 + $0x171] sm:$0xff]
      %v301 = vpack.c.bf16 %v270, %v269
      %v302 = vpack.c.bf16 %v272, %v271
      %v303 = vpack.c.bf16 %v274, %v273
      %v304 = vpack.c.bf16 %v276, %v275
      %v305 = vpack.c.bf16 %v278, %v277
      %v306 = vpack.c.bf16 %v280, %v279
      %v307 = vpack.c.bf16 %v282, %v281
      %v308 = vpack.c.bf16 %v284, %v283
      %v309 = vpack.c.bf16 %v286, %v285
      %v310 = vpack.c.bf16 %v288, %v287
      %v311 = vpack.c.bf16 %v290, %v289
      %v312 = vpack.c.bf16 %v292, %v291
      %v313 = vpack.c.bf16 %v294, %v293
      %v314 = vpack.c.bf16 %v296, %v295
      %v315 = vpack.c.bf16 %v298, %v297
      %v316 = vpack.c.bf16 %v300, %v299
      %s317 = scalar_lea.vmem %s1, 4
      %v318 = vld [vmem:[%s317] sm:$0xf]
      %vm319 = vcmask 64512
      %v321 = vsel %vm319, %v301, 0
      %v324 = vsel %vm319, %v302, 0
      %v327 = vsel %vm319, %v303, 0
      %v330 = vsel %vm319, %v304, 0
      %v333 = vsel %vm319, %v305, 0
      %v336 = vsel %vm319, %v306, 0
      %v339 = vsel %vm319, %v307, 0
      %v342 = vsel %vm319, %v308, 0
      %v345 = vsel %vm319, %v309, 0
      %v348 = vsel %vm319, %v310, 0
      %v351 = vsel %vm319, %v311, 0
      %v354 = vsel %vm319, %v312, 0
      %v357 = vsel %vm319, %v313, 0
      %v360 = vsel %vm319, %v314, 0
      %v363 = vsel %vm319, %v315, 0
      %v366 = vsel %vm319, %v316, 0
      %vm368 = vcmask 1043456
      %v370 = vsel %vm368, %v318, 0
      %372 = vmatpush.bf16.msra.mxu0 0
      %373 = vmatpush.bf16.msra.mxu0 0
      %374 = vmatpush.bf16.msra.mxu0 0
      %375 = vmatpush.bf16.msra.mxu0 0
      %376 = vmatpush.bf16.msra.mxu0 0
      %377 = vmatpush.bf16.msra.mxu0 0
      %378 = vmatpush.bf16.msra.mxu0 0
      %379 = vmatpush.bf16.msra.mxu0 %v370
      %380 = vmatmul.bf16.gmra.mxu0 %v321
      %v381 = vpop.f32.mrf.mxu0
      %v382 = vadd.f32 0.0, %v381
      %v383 = vpop.f32.mrf.mxu0
      %v384 = vadd.f32 0.0, %v383
      %385 = vmatmul.bf16.gmra.mxu0 %v324
      %v386 = vpop.f32.mrf.mxu0
      %v387 = vadd.f32 0.0, %v386
      %v388 = vpop.f32.mrf.mxu0
      %v389 = vadd.f32 0.0, %v388
      %390 = vmatmul.bf16.gmra.mxu0 %v327
      %v391 = vpop.f32.mrf.mxu0
      %v392 = vadd.f32 0.0, %v391
      %v393 = vpop.f32.mrf.mxu0
      %v394 = vadd.f32 0.0, %v393
      %395 = vmatmul.bf16.gmra.mxu0 %v330
      %v396 = vpop.f32.mrf.mxu0
      %v397 = vadd.f32 0.0, %v396
      %v398 = vpop.f32.mrf.mxu0
      %v399 = vadd.f32 0.0, %v398
      %400 = vmatmul.bf16.gmra.mxu0 %v333
      %v401 = vpop.f32.mrf.mxu0
      %v402 = vadd.f32 0.0, %v401
      %v403 = vpop.f32.mrf.mxu0
      %v404 = vadd.f32 0.0, %v403
      %405 = vmatmul.bf16.gmra.mxu0 %v336
      %v406 = vpop.f32.mrf.mxu0
      %v407 = vadd.f32 0.0, %v406
      %v408 = vpop.f32.mrf.mxu0
      %v409 = vadd.f32 0.0, %v408
      %410 = vmatmul.bf16.gmra.mxu0 %v339
      %v411 = vpop.f32.mrf.mxu0
      %v412 = vadd.f32 0.0, %v411
      %v413 = vpop.f32.mrf.mxu0
      %v414 = vadd.f32 0.0, %v413
      %415 = vmatmul.bf16.gmra.mxu0 %v342
      %v416 = vpop.f32.mrf.mxu0
      %v417 = vadd.f32 0.0, %v416
      %v418 = vpop.f32.mrf.mxu0
      %v419 = vadd.f32 0.0, %v418
      %420 = vmatmul.bf16.gmra.mxu0 %v345
      %v421 = vpop.f32.mrf.mxu0
      %v422 = vadd.f32 0.0, %v421
      %v423 = vpop.f32.mrf.mxu0
      %v424 = vadd.f32 0.0, %v423
      %425 = vmatmul.bf16.gmra.mxu0 %v348
      %v426 = vpop.f32.mrf.mxu0
      %v427 = vadd.f32 0.0, %v426
      %v428 = vpop.f32.mrf.mxu0
      %v429 = vadd.f32 0.0, %v428
      %430 = vmatmul.bf16.gmra.mxu0 %v351
      %v431 = vpop.f32.mrf.mxu0
      %v432 = vadd.f32 0.0, %v431
      %v433 = vpop.f32.mrf.mxu0
      %v434 = vadd.f32 0.0, %v433
      %435 = vmatmul.bf16.gmra.mxu0 %v354
      %v436 = vpop.f32.mrf.mxu0
      %v437 = vadd.f32 0.0, %v436
      %v438 = vpop.f32.mrf.mxu0
      %v439 = vadd.f32 0.0, %v438
      %440 = vmatmul.bf16.gmra.mxu0 %v357
      %v441 = vpop.f32.mrf.mxu0
      %v442 = vadd.f32 0.0, %v441
      %v443 = vpop.f32.mrf.mxu0
      %v444 = vadd.f32 0.0, %v443
      %445 = vmatmul.bf16.gmra.mxu0 %v360
      %v446 = vpop.f32.mrf.mxu0
      %v447 = vadd.f32 0.0, %v446
      %v448 = vpop.f32.mrf.mxu0
      %v449 = vadd.f32 0.0, %v448
      %450 = vmatmul.bf16.gmra.mxu0 %v363
      %v451 = vpop.f32.mrf.mxu0
      %v452 = vadd.f32 0.0, %v451
      %v453 = vpop.f32.mrf.mxu0
      %v454 = vadd.f32 0.0, %v453
      %455 = vmatmul.bf16.gmra.mxu0 %v366
      %v456 = vpop.f32.mrf.mxu0
      %v457 = vadd.f32 0.0, %v456
      %v458 = vpop.f32.mrf.mxu0
      %v459 = vadd.f32 0.0, %v458
      %460 = vdwg.mxu0
      %v462 = vsel %vm319, %v252, 0
      %v465 = vsel %vm319, %v253, 0
      %v468 = vsel %vm319, %v254, 0
      %v471 = vsel %vm319, %v255, 0
      %v474 = vsel %vm319, %v256, 0
      %v477 = vsel %vm319, %v257, 0
      %v480 = vsel %vm319, %v258, 0
      %v483 = vsel %vm319, %v259, 0
      %v486 = vsel %vm319, %v260, 0
      %v489 = vsel %vm319, %v261, 0
      %v492 = vsel %vm319, %v262, 0
      %v495 = vsel %vm319, %v263, 0
      %v498 = vsel %vm319, %v264, 0
      %v501 = vsel %vm319, %v265, 0
      %v504 = vsel %vm319, %v266, 0
      %v507 = vsel %vm319, %v267, 0
      %v510 = vsel %vm368, %v268, 0
      %512 = vmatpush.bf16.msra.mxu0 0
      %513 = vmatpush.bf16.msra.mxu0 0
      %514 = vmatpush.bf16.msra.mxu0 0
      %515 = vmatpush.bf16.msra.mxu0 0
      %516 = vmatpush.bf16.msra.mxu0 0
      %517 = vmatpush.bf16.msra.mxu0 0
      %518 = vmatpush.bf16.msra.mxu0 0
      %519 = vmatpush.bf16.msra.mxu0 %v510
      %520 = vmatmul.bf16.gmra.mxu0 %v462
      %v521 = vpop.f32.mrf.mxu0
      %v522 = vadd.f32 %v382, %v521
      %v523 = vpop.f32.mrf.mxu0
      %v524 = vadd.f32 %v384, %v523
      %525 = vmatmul.bf16.gmra.mxu0 %v465
      %v526 = vpop.f32.mrf.mxu0
      %v527 = vadd.f32 %v387, %v526
      %v528 = vpop.f32.mrf.mxu0
      %v529 = vadd.f32 %v389, %v528
      %530 = vmatmul.bf16.gmra.mxu0 %v468
      %v531 = vpop.f32.mrf.mxu0
      %v532 = vadd.f32 %v392, %v531
      %v533 = vpop.f32.mrf.mxu0
      %v534 = vadd.f32 %v394, %v533
      %535 = vmatmul.bf16.gmra.mxu0 %v471
      %v536 = vpop.f32.mrf.mxu0
      %v537 = vadd.f32 %v397, %v536
      %v538 = vpop.f32.mrf.mxu0
      %v539 = vadd.f32 %v399, %v538
      %540 = vmatmul.bf16.gmra.mxu0 %v474
      %v541 = vpop.f32.mrf.mxu0
      %v542 = vadd.f32 %v402, %v541
      %v543 = vpop.f32.mrf.mxu0
      %v544 = vadd.f32 %v404, %v543
      %545 = vmatmul.bf16.gmra.mxu0 %v477
      %v546 = vpop.f32.mrf.mxu0
      %v547 = vadd.f32 %v407, %v546
      %v548 = vpop.f32.mrf.mxu0
      %v549 = vadd.f32 %v409, %v548
      %550 = vmatmul.bf16.gmra.mxu0 %v480
      %v551 = vpop.f32.mrf.mxu0
      %v552 = vadd.f32 %v412, %v551
      %v553 = vpop.f32.mrf.mxu0
      %v554 = vadd.f32 %v414, %v553
      %555 = vmatmul.bf16.gmra.mxu0 %v483
      %v556 = vpop.f32.mrf.mxu0
      %v557 = vadd.f32 %v417, %v556
      %v558 = vpop.f32.mrf.mxu0
      %v559 = vadd.f32 %v419, %v558
      %560 = vmatmul.bf16.gmra.mxu0 %v486
      %v561 = vpop.f32.mrf.mxu0
      %v562 = vadd.f32 %v422, %v561
      %v563 = vpop.f32.mrf.mxu0
      %v564 = vadd.f32 %v424, %v563
      %565 = vmatmul.bf16.gmra.mxu0 %v489
      %v566 = vpop.f32.mrf.mxu0
      %v567 = vadd.f32 %v427, %v566
      %v568 = vpop.f32.mrf.mxu0
      %v569 = vadd.f32 %v429, %v568
      %570 = vmatmul.bf16.gmra.mxu0 %v492
      %v571 = vpop.f32.mrf.mxu0
      %v572 = vadd.f32 %v432, %v571
      %v573 = vpop.f32.mrf.mxu0
      %v574 = vadd.f32 %v434, %v573
      %575 = vmatmul.bf16.gmra.mxu0 %v495
      %v576 = vpop.f32.mrf.mxu0
      %v577 = vadd.f32 %v437, %v576
      %v578 = vpop.f32.mrf.mxu0
      %v579 = vadd.f32 %v439, %v578
      %580 = vmatmul.bf16.gmra.mxu0 %v498
      %v581 = vpop.f32.mrf.mxu0
      %v582 = vadd.f32 %v442, %v581
      %v583 = vpop.f32.mrf.mxu0
      %v584 = vadd.f32 %v444, %v583
      %585 = vmatmul.bf16.gmra.mxu0 %v501
      %v586 = vpop.f32.mrf.mxu0
      %v587 = vadd.f32 %v447, %v586
      %v588 = vpop.f32.mrf.mxu0
      %v589 = vadd.f32 %v449, %v588
      %590 = vmatmul.bf16.gmra.mxu0 %v504
      %v591 = vpop.f32.mrf.mxu0
      %v592 = vadd.f32 %v452, %v591
      %v593 = vpop.f32.mrf.mxu0
      %v594 = vadd.f32 %v454, %v593
      %595 = vmatmul.bf16.gmra.mxu0 %v507
      %v596 = vpop.f32.mrf.mxu0
      %v597 = vadd.f32 %v457, %v596
      %v598 = vpop.f32.mrf.mxu0
      %v599 = vadd.f32 %v459, %v598
      %600 = vdwg.mxu0
      %v601 = vld [vmem:[%s204 + $0x2] sm:$0xff]
      %v602 = vld [vmem:[%s204 + $0xa] sm:$0xff]
      %v603 = vld [vmem:[%s204 + $0x1a] sm:$0xff]
      %v604 = vld [vmem:[%s204 + $0x22] sm:$0xff]
      %v605 = vld [vmem:[%s204 + $0x32] sm:$0xff]
      %v606 = vld [vmem:[%s204 + $0x3a] sm:$0xff]
      %v607 = vld [vmem:[%s204 + $0x4a] sm:$0xff]
      %v608 = vld [vmem:[%s204 + $0x52] sm:$0xff]
      %v609 = vld [vmem:[%s204 + $0x62] sm:$0xff]
      %v610 = vld [vmem:[%s204 + $0x6a] sm:$0xff]
      %v611 = vld [vmem:[%s204 + $0x7a] sm:$0xff]
      %v612 = vld [vmem:[%s204 + $0x82] sm:$0xff]
      %v613 = vld [vmem:[%s204 + $0x92] sm:$0xff]
      %v614 = vld [vmem:[%s204 + $0x9a] sm:$0xff]
      %v615 = vld [vmem:[%s204 + $0xaa] sm:$0xff]
      %v616 = vld [vmem:[%s204 + $0xb2] sm:$0xff]
      %v617 = vld [vmem:[%s204 + $0xc2] sm:$0xff]
      %v618 = vld [vmem:[%s204 + $0xca] sm:$0xff]
      %v619 = vld [vmem:[%s204 + $0xda] sm:$0xff]
      %v620 = vld [vmem:[%s204 + $0xe2] sm:$0xff]
      %v621 = vld [vmem:[%s204 + $0xf2] sm:$0xff]
      %v622 = vld [vmem:[%s204 + $0xfa] sm:$0xff]
      %v623 = vld [vmem:[%s204 + $0x10a] sm:$0xff]
      %v624 = vld [vmem:[%s204 + $0x112] sm:$0xff]
      %v625 = vld [vmem:[%s204 + $0x122] sm:$0xff]
      %v626 = vld [vmem:[%s204 + $0x12a] sm:$0xff]
      %v627 = vld [vmem:[%s204 + $0x13a] sm:$0xff]
      %v628 = vld [vmem:[%s204 + $0x142] sm:$0xff]
      %v629 = vld [vmem:[%s204 + $0x152] sm:$0xff]
      %v630 = vld [vmem:[%s204 + $0x15a] sm:$0xff]
      %v631 = vld [vmem:[%s204 + $0x16a] sm:$0xff]
      %v632 = vld [vmem:[%s204 + $0x172] sm:$0xff]
      %v633 = vpack.c.bf16 %v602, %v601
      %v634 = vpack.c.bf16 %v604, %v603
      %v635 = vpack.c.bf16 %v606, %v605
      %v636 = vpack.c.bf16 %v608, %v607
      %v637 = vpack.c.bf16 %v610, %v609
      %v638 = vpack.c.bf16 %v612, %v611
      %v639 = vpack.c.bf16 %v614, %v613
      %v640 = vpack.c.bf16 %v616, %v615
      %v641 = vpack.c.bf16 %v618, %v617
      %v642 = vpack.c.bf16 %v620, %v619
      %v643 = vpack.c.bf16 %v622, %v621
      %v644 = vpack.c.bf16 %v624, %v623
      %v645 = vpack.c.bf16 %v626, %v625
      %v646 = vpack.c.bf16 %v628, %v627
      %v647 = vpack.c.bf16 %v630, %v629
      %v648 = vpack.c.bf16 %v632, %v631
      %s649 = scalar_lea.vmem %s1, 8
      %v650 = vld [vmem:[%s649] sm:$0xf]
      %v652 = vsel %vm319, %v633, 0
      %v655 = vsel %vm319, %v634, 0
      %v658 = vsel %vm319, %v635, 0
      %v661 = vsel %vm319, %v636, 0
      %v664 = vsel %vm319, %v637, 0
      %v667 = vsel %vm319, %v638, 0
      %v670 = vsel %vm319, %v639, 0
      %v673 = vsel %vm319, %v640, 0
      %v676 = vsel %vm319, %v641, 0
      %v679 = vsel %vm319, %v642, 0
      %v682 = vsel %vm319, %v643, 0
      %v685 = vsel %vm319, %v644, 0
      %v688 = vsel %vm319, %v645, 0
      %v691 = vsel %vm319, %v646, 0
      %v694 = vsel %vm319, %v647, 0
      %v697 = vsel %vm319, %v648, 0
      %v700 = vsel %vm368, %v650, 0
      %702 = vmatpush.bf16.msra.mxu0 0
      %703 = vmatpush.bf16.msra.mxu0 0
      %704 = vmatpush.bf16.msra.mxu0 0
      %705 = vmatpush.bf16.msra.mxu0 0
      %706 = vmatpush.bf16.msra.mxu0 0
      %707 = vmatpush.bf16.msra.mxu0 0
      %708 = vmatpush.bf16.msra.mxu0 0
      %709 = vmatpush.bf16.msra.mxu0 %v700
      %710 = vmatmul.bf16.gmra.mxu0 %v652
      %v711 = vpop.f32.mrf.mxu0
      %v712 = vadd.f32 0.0, %v711
      %v713 = vpop.f32.mrf.mxu0
      %v714 = vadd.f32 0.0, %v713
      %715 = vmatmul.bf16.gmra.mxu0 %v655
      %v716 = vpop.f32.mrf.mxu0
      %v717 = vadd.f32 0.0, %v716
      %v718 = vpop.f32.mrf.mxu0
      %v719 = vadd.f32 0.0, %v718
      %720 = vmatmul.bf16.gmra.mxu0 %v658
      %v721 = vpop.f32.mrf.mxu0
      %v722 = vadd.f32 0.0, %v721
      %v723 = vpop.f32.mrf.mxu0
      %v724 = vadd.f32 0.0, %v723
      %725 = vmatmul.bf16.gmra.mxu0 %v661
      %v726 = vpop.f32.mrf.mxu0
      %v727 = vadd.f32 0.0, %v726
      %v728 = vpop.f32.mrf.mxu0
      %v729 = vadd.f32 0.0, %v728
      %730 = vmatmul.bf16.gmra.mxu0 %v664
      %v731 = vpop.f32.mrf.mxu0
      %v732 = vadd.f32 0.0, %v731
      %v733 = vpop.f32.mrf.mxu0
      %v734 = vadd.f32 0.0, %v733
      %735 = vmatmul.bf16.gmra.mxu0 %v667
      %v736 = vpop.f32.mrf.mxu0
      %v737 = vadd.f32 0.0, %v736
      %v738 = vpop.f32.mrf.mxu0
      %v739 = vadd.f32 0.0, %v738
      %740 = vmatmul.bf16.gmra.mxu0 %v670
      %v741 = vpop.f32.mrf.mxu0
      %v742 = vadd.f32 0.0, %v741
      %v743 = vpop.f32.mrf.mxu0
      %v744 = vadd.f32 0.0, %v743
      %745 = vmatmul.bf16.gmra.mxu0 %v673
      %v746 = vpop.f32.mrf.mxu0
      %v747 = vadd.f32 0.0, %v746
      %v748 = vpop.f32.mrf.mxu0
      %v749 = vadd.f32 0.0, %v748
      %750 = vmatmul.bf16.gmra.mxu0 %v676
      %v751 = vpop.f32.mrf.mxu0
      %v752 = vadd.f32 0.0, %v751
      %v753 = vpop.f32.mrf.mxu0
      %v754 = vadd.f32 0.0, %v753
      %755 = vmatmul.bf16.gmra.mxu0 %v679
      %v756 = vpop.f32.mrf.mxu0
      %v757 = vadd.f32 0.0, %v756
      %v758 = vpop.f32.mrf.mxu0
      %v759 = vadd.f32 0.0, %v758
      %760 = vmatmul.bf16.gmra.mxu0 %v682
      %v761 = vpop.f32.mrf.mxu0
      %v762 = vadd.f32 0.0, %v761
      %v763 = vpop.f32.mrf.mxu0
      %v764 = vadd.f32 0.0, %v763
      %765 = vmatmul.bf16.gmra.mxu0 %v685
      %v766 = vpop.f32.mrf.mxu0
      %v767 = vadd.f32 0.0, %v766
      %v768 = vpop.f32.mrf.mxu0
      %v769 = vadd.f32 0.0, %v768
      %770 = vmatmul.bf16.gmra.mxu0 %v688
      %v771 = vpop.f32.mrf.mxu0
      %v772 = vadd.f32 0.0, %v771
      %v773 = vpop.f32.mrf.mxu0
      %v774 = vadd.f32 0.0, %v773
      %775 = vmatmul.bf16.gmra.mxu0 %v691
      %v776 = vpop.f32.mrf.mxu0
      %v777 = vadd.f32 0.0, %v776
      %v778 = vpop.f32.mrf.mxu0
      %v779 = vadd.f32 0.0, %v778
      %780 = vmatmul.bf16.gmra.mxu0 %v694
      %v781 = vpop.f32.mrf.mxu0
      %v782 = vadd.f32 0.0, %v781
      %v783 = vpop.f32.mrf.mxu0
      %v784 = vadd.f32 0.0, %v783
      %785 = vmatmul.bf16.gmra.mxu0 %v697
      %v786 = vpop.f32.mrf.mxu0
      %v787 = vadd.f32 0.0, %v786
      %v788 = vpop.f32.mrf.mxu0
      %v789 = vadd.f32 0.0, %v788
      %790 = vdwg.mxu0
      %v791 = vadd.f32 %v522, %v712
      %v792 = vadd.f32 %v524, %v714
      %v793 = vadd.f32 %v527, %v717
      %v794 = vadd.f32 %v529, %v719
      %v795 = vadd.f32 %v532, %v722
      %v796 = vadd.f32 %v534, %v724
      %v797 = vadd.f32 %v537, %v727
      %v798 = vadd.f32 %v539, %v729
      %v799 = vadd.f32 %v542, %v732
      %v800 = vadd.f32 %v544, %v734
      %v801 = vadd.f32 %v547, %v737
      %v802 = vadd.f32 %v549, %v739
      %v803 = vadd.f32 %v552, %v742
      %v804 = vadd.f32 %v554, %v744
      %v805 = vadd.f32 %v557, %v747
      %v806 = vadd.f32 %v559, %v749
      %v807 = vadd.f32 %v562, %v752
      %v808 = vadd.f32 %v564, %v754
      %v809 = vadd.f32 %v567, %v757
      %v810 = vadd.f32 %v569, %v759
      %v811 = vadd.f32 %v572, %v762
      %v812 = vadd.f32 %v574, %v764
      %v813 = vadd.f32 %v577, %v767
      %v814 = vadd.f32 %v579, %v769
      %v815 = vadd.f32 %v582, %v772
      %v816 = vadd.f32 %v584, %v774
      %v817 = vadd.f32 %v587, %v777
      %v818 = vadd.f32 %v589, %v779
      %v819 = vadd.f32 %v592, %v782
      %v820 = vadd.f32 %v594, %v784
      %v821 = vadd.f32 %v597, %v787
      %v822 = vadd.f32 %v599, %v789
      %s823 = scalar_lea.vmem %s204, 24
      %v824 = vld [vmem:[%s823] sm:$0xff]
      %v825 = vld [vmem:[%s823 + $0x8] sm:$0xff]
      %v826 = vld [vmem:[%s823 + $0x18] sm:$0xff]
      %v827 = vld [vmem:[%s823 + $0x20] sm:$0xff]
      %v828 = vld [vmem:[%s823 + $0x30] sm:$0xff]
      %v829 = vld [vmem:[%s823 + $0x38] sm:$0xff]
      %v830 = vld [vmem:[%s823 + $0x48] sm:$0xff]
      %v831 = vld [vmem:[%s823 + $0x50] sm:$0xff]
      %v832 = vld [vmem:[%s823 + $0x60] sm:$0xff]
      %v833 = vld [vmem:[%s823 + $0x68] sm:$0xff]
      %v834 = vld [vmem:[%s823 + $0x78] sm:$0xff]
      %v835 = vld [vmem:[%s823 + $0x80] sm:$0xff]
      %v836 = vld [vmem:[%s823 + $0x90] sm:$0xff]
      %v837 = vld [vmem:[%s823 + $0x98] sm:$0xff]
      %v838 = vld [vmem:[%s823 + $0xa8] sm:$0xff]
      %v839 = vld [vmem:[%s823 + $0xb0] sm:$0xff]
      %v840 = vld [vmem:[%s823 + $0xc0] sm:$0xff]
      %v841 = vld [vmem:[%s823 + $0xc8] sm:$0xff]
      %v842 = vld [vmem:[%s823 + $0xd8] sm:$0xff]
      %v843 = vld [vmem:[%s823 + $0xe0] sm:$0xff]
      %v844 = vld [vmem:[%s823 + $0xf0] sm:$0xff]
      %v845 = vld [vmem:[%s823 + $0xf8] sm:$0xff]
      %v846 = vld [vmem:[%s823 + $0x108] sm:$0xff]
      %v847 = vld [vmem:[%s823 + $0x110] sm:$0xff]
      %v848 = vld [vmem:[%s823 + $0x120] sm:$0xff]
      %v849 = vld [vmem:[%s823 + $0x128] sm:$0xff]
      %v850 = vld [vmem:[%s823 + $0x138] sm:$0xff]
      %v851 = vld [vmem:[%s823 + $0x140] sm:$0xff]
      %v852 = vld [vmem:[%s823 + $0x150] sm:$0xff]
      %v853 = vld [vmem:[%s823 + $0x158] sm:$0xff]
      %v854 = vld [vmem:[%s823 + $0x168] sm:$0xff]
      %v855 = vld [vmem:[%s823 + $0x170] sm:$0xff]
      %v856 = vpack.c.bf16 %v825, %v824
      %v857 = vpack.c.bf16 %v827, %v826
      %v858 = vpack.c.bf16 %v829, %v828
      %v859 = vpack.c.bf16 %v831, %v830
      %v860 = vpack.c.bf16 %v833, %v832
      %v861 = vpack.c.bf16 %v835, %v834
      %v862 = vpack.c.bf16 %v837, %v836
      %v863 = vpack.c.bf16 %v839, %v838
      %v864 = vpack.c.bf16 %v841, %v840
      %v865 = vpack.c.bf16 %v843, %v842
      %v866 = vpack.c.bf16 %v845, %v844
      %v867 = vpack.c.bf16 %v847, %v846
      %v868 = vpack.c.bf16 %v849, %v848
      %v869 = vpack.c.bf16 %v851, %v850
      %v870 = vpack.c.bf16 %v853, %v852
      %v871 = vpack.c.bf16 %v855, %v854
      %s872 = scalar_lea.vmem %s1, 12
      %v873 = vld [vmem:[%s872] sm:$0xf]
      %v875 = vsel %vm319, %v856, 0
      %v878 = vsel %vm319, %v857, 0
      %v881 = vsel %vm319, %v858, 0
      %v884 = vsel %vm319, %v859, 0
      %v887 = vsel %vm319, %v860, 0
      %v890 = vsel %vm319, %v861, 0
      %v893 = vsel %vm319, %v862, 0
      %v896 = vsel %vm319, %v863, 0
      %v899 = vsel %vm319, %v864, 0
      %v902 = vsel %vm319, %v865, 0
      %v905 = vsel %vm319, %v866, 0
      %v908 = vsel %vm319, %v867, 0
      %v911 = vsel %vm319, %v868, 0
      %v914 = vsel %vm319, %v869, 0
      %v917 = vsel %vm319, %v870, 0
      %v920 = vsel %vm319, %v871, 0
      %v923 = vsel %vm368, %v873, 0
      %925 = vmatpush.bf16.msra.mxu0 0
      %926 = vmatpush.bf16.msra.mxu0 0
      %927 = vmatpush.bf16.msra.mxu0 0
      %928 = vmatpush.bf16.msra.mxu0 0
      %929 = vmatpush.bf16.msra.mxu0 0
      %930 = vmatpush.bf16.msra.mxu0 0
      %931 = vmatpush.bf16.msra.mxu0 0
      %932 = vmatpush.bf16.msra.mxu0 %v923
      %933 = vmatmul.bf16.gmra.mxu0 %v875
      %v934 = vpop.f32.mrf.mxu0
      %v935 = vadd.f32 0.0, %v934
      %v936 = vpop.f32.mrf.mxu0
      %v937 = vadd.f32 0.0, %v936
      %938 = vmatmul.bf16.gmra.mxu0 %v878
      %v939 = vpop.f32.mrf.mxu0
      %v940 = vadd.f32 0.0, %v939
      %v941 = vpop.f32.mrf.mxu0
      %v942 = vadd.f32 0.0, %v941
      %943 = vmatmul.bf16.gmra.mxu0 %v881
      %v944 = vpop.f32.mrf.mxu0
      %v945 = vadd.f32 0.0, %v944
      %v946 = vpop.f32.mrf.mxu0
      %v947 = vadd.f32 0.0, %v946
      %948 = vmatmul.bf16.gmra.mxu0 %v884
      %v949 = vpop.f32.mrf.mxu0
      %v950 = vadd.f32 0.0, %v949
      %v951 = vpop.f32.mrf.mxu0
      %v952 = vadd.f32 0.0, %v951
      %953 = vmatmul.bf16.gmra.mxu0 %v887
      %v954 = vpop.f32.mrf.mxu0
      %v955 = vadd.f32 0.0, %v954
      %v956 = vpop.f32.mrf.mxu0
      %v957 = vadd.f32 0.0, %v956
      %958 = vmatmul.bf16.gmra.mxu0 %v890
      %v959 = vpop.f32.mrf.mxu0
      %v960 = vadd.f32 0.0, %v959
      %v961 = vpop.f32.mrf.mxu0
      %v962 = vadd.f32 0.0, %v961
      %963 = vmatmul.bf16.gmra.mxu0 %v893
      %v964 = vpop.f32.mrf.mxu0
      %v965 = vadd.f32 0.0, %v964
      %v966 = vpop.f32.mrf.mxu0
      %v967 = vadd.f32 0.0, %v966
      %968 = vmatmul.bf16.gmra.mxu0 %v896
      %v969 = vpop.f32.mrf.mxu0
      %v970 = vadd.f32 0.0, %v969
      %v971 = vpop.f32.mrf.mxu0
      %v972 = vadd.f32 0.0, %v971
      %973 = vmatmul.bf16.gmra.mxu0 %v899
      %v974 = vpop.f32.mrf.mxu0
      %v975 = vadd.f32 0.0, %v974
      %v976 = vpop.f32.mrf.mxu0
      %v977 = vadd.f32 0.0, %v976
      %978 = vmatmul.bf16.gmra.mxu0 %v902
      %v979 = vpop.f32.mrf.mxu0
      %v980 = vadd.f32 0.0, %v979
      %v981 = vpop.f32.mrf.mxu0
      %v982 = vadd.f32 0.0, %v981
      %983 = vmatmul.bf16.gmra.mxu0 %v905
      %v984 = vpop.f32.mrf.mxu0
      %v985 = vadd.f32 0.0, %v984
      %v986 = vpop.f32.mrf.mxu0
      %v987 = vadd.f32 0.0, %v986
      %988 = vmatmul.bf16.gmra.mxu0 %v908
      %v989 = vpop.f32.mrf.mxu0
      %v990 = vadd.f32 0.0, %v989
      %v991 = vpop.f32.mrf.mxu0
      %v992 = vadd.f32 0.0, %v991
      %993 = vmatmul.bf16.gmra.mxu0 %v911
      %v994 = vpop.f32.mrf.mxu0
      %v995 = vadd.f32 0.0, %v994
      %v996 = vpop.f32.mrf.mxu0
      %v997 = vadd.f32 0.0, %v996
      %998 = vmatmul.bf16.gmra.mxu0 %v914
      %v999 = vpop.f32.mrf.mxu0
      %v1000 = vadd.f32 0.0, %v999
      %v1001 = vpop.f32.mrf.mxu0
      %v1002 = vadd.f32 0.0, %v1001
      %1003 = vmatmul.bf16.gmra.mxu0 %v917
      %v1004 = vpop.f32.mrf.mxu0
      %v1005 = vadd.f32 0.0, %v1004
      %v1006 = vpop.f32.mrf.mxu0
      %v1007 = vadd.f32 0.0, %v1006
      %1008 = vmatmul.bf16.gmra.mxu0 %v920
      %v1009 = vpop.f32.mrf.mxu0
      %v1010 = vadd.f32 0.0, %v1009
      %v1011 = vpop.f32.mrf.mxu0
      %v1012 = vadd.f32 0.0, %v1011
      %1013 = vdwg.mxu0
      %v1014 = vadd.f32 %v791, %v935
      %v1015 = vadd.f32 %v792, %v937
      %v1016 = vadd.f32 %v793, %v940
      %v1017 = vadd.f32 %v794, %v942
      %v1018 = vadd.f32 %v795, %v945
      %v1019 = vadd.f32 %v796, %v947
      %v1020 = vadd.f32 %v797, %v950
      %v1021 = vadd.f32 %v798, %v952
      %v1022 = vadd.f32 %v799, %v955
      %v1023 = vadd.f32 %v800, %v957
      %v1024 = vadd.f32 %v801, %v960
      %v1025 = vadd.f32 %v802, %v962
      %v1026 = vadd.f32 %v803, %v965
      %v1027 = vadd.f32 %v804, %v967
      %v1028 = vadd.f32 %v805, %v970
      %v1029 = vadd.f32 %v806, %v972
      %v1030 = vadd.f32 %v807, %v975
      %v1031 = vadd.f32 %v808, %v977
      %v1032 = vadd.f32 %v809, %v980
      %v1033 = vadd.f32 %v810, %v982
      %v1034 = vadd.f32 %v811, %v985
      %v1035 = vadd.f32 %v812, %v987
      %v1036 = vadd.f32 %v813, %v990
      %v1037 = vadd.f32 %v814, %v992
      %v1038 = vadd.f32 %v815, %v995
      %v1039 = vadd.f32 %v816, %v997
      %v1040 = vadd.f32 %v817, %v1000
      %v1041 = vadd.f32 %v818, %v1002
      %v1042 = vadd.f32 %v819, %v1005
      %v1043 = vadd.f32 %v820, %v1007
      %v1044 = vadd.f32 %v821, %v1010
      %v1045 = vadd.f32 %v822, %v1012
      %v1046 = vld [vmem:[%s823 + $0x1] sm:$0xff]
      %v1047 = vld [vmem:[%s823 + $0x9] sm:$0xff]
      %v1048 = vld [vmem:[%s823 + $0x19] sm:$0xff]
      %v1049 = vld [vmem:[%s823 + $0x21] sm:$0xff]
      %v1050 = vld [vmem:[%s823 + $0x31] sm:$0xff]
      %v1051 = vld [vmem:[%s823 + $0x39] sm:$0xff]
      %v1052 = vld [vmem:[%s823 + $0x49] sm:$0xff]
      %v1053 = vld [vmem:[%s823 + $0x51] sm:$0xff]
      %v1054 = vld [vmem:[%s823 + $0x61] sm:$0xff]
      %v1055 = vld [vmem:[%s823 + $0x69] sm:$0xff]
      %v1056 = vld [vmem:[%s823 + $0x79] sm:$0xff]
      %v1057 = vld [vmem:[%s823 + $0x81] sm:$0xff]
      %v1058 = vld [vmem:[%s823 + $0x91] sm:$0xff]
      %v1059 = vld [vmem:[%s823 + $0x99] sm:$0xff]
      %v1060 = vld [vmem:[%s823 + $0xa9] sm:$0xff]
      %v1061 = vld [vmem:[%s823 + $0xb1] sm:$0xff]
      %v1062 = vld [vmem:[%s823 + $0xc1] sm:$0xff]
      %v1063 = vld [vmem:[%s823 + $0xc9] sm:$0xff]
      %v1064 = vld [vmem:[%s823 + $0xd9] sm:$0xff]
      %v1065 = vld [vmem:[%s823 + $0xe1] sm:$0xff]
      %v1066 = vld [vmem:[%s823 + $0xf1] sm:$0xff]
      %v1067 = vld [vmem:[%s823 + $0xf9] sm:$0xff]
      %v1068 = vld [vmem:[%s823 + $0x109] sm:$0xff]
      %v1069 = vld [vmem:[%s823 + $0x111] sm:$0xff]
      %v1070 = vld [vmem:[%s823 + $0x121] sm:$0xff]
      %v1071 = vld [vmem:[%s823 + $0x129] sm:$0xff]
      %v1072 = vld [vmem:[%s823 + $0x139] sm:$0xff]
      %v1073 = vld [vmem:[%s823 + $0x141] sm:$0xff]
      %v1074 = vld [vmem:[%s823 + $0x151] sm:$0xff]
      %v1075 = vld [vmem:[%s823 + $0x159] sm:$0xff]
      %v1076 = vld [vmem:[%s823 + $0x169] sm:$0xff]
      %v1077 = vld [vmem:[%s823 + $0x171] sm:$0xff]
      %v1078 = vpack.c.bf16 %v1047, %v1046
      %v1079 = vpack.c.bf16 %v1049, %v1048
      %v1080 = vpack.c.bf16 %v1051, %v1050
      %v1081 = vpack.c.bf16 %v1053, %v1052
      %v1082 = vpack.c.bf16 %v1055, %v1054
      %v1083 = vpack.c.bf16 %v1057, %v1056
      %v1084 = vpack.c.bf16 %v1059, %v1058
      %v1085 = vpack.c.bf16 %v1061, %v1060
      %v1086 = vpack.c.bf16 %v1063, %v1062
      %v1087 = vpack.c.bf16 %v1065, %v1064
      %v1088 = vpack.c.bf16 %v1067, %v1066
      %v1089 = vpack.c.bf16 %v1069, %v1068
      %v1090 = vpack.c.bf16 %v1071, %v1070
      %v1091 = vpack.c.bf16 %v1073, %v1072
      %v1092 = vpack.c.bf16 %v1075, %v1074
      %v1093 = vpack.c.bf16 %v1077, %v1076
      %s1094 = scalar_lea.vmem %s1, 16
      %v1095 = vld [vmem:[%s1094] sm:$0xf]
      %v1097 = vsel %vm319, %v1078, 0
      %v1100 = vsel %vm319, %v1079, 0
      %v1103 = vsel %vm319, %v1080, 0
      %v1106 = vsel %vm319, %v1081, 0
      %v1109 = vsel %vm319, %v1082, 0
      %v1112 = vsel %vm319, %v1083, 0
      %v1115 = vsel %vm319, %v1084, 0
      %v1118 = vsel %vm319, %v1085, 0
      %v1121 = vsel %vm319, %v1086, 0
      %v1124 = vsel %vm319, %v1087, 0
      %v1127 = vsel %vm319, %v1088, 0
      %v1130 = vsel %vm319, %v1089, 0
      %v1133 = vsel %vm319, %v1090, 0
      %v1136 = vsel %vm319, %v1091, 0
      %v1139 = vsel %vm319, %v1092, 0
      %v1142 = vsel %vm319, %v1093, 0
      %v1145 = vsel %vm368, %v1095, 0
      %1147 = vmatpush.bf16.msra.mxu0 0
      %1148 = vmatpush.bf16.msra.mxu0 0
      %1149 = vmatpush.bf16.msra.mxu0 0
      %1150 = vmatpush.bf16.msra.mxu0 0
      %1151 = vmatpush.bf16.msra.mxu0 0
      %1152 = vmatpush.bf16.msra.mxu0 0
      %1153 = vmatpush.bf16.msra.mxu0 0
      %1154 = vmatpush.bf16.msra.mxu0 %v1145
      %1155 = vmatmul.bf16.gmra.mxu0 %v1097
      %v1156 = vpop.f32.mrf.mxu0
      %v1157 = vadd.f32 0.0, %v1156
      %v1158 = vpop.f32.mrf.mxu0
      %v1159 = vadd.f32 0.0, %v1158
      %1160 = vmatmul.bf16.gmra.mxu0 %v1100
      %v1161 = vpop.f32.mrf.mxu0
      %v1162 = vadd.f32 0.0, %v1161
      %v1163 = vpop.f32.mrf.mxu0
      %v1164 = vadd.f32 0.0, %v1163
      %1165 = vmatmul.bf16.gmra.mxu0 %v1103
      %v1166 = vpop.f32.mrf.mxu0
      %v1167 = vadd.f32 0.0, %v1166
      %v1168 = vpop.f32.mrf.mxu0
      %v1169 = vadd.f32 0.0, %v1168
      %1170 = vmatmul.bf16.gmra.mxu0 %v1106
      %v1171 = vpop.f32.mrf.mxu0
      %v1172 = vadd.f32 0.0, %v1171
      %v1173 = vpop.f32.mrf.mxu0
      %v1174 = vadd.f32 0.0, %v1173
      %1175 = vmatmul.bf16.gmra.mxu0 %v1109
      %v1176 = vpop.f32.mrf.mxu0
      %v1177 = vadd.f32 0.0, %v1176
      %v1178 = vpop.f32.mrf.mxu0
      %v1179 = vadd.f32 0.0, %v1178
      %1180 = vmatmul.bf16.gmra.mxu0 %v1112
      %v1181 = vpop.f32.mrf.mxu0
      %v1182 = vadd.f32 0.0, %v1181
      %v1183 = vpop.f32.mrf.mxu0
      %v1184 = vadd.f32 0.0, %v1183
      %1185 = vmatmul.bf16.gmra.mxu0 %v1115
      %v1186 = vpop.f32.mrf.mxu0
      %v1187 = vadd.f32 0.0, %v1186
      %v1188 = vpop.f32.mrf.mxu0
      %v1189 = vadd.f32 0.0, %v1188
      %1190 = vmatmul.bf16.gmra.mxu0 %v1118
      %v1191 = vpop.f32.mrf.mxu0
      %v1192 = vadd.f32 0.0, %v1191
      %v1193 = vpop.f32.mrf.mxu0
      %v1194 = vadd.f32 0.0, %v1193
      %1195 = vmatmul.bf16.gmra.mxu0 %v1121
      %v1196 = vpop.f32.mrf.mxu0
      %v1197 = vadd.f32 0.0, %v1196
      %v1198 = vpop.f32.mrf.mxu0
      %v1199 = vadd.f32 0.0, %v1198
      %1200 = vmatmul.bf16.gmra.mxu0 %v1124
      %v1201 = vpop.f32.mrf.mxu0
      %v1202 = vadd.f32 0.0, %v1201
      %v1203 = vpop.f32.mrf.mxu0
      %v1204 = vadd.f32 0.0, %v1203
      %1205 = vmatmul.bf16.gmra.mxu0 %v1127
      %v1206 = vpop.f32.mrf.mxu0
      %v1207 = vadd.f32 0.0, %v1206
      %v1208 = vpop.f32.mrf.mxu0
      %v1209 = vadd.f32 0.0, %v1208
      %1210 = vmatmul.bf16.gmra.mxu0 %v1130
      %v1211 = vpop.f32.mrf.mxu0
      %v1212 = vadd.f32 0.0, %v1211
      %v1213 = vpop.f32.mrf.mxu0
      %v1214 = vadd.f32 0.0, %v1213
      %1215 = vmatmul.bf16.gmra.mxu0 %v1133
      %v1216 = vpop.f32.mrf.mxu0
      %v1217 = vadd.f32 0.0, %v1216
      %v1218 = vpop.f32.mrf.mxu0
      %v1219 = vadd.f32 0.0, %v1218
      %1220 = vmatmul.bf16.gmra.mxu0 %v1136
      %v1221 = vpop.f32.mrf.mxu0
      %v1222 = vadd.f32 0.0, %v1221
      %v1223 = vpop.f32.mrf.mxu0
      %v1224 = vadd.f32 0.0, %v1223
      %1225 = vmatmul.bf16.gmra.mxu0 %v1139
      %v1226 = vpop.f32.mrf.mxu0
      %v1227 = vadd.f32 0.0, %v1226
      %v1228 = vpop.f32.mrf.mxu0
      %v1229 = vadd.f32 0.0, %v1228
      %1230 = vmatmul.bf16.gmra.mxu0 %v1142
      %v1231 = vpop.f32.mrf.mxu0
      %v1232 = vadd.f32 0.0, %v1231
      %v1233 = vpop.f32.mrf.mxu0
      %v1234 = vadd.f32 0.0, %v1233
      %1235 = vdwg.mxu0
      %v1236 = vadd.f32 %v1014, %v1157
      %v1237 = vadd.f32 %v1015, %v1159
      %v1238 = vadd.f32 %v1016, %v1162
      %v1239 = vadd.f32 %v1017, %v1164
      %v1240 = vadd.f32 %v1018, %v1167
      %v1241 = vadd.f32 %v1019, %v1169
      %v1242 = vadd.f32 %v1020, %v1172
      %v1243 = vadd.f32 %v1021, %v1174
      %v1244 = vadd.f32 %v1022, %v1177
      %v1245 = vadd.f32 %v1023, %v1179
      %v1246 = vadd.f32 %v1024, %v1182
      %v1247 = vadd.f32 %v1025, %v1184
      %v1248 = vadd.f32 %v1026, %v1187
      %v1249 = vadd.f32 %v1027, %v1189
      %v1250 = vadd.f32 %v1028, %v1192
      %v1251 = vadd.f32 %v1029, %v1194
      %v1252 = vadd.f32 %v1030, %v1197
      %v1253 = vadd.f32 %v1031, %v1199
      %v1254 = vadd.f32 %v1032, %v1202
      %v1255 = vadd.f32 %v1033, %v1204
      %v1256 = vadd.f32 %v1034, %v1207
      %v1257 = vadd.f32 %v1035, %v1209
      %v1258 = vadd.f32 %v1036, %v1212
      %v1259 = vadd.f32 %v1037, %v1214
      %v1260 = vadd.f32 %v1038, %v1217
      %v1261 = vadd.f32 %v1039, %v1219
      %v1262 = vadd.f32 %v1040, %v1222
      %v1263 = vadd.f32 %v1041, %v1224
      %v1264 = vadd.f32 %v1042, %v1227
      %v1265 = vadd.f32 %v1043, %v1229
      %v1266 = vadd.f32 %v1044, %v1232
      %v1267 = vadd.f32 %v1045, %v1234
      %v1268 = vld [vmem:[%s823 + $0x2] sm:$0xff]
      %v1269 = vld [vmem:[%s823 + $0xa] sm:$0xff]
      %v1270 = vld [vmem:[%s823 + $0x1a] sm:$0xff]
      %v1271 = vld [vmem:[%s823 + $0x22] sm:$0xff]
      %v1272 = vld [vmem:[%s823 + $0x32] sm:$0xff]
      %v1273 = vld [vmem:[%s823 + $0x3a] sm:$0xff]
      %v1274 = vld [vmem:[%s823 + $0x4a] sm:$0xff]
      %v1275 = vld [vmem:[%s823 + $0x52] sm:$0xff]
      %v1276 = vld [vmem:[%s823 + $0x62] sm:$0xff]
      %v1277 = vld [vmem:[%s823 + $0x6a] sm:$0xff]
      %v1278 = vld [vmem:[%s823 + $0x7a] sm:$0xff]
      %v1279 = vld [vmem:[%s823 + $0x82] sm:$0xff]
      %v1280 = vld [vmem:[%s823 + $0x92] sm:$0xff]
      %v1281 = vld [vmem:[%s823 + $0x9a] sm:$0xff]
      %v1282 = vld [vmem:[%s823 + $0xaa] sm:$0xff]
      %v1283 = vld [vmem:[%s823 + $0xb2] sm:$0xff]
      %v1284 = vld [vmem:[%s823 + $0xc2] sm:$0xff]
      %v1285 = vld [vmem:[%s823 + $0xca] sm:$0xff]
      %v1286 = vld [vmem:[%s823 + $0xda] sm:$0xff]
      %v1287 = vld [vmem:[%s823 + $0xe2] sm:$0xff]
      %v1288 = vld [vmem:[%s823 + $0xf2] sm:$0xff]
      %v1289 = vld [vmem:[%s823 + $0xfa] sm:$0xff]
      %v1290 = vld [vmem:[%s823 + $0x10a] sm:$0xff]
      %v1291 = vld [vmem:[%s823 + $0x112] sm:$0xff]
      %v1292 = vld [vmem:[%s823 + $0x122] sm:$0xff]
      %v1293 = vld [vmem:[%s823 + $0x12a] sm:$0xff]
      %v1294 = vld [vmem:[%s823 + $0x13a] sm:$0xff]
      %v1295 = vld [vmem:[%s823 + $0x142] sm:$0xff]
      %v1296 = vld [vmem:[%s823 + $0x152] sm:$0xff]
      %v1297 = vld [vmem:[%s823 + $0x15a] sm:$0xff]
      %v1298 = vld [vmem:[%s823 + $0x16a] sm:$0xff]
      %v1299 = vld [vmem:[%s823 + $0x172] sm:$0xff]
      %v1300 = vpack.c.bf16 %v1269, %v1268
      %v1301 = vpack.c.bf16 %v1271, %v1270
      %v1302 = vpack.c.bf16 %v1273, %v1272
      %v1303 = vpack.c.bf16 %v1275, %v1274
      %v1304 = vpack.c.bf16 %v1277, %v1276
      %v1305 = vpack.c.bf16 %v1279, %v1278
      %v1306 = vpack.c.bf16 %v1281, %v1280
      %v1307 = vpack.c.bf16 %v1283, %v1282
      %v1308 = vpack.c.bf16 %v1285, %v1284
      %v1309 = vpack.c.bf16 %v1287, %v1286
      %v1310 = vpack.c.bf16 %v1289, %v1288
      %v1311 = vpack.c.bf16 %v1291, %v1290
      %v1312 = vpack.c.bf16 %v1293, %v1292
      %v1313 = vpack.c.bf16 %v1295, %v1294
      %v1314 = vpack.c.bf16 %v1297, %v1296
      %v1315 = vpack.c.bf16 %v1299, %v1298
      %s1316 = scalar_lea.vmem %s1, 20
      %v1317 = vld [vmem:[%s1316] sm:$0xf]
      %v1319 = vsel %vm319, %v1300, 0
      %v1322 = vsel %vm319, %v1301, 0
      %v1325 = vsel %vm319, %v1302, 0
      %v1328 = vsel %vm319, %v1303, 0
      %v1331 = vsel %vm319, %v1304, 0
      %v1334 = vsel %vm319, %v1305, 0
      %v1337 = vsel %vm319, %v1306, 0
      %v1340 = vsel %vm319, %v1307, 0
      %v1343 = vsel %vm319, %v1308, 0
      %v1346 = vsel %vm319, %v1309, 0
      %v1349 = vsel %vm319, %v1310, 0
      %v1352 = vsel %vm319, %v1311, 0
      %v1355 = vsel %vm319, %v1312, 0
      %v1358 = vsel %vm319, %v1313, 0
      %v1361 = vsel %vm319, %v1314, 0
      %v1364 = vsel %vm319, %v1315, 0
      %v1367 = vsel %vm368, %v1317, 0
      %1369 = vmatpush.bf16.msra.mxu0 0
      %1370 = vmatpush.bf16.msra.mxu0 0
      %1371 = vmatpush.bf16.msra.mxu0 0
      %1372 = vmatpush.bf16.msra.mxu0 0
      %1373 = vmatpush.bf16.msra.mxu0 0
      %1374 = vmatpush.bf16.msra.mxu0 0
      %1375 = vmatpush.bf16.msra.mxu0 0
      %1376 = vmatpush.bf16.msra.mxu0 %v1367
      %1377 = vmatmul.bf16.gmra.mxu0 %v1319
      %v1378 = vpop.f32.mrf.mxu0
      %v1379 = vadd.f32 0.0, %v1378
      %v1380 = vpop.f32.mrf.mxu0
      %v1381 = vadd.f32 0.0, %v1380
      %1382 = vmatmul.bf16.gmra.mxu0 %v1322
      %v1383 = vpop.f32.mrf.mxu0
      %v1384 = vadd.f32 0.0, %v1383
      %v1385 = vpop.f32.mrf.mxu0
      %v1386 = vadd.f32 0.0, %v1385
      %1387 = vmatmul.bf16.gmra.mxu0 %v1325
      %v1388 = vpop.f32.mrf.mxu0
      %v1389 = vadd.f32 0.0, %v1388
      %v1390 = vpop.f32.mrf.mxu0
      %v1391 = vadd.f32 0.0, %v1390
      %1392 = vmatmul.bf16.gmra.mxu0 %v1328
      %v1393 = vpop.f32.mrf.mxu0
      %v1394 = vadd.f32 0.0, %v1393
      %v1395 = vpop.f32.mrf.mxu0
      %v1396 = vadd.f32 0.0, %v1395
      %1397 = vmatmul.bf16.gmra.mxu0 %v1331
      %v1398 = vpop.f32.mrf.mxu0
      %v1399 = vadd.f32 0.0, %v1398
      %v1400 = vpop.f32.mrf.mxu0
      %v1401 = vadd.f32 0.0, %v1400
      %1402 = vmatmul.bf16.gmra.mxu0 %v1334
      %v1403 = vpop.f32.mrf.mxu0
      %v1404 = vadd.f32 0.0, %v1403
      %v1405 = vpop.f32.mrf.mxu0
      %v1406 = vadd.f32 0.0, %v1405
      %1407 = vmatmul.bf16.gmra.mxu0 %v1337
      %v1408 = vpop.f32.mrf.mxu0
      %v1409 = vadd.f32 0.0, %v1408
      %v1410 = vpop.f32.mrf.mxu0
      %v1411 = vadd.f32 0.0, %v1410
      %1412 = vmatmul.bf16.gmra.mxu0 %v1340
      %v1413 = vpop.f32.mrf.mxu0
      %v1414 = vadd.f32 0.0, %v1413
      %v1415 = vpop.f32.mrf.mxu0
      %v1416 = vadd.f32 0.0, %v1415
      %1417 = vmatmul.bf16.gmra.mxu0 %v1343
      %v1418 = vpop.f32.mrf.mxu0
      %v1419 = vadd.f32 0.0, %v1418
      %v1420 = vpop.f32.mrf.mxu0
      %v1421 = vadd.f32 0.0, %v1420
      %1422 = vmatmul.bf16.gmra.mxu0 %v1346
      %v1423 = vpop.f32.mrf.mxu0
      %v1424 = vadd.f32 0.0, %v1423
      %v1425 = vpop.f32.mrf.mxu0
      %v1426 = vadd.f32 0.0, %v1425
      %1427 = vmatmul.bf16.gmra.mxu0 %v1349
      %v1428 = vpop.f32.mrf.mxu0
      %v1429 = vadd.f32 0.0, %v1428
      %v1430 = vpop.f32.mrf.mxu0
      %v1431 = vadd.f32 0.0, %v1430
      %1432 = vmatmul.bf16.gmra.mxu0 %v1352
      %v1433 = vpop.f32.mrf.mxu0
      %v1434 = vadd.f32 0.0, %v1433
      %v1435 = vpop.f32.mrf.mxu0
      %v1436 = vadd.f32 0.0, %v1435
      %1437 = vmatmul.bf16.gmra.mxu0 %v1355
      %v1438 = vpop.f32.mrf.mxu0
      %v1439 = vadd.f32 0.0, %v1438
      %v1440 = vpop.f32.mrf.mxu0
      %v1441 = vadd.f32 0.0, %v1440
      %1442 = vmatmul.bf16.gmra.mxu0 %v1358
      %v1443 = vpop.f32.mrf.mxu0
      %v1444 = vadd.f32 0.0, %v1443
      %v1445 = vpop.f32.mrf.mxu0
      %v1446 = vadd.f32 0.0, %v1445
      %1447 = vmatmul.bf16.gmra.mxu0 %v1361
      %v1448 = vpop.f32.mrf.mxu0
      %v1449 = vadd.f32 0.0, %v1448
      %v1450 = vpop.f32.mrf.mxu0
      %v1451 = vadd.f32 0.0, %v1450
      %1452 = vmatmul.bf16.gmra.mxu0 %v1364
      %v1453 = vpop.f32.mrf.mxu0
      %v1454 = vadd.f32 0.0, %v1453
      %v1455 = vpop.f32.mrf.mxu0
      %v1456 = vadd.f32 0.0, %v1455
      %1457 = vdwg.mxu0
      %v1458 = vadd.f32 %v1236, %v1379
      %v1459 = vadd.f32 %v1237, %v1381
      %v1460 = vadd.f32 %v1238, %v1384
      %v1461 = vadd.f32 %v1239, %v1386
      %v1462 = vadd.f32 %v1240, %v1389
      %v1463 = vadd.f32 %v1241, %v1391
      %v1464 = vadd.f32 %v1242, %v1394
      %v1465 = vadd.f32 %v1243, %v1396
      %v1466 = vadd.f32 %v1244, %v1399
      %v1467 = vadd.f32 %v1245, %v1401
      %v1468 = vadd.f32 %v1246, %v1404
      %v1469 = vadd.f32 %v1247, %v1406
      %v1470 = vadd.f32 %v1248, %v1409
      %v1471 = vadd.f32 %v1249, %v1411
      %v1472 = vadd.f32 %v1250, %v1414
      %v1473 = vadd.f32 %v1251, %v1416
      %v1474 = vadd.f32 %v1252, %v1419
      %v1475 = vadd.f32 %v1253, %v1421
      %v1476 = vadd.f32 %v1254, %v1424
      %v1477 = vadd.f32 %v1255, %v1426
      %v1478 = vadd.f32 %v1256, %v1429
      %v1479 = vadd.f32 %v1257, %v1431
      %v1480 = vadd.f32 %v1258, %v1434
      %v1481 = vadd.f32 %v1259, %v1436
      %v1482 = vadd.f32 %v1260, %v1439
      %v1483 = vadd.f32 %v1261, %v1441
      %v1484 = vadd.f32 %v1262, %v1444
      %v1485 = vadd.f32 %v1263, %v1446
      %v1486 = vadd.f32 %v1264, %v1449
      %v1487 = vadd.f32 %v1265, %v1451
      %v1488 = vadd.f32 %v1266, %v1454
      %v1489 = vadd.f32 %v1267, %v1456
      %s1490 = scalar_lea.vmem %s204, 48
      %v1491 = vld [vmem:[%s1490] sm:$0xff]
      %v1492 = vld [vmem:[%s1490 + $0x8] sm:$0xff]
      %v1493 = vld [vmem:[%s1490 + $0x18] sm:$0xff]
      %v1494 = vld [vmem:[%s1490 + $0x20] sm:$0xff]
      %v1495 = vld [vmem:[%s1490 + $0x30] sm:$0xff]
      %v1496 = vld [vmem:[%s1490 + $0x38] sm:$0xff]
      %v1497 = vld [vmem:[%s1490 + $0x48] sm:$0xff]
      %v1498 = vld [vmem:[%s1490 + $0x50] sm:$0xff]
      %v1499 = vld [vmem:[%s1490 + $0x60] sm:$0xff]
      %v1500 = vld [vmem:[%s1490 + $0x68] sm:$0xff]
      %v1501 = vld [vmem:[%s1490 + $0x78] sm:$0xff]
      %v1502 = vld [vmem:[%s1490 + $0x80] sm:$0xff]
      %v1503 = vld [vmem:[%s1490 + $0x90] sm:$0xff]
      %v1504 = vld [vmem:[%s1490 + $0x98] sm:$0xff]
      %v1505 = vld [vmem:[%s1490 + $0xa8] sm:$0xff]
      %v1506 = vld [vmem:[%s1490 + $0xb0] sm:$0xff]
      %v1507 = vld [vmem:[%s1490 + $0xc0] sm:$0xff]
      %v1508 = vld [vmem:[%s1490 + $0xc8] sm:$0xff]
      %v1509 = vld [vmem:[%s1490 + $0xd8] sm:$0xff]
      %v1510 = vld [vmem:[%s1490 + $0xe0] sm:$0xff]
      %v1511 = vld [vmem:[%s1490 + $0xf0] sm:$0xff]
      %v1512 = vld [vmem:[%s1490 + $0xf8] sm:$0xff]
      %v1513 = vld [vmem:[%s1490 + $0x108] sm:$0xff]
      %v1514 = vld [vmem:[%s1490 + $0x110] sm:$0xff]
      %v1515 = vld [vmem:[%s1490 + $0x120] sm:$0xff]
      %v1516 = vld [vmem:[%s1490 + $0x128] sm:$0xff]
      %v1517 = vld [vmem:[%s1490 + $0x138] sm:$0xff]
      %v1518 = vld [vmem:[%s1490 + $0x140] sm:$0xff]
      %v1519 = vld [vmem:[%s1490 + $0x150] sm:$0xff]
      %v1520 = vld [vmem:[%s1490 + $0x158] sm:$0xff]
      %v1521 = vld [vmem:[%s1490 + $0x168] sm:$0xff]
      %v1522 = vld [vmem:[%s1490 + $0x170] sm:$0xff]
      %v1523 = vpack.c.bf16 %v1492, %v1491
      %v1524 = vpack.c.bf16 %v1494, %v1493
      %v1525 = vpack.c.bf16 %v1496, %v1495
      %v1526 = vpack.c.bf16 %v1498, %v1497
      %v1527 = vpack.c.bf16 %v1500, %v1499
      %v1528 = vpack.c.bf16 %v1502, %v1501
      %v1529 = vpack.c.bf16 %v1504, %v1503
      %v1530 = vpack.c.bf16 %v1506, %v1505
      %v1531 = vpack.c.bf16 %v1508, %v1507
      %v1532 = vpack.c.bf16 %v1510, %v1509
      %v1533 = vpack.c.bf16 %v1512, %v1511
      %v1534 = vpack.c.bf16 %v1514, %v1513
      %v1535 = vpack.c.bf16 %v1516, %v1515
      %v1536 = vpack.c.bf16 %v1518, %v1517
      %v1537 = vpack.c.bf16 %v1520, %v1519
      %v1538 = vpack.c.bf16 %v1522, %v1521
      %s1539 = scalar_lea.vmem %s1, 24
      %v1540 = vld [vmem:[%s1539] sm:$0xf]
      %v1542 = vsel %vm319, %v1523, 0
      %v1545 = vsel %vm319, %v1524, 0
      %v1548 = vsel %vm319, %v1525, 0
      %v1551 = vsel %vm319, %v1526, 0
      %v1554 = vsel %vm319, %v1527, 0
      %v1557 = vsel %vm319, %v1528, 0
      %v1560 = vsel %vm319, %v1529, 0
      %v1563 = vsel %vm319, %v1530, 0
      %v1566 = vsel %vm319, %v1531, 0
      %v1569 = vsel %vm319, %v1532, 0
      %v1572 = vsel %vm319, %v1533, 0
      %v1575 = vsel %vm319, %v1534, 0
      %v1578 = vsel %vm319, %v1535, 0
      %v1581 = vsel %vm319, %v1536, 0
      %v1584 = vsel %vm319, %v1537, 0
      %v1587 = vsel %vm319, %v1538, 0
      %v1590 = vsel %vm368, %v1540, 0
      %1592 = vmatpush.bf16.msra.mxu0 0
      %1593 = vmatpush.bf16.msra.mxu0 0
      %1594 = vmatpush.bf16.msra.mxu0 0
      %1595 = vmatpush.bf16.msra.mxu0 0
      %1596 = vmatpush.bf16.msra.mxu0 0
      %1597 = vmatpush.bf16.msra.mxu0 0
      %1598 = vmatpush.bf16.msra.mxu0 0
      %1599 = vmatpush.bf16.msra.mxu0 %v1590
      %1600 = vmatmul.bf16.gmra.mxu0 %v1542
      %v1601 = vpop.f32.mrf.mxu0
      %v1602 = vadd.f32 0.0, %v1601
      %v1603 = vpop.f32.mrf.mxu0
      %v1604 = vadd.f32 0.0, %v1603
      %1605 = vmatmul.bf16.gmra.mxu0 %v1545
      %v1606 = vpop.f32.mrf.mxu0
      %v1607 = vadd.f32 0.0, %v1606
      %v1608 = vpop.f32.mrf.mxu0
      %v1609 = vadd.f32 0.0, %v1608
      %1610 = vmatmul.bf16.gmra.mxu0 %v1548
      %v1611 = vpop.f32.mrf.mxu0
      %v1612 = vadd.f32 0.0, %v1611
      %v1613 = vpop.f32.mrf.mxu0
      %v1614 = vadd.f32 0.0, %v1613
      %1615 = vmatmul.bf16.gmra.mxu0 %v1551
      %v1616 = vpop.f32.mrf.mxu0
      %v1617 = vadd.f32 0.0, %v1616
      %v1618 = vpop.f32.mrf.mxu0
      %v1619 = vadd.f32 0.0, %v1618
      %1620 = vmatmul.bf16.gmra.mxu0 %v1554
      %v1621 = vpop.f32.mrf.mxu0
      %v1622 = vadd.f32 0.0, %v1621
      %v1623 = vpop.f32.mrf.mxu0
      %v1624 = vadd.f32 0.0, %v1623
      %1625 = vmatmul.bf16.gmra.mxu0 %v1557
      %v1626 = vpop.f32.mrf.mxu0
      %v1627 = vadd.f32 0.0, %v1626
      %v1628 = vpop.f32.mrf.mxu0
      %v1629 = vadd.f32 0.0, %v1628
      %1630 = vmatmul.bf16.gmra.mxu0 %v1560
      %v1631 = vpop.f32.mrf.mxu0
      %v1632 = vadd.f32 0.0, %v1631
      %v1633 = vpop.f32.mrf.mxu0
      %v1634 = vadd.f32 0.0, %v1633
      %1635 = vmatmul.bf16.gmra.mxu0 %v1563
      %v1636 = vpop.f32.mrf.mxu0
      %v1637 = vadd.f32 0.0, %v1636
      %v1638 = vpop.f32.mrf.mxu0
      %v1639 = vadd.f32 0.0, %v1638
      %1640 = vmatmul.bf16.gmra.mxu0 %v1566
      %v1641 = vpop.f32.mrf.mxu0
      %v1642 = vadd.f32 0.0, %v1641
      %v1643 = vpop.f32.mrf.mxu0
      %v1644 = vadd.f32 0.0, %v1643
      %1645 = vmatmul.bf16.gmra.mxu0 %v1569
      %v1646 = vpop.f32.mrf.mxu0
      %v1647 = vadd.f32 0.0, %v1646
      %v1648 = vpop.f32.mrf.mxu0
      %v1649 = vadd.f32 0.0, %v1648
      %1650 = vmatmul.bf16.gmra.mxu0 %v1572
      %v1651 = vpop.f32.mrf.mxu0
      %v1652 = vadd.f32 0.0, %v1651
      %v1653 = vpop.f32.mrf.mxu0
      %v1654 = vadd.f32 0.0, %v1653
      %1655 = vmatmul.bf16.gmra.mxu0 %v1575
      %v1656 = vpop.f32.mrf.mxu0
      %v1657 = vadd.f32 0.0, %v1656
      %v1658 = vpop.f32.mrf.mxu0
      %v1659 = vadd.f32 0.0, %v1658
      %1660 = vmatmul.bf16.gmra.mxu0 %v1578
      %v1661 = vpop.f32.mrf.mxu0
      %v1662 = vadd.f32 0.0, %v1661
      %v1663 = vpop.f32.mrf.mxu0
      %v1664 = vadd.f32 0.0, %v1663
      %1665 = vmatmul.bf16.gmra.mxu0 %v1581
      %v1666 = vpop.f32.mrf.mxu0
      %v1667 = vadd.f32 0.0, %v1666
      %v1668 = vpop.f32.mrf.mxu0
      %v1669 = vadd.f32 0.0, %v1668
      %1670 = vmatmul.bf16.gmra.mxu0 %v1584
      %v1671 = vpop.f32.mrf.mxu0
      %v1672 = vadd.f32 0.0, %v1671
      %v1673 = vpop.f32.mrf.mxu0
      %v1674 = vadd.f32 0.0, %v1673
      %1675 = vmatmul.bf16.gmra.mxu0 %v1587
      %v1676 = vpop.f32.mrf.mxu0
      %v1677 = vadd.f32 0.0, %v1676
      %v1678 = vpop.f32.mrf.mxu0
      %v1679 = vadd.f32 0.0, %v1678
      %1680 = vdwg.mxu0
      %v1681 = vadd.f32 %v1458, %v1602
      %v1682 = vadd.f32 %v1459, %v1604
      %v1683 = vadd.f32 %v1460, %v1607
      %v1684 = vadd.f32 %v1461, %v1609
      %v1685 = vadd.f32 %v1462, %v1612
      %v1686 = vadd.f32 %v1463, %v1614
      %v1687 = vadd.f32 %v1464, %v1617
      %v1688 = vadd.f32 %v1465, %v1619
      %v1689 = vadd.f32 %v1466, %v1622
      %v1690 = vadd.f32 %v1467, %v1624
      %v1691 = vadd.f32 %v1468, %v1627
      %v1692 = vadd.f32 %v1469, %v1629
      %v1693 = vadd.f32 %v1470, %v1632
      %v1694 = vadd.f32 %v1471, %v1634
      %v1695 = vadd.f32 %v1472, %v1637
      %v1696 = vadd.f32 %v1473, %v1639
      %v1697 = vadd.f32 %v1474, %v1642
      %v1698 = vadd.f32 %v1475, %v1644
      %v1699 = vadd.f32 %v1476, %v1647
      %v1700 = vadd.f32 %v1477, %v1649
      %v1701 = vadd.f32 %v1478, %v1652
      %v1702 = vadd.f32 %v1479, %v1654
      %v1703 = vadd.f32 %v1480, %v1657
      %v1704 = vadd.f32 %v1481, %v1659
      %v1705 = vadd.f32 %v1482, %v1662
      %v1706 = vadd.f32 %v1483, %v1664
      %v1707 = vadd.f32 %v1484, %v1667
      %v1708 = vadd.f32 %v1485, %v1669
      %v1709 = vadd.f32 %v1486, %v1672
      %v1710 = vadd.f32 %v1487, %v1674
      %v1711 = vadd.f32 %v1488, %v1677
      %v1712 = vadd.f32 %v1489, %v1679
      %v1713 = vld [vmem:[%s1490 + $0x1] sm:$0xff]
      %v1714 = vld [vmem:[%s1490 + $0x9] sm:$0xff]
      %v1715 = vld [vmem:[%s1490 + $0x19] sm:$0xff]
      %v1716 = vld [vmem:[%s1490 + $0x21] sm:$0xff]
      %v1717 = vld [vmem:[%s1490 + $0x31] sm:$0xff]
      %v1718 = vld [vmem:[%s1490 + $0x39] sm:$0xff]
      %v1719 = vld [vmem:[%s1490 + $0x49] sm:$0xff]
      %v1720 = vld [vmem:[%s1490 + $0x51] sm:$0xff]
      %v1721 = vld [vmem:[%s1490 + $0x61] sm:$0xff]
      %v1722 = vld [vmem:[%s1490 + $0x69] sm:$0xff]
      %v1723 = vld [vmem:[%s1490 + $0x79] sm:$0xff]
      %v1724 = vld [vmem:[%s1490 + $0x81] sm:$0xff]
      %v1725 = vld [vmem:[%s1490 + $0x91] sm:$0xff]
      %v1726 = vld [vmem:[%s1490 + $0x99] sm:$0xff]
      %v1727 = vld [vmem:[%s1490 + $0xa9] sm:$0xff]
      %v1728 = vld [vmem:[%s1490 + $0xb1] sm:$0xff]
      %v1729 = vld [vmem:[%s1490 + $0xc1] sm:$0xff]
      %v1730 = vld [vmem:[%s1490 + $0xc9] sm:$0xff]
      %v1731 = vld [vmem:[%s1490 + $0xd9] sm:$0xff]
      %v1732 = vld [vmem:[%s1490 + $0xe1] sm:$0xff]
      %v1733 = vld [vmem:[%s1490 + $0xf1] sm:$0xff]
      %v1734 = vld [vmem:[%s1490 + $0xf9] sm:$0xff]
      %v1735 = vld [vmem:[%s1490 + $0x109] sm:$0xff]
      %v1736 = vld [vmem:[%s1490 + $0x111] sm:$0xff]
      %v1737 = vld [vmem:[%s1490 + $0x121] sm:$0xff]
      %v1738 = vld [vmem:[%s1490 + $0x129] sm:$0xff]
      %v1739 = vld [vmem:[%s1490 + $0x139] sm:$0xff]
      %v1740 = vld [vmem:[%s1490 + $0x141] sm:$0xff]
      %v1741 = vld [vmem:[%s1490 + $0x151] sm:$0xff]
      %v1742 = vld [vmem:[%s1490 + $0x159] sm:$0xff]
      %v1743 = vld [vmem:[%s1490 + $0x169] sm:$0xff]
      %v1744 = vld [vmem:[%s1490 + $0x171] sm:$0xff]
      %v1745 = vpack.c.bf16 %v1714, %v1713
      %v1746 = vpack.c.bf16 %v1716, %v1715
      %v1747 = vpack.c.bf16 %v1718, %v1717
      %v1748 = vpack.c.bf16 %v1720, %v1719
      %v1749 = vpack.c.bf16 %v1722, %v1721
      %v1750 = vpack.c.bf16 %v1724, %v1723
      %v1751 = vpack.c.bf16 %v1726, %v1725
      %v1752 = vpack.c.bf16 %v1728, %v1727
      %v1753 = vpack.c.bf16 %v1730, %v1729
      %v1754 = vpack.c.bf16 %v1732, %v1731
      %v1755 = vpack.c.bf16 %v1734, %v1733
      %v1756 = vpack.c.bf16 %v1736, %v1735
      %v1757 = vpack.c.bf16 %v1738, %v1737
      %v1758 = vpack.c.bf16 %v1740, %v1739
      %v1759 = vpack.c.bf16 %v1742, %v1741
      %v1760 = vpack.c.bf16 %v1744, %v1743
      %s1761 = scalar_lea.vmem %s1, 28
      %v1762 = vld [vmem:[%s1761] sm:$0xf]
      %v1764 = vsel %vm319, %v1745, 0
      %v1767 = vsel %vm319, %v1746, 0
      %v1770 = vsel %vm319, %v1747, 0
      %v1773 = vsel %vm319, %v1748, 0
      %v1776 = vsel %vm319, %v1749, 0
      %v1779 = vsel %vm319, %v1750, 0
      %v1782 = vsel %vm319, %v1751, 0
      %v1785 = vsel %vm319, %v1752, 0
      %v1788 = vsel %vm319, %v1753, 0
      %v1791 = vsel %vm319, %v1754, 0
      %v1794 = vsel %vm319, %v1755, 0
      %v1797 = vsel %vm319, %v1756, 0
      %v1800 = vsel %vm319, %v1757, 0
      %v1803 = vsel %vm319, %v1758, 0
      %v1806 = vsel %vm319, %v1759, 0
      %v1809 = vsel %vm319, %v1760, 0
      %v1812 = vsel %vm368, %v1762, 0
      %1814 = vmatpush.bf16.msra.mxu0 0
      %1815 = vmatpush.bf16.msra.mxu0 0
      %1816 = vmatpush.bf16.msra.mxu0 0
      %1817 = vmatpush.bf16.msra.mxu0 0
      %1818 = vmatpush.bf16.msra.mxu0 0
      %1819 = vmatpush.bf16.msra.mxu0 0
      %1820 = vmatpush.bf16.msra.mxu0 0
      %1821 = vmatpush.bf16.msra.mxu0 %v1812
      %1822 = vmatmul.bf16.gmra.mxu0 %v1764
      %v1823 = vpop.f32.mrf.mxu0
      %v1824 = vadd.f32 0.0, %v1823
      %v1825 = vpop.f32.mrf.mxu0
      %v1826 = vadd.f32 0.0, %v1825
      %1827 = vmatmul.bf16.gmra.mxu0 %v1767
      %v1828 = vpop.f32.mrf.mxu0
      %v1829 = vadd.f32 0.0, %v1828
      %v1830 = vpop.f32.mrf.mxu0
      %v1831 = vadd.f32 0.0, %v1830
      %1832 = vmatmul.bf16.gmra.mxu0 %v1770
      %v1833 = vpop.f32.mrf.mxu0
      %v1834 = vadd.f32 0.0, %v1833
      %v1835 = vpop.f32.mrf.mxu0
      %v1836 = vadd.f32 0.0, %v1835
      %1837 = vmatmul.bf16.gmra.mxu0 %v1773
      %v1838 = vpop.f32.mrf.mxu0
      %v1839 = vadd.f32 0.0, %v1838
      %v1840 = vpop.f32.mrf.mxu0
      %v1841 = vadd.f32 0.0, %v1840
      %1842 = vmatmul.bf16.gmra.mxu0 %v1776
      %v1843 = vpop.f32.mrf.mxu0
      %v1844 = vadd.f32 0.0, %v1843
      %v1845 = vpop.f32.mrf.mxu0
      %v1846 = vadd.f32 0.0, %v1845
      %1847 = vmatmul.bf16.gmra.mxu0 %v1779
      %v1848 = vpop.f32.mrf.mxu0
      %v1849 = vadd.f32 0.0, %v1848
      %v1850 = vpop.f32.mrf.mxu0
      %v1851 = vadd.f32 0.0, %v1850
      %1852 = vmatmul.bf16.gmra.mxu0 %v1782
      %v1853 = vpop.f32.mrf.mxu0
      %v1854 = vadd.f32 0.0, %v1853
      %v1855 = vpop.f32.mrf.mxu0
      %v1856 = vadd.f32 0.0, %v1855
      %1857 = vmatmul.bf16.gmra.mxu0 %v1785
      %v1858 = vpop.f32.mrf.mxu0
      %v1859 = vadd.f32 0.0, %v1858
      %v1860 = vpop.f32.mrf.mxu0
      %v1861 = vadd.f32 0.0, %v1860
      %1862 = vmatmul.bf16.gmra.mxu0 %v1788
      %v1863 = vpop.f32.mrf.mxu0
      %v1864 = vadd.f32 0.0, %v1863
      %v1865 = vpop.f32.mrf.mxu0
      %v1866 = vadd.f32 0.0, %v1865
      %1867 = vmatmul.bf16.gmra.mxu0 %v1791
      %v1868 = vpop.f32.mrf.mxu0
      %v1869 = vadd.f32 0.0, %v1868
      %v1870 = vpop.f32.mrf.mxu0
      %v1871 = vadd.f32 0.0, %v1870
      %1872 = vmatmul.bf16.gmra.mxu0 %v1794
      %v1873 = vpop.f32.mrf.mxu0
      %v1874 = vadd.f32 0.0, %v1873
      %v1875 = vpop.f32.mrf.mxu0
      %v1876 = vadd.f32 0.0, %v1875
      %1877 = vmatmul.bf16.gmra.mxu0 %v1797
      %v1878 = vpop.f32.mrf.mxu0
      %v1879 = vadd.f32 0.0, %v1878
      %v1880 = vpop.f32.mrf.mxu0
      %v1881 = vadd.f32 0.0, %v1880
      %1882 = vmatmul.bf16.gmra.mxu0 %v1800
      %v1883 = vpop.f32.mrf.mxu0
      %v1884 = vadd.f32 0.0, %v1883
      %v1885 = vpop.f32.mrf.mxu0
      %v1886 = vadd.f32 0.0, %v1885
      %1887 = vmatmul.bf16.gmra.mxu0 %v1803
      %v1888 = vpop.f32.mrf.mxu0
      %v1889 = vadd.f32 0.0, %v1888
      %v1890 = vpop.f32.mrf.mxu0
      %v1891 = vadd.f32 0.0, %v1890
      %1892 = vmatmul.bf16.gmra.mxu0 %v1806
      %v1893 = vpop.f32.mrf.mxu0
      %v1894 = vadd.f32 0.0, %v1893
      %v1895 = vpop.f32.mrf.mxu0
      %v1896 = vadd.f32 0.0, %v1895
      %1897 = vmatmul.bf16.gmra.mxu0 %v1809
      %v1898 = vpop.f32.mrf.mxu0
      %v1899 = vadd.f32 0.0, %v1898
      %v1900 = vpop.f32.mrf.mxu0
      %v1901 = vadd.f32 0.0, %v1900
      %1902 = vdwg.mxu0
      %v1903 = vadd.f32 %v1681, %v1824
      %v1904 = vadd.f32 %v1682, %v1826
      %v1905 = vadd.f32 %v1683, %v1829
      %v1906 = vadd.f32 %v1684, %v1831
      %v1907 = vadd.f32 %v1685, %v1834
      %v1908 = vadd.f32 %v1686, %v1836
      %v1909 = vadd.f32 %v1687, %v1839
      %v1910 = vadd.f32 %v1688, %v1841
      %v1911 = vadd.f32 %v1689, %v1844
      %v1912 = vadd.f32 %v1690, %v1846
      %v1913 = vadd.f32 %v1691, %v1849
      %v1914 = vadd.f32 %v1692, %v1851
      %v1915 = vadd.f32 %v1693, %v1854
      %v1916 = vadd.f32 %v1694, %v1856
      %v1917 = vadd.f32 %v1695, %v1859
      %v1918 = vadd.f32 %v1696, %v1861
      %v1919 = vadd.f32 %v1697, %v1864
      %v1920 = vadd.f32 %v1698, %v1866
      %v1921 = vadd.f32 %v1699, %v1869
      %v1922 = vadd.f32 %v1700, %v1871
      %v1923 = vadd.f32 %v1701, %v1874
      %v1924 = vadd.f32 %v1702, %v1876
      %v1925 = vadd.f32 %v1703, %v1879
      %v1926 = vadd.f32 %v1704, %v1881
      %v1927 = vadd.f32 %v1705, %v1884
      %v1928 = vadd.f32 %v1706, %v1886
      %v1929 = vadd.f32 %v1707, %v1889
      %v1930 = vadd.f32 %v1708, %v1891
      %v1931 = vadd.f32 %v1709, %v1894
      %v1932 = vadd.f32 %v1710, %v1896
      %v1933 = vadd.f32 %v1711, %v1899
      %v1934 = vadd.f32 %v1712, %v1901
      %v1935 = vld [vmem:[%s1490 + $0x2] sm:$0xff]
      %v1936 = vld [vmem:[%s1490 + $0xa] sm:$0xff]
      %v1937 = vld [vmem:[%s1490 + $0x1a] sm:$0xff]
      %v1938 = vld [vmem:[%s1490 + $0x22] sm:$0xff]
      %v1939 = vld [vmem:[%s1490 + $0x32] sm:$0xff]
      %v1940 = vld [vmem:[%s1490 + $0x3a] sm:$0xff]
      %v1941 = vld [vmem:[%s1490 + $0x4a] sm:$0xff]
      %v1942 = vld [vmem:[%s1490 + $0x52] sm:$0xff]
      %v1943 = vld [vmem:[%s1490 + $0x62] sm:$0xff]
      %v1944 = vld [vmem:[%s1490 + $0x6a] sm:$0xff]
      %v1945 = vld [vmem:[%s1490 + $0x7a] sm:$0xff]
      %v1946 = vld [vmem:[%s1490 + $0x82] sm:$0xff]
      %v1947 = vld [vmem:[%s1490 + $0x92] sm:$0xff]
      %v1948 = vld [vmem:[%s1490 + $0x9a] sm:$0xff]
      %v1949 = vld [vmem:[%s1490 + $0xaa] sm:$0xff]
      %v1950 = vld [vmem:[%s1490 + $0xb2] sm:$0xff]
      %v1951 = vld [vmem:[%s1490 + $0xc2] sm:$0xff]
      %v1952 = vld [vmem:[%s1490 + $0xca] sm:$0xff]
      %v1953 = vld [vmem:[%s1490 + $0xda] sm:$0xff]
      %v1954 = vld [vmem:[%s1490 + $0xe2] sm:$0xff]
      %v1955 = vld [vmem:[%s1490 + $0xf2] sm:$0xff]
      %v1956 = vld [vmem:[%s1490 + $0xfa] sm:$0xff]
      %v1957 = vld [vmem:[%s1490 + $0x10a] sm:$0xff]
      %v1958 = vld [vmem:[%s1490 + $0x112] sm:$0xff]
      %v1959 = vld [vmem:[%s1490 + $0x122] sm:$0xff]
      %v1960 = vld [vmem:[%s1490 + $0x12a] sm:$0xff]
      %v1961 = vld [vmem:[%s1490 + $0x13a] sm:$0xff]
      %v1962 = vld [vmem:[%s1490 + $0x142] sm:$0xff]
      %v1963 = vld [vmem:[%s1490 + $0x152] sm:$0xff]
      %v1964 = vld [vmem:[%s1490 + $0x15a] sm:$0xff]
      %v1965 = vld [vmem:[%s1490 + $0x16a] sm:$0xff]
      %v1966 = vld [vmem:[%s1490 + $0x172] sm:$0xff]
      %v1967 = vpack.c.bf16 %v1936, %v1935
      %v1968 = vpack.c.bf16 %v1938, %v1937
      %v1969 = vpack.c.bf16 %v1940, %v1939
      %v1970 = vpack.c.bf16 %v1942, %v1941
      %v1971 = vpack.c.bf16 %v1944, %v1943
      %v1972 = vpack.c.bf16 %v1946, %v1945
      %v1973 = vpack.c.bf16 %v1948, %v1947
      %v1974 = vpack.c.bf16 %v1950, %v1949
      %v1975 = vpack.c.bf16 %v1952, %v1951
      %v1976 = vpack.c.bf16 %v1954, %v1953
      %v1977 = vpack.c.bf16 %v1956, %v1955
      %v1978 = vpack.c.bf16 %v1958, %v1957
      %v1979 = vpack.c.bf16 %v1960, %v1959
      %v1980 = vpack.c.bf16 %v1962, %v1961
      %v1981 = vpack.c.bf16 %v1964, %v1963
      %v1982 = vpack.c.bf16 %v1966, %v1965
      %s1983 = scalar_lea.vmem %s1, 32
      %v1984 = vld [vmem:[%s1983] sm:$0xf]
      %v1986 = vsel %vm319, %v1967, 0
      %v1989 = vsel %vm319, %v1968, 0
      %v1992 = vsel %vm319, %v1969, 0
      %v1995 = vsel %vm319, %v1970, 0
      %v1998 = vsel %vm319, %v1971, 0
      %v2001 = vsel %vm319, %v1972, 0
      %v2004 = vsel %vm319, %v1973, 0
      %v2007 = vsel %vm319, %v1974, 0
      %v2010 = vsel %vm319, %v1975, 0
      %v2013 = vsel %vm319, %v1976, 0
      %v2016 = vsel %vm319, %v1977, 0
      %v2019 = vsel %vm319, %v1978, 0
      %v2022 = vsel %vm319, %v1979, 0
      %v2025 = vsel %vm319, %v1980, 0
      %v2028 = vsel %vm319, %v1981, 0
      %v2031 = vsel %vm319, %v1982, 0
      %v2034 = vsel %vm368, %v1984, 0
      %2036 = vmatpush.bf16.msra.mxu0 0
      %2037 = vmatpush.bf16.msra.mxu0 0
      %2038 = vmatpush.bf16.msra.mxu0 0
      %2039 = vmatpush.bf16.msra.mxu0 0
      %2040 = vmatpush.bf16.msra.mxu0 0
      %2041 = vmatpush.bf16.msra.mxu0 0
      %2042 = vmatpush.bf16.msra.mxu0 0
      %2043 = vmatpush.bf16.msra.mxu0 %v2034
      %2044 = vmatmul.bf16.gmra.mxu0 %v1986
      %v2045 = vpop.f32.mrf.mxu0
      %v2046 = vadd.f32 0.0, %v2045
      %v2047 = vpop.f32.mrf.mxu0
      %v2048 = vadd.f32 0.0, %v2047
      %2049 = vmatmul.bf16.gmra.mxu0 %v1989
      %v2050 = vpop.f32.mrf.mxu0
      %v2051 = vadd.f32 0.0, %v2050
      %v2052 = vpop.f32.mrf.mxu0
      %v2053 = vadd.f32 0.0, %v2052
      %2054 = vmatmul.bf16.gmra.mxu0 %v1992
      %v2055 = vpop.f32.mrf.mxu0
      %v2056 = vadd.f32 0.0, %v2055
      %v2057 = vpop.f32.mrf.mxu0
      %v2058 = vadd.f32 0.0, %v2057
      %2059 = vmatmul.bf16.gmra.mxu0 %v1995
      %v2060 = vpop.f32.mrf.mxu0
      %v2061 = vadd.f32 0.0, %v2060
      %v2062 = vpop.f32.mrf.mxu0
      %v2063 = vadd.f32 0.0, %v2062
      %2064 = vmatmul.bf16.gmra.mxu0 %v1998
      %v2065 = vpop.f32.mrf.mxu0
      %v2066 = vadd.f32 0.0, %v2065
      %v2067 = vpop.f32.mrf.mxu0
      %v2068 = vadd.f32 0.0, %v2067
      %2069 = vmatmul.bf16.gmra.mxu0 %v2001
      %v2070 = vpop.f32.mrf.mxu0
      %v2071 = vadd.f32 0.0, %v2070
      %v2072 = vpop.f32.mrf.mxu0
      %v2073 = vadd.f32 0.0, %v2072
      %2074 = vmatmul.bf16.gmra.mxu0 %v2004
      %v2075 = vpop.f32.mrf.mxu0
      %v2076 = vadd.f32 0.0, %v2075
      %v2077 = vpop.f32.mrf.mxu0
      %v2078 = vadd.f32 0.0, %v2077
      %2079 = vmatmul.bf16.gmra.mxu0 %v2007
      %v2080 = vpop.f32.mrf.mxu0
      %v2081 = vadd.f32 0.0, %v2080
      %v2082 = vpop.f32.mrf.mxu0
      %v2083 = vadd.f32 0.0, %v2082
      %2084 = vmatmul.bf16.gmra.mxu0 %v2010
      %v2085 = vpop.f32.mrf.mxu0
      %v2086 = vadd.f32 0.0, %v2085
      %v2087 = vpop.f32.mrf.mxu0
      %v2088 = vadd.f32 0.0, %v2087
      %2089 = vmatmul.bf16.gmra.mxu0 %v2013
      %v2090 = vpop.f32.mrf.mxu0
      %v2091 = vadd.f32 0.0, %v2090
      %v2092 = vpop.f32.mrf.mxu0
      %v2093 = vadd.f32 0.0, %v2092
      %2094 = vmatmul.bf16.gmra.mxu0 %v2016
      %v2095 = vpop.f32.mrf.mxu0
      %v2096 = vadd.f32 0.0, %v2095
      %v2097 = vpop.f32.mrf.mxu0
      %v2098 = vadd.f32 0.0, %v2097
      %2099 = vmatmul.bf16.gmra.mxu0 %v2019
      %v2100 = vpop.f32.mrf.mxu0
      %v2101 = vadd.f32 0.0, %v2100
      %v2102 = vpop.f32.mrf.mxu0
      %v2103 = vadd.f32 0.0, %v2102
      %2104 = vmatmul.bf16.gmra.mxu0 %v2022
      %v2105 = vpop.f32.mrf.mxu0
      %v2106 = vadd.f32 0.0, %v2105
      %v2107 = vpop.f32.mrf.mxu0
      %v2108 = vadd.f32 0.0, %v2107
      %2109 = vmatmul.bf16.gmra.mxu0 %v2025
      %v2110 = vpop.f32.mrf.mxu0
      %v2111 = vadd.f32 0.0, %v2110
      %v2112 = vpop.f32.mrf.mxu0
      %v2113 = vadd.f32 0.0, %v2112
      %2114 = vmatmul.bf16.gmra.mxu0 %v2028
      %v2115 = vpop.f32.mrf.mxu0
      %v2116 = vadd.f32 0.0, %v2115
      %v2117 = vpop.f32.mrf.mxu0
      %v2118 = vadd.f32 0.0, %v2117
      %2119 = vmatmul.bf16.gmra.mxu0 %v2031
      %v2120 = vpop.f32.mrf.mxu0
      %v2121 = vadd.f32 0.0, %v2120
      %v2122 = vpop.f32.mrf.mxu0
      %v2123 = vadd.f32 0.0, %v2122
      %2124 = vdwg.mxu0
      %v2125 = vadd.f32 %v1903, %v2046
      %v2126 = vadd.f32 %v1904, %v2048
      %v2127 = vadd.f32 %v1905, %v2051
      %v2128 = vadd.f32 %v1906, %v2053
      %v2129 = vadd.f32 %v1907, %v2056
      %v2130 = vadd.f32 %v1908, %v2058
      %v2131 = vadd.f32 %v1909, %v2061
      %v2132 = vadd.f32 %v1910, %v2063
      %v2133 = vadd.f32 %v1911, %v2066
      %v2134 = vadd.f32 %v1912, %v2068
      %v2135 = vadd.f32 %v1913, %v2071
      %v2136 = vadd.f32 %v1914, %v2073
      %v2137 = vadd.f32 %v1915, %v2076
      %v2138 = vadd.f32 %v1916, %v2078
      %v2139 = vadd.f32 %v1917, %v2081
      %v2140 = vadd.f32 %v1918, %v2083
      %v2141 = vadd.f32 %v1919, %v2086
      %v2142 = vadd.f32 %v1920, %v2088
      %v2143 = vadd.f32 %v1921, %v2091
      %v2144 = vadd.f32 %v1922, %v2093
      %v2145 = vadd.f32 %v1923, %v2096
      %v2146 = vadd.f32 %v1924, %v2098
      %v2147 = vadd.f32 %v1925, %v2101
      %v2148 = vadd.f32 %v1926, %v2103
      %v2149 = vadd.f32 %v1927, %v2106
      %v2150 = vadd.f32 %v1928, %v2108
      %v2151 = vadd.f32 %v1929, %v2111
      %v2152 = vadd.f32 %v1930, %v2113
      %v2153 = vadd.f32 %v1931, %v2116
      %v2154 = vadd.f32 %v1932, %v2118
      %v2155 = vadd.f32 %v1933, %v2121
      %v2156 = vadd.f32 %v1934, %v2123
      // Predicated region
      $region41: #{multires_block_forward.11} parent=35 // pred_check
        %p2157 = pneg %p211
      $region42: #{multires_block_forward.11} parent=35 // pred_check_branch
        %2159 = sbr.rel (%p2157) target = $region44
      $region43: #{multires_block_forward.11} parent=35 // pred_region
        %v2160 = vld [vmem:[#allocation2] sm:$0x1]
        %v2161 = vsel %vm319, %v2125, 0.0
        %v2162 = vsel %vm319, %v2126, 0.0
        %v2163 = vadd.f32 %v2161, %v2162
        %v2164 = vsel %vm319, %v2127, 0.0
        %v2165 = vadd.f32 %v2163, %v2164
        %v2166 = vsel %vm319, %v2128, 0.0
        %v2167 = vadd.f32 %v2165, %v2166
        %v2168 = vsel %vm319, %v2129, 0.0
        %v2169 = vadd.f32 %v2167, %v2168
        %v2170 = vsel %vm319, %v2130, 0.0
        %v2171 = vadd.f32 %v2169, %v2170
        %v2172 = vsel %vm319, %v2131, 0.0
        %v2173 = vadd.f32 %v2171, %v2172
        %v2174 = vsel %vm319, %v2132, 0.0
        %v2175 = vadd.f32 %v2173, %v2174
        %v2176 = vsel %vm319, %v2133, 0.0
        %v2177 = vadd.f32 %v2175, %v2176
        %v2178 = vsel %vm319, %v2134, 0.0
        %v2179 = vadd.f32 %v2177, %v2178
        %v2180 = vsel %vm319, %v2135, 0.0
        %v2181 = vadd.f32 %v2179, %v2180
        %v2182 = vsel %vm319, %v2136, 0.0
        %v2183 = vadd.f32 %v2181, %v2182
        %v2184 = vsel %vm319, %v2137, 0.0
        %v2185 = vadd.f32 %v2183, %v2184
        %v2186 = vsel %vm319, %v2138, 0.0
        %v2187 = vadd.f32 %v2185, %v2186
        %v2188 = vsel %vm319, %v2139, 0.0
        %v2189 = vadd.f32 %v2187, %v2188
        %v2190 = vsel %vm319, %v2140, 0.0
        %v2191 = vadd.f32 %v2189, %v2190
        %v2192 = vsel %vm319, %v2141, 0.0
        %v2193 = vadd.f32 %v2191, %v2192
        %v2194 = vsel %vm319, %v2142, 0.0
        %v2195 = vadd.f32 %v2193, %v2194
        %v2196 = vsel %vm319, %v2143, 0.0
        %v2197 = vadd.f32 %v2195, %v2196
        %v2198 = vsel %vm319, %v2144, 0.0
        %v2199 = vadd.f32 %v2197, %v2198
        %v2200 = vsel %vm319, %v2145, 0.0
        %v2201 = vadd.f32 %v2199, %v2200
        %v2202 = vsel %vm319, %v2146, 0.0
        %v2203 = vadd.f32 %v2201, %v2202
        %v2204 = vsel %vm319, %v2147, 0.0
        %v2205 = vadd.f32 %v2203, %v2204
        %v2206 = vsel %vm319, %v2148, 0.0
        %v2207 = vadd.f32 %v2205, %v2206
        %v2208 = vsel %vm319, %v2149, 0.0
        %v2209 = vadd.f32 %v2207, %v2208
        %v2210 = vsel %vm319, %v2150, 0.0
        %v2211 = vadd.f32 %v2209, %v2210
        %v2212 = vsel %vm319, %v2151, 0.0
        %v2213 = vadd.f32 %v2211, %v2212
        %v2214 = vsel %vm319, %v2152, 0.0
        %v2215 = vadd.f32 %v2213, %v2214
        %v2216 = vsel %vm319, %v2153, 0.0
        %v2217 = vadd.f32 %v2215, %v2216
        %v2218 = vsel %vm319, %v2154, 0.0
        %v2219 = vadd.f32 %v2217, %v2218
        %v2220 = vsel %vm319, %v2155, 0.0
        %v2221 = vadd.f32 %v2219, %v2220
        %v2222 = vsel %vm319, %v2156, 0.0
        %v2223 = vadd.f32 %v2221, %v2222
        %v2224 = vrot.slane %v2223, 4
        %v2225 = vadd.f32 %v2223, %v2224
        %v2226 = vrot.slane %v2225, 2
        %v2227 = vadd.f32 %v2225, %v2226
        %v2228 = vrot.slane %v2227, 1
        %v2229 = vadd.f32 %v2227, %v2228
        %v2230 = vadd.f32 %v2160, %v2229
        %vm2231 = vcmask 57344
        %2232 = vst.msk [vmem:[#allocation2] sm:$0x1] %vm2231, %v2230
        %v2233 = vld [vmem:[#allocation3] sm:$0x1]
        %v2234 = vmul.f32 %v2125, %v2125
        %v2235 = vmul.f32 %v2126, %v2126
        %v2236 = vmul.f32 %v2127, %v2127
        %v2237 = vmul.f32 %v2128, %v2128
        %v2238 = vmul.f32 %v2129, %v2129
        %v2239 = vmul.f32 %v2130, %v2130
        %v2240 = vmul.f32 %v2131, %v2131
        %v2241 = vmul.f32 %v2132, %v2132
        %v2242 = vmul.f32 %v2133, %v2133
        %v2243 = vmul.f32 %v2134, %v2134
        %v2244 = vmul.f32 %v2135, %v2135
        %v2245 = vmul.f32 %v2136, %v2136
        %v2246 = vmul.f32 %v2137, %v2137
        %v2247 = vmul.f32 %v2138, %v2138
        %v2248 = vmul.f32 %v2139, %v2139
        %v2249 = vmul.f32 %v2140, %v2140
        %v2250 = vmul.f32 %v2141, %v2141
        %v2251 = vmul.f32 %v2142, %v2142
        %v2252 = vmul.f32 %v2143, %v2143
        %v2253 = vmul.f32 %v2144, %v2144
        %v2254 = vmul.f32 %v2145, %v2145
        %v2255 = vmul.f32 %v2146, %v2146
        %v2256 = vmul.f32 %v2147, %v2147
        %v2257 = vmul.f32 %v2148, %v2148
        %v2258 = vmul.f32 %v2149, %v2149
        %v2259 = vmul.f32 %v2150, %v2150
        %v2260 = vmul.f32 %v2151, %v2151
        %v2261 = vmul.f32 %v2152, %v2152
        %v2262 = vmul.f32 %v2153, %v2153
        %v2263 = vmul.f32 %v2154, %v2154
        %v2264 = vmul.f32 %v2155, %v2155
        %v2265 = vmul.f32 %v2156, %v2156
        %v2266 = vsel %vm319, %v2234, 0.0
        %v2267 = vsel %vm319, %v2235, 0.0
        %v2268 = vadd.f32 %v2266, %v2267
        %v2269 = vsel %vm319, %v2236, 0.0
        %v2270 = vadd.f32 %v2268, %v2269
        %v2271 = vsel %vm319, %v2237, 0.0
        %v2272 = vadd.f32 %v2270, %v2271
        %v2273 = vsel %vm319, %v2238, 0.0
        %v2274 = vadd.f32 %v2272, %v2273
        %v2275 = vsel %vm319, %v2239, 0.0
        %v2276 = vadd.f32 %v2274, %v2275
        %v2277 = vsel %vm319, %v2240, 0.0
        %v2278 = vadd.f32 %v2276, %v2277
        %v2279 = vsel %vm319, %v2241, 0.0
        %v2280 = vadd.f32 %v2278, %v2279
        %v2281 = vsel %vm319, %v2242, 0.0
        %v2282 = vadd.f32 %v2280, %v2281
        %v2283 = vsel %vm319, %v2243, 0.0
        %v2284 = vadd.f32 %v2282, %v2283
        %v2285 = vsel %vm319, %v2244, 0.0
        %v2286 = vadd.f32 %v2284, %v2285
        %v2287 = vsel %vm319, %v2245, 0.0
        %v2288 = vadd.f32 %v2286, %v2287
        %v2289 = vsel %vm319, %v2246, 0.0
        %v2290 = vadd.f32 %v2288, %v2289
        %v2291 = vsel %vm319, %v2247, 0.0
        %v2292 = vadd.f32 %v2290, %v2291
        %v2293 = vsel %vm319, %v2248, 0.0
        %v2294 = vadd.f32 %v2292, %v2293
        %v2295 = vsel %vm319, %v2249, 0.0
        %v2296 = vadd.f32 %v2294, %v2295
        %v2297 = vsel %vm319, %v2250, 0.0
        %v2298 = vadd.f32 %v2296, %v2297
        %v2299 = vsel %vm319, %v2251, 0.0
        %v2300 = vadd.f32 %v2298, %v2299
        %v2301 = vsel %vm319, %v2252, 0.0
        %v2302 = vadd.f32 %v2300, %v2301
        %v2303 = vsel %vm319, %v2253, 0.0
        %v2304 = vadd.f32 %v2302, %v2303
        %v2305 = vsel %vm319, %v2254, 0.0
        %v2306 = vadd.f32 %v2304, %v2305
        %v2307 = vsel %vm319, %v2255, 0.0
        %v2308 = vadd.f32 %v2306, %v2307
        %v2309 = vsel %vm319, %v2256, 0.0
        %v2310 = vadd.f32 %v2308, %v2309
        %v2311 = vsel %vm319, %v2257, 0.0
        %v2312 = vadd.f32 %v2310, %v2311
        %v2313 = vsel %vm319, %v2258, 0.0
        %v2314 = vadd.f32 %v2312, %v2313
        %v2315 = vsel %vm319, %v2259, 0.0
        %v2316 = vadd.f32 %v2314, %v2315
        %v2317 = vsel %vm319, %v2260, 0.0
        %v2318 = vadd.f32 %v2316, %v2317
        %v2319 = vsel %vm319, %v2261, 0.0
        %v2320 = vadd.f32 %v2318, %v2319
        %v2321 = vsel %vm319, %v2262, 0.0
        %v2322 = vadd.f32 %v2320, %v2321
        %v2323 = vsel %vm319, %v2263, 0.0
        %v2324 = vadd.f32 %v2322, %v2323
        %v2325 = vsel %vm319, %v2264, 0.0
        %v2326 = vadd.f32 %v2324, %v2325
        %v2327 = vsel %vm319, %v2265, 0.0
        %v2328 = vadd.f32 %v2326, %v2327
        %v2329 = vrot.slane %v2328, 4
        %v2330 = vadd.f32 %v2328, %v2329
        %v2331 = vrot.slane %v2330, 2
        %v2332 = vadd.f32 %v2330, %v2331
        %v2333 = vrot.slane %v2332, 1
        %v2334 = vadd.f32 %v2332, %v2333
        %v2335 = vadd.f32 %v2233, %v2334
        %2336 = vst.msk [vmem:[#allocation3] sm:$0x1] %vm2231, %v2335
        %2337 = vst.msk [vmem:[%s209] sm:$0xff] %vm319, %v2125
        %2338 = vst.msk [vmem:[%s209 + $0x8] sm:$0xff] %vm319, %v2126
        %2339 = vst.msk [vmem:[%s209 + $0x10] sm:$0xff] %vm319, %v2127
        %2340 = vst.msk [vmem:[%s209 + $0x18] sm:$0xff] %vm319, %v2128
        %2341 = vst.msk [vmem:[%s209 + $0x20] sm:$0xff] %vm319, %v2129
        %2342 = vst.msk [vmem:[%s209 + $0x28] sm:$0xff] %vm319, %v2130
        %2343 = vst.msk [vmem:[%s209 + $0x30] sm:$0xff] %vm319, %v2131
        %2344 = vst.msk [vmem:[%s209 + $0x38] sm:$0xff] %vm319, %v2132
        %2345 = vst.msk [vmem:[%s209 + $0x40] sm:$0xff] %vm319, %v2133
        %2346 = vst.msk [vmem:[%s209 + $0x48] sm:$0xff] %vm319, %v2134
        %2347 = vst.msk [vmem:[%s209 + $0x50] sm:$0xff] %vm319, %v2135
        %2348 = vst.msk [vmem:[%s209 + $0x58] sm:$0xff] %vm319, %v2136
        %2349 = vst.msk [vmem:[%s209 + $0x60] sm:$0xff] %vm319, %v2137
        %2350 = vst.msk [vmem:[%s209 + $0x68] sm:$0xff] %vm319, %v2138
        %2351 = vst.msk [vmem:[%s209 + $0x70] sm:$0xff] %vm319, %v2139
        %2352 = vst.msk [vmem:[%s209 + $0x78] sm:$0xff] %vm319, %v2140
        %2353 = vst.msk [vmem:[%s209 + $0x80] sm:$0xff] %vm319, %v2141
        %2354 = vst.msk [vmem:[%s209 + $0x88] sm:$0xff] %vm319, %v2142
        %2355 = vst.msk [vmem:[%s209 + $0x90] sm:$0xff] %vm319, %v2143
        %2356 = vst.msk [vmem:[%s209 + $0x98] sm:$0xff] %vm319, %v2144
        %2357 = vst.msk [vmem:[%s209 + $0xa0] sm:$0xff] %vm319, %v2145
        %2358 = vst.msk [vmem:[%s209 + $0xa8] sm:$0xff] %vm319, %v2146
        %2359 = vst.msk [vmem:[%s209 + $0xb0] sm:$0xff] %vm319, %v2147
        %2360 = vst.msk [vmem:[%s209 + $0xb8] sm:$0xff] %vm319, %v2148
        %2361 = vst.msk [vmem:[%s209 + $0xc0] sm:$0xff] %vm319, %v2149
        %2362 = vst.msk [vmem:[%s209 + $0xc8] sm:$0xff] %vm319, %v2150
        %2363 = vst.msk [vmem:[%s209 + $0xd0] sm:$0xff] %vm319, %v2151
        %2364 = vst.msk [vmem:[%s209 + $0xd8] sm:$0xff] %vm319, %v2152
        %2365 = vst.msk [vmem:[%s209 + $0xe0] sm:$0xff] %vm319, %v2153
        %2366 = vst.msk [vmem:[%s209 + $0xe8] sm:$0xff] %vm319, %v2154
        %2367 = vst.msk [vmem:[%s209 + $0xf0] sm:$0xff] %vm319, %v2155
        %2368 = vst.msk [vmem:[%s209 + $0xf8] sm:$0xff] %vm319, %v2156
      $region44: #{multires_block_forward.11} parent=35 // pred_fallthru
        _
      %p2369 = scmp.eq.s32.totalorder %s19, 1
      // Predicated region
      $region45: #{multires_block_forward.11} parent=35 // pred_check
        %p2370 = pneg %p2369
      $region46: #{multires_block_forward.11} parent=35 // pred_check_branch
        %2372 = sbr.rel (%p2370) target = $region48
      $region47: #{multires_block_forward.11} parent=35 // pred_region
        %v2373 = vld [vmem:[#allocation2] sm:$0x1]
        %v2374 = vmul.f32 %v2373, 0.001953125
        %v2375 = vld [vmem:[#allocation3] sm:$0x1]
        %v2376 = vmul.f32 %v2375, 0.001953125
        %v2377 = vmul.f32 %v2374, %v2374
        %v2378 = vsub.f32 %v2376, %v2377
        %v2379 = vadd.f32 %v2378, 1e-05
        %v2380 = vrsqrt.pop %v2379
        %v2381 = vmul.f32 %v2380, %v2379
        %v2382 = vmul.f32 %v2381, %v2380
        %v2383 = vmul.f32 0.5, %v2382
        %v2384 = vsub.f32 1.5, %v2383
        %v2385 = vmul.f32 %v2380, %v2384
        %vm2386 = vweird.f32 %v2379
        %vm2387 = vweird.f32 %v2380
        %vm2388 = vmor %vm2386, %vm2387
        %v2389 = vsel %vm2388, %v2380, %v2385
        %v2390 = vld [vmem:[%s2] sm:$0x1]
        %v2391 = vmul.f32 %v2389, %v2390
        %v2393 = vperm.slane %v2374, 0
        %v2395 = vsub.f32 %v2125, %v2393
        %v2396 = vsub.f32 %v2126, %v2393
        %v2397 = vsub.f32 %v2127, %v2393
        %v2398 = vsub.f32 %v2128, %v2393
        %v2399 = vsub.f32 %v2129, %v2393
        %v2400 = vsub.f32 %v2130, %v2393
        %v2401 = vsub.f32 %v2131, %v2393
        %v2402 = vsub.f32 %v2132, %v2393
        %v2403 = vsub.f32 %v2133, %v2393
        %v2404 = vsub.f32 %v2134, %v2393
        %v2405 = vsub.f32 %v2135, %v2393
        %v2406 = vsub.f32 %v2136, %v2393
        %v2407 = vsub.f32 %v2137, %v2393
        %v2408 = vsub.f32 %v2138, %v2393
        %v2409 = vsub.f32 %v2139, %v2393
        %v2410 = vsub.f32 %v2140, %v2393
        %v2411 = vsub.f32 %v2141, %v2393
        %v2412 = vsub.f32 %v2142, %v2393
        %v2413 = vsub.f32 %v2143, %v2393
        %v2414 = vsub.f32 %v2144, %v2393
        %v2415 = vsub.f32 %v2145, %v2393
        %v2416 = vsub.f32 %v2146, %v2393
        %v2417 = vsub.f32 %v2147, %v2393
        %v2418 = vsub.f32 %v2148, %v2393
        %v2419 = vsub.f32 %v2149, %v2393
        %v2420 = vsub.f32 %v2150, %v2393
        %v2421 = vsub.f32 %v2151, %v2393
        %v2422 = vsub.f32 %v2152, %v2393
        %v2423 = vsub.f32 %v2153, %v2393
        %v2424 = vsub.f32 %v2154, %v2393
        %v2425 = vsub.f32 %v2155, %v2393
        %v2426 = vsub.f32 %v2156, %v2393
        %v2428 = vperm.slane %v2391, 0
        %v2430 = vmul.f32 %v2395, %v2428
        %v2431 = vmul.f32 %v2396, %v2428
        %v2432 = vmul.f32 %v2397, %v2428
        %v2433 = vmul.f32 %v2398, %v2428
        %v2434 = vmul.f32 %v2399, %v2428
        %v2435 = vmul.f32 %v2400, %v2428
        %v2436 = vmul.f32 %v2401, %v2428
        %v2437 = vmul.f32 %v2402, %v2428
        %v2438 = vmul.f32 %v2403, %v2428
        %v2439 = vmul.f32 %v2404, %v2428
        %v2440 = vmul.f32 %v2405, %v2428
        %v2441 = vmul.f32 %v2406, %v2428
        %v2442 = vmul.f32 %v2407, %v2428
        %v2443 = vmul.f32 %v2408, %v2428
        %v2444 = vmul.f32 %v2409, %v2428
        %v2445 = vmul.f32 %v2410, %v2428
        %v2446 = vmul.f32 %v2411, %v2428
        %v2447 = vmul.f32 %v2412, %v2428
        %v2448 = vmul.f32 %v2413, %v2428
        %v2449 = vmul.f32 %v2414, %v2428
        %v2450 = vmul.f32 %v2415, %v2428
        %v2451 = vmul.f32 %v2416, %v2428
        %v2452 = vmul.f32 %v2417, %v2428
        %v2453 = vmul.f32 %v2418, %v2428
        %v2454 = vmul.f32 %v2419, %v2428
        %v2455 = vmul.f32 %v2420, %v2428
        %v2456 = vmul.f32 %v2421, %v2428
        %v2457 = vmul.f32 %v2422, %v2428
        %v2458 = vmul.f32 %v2423, %v2428
        %v2459 = vmul.f32 %v2424, %v2428
        %v2460 = vmul.f32 %v2425, %v2428
        %v2461 = vmul.f32 %v2426, %v2428
        %v2462 = vld [vmem:[%s3] sm:$0x1]
        %v2464 = vperm.slane %v2462, 0
        %v2466 = vadd.f32 %v2430, %v2464
        %v2467 = vadd.f32 %v2431, %v2464
        %v2468 = vadd.f32 %v2432, %v2464
        %v2469 = vadd.f32 %v2433, %v2464
        %v2470 = vadd.f32 %v2434, %v2464
        %v2471 = vadd.f32 %v2435, %v2464
        %v2472 = vadd.f32 %v2436, %v2464
        %v2473 = vadd.f32 %v2437, %v2464
        %v2474 = vadd.f32 %v2438, %v2464
        %v2475 = vadd.f32 %v2439, %v2464
        %v2476 = vadd.f32 %v2440, %v2464
        %v2477 = vadd.f32 %v2441, %v2464
        %v2478 = vadd.f32 %v2442, %v2464
        %v2479 = vadd.f32 %v2443, %v2464
        %v2480 = vadd.f32 %v2444, %v2464
        %v2481 = vadd.f32 %v2445, %v2464
        %v2482 = vadd.f32 %v2446, %v2464
        %v2483 = vadd.f32 %v2447, %v2464
        %v2484 = vadd.f32 %v2448, %v2464
        %v2485 = vadd.f32 %v2449, %v2464
        %v2486 = vadd.f32 %v2450, %v2464
        %v2487 = vadd.f32 %v2451, %v2464
        %v2488 = vadd.f32 %v2452, %v2464
        %v2489 = vadd.f32 %v2453, %v2464
        %v2490 = vadd.f32 %v2454, %v2464
        %v2491 = vadd.f32 %v2455, %v2464
        %v2492 = vadd.f32 %v2456, %v2464
        %v2493 = vadd.f32 %v2457, %v2464
        %v2494 = vadd.f32 %v2458, %v2464
        %v2495 = vadd.f32 %v2459, %v2464
        %v2496 = vadd.f32 %v2460, %v2464
        %v2497 = vadd.f32 %v2461, %v2464
        %v2498 = vmax.f32 %v2466, 0.0
        %v2499 = vmax.f32 %v2467, 0.0
        %v2500 = vmax.f32 %v2468, 0.0
        %v2501 = vmax.f32 %v2469, 0.0
        %v2502 = vmax.f32 %v2470, 0.0
        %v2503 = vmax.f32 %v2471, 0.0
        %v2504 = vmax.f32 %v2472, 0.0
        %v2505 = vmax.f32 %v2473, 0.0
        %v2506 = vmax.f32 %v2474, 0.0
        %v2507 = vmax.f32 %v2475, 0.0
        %v2508 = vmax.f32 %v2476, 0.0
        %v2509 = vmax.f32 %v2477, 0.0
        %v2510 = vmax.f32 %v2478, 0.0
        %v2511 = vmax.f32 %v2479, 0.0
        %v2512 = vmax.f32 %v2480, 0.0
        %v2513 = vmax.f32 %v2481, 0.0
        %v2514 = vmax.f32 %v2482, 0.0
        %v2515 = vmax.f32 %v2483, 0.0
        %v2516 = vmax.f32 %v2484, 0.0
        %v2517 = vmax.f32 %v2485, 0.0
        %v2518 = vmax.f32 %v2486, 0.0
        %v2519 = vmax.f32 %v2487, 0.0
        %v2520 = vmax.f32 %v2488, 0.0
        %v2521 = vmax.f32 %v2489, 0.0
        %v2522 = vmax.f32 %v2490, 0.0
        %v2523 = vmax.f32 %v2491, 0.0
        %v2524 = vmax.f32 %v2492, 0.0
        %v2525 = vmax.f32 %v2493, 0.0
        %v2526 = vmax.f32 %v2494, 0.0
        %v2527 = vmax.f32 %v2495, 0.0
        %v2528 = vmax.f32 %v2496, 0.0
        %v2529 = vmax.f32 %v2497, 0.0
        %2530 = vst.msk [vmem:[%s209] sm:$0xff] %vm319, %v2498
        %2531 = vst.msk [vmem:[%s209 + $0x8] sm:$0xff] %vm319, %v2499
        %2532 = vst.msk [vmem:[%s209 + $0x10] sm:$0xff] %vm319, %v2500
        %2533 = vst.msk [vmem:[%s209 + $0x18] sm:$0xff] %vm319, %v2501
        %2534 = vst.msk [vmem:[%s209 + $0x20] sm:$0xff] %vm319, %v2502
        %2535 = vst.msk [vmem:[%s209 + $0x28] sm:$0xff] %vm319, %v2503
        %2536 = vst.msk [vmem:[%s209 + $0x30] sm:$0xff] %vm319, %v2504
        %2537 = vst.msk [vmem:[%s209 + $0x38] sm:$0xff] %vm319, %v2505
        %2538 = vst.msk [vmem:[%s209 + $0x40] sm:$0xff] %vm319, %v2506
        %2539 = vst.msk [vmem:[%s209 + $0x48] sm:$0xff] %vm319, %v2507
        %2540 = vst.msk [vmem:[%s209 + $0x50] sm:$0xff] %vm319, %v2508
        %2541 = vst.msk [vmem:[%s209 + $0x58] sm:$0xff] %vm319, %v2509
        %2542 = vst.msk [vmem:[%s209 + $0x60] sm:$0xff] %vm319, %v2510
        %2543 = vst.msk [vmem:[%s209 + $0x68] sm:$0xff] %vm319, %v2511
        %2544 = vst.msk [vmem:[%s209 + $0x70] sm:$0xff] %vm319, %v2512
        %2545 = vst.msk [vmem:[%s209 + $0x78] sm:$0xff] %vm319, %v2513
        %2546 = vst.msk [vmem:[%s209 + $0x80] sm:$0xff] %vm319, %v2514
        %2547 = vst.msk [vmem:[%s209 + $0x88] sm:$0xff] %vm319, %v2515
        %2548 = vst.msk [vmem:[%s209 + $0x90] sm:$0xff] %vm319, %v2516
        %2549 = vst.msk [vmem:[%s209 + $0x98] sm:$0xff] %vm319, %v2517
        %2550 = vst.msk [vmem:[%s209 + $0xa0] sm:$0xff] %vm319, %v2518
        %2551 = vst.msk [vmem:[%s209 + $0xa8] sm:$0xff] %vm319, %v2519
        %2552 = vst.msk [vmem:[%s209 + $0xb0] sm:$0xff] %vm319, %v2520
        %2553 = vst.msk [vmem:[%s209 + $0xb8] sm:$0xff] %vm319, %v2521
        %2554 = vst.msk [vmem:[%s209 + $0xc0] sm:$0xff] %vm319, %v2522
        %2555 = vst.msk [vmem:[%s209 + $0xc8] sm:$0xff] %vm319, %v2523
        %2556 = vst.msk [vmem:[%s209 + $0xd0] sm:$0xff] %vm319, %v2524
        %2557 = vst.msk [vmem:[%s209 + $0xd8] sm:$0xff] %vm319, %v2525
        %2558 = vst.msk [vmem:[%s209 + $0xe0] sm:$0xff] %vm319, %v2526
        %2559 = vst.msk [vmem:[%s209 + $0xe8] sm:$0xff] %vm319, %v2527
        %2560 = vst.msk [vmem:[%s209 + $0xf0] sm:$0xff] %vm319, %v2528
        %2561 = vst.msk [vmem:[%s209 + $0xf8] sm:$0xff] %vm319, %v2529
      $region48: #{multires_block_forward.11} parent=35 // pred_fallthru
        _
      %p2562 = scmp.lt.s32.totalorder %s20, 1
      %s2563 = scalar_select %p2562, %s20, 1
      %s2564 = smul.addr %s2563, 32
      %s2565 = smul.addr %s2564, 8
      %s2566 = scalar_lea.vmem %s4, %s2565
      // Predicated region
      $region49: #{multires_block_forward.11} parent=35 // pred_check
        %p2567 = pneg %p134
      $region50: #{multires_block_forward.11} parent=35 // pred_check_branch
        %2569 = sbr.rel (%p2567) target = $region52
      $region51: #{multires_block_forward.11} parent=35 // pred_region
        _
      $region52: #{multires_block_forward.11} parent=35 // pred_fallthru
        _
    $region36: #{multires_block_forward.11} parent=5 // pred_fallthru
      _
    %p2570 = scmp.le.s32.totalorder 2, %s10
    // Predicated region
    $region53: #{multires_block_forward.11} parent=5 // pred_check
      %p2571 = pneg %p2570
    $region54: #{multires_block_forward.11} parent=5 // pred_check_branch
      %2573 = sbr.rel (%p2571) target = $region56
    $region55: #{multires_block_forward.11} parent=5 // pred_region
      %s2574 = ssub.s32 %s10, 2
      // Predicated region
      $region57: #{multires_block_forward.11} parent=55 // pred_check
        %p2575 = pneg %p140
      $region58: #{multires_block_forward.11} parent=55 // pred_check_branch
        %2577 = sbr.rel (%p2575) target = $region60
      $region59: #{multires_block_forward.11} parent=55 // pred_region
        %p2578 = scmp.lt.s32.totalorder %s22, 1
        %s2579 = scalar_select %p2578, %s22, 1
        %s2580 = smul.addr %s2579, 32
        %s2581 = smul.addr %s2580, 8
        %s2582 = scalar_lea.vmem %s4, %s2581
      $region60: #{multires_block_forward.11} parent=55 // pred_fallthru
        _
    $region56: #{multires_block_forward.11} parent=5 // pred_fallthru
      _
  $region6: #{multires_block_forward.11} parent=0 // loop_footer
    %s14 = sadd.s32 1, %s10
  $region7: #{multires_block_forward.11} parent=0 // loop_footer_branch
    %9 = sbr.rel target = $region3
  $region8: #{multires_block_forward.11} parent=0 // loop_exit
    _

// kernel: multires_block_forward.15
$region0: #{multires_block_forward.15}
  #allocation0 [shape = 'u32[]', space=smem, size = 0x4, offset = 0x4, fixed_abs, tag = 'smem constant byte address 0x4 - core index']
  #allocation1 [shape = 'u32[72,128]{1,0:T(1,128)}', space=vmem, size = 0x9000, scoped, tag = 'internal scratch']
  %s0 = inlined_call_operand.vmem [shape: f32[384,8], index: 0, kind: input, shape index: {}]
  %s1 = inlined_call_operand.vmem [shape: f32[1,8], index: 1, kind: input, shape index: {}]
  %s2 = inlined_call_operand.vmem [shape: f32[1,8], index: 2, kind: input, shape index: {}]
  %s3 = inlined_call_operand.vmem [shape: f32[384,8], index: 3, kind: output, shape index: {}]
  %s4 = sld [smem:[#allocation0]]
  $region45: #{multires_block_forward.15} parent=0
    _
  %s6 = ssub.s32 1, %s4
  %s7 = scalar_select 0, %s6, %s4
  loop: start=0, step=1, limit=5
  $region2: #{multires_block_forward.15} parent=0 // loop_pre_header
    _
  $region3: #{multires_block_forward.15} parent=0 // loop_header
    %s9 = sphi 0, %s13
    %p10 = scmp.ge.s32.totalorder %s9, 5
    %s19 = sphi 0, %s21
    %s22 = sphi 0, %s19
    %s23 = sphi 0, %s22
    %s39 = sphi 0, %s23
    %s43 = sphi 0, %s43
    %s45 = sphi 0, %s43
    %s46 = sphi 0, %s45
    %s60 = sphi 0, %s46
    %s64 = sphi 0, %s64
    %s66 = sphi 0, %s64
    %s67 = sphi 0, %s66
    %s81 = sphi 0, %s67
    %s87 = sphi 0, %s89
    %s90 = sphi 0, %s87
    %s91 = sphi 0, %s90
    %s107 = sphi 0, %s91
  $region4: #{multires_block_forward.15} parent=0 // loop_header_branch
    %12 = sbr.rel (%p10) target = $region8
  $region5: #{multires_block_forward.15} parent=0 // loop_body
    %s14 = ssub.s32 %s9, 1
    %s15 = ssub.s32 %s9, 2
    %s16 = sadd.s32 %s9, 1
    %s17 = ssub.s32 %s9, %s16
    %p18 = scmp.eq.s32.totalorder %s17, 0
    %s20 = sadd.s32 %s19, 1
    %s21 = scalar_select %p18, %s19, %s20
    %p24 = pneg %p18
    %p25 = scmp.eq.s32.totalorder %s9, 2
    %p26 = por %p24, %p25
    %p27 = scmp.ne.s32.totalorder %s19, %s22
    %p28 = scmp.eq.s32.totalorder %s9, 0
    %p29 = por %p27, %p28
    %p30 = scmp.ne.s32.totalorder %s19, %s22
    %p31 = scmp.eq.s32.totalorder %s14, 2
    %p32 = por %p30, %p31
    %p33 = scmp.ne.s32.totalorder %s22, %s23
    %p34 = scmp.eq.s32.totalorder %s14, 0
    %p35 = por %p33, %p34
    %p36 = scmp.ne.s32.totalorder %s22, %s23
    %p37 = scmp.eq.s32.totalorder %s15, 2
    %p38 = por %p36, %p37
    %p40 = scmp.ne.s32.totalorder %s23, %s39
    %p41 = scmp.eq.s32.totalorder %s15, 0
    %p42 = por %p40, %p41
    %s44 = sadd.s32 %s43, 1
    %p47 = scmp.eq.s32.totalorder %s9, 2
    %p48 = scmp.ne.s32.totalorder %s43, %s45
    %p49 = scmp.eq.s32.totalorder %s9, 0
    %p50 = por %p48, %p49
    %p51 = scmp.ne.s32.totalorder %s43, %s45
    %p52 = scmp.eq.s32.totalorder %s14, 2
    %p53 = por %p51, %p52
    %p54 = scmp.ne.s32.totalorder %s45, %s46
    %p55 = scmp.eq.s32.totalorder %s14, 0
    %p56 = por %p54, %p55
    %p57 = scmp.ne.s32.totalorder %s45, %s46
    %p58 = scmp.eq.s32.totalorder %s15, 2
    %p59 = por %p57, %p58
    %p61 = scmp.ne.s32.totalorder %s46, %s60
    %p62 = scmp.eq.s32.totalorder %s15, 0
    %p63 = por %p61, %p62
    %s65 = sadd.s32 %s64, 1
    %p68 = scmp.eq.s32.totalorder %s9, 2
    %p69 = scmp.ne.s32.totalorder %s64, %s66
    %p70 = scmp.eq.s32.totalorder %s9, 0
    %p71 = por %p69, %p70
    %p72 = scmp.ne.s32.totalorder %s64, %s66
    %p73 = scmp.eq.s32.totalorder %s14, 2
    %p74 = por %p72, %p73
    %p75 = scmp.ne.s32.totalorder %s66, %s67
    %p76 = scmp.eq.s32.totalorder %s14, 0
    %p77 = por %p75, %p76
    %p78 = scmp.ne.s32.totalorder %s66, %s67
    %p79 = scmp.eq.s32.totalorder %s15, 2
    %p80 = por %p78, %p79
    %p82 = scmp.ne.s32.totalorder %s67, %s81
    %p83 = scmp.eq.s32.totalorder %s15, 0
    %p84 = por %p82, %p83
    %s85 = ssub.s32 %s9, %s16
    %p86 = scmp.eq.s32.totalorder %s85, 0
    %s88 = sadd.s32 %s87, 1
    %s89 = scalar_select %p86, %s87, %s88
    %p92 = pneg %p86
    %p93 = scmp.eq.s32.totalorder %s9, 2
    %p94 = por %p92, %p93
    %p95 = scmp.ne.s32.totalorder %s87, %s90
    %p96 = scmp.eq.s32.totalorder %s9, 0
    %p97 = por %p95, %p96
    %p98 = scmp.ne.s32.totalorder %s87, %s90
    %p99 = scmp.eq.s32.totalorder %s14, 2
    %p100 = por %p98, %p99
    %p101 = scmp.ne.s32.totalorder %s90, %s91
    %p102 = scmp.eq.s32.totalorder %s14, 0
    %p103 = por %p101, %p102
    %p104 = scmp.ne.s32.totalorder %s90, %s91
    %p105 = scmp.eq.s32.totalorder %s15, 2
    %p106 = por %p104, %p105
    %p108 = scmp.ne.s32.totalorder %s91, %s107
    %p109 = scmp.eq.s32.totalorder %s15, 0
    %p110 = por %p108, %p109
    %p111 = scmp.le.s32.totalorder 1, %s9
    %p112 = scmp.lt.s32.totalorder %s9, 4
    %p113 = pnand %p111, %p112
    %p114 = pneg %p113
    // Predicated region
    $region9: #{multires_block_forward.15} parent=5 // pred_check
      _
    $region10: #{multires_block_forward.15} parent=5 // pred_check_branch
      %116 = sbr.rel (%p113) target = $region12
    $region11: #{multires_block_forward.15} parent=5 // pred_region
      %s117 = ssub.s32 %s9, 1
      // Predicated region
      $region13: #{multires_block_forward.15} parent=11 // pred_check
        %p118 = pneg %p56
      $region14: #{multires_block_forward.15} parent=11 // pred_check_branch
        %120 = sbr.rel (%p118) target = $region16
      $region15: #{multires_block_forward.15} parent=11 // pred_region
        _
      $region16: #{multires_block_forward.15} parent=11 // pred_fallthru
        _
      // Predicated region
      $region17: #{multires_block_forward.15} parent=11 // pred_check
        %p121 = pneg %p77
      $region18: #{multires_block_forward.15} parent=11 // pred_check_branch
        %123 = sbr.rel (%p121) target = $region20
      $region19: #{multires_block_forward.15} parent=11 // pred_region
        _
      $region20: #{multires_block_forward.15} parent=11 // pred_fallthru
        _
    $region12: #{multires_block_forward.15} parent=5 // pred_fallthru
      _
    %p124 = scmp.lt.s32.totalorder %s9, 3
    // Predicated region
    $region21: #{multires_block_forward.15} parent=5 // pred_check
      %p125 = pneg %p124
    $region22: #{multires_block_forward.15} parent=5 // pred_check_branch
      %127 = sbr.rel (%p125) target = $region24
    $region23: #{multires_block_forward.15} parent=5 // pred_region
      // Predicated region
      $region25: #{multires_block_forward.15} parent=23 // pred_check
        %p128 = pneg %p29
      $region26: #{multires_block_forward.15} parent=23 // pred_check_branch
        %130 = sbr.rel (%p128) target = $region28
      $region27: #{multires_block_forward.15} parent=23 // pred_region
        %s131 = smul.u32 16, %s9
        %p132 = scmp.lt.s32.totalorder %s131, 47
        %s133 = scalar_select %p132, %s131, 47
        %s134 = smul.addr %s133, 8
        %s135 = scalar_lea.vmem %s0, %s134
        %s136 = smul.u32 16, %s9
      $region28: #{multires_block_forward.15} parent=23 // pred_fallthru
        _
    $region24: #{multires_block_forward.15} parent=5 // pred_fallthru
      _
    %p137 = scmp.le.s32.totalorder 1, %s9
    %p138 = scmp.lt.s32.totalorder %s9, 4
    %p139 = pnand %p137, %p138
    %p140 = pneg %p139
    // Predicated region
    $region29: #{multires_block_forward.15} parent=5 // pred_check
      _
    $region30: #{multires_block_forward.15} parent=5 // pred_check_branch
      %142 = sbr.rel (%p139) target = $region32
    $region31: #{multires_block_forward.15} parent=5 // pred_region
      %s143 = ssub.s32 %s9, 1
      %s144 = smul.u32 16, %s14
      %p145 = scmp.lt.s32.totalorder %s144, 47
      %s146 = scalar_select %p145, %s144, 47
      %s147 = smul.addr %s146, 8
      %s148 = scalar_lea.vmem %s0, %s147
      %p149 = pneg %p35
      %p150 = pneg %p32
      %p151 = pneg %p56
      %p152 = pneg %p53
      %p153 = pneg %p77
      %p154 = pneg %p74
      %p155 = pneg %p103
      %p156 = pneg %p100
      %s157 = smul.u32 16, %s14
      %p158 = scmp.lt.s32.totalorder %s157, 47
      %s159 = scalar_select %p158, %s157, 47
      %s160 = smul.addr %s159, 8
      %s161 = scalar_lea.vmem %s3, %s160
      %s162 = smul.u32 16, %s14
      %p163 = scmp.lt.s32.totalorder %s162, 47
      %s164 = scalar_select %p163, %s162, 47
      %s165 = smul.addr %s164, 8
      %s166 = scalar_lea.vmem %s0, %s165
      %s167 = smul.u32 16, %s14
      %s168 = smul.u32 16, %s14
      %p169 = scmp.lt.s32.totalorder %s168, 47
      %s170 = scalar_select %p169, %s168, 47
      %s171 = smul.addr %s170, 8
      %s172 = scalar_lea.vmem %s3, %s171
      %s173 = smul.u32 16, %s14
      %v174 = vld [vmem:[%s166] sm:$0xff]
      %v175 = vld [vmem:[%s166 + $0x8] sm:$0xff]
      %v176 = vld [vmem:[%s166 + $0x10] sm:$0xff]
      %v177 = vld [vmem:[%s166 + $0x18] sm:$0xff]
      %v178 = vld [vmem:[%s166 + $0x20] sm:$0xff]
      %v179 = vld [vmem:[%s166 + $0x28] sm:$0xff]
      %v180 = vld [vmem:[%s166 + $0x30] sm:$0xff]
      %v181 = vld [vmem:[%s166 + $0x38] sm:$0xff]
      %v182 = vld [vmem:[%s166 + $0x40] sm:$0xff]
      %v183 = vld [vmem:[%s166 + $0x48] sm:$0xff]
      %v184 = vld [vmem:[%s166 + $0x50] sm:$0xff]
      %v185 = vld [vmem:[%s166 + $0x58] sm:$0xff]
      %v186 = vld [vmem:[%s166 + $0x60] sm:$0xff]
      %v187 = vld [vmem:[%s166 + $0x68] sm:$0xff]
      %v188 = vld [vmem:[%s166 + $0x70] sm:$0xff]
      %v189 = vld [vmem:[%s166 + $0x78] sm:$0xff]
      %vm190 = vcmask 64512
      %v191 = vsel %vm190, %v174, 0.0
      %192 = vadd.xlane.f32.xlu0 %v191
      %v193 = vpop.xlane.xlu0 %192
      %v194 = vsel %vm190, %v175, 0.0
      %195 = vadd.xlane.f32.xlu0 %v194
      %v196 = vpop.xlane.xlu0 %195
      %v197 = vsel %vm190, %v176, 0.0
      %198 = vadd.xlane.f32.xlu0 %v197
      %v199 = vpop.xlane.xlu0 %198
      %v200 = vsel %vm190, %v177, 0.0
      %201 = vadd.xlane.f32.xlu0 %v200
      %v202 = vpop.xlane.xlu0 %201
      %v203 = vsel %vm190, %v178, 0.0
      %204 = vadd.xlane.f32.xlu0 %v203
      %v205 = vpop.xlane.xlu0 %204
      %v206 = vsel %vm190, %v179, 0.0
      %207 = vadd.xlane.f32.xlu0 %v206
      %v208 = vpop.xlane.xlu0 %207
      %v209 = vsel %vm190, %v180, 0.0
      %210 = vadd.xlane.f32.xlu0 %v209
      %v211 = vpop.xlane.xlu0 %210
      %v212 = vsel %vm190, %v181, 0.0
      %213 = vadd.xlane.f32.xlu0 %v212
      %v214 = vpop.xlane.xlu0 %213
      %v215 = vsel %vm190, %v182, 0.0
      %216 = vadd.xlane.f32.xlu0 %v215
      %v217 = vpop.xlane.xlu0 %216
      %v218 = vsel %vm190, %v183, 0.0
      %219 = vadd.xlane.f32.xlu0 %v218
      %v220 = vpop.xlane.xlu0 %219
      %v221 = vsel %vm190, %v184, 0.0
      %222 = vadd.xlane.f32.xlu0 %v221
      %v223 = vpop.xlane.xlu0 %222
      %v224 = vsel %vm190, %v185, 0.0
      %225 = vadd.xlane.f32.xlu0 %v224
      %v226 = vpop.xlane.xlu0 %225
      %v227 = vsel %vm190, %v186, 0.0
      %228 = vadd.xlane.f32.xlu0 %v227
      %v229 = vpop.xlane.xlu0 %228
      %v230 = vsel %vm190, %v187, 0.0
      %231 = vadd.xlane.f32.xlu0 %v230
      %v232 = vpop.xlane.xlu0 %231
      %v233 = vsel %vm190, %v188, 0.0
      %234 = vadd.xlane.f32.xlu0 %v233
      %v235 = vpop.xlane.xlu0 %234
      %v236 = vsel %vm190, %v189, 0.0
      %237 = vadd.xlane.f32.xlu0 %v236
      %v238 = vpop.xlane.xlu0 %237
      %v239 = vrcp.pop 8.0
      %v240 = vmul.f32 8.0, %v239
      %v241 = vsub.f32 1.0, %v240
      %v242 = vmul.f32 %v239, %v241
      %v243 = vadd.f32 %v239, %v242
      %vm244 = vweird.f32 %v239
      %v245 = vsel %vm244, %v239, %v243
      %v246 = vmul.f32 %v193, %v245
      %v247 = vmul.f32 %v196, %v245
      %v248 = vmul.f32 %v199, %v245
      %v249 = vmul.f32 %v202, %v245
      %v250 = vmul.f32 %v205, %v245
      %v251 = vmul.f32 %v208, %v245
      %v252 = vmul.f32 %v211, %v245
      %v253 = vmul.f32 %v214, %v245
      %v254 = vmul.f32 %v217, %v245
      %v255 = vmul.f32 %v220, %v245
      %v256 = vmul.f32 %v223, %v245
      %v257 = vmul.f32 %v226, %v245
      %v258 = vmul.f32 %v229, %v245
      %v259 = vmul.f32 %v232, %v245
      %v260 = vmul.f32 %v235, %v245
      %v261 = vmul.f32 %v238, %v245
      %v262 = vsub.f32 %v174, %v246
      %v263 = vsub.f32 %v175, %v247
      %v264 = vsub.f32 %v176, %v248
      %v265 = vsub.f32 %v177, %v249
      %v266 = vsub.f32 %v178, %v250
      %v267 = vsub.f32 %v179, %v251
      %v268 = vsub.f32 %v180, %v252
      %v269 = vsub.f32 %v181, %v253
      %v270 = vsub.f32 %v182, %v254
      %v271 = vsub.f32 %v183, %v255
      %v272 = vsub.f32 %v184, %v256
      %v273 = vsub.f32 %v185, %v257
      %v274 = vsub.f32 %v186, %v258
      %v275 = vsub.f32 %v187, %v259
      %v276 = vsub.f32 %v188, %v260
      %v277 = vsub.f32 %v189, %v261
      %v278 = vmul.f32 %v262, %v262
      %v279 = vmul.f32 %v263, %v263
      %v280 = vmul.f32 %v264, %v264
      %v281 = vmul.f32 %v265, %v265
      %v282 = vmul.f32 %v266, %v266
      %v283 = vmul.f32 %v267, %v267
      %v284 = vmul.f32 %v268, %v268
      %v285 = vmul.f32 %v269, %v269
      %v286 = vmul.f32 %v270, %v270
      %v287 = vmul.f32 %v271, %v271
      %v288 = vmul.f32 %v272, %v272
      %v289 = vmul.f32 %v273, %v273
      %v290 = vmul.f32 %v274, %v274
      %v291 = vmul.f32 %v275, %v275
      %v292 = vmul.f32 %v276, %v276
      %v293 = vmul.f32 %v277, %v277
      %v294 = vsel %vm190, %v278, 0.0
      %295 = vadd.xlane.f32.xlu0 %v294
      %v296 = vpop.xlane.xlu0 %295
      %v297 = vsel %vm190, %v279, 0.0
      %298 = vadd.xlane.f32.xlu0 %v297
      %v299 = vpop.xlane.xlu0 %298
      %v300 = vsel %vm190, %v280, 0.0
      %301 = vadd.xlane.f32.xlu0 %v300
      %v302 = vpop.xlane.xlu0 %301
      %v303 = vsel %vm190, %v281, 0.0
      %304 = vadd.xlane.f32.xlu0 %v303
      %v305 = vpop.xlane.xlu0 %304
      %v306 = vsel %vm190, %v282, 0.0
      %307 = vadd.xlane.f32.xlu0 %v306
      %v308 = vpop.xlane.xlu0 %307
      %v309 = vsel %vm190, %v283, 0.0
      %310 = vadd.xlane.f32.xlu0 %v309
      %v311 = vpop.xlane.xlu0 %310
      %v312 = vsel %vm190, %v284, 0.0
      %313 = vadd.xlane.f32.xlu0 %v312
      %v314 = vpop.xlane.xlu0 %313
      %v315 = vsel %vm190, %v285, 0.0
      %316 = vadd.xlane.f32.xlu0 %v315
      %v317 = vpop.xlane.xlu0 %316
      %v318 = vsel %vm190, %v286, 0.0
      %319 = vadd.xlane.f32.xlu0 %v318
      %v320 = vpop.xlane.xlu0 %319
      %v321 = vsel %vm190, %v287, 0.0
      %322 = vadd.xlane.f32.xlu0 %v321
      %v323 = vpop.xlane.xlu0 %322
      %v324 = vsel %vm190, %v288, 0.0
      %325 = vadd.xlane.f32.xlu0 %v324
      %v326 = vpop.xlane.xlu0 %325
      %v327 = vsel %vm190, %v289, 0.0
      %328 = vadd.xlane.f32.xlu0 %v327
      %v329 = vpop.xlane.xlu0 %328
      %v330 = vsel %vm190, %v290, 0.0
      %331 = vadd.xlane.f32.xlu0 %v330
      %v332 = vpop.xlane.xlu0 %331
      %v333 = vsel %vm190, %v291, 0.0
      %334 = vadd.xlane.f32.xlu0 %v333
      %v335 = vpop.xlane.xlu0 %334
      %v336 = vsel %vm190, %v292, 0.0
      %337 = vadd.xlane.f32.xlu0 %v336
      %v338 = vpop.xlane.xlu0 %337
      %v339 = vsel %vm190, %v293, 0.0
      %340 = vadd.xlane.f32.xlu0 %v339
      %v341 = vpop.xlane.xlu0 %340
      %v342 = vmul.f32 %v296, %v245
      %v343 = vmul.f32 %v299, %v245
      %v344 = vmul.f32 %v302, %v245
      %v345 = vmul.f32 %v305, %v245
      %v346 = vmul.f32 %v308, %v245
      %v347 = vmul.f32 %v311, %v245
      %v348 = vmul.f32 %v314, %v245
      %v349 = vmul.f32 %v317, %v245
      %v350 = vmul.f32 %v320, %v245
      %v351 = vmul.f32 %v323, %v245
      %v352 = vmul.f32 %v326, %v245
      %v353 = vmul.f32 %v329, %v245
      %v354 = vmul.f32 %v332, %v245
      %v355 = vmul.f32 %v335, %v245
      %v356 = vmul.f32 %v338, %v245
      %v357 = vmul.f32 %v341, %v245
      %v358 = vadd.f32 %v342, 1e-05
      %v359 = vadd.f32 %v343, 1e-05
      %v360 = vadd.f32 %v344, 1e-05
      %v361 = vadd.f32 %v345, 1e-05
      %v362 = vadd.f32 %v346, 1e-05
      %v363 = vadd.f32 %v347, 1e-05
      %v364 = vadd.f32 %v348, 1e-05
      %v365 = vadd.f32 %v349, 1e-05
      %v366 = vadd.f32 %v350, 1e-05
      %v367 = vadd.f32 %v351, 1e-05
      %v368 = vadd.f32 %v352, 1e-05
      %v369 = vadd.f32 %v353, 1e-05
      %v370 = vadd.f32 %v354, 1e-05
      %v371 = vadd.f32 %v355, 1e-05
      %v372 = vadd.f32 %v356, 1e-05
      %v373 = vadd.f32 %v357, 1e-05
      %v374 = vrsqrt.pop %v358
      %v375 = vmul.f32 %v374, %v358
      %v376 = vmul.f32 %v375, %v374
      %v377 = vmul.f32 0.5, %v376
      %v378 = vsub.f32 1.5, %v377
      %v379 = vmul.f32 %v374, %v378
      %vm380 = vweird.f32 %v358
      %vm381 = vweird.f32 %v374
      %vm382 = vmor %vm380, %vm381
      %v383 = vsel %vm382, %v374, %v379
      %v384 = vrsqrt.pop %v359
      %v385 = vmul.f32 %v384, %v359
      %v386 = vmul.f32 %v385, %v384
      %v387 = vmul.f32 0.5, %v386
      %v388 = vsub.f32 1.5, %v387
      %v389 = vmul.f32 %v384, %v388
      %vm390 = vweird.f32 %v359
      %vm391 = vweird.f32 %v384
      %vm392 = vmor %vm390, %vm391
      %v393 = vsel %vm392, %v384, %v389
      %v394 = vrsqrt.pop %v360
      %v395 = vmul.f32 %v394, %v360
      %v396 = vmul.f32 %v395, %v394
      %v397 = vmul.f32 0.5, %v396
      %v398 = vsub.f32 1.5, %v397
      %v399 = vmul.f32 %v394, %v398
      %vm400 = vweird.f32 %v360
      %vm401 = vweird.f32 %v394
      %vm402 = vmor %vm400, %vm401
      %v403 = vsel %vm402, %v394, %v399
      %v404 = vrsqrt.pop %v361
      %v405 = vmul.f32 %v404, %v361
      %v406 = vmul.f32 %v405, %v404
      %v407 = vmul.f32 0.5, %v406
      %v408 = vsub.f32 1.5, %v407
      %v409 = vmul.f32 %v404, %v408
      %vm410 = vweird.f32 %v361
      %vm411 = vweird.f32 %v404
      %vm412 = vmor %vm410, %vm411
      %v413 = vsel %vm412, %v404, %v409
      %v414 = vrsqrt.pop %v362
      %v415 = vmul.f32 %v414, %v362
      %v416 = vmul.f32 %v415, %v414
      %v417 = vmul.f32 0.5, %v416
      %v418 = vsub.f32 1.5, %v417
      %v419 = vmul.f32 %v414, %v418
      %vm420 = vweird.f32 %v362
      %vm421 = vweird.f32 %v414
      %vm422 = vmor %vm420, %vm421
      %v423 = vsel %vm422, %v414, %v419
      %v424 = vrsqrt.pop %v363
      %v425 = vmul.f32 %v424, %v363
      %v426 = vmul.f32 %v425, %v424
      %v427 = vmul.f32 0.5, %v426
      %v428 = vsub.f32 1.5, %v427
      %v429 = vmul.f32 %v424, %v428
      %vm430 = vweird.f32 %v363
      %vm431 = vweird.f32 %v424
      %vm432 = vmor %vm430, %vm431
      %v433 = vsel %vm432, %v424, %v429
      %v434 = vrsqrt.pop %v364
      %v435 = vmul.f32 %v434, %v364
      %v436 = vmul.f32 %v435, %v434
      %v437 = vmul.f32 0.5, %v436
      %v438 = vsub.f32 1.5, %v437
      %v439 = vmul.f32 %v434, %v438
      %vm440 = vweird.f32 %v364
      %vm441 = vweird.f32 %v434
      %vm442 = vmor %vm440, %vm441
      %v443 = vsel %vm442, %v434, %v439
      %v444 = vrsqrt.pop %v365
      %v445 = vmul.f32 %v444, %v365
      %v446 = vmul.f32 %v445, %v444
      %v447 = vmul.f32 0.5, %v446
      %v448 = vsub.f32 1.5, %v447
      %v449 = vmul.f32 %v444, %v448
      %vm450 = vweird.f32 %v365
      %vm451 = vweird.f32 %v444
      %vm452 = vmor %vm450, %vm451
      %v453 = vsel %vm452, %v444, %v449
      %v454 = vrsqrt.pop %v366
      %v455 = vmul.f32 %v454, %v366
      %v456 = vmul.f32 %v455, %v454
      %v457 = vmul.f32 0.5, %v456
      %v458 = vsub.f32 1.5, %v457
      %v459 = vmul.f32 %v454, %v458
      %vm460 = vweird.f32 %v366
      %vm461 = vweird.f32 %v454
      %vm462 = vmor %vm460, %vm461
      %v463 = vsel %vm462, %v454, %v459
      %v464 = vrsqrt.pop %v367
      %v465 = vmul.f32 %v464, %v367
      %v466 = vmul.f32 %v465, %v464
      %v467 = vmul.f32 0.5, %v466
      %v468 = vsub.f32 1.5, %v467
      %v469 = vmul.f32 %v464, %v468
      %vm470 = vweird.f32 %v367
      %vm471 = vweird.f32 %v464
      %vm472 = vmor %vm470, %vm471
      %v473 = vsel %vm472, %v464, %v469
      %v474 = vrsqrt.pop %v368
      %v475 = vmul.f32 %v474, %v368
      %v476 = vmul.f32 %v475, %v474
      %v477 = vmul.f32 0.5, %v476
      %v478 = vsub.f32 1.5, %v477
      %v479 = vmul.f32 %v474, %v478
      %vm480 = vweird.f32 %v368
      %vm481 = vweird.f32 %v474
      %vm482 = vmor %vm480, %vm481
      %v483 = vsel %vm482, %v474, %v479
      %v484 = vrsqrt.pop %v369
      %v485 = vmul.f32 %v484, %v369
      %v486 = vmul.f32 %v485, %v484
      %v487 = vmul.f32 0.5, %v486
      %v488 = vsub.f32 1.5, %v487
      %v489 = vmul.f32 %v484, %v488
      %vm490 = vweird.f32 %v369
      %vm491 = vweird.f32 %v484
      %vm492 = vmor %vm490, %vm491
      %v493 = vsel %vm492, %v484, %v489
      %v494 = vrsqrt.pop %v370
      %v495 = vmul.f32 %v494, %v370
      %v496 = vmul.f32 %v495, %v494
      %v497 = vmul.f32 0.5, %v496
      %v498 = vsub.f32 1.5, %v497
      %v499 = vmul.f32 %v494, %v498
      %vm500 = vweird.f32 %v370
      %vm501 = vweird.f32 %v494
      %vm502 = vmor %vm500, %vm501
      %v503 = vsel %vm502, %v494, %v499
      %v504 = vrsqrt.pop %v371
      %v505 = vmul.f32 %v504, %v371
      %v506 = vmul.f32 %v505, %v504
      %v507 = vmul.f32 0.5, %v506
      %v508 = vsub.f32 1.5, %v507
      %v509 = vmul.f32 %v504, %v508
      %vm510 = vweird.f32 %v371
      %vm511 = vweird.f32 %v504
      %vm512 = vmor %vm510, %vm511
      %v513 = vsel %vm512, %v504, %v509
      %v514 = vrsqrt.pop %v372
      %v515 = vmul.f32 %v514, %v372
      %v516 = vmul.f32 %v515, %v514
      %v517 = vmul.f32 0.5, %v516
      %v518 = vsub.f32 1.5, %v517
      %v519 = vmul.f32 %v514, %v518
      %vm520 = vweird.f32 %v372
      %vm521 = vweird.f32 %v514
      %vm522 = vmor %vm520, %vm521
      %v523 = vsel %vm522, %v514, %v519
      %v524 = vrsqrt.pop %v373
      %v525 = vmul.f32 %v524, %v373
      %v526 = vmul.f32 %v525, %v524
      %v527 = vmul.f32 0.5, %v526
      %v528 = vsub.f32 1.5, %v527
      %v529 = vmul.f32 %v524, %v528
      %vm530 = vweird.f32 %v373
      %vm531 = vweird.f32 %v524
      %vm532 = vmor %vm530, %vm531
      %v533 = vsel %vm532, %v524, %v529
      %v534 = vmul.f32 %v262, %v383
      %v535 = vmul.f32 %v263, %v393
      %v536 = vmul.f32 %v264, %v403
      %v537 = vmul.f32 %v265, %v413
      %v538 = vmul.f32 %v266, %v423
      %v539 = vmul.f32 %v267, %v433
      %v540 = vmul.f32 %v268, %v443
      %v541 = vmul.f32 %v269, %v453
      %v542 = vmul.f32 %v270, %v463
      %v543 = vmul.f32 %v271, %v473
      %v544 = vmul.f32 %v272, %v483
      %v545 = vmul.f32 %v273, %v493
      %v546 = vmul.f32 %v274, %v503
      %v547 = vmul.f32 %v275, %v513
      %v548 = vmul.f32 %v276, %v523
      %v549 = vmul.f32 %v277, %v533
      %v550 = vld [vmem:[%s1] sm:$0x1]
      %v552 = vperm.slane %v550, 0
      %v554 = vmul.f32 %v534, %v552
      %v555 = vmul.f32 %v535, %v552
      %v556 = vmul.f32 %v536, %v552
      %v557 = vmul.f32 %v537, %v552
      %v558 = vmul.f32 %v538, %v552
      %v559 = vmul.f32 %v539, %v552
      %v560 = vmul.f32 %v540, %v552
      %v561 = vmul.f32 %v541, %v552
      %v562 = vmul.f32 %v542, %v552
      %v563 = vmul.f32 %v543, %v552
      %v564 = vmul.f32 %v544, %v552
      %v565 = vmul.f32 %v545, %v552
      %v566 = vmul.f32 %v546, %v552
      %v567 = vmul.f32 %v547, %v552
      %v568 = vmul.f32 %v548, %v552
      %v569 = vmul.f32 %v549, %v552
      %v570 = vld [vmem:[%s2] sm:$0x1]
      %v572 = vperm.slane %v570, 0
      %v574 = vadd.f32 %v554, %v572
      %v575 = vadd.f32 %v555, %v572
      %v576 = vadd.f32 %v556, %v572
      %v577 = vadd.f32 %v557, %v572
      %v578 = vadd.f32 %v558, %v572
      %v579 = vadd.f32 %v559, %v572
      %v580 = vadd.f32 %v560, %v572
      %v581 = vadd.f32 %v561, %v572
      %v582 = vadd.f32 %v562, %v572
      %v583 = vadd.f32 %v563, %v572
      %v584 = vadd.f32 %v564, %v572
      %v585 = vadd.f32 %v565, %v572
      %v586 = vadd.f32 %v566, %v572
      %v587 = vadd.f32 %v567, %v572
      %v588 = vadd.f32 %v568, %v572
      %v589 = vadd.f32 %v569, %v572
      %590 = vst.msk [vmem:[%s172] sm:$0xff] %vm190, %v574
      %591 = vst.msk [vmem:[%s172 + $0x8] sm:$0xff] %vm190, %v575
      %592 = vst.msk [vmem:[%s172 + $0x10] sm:$0xff] %vm190, %v576
      %593 = vst.msk [vmem:[%s172 + $0x18] sm:$0xff] %vm190, %v577
      %594 = vst.msk [vmem:[%s172 + $0x20] sm:$0xff] %vm190, %v578
      %595 = vst.msk [vmem:[%s172 + $0x28] sm:$0xff] %vm190, %v579
      %596 = vst.msk [vmem:[%s172 + $0x30] sm:$0xff] %vm190, %v580
      %597 = vst.msk [vmem:[%s172 + $0x38] sm:$0xff] %vm190, %v581
      %598 = vst.msk [vmem:[%s172 + $0x40] sm:$0xff] %vm190, %v582
      %599 = vst.msk [vmem:[%s172 + $0x48] sm:$0xff] %vm190, %v583
      %600 = vst.msk [vmem:[%s172 + $0x50] sm:$0xff] %vm190, %v584
      %601 = vst.msk [vmem:[%s172 + $0x58] sm:$0xff] %vm190, %v585
      %602 = vst.msk [vmem:[%s172 + $0x60] sm:$0xff] %vm190, %v586
      %603 = vst.msk [vmem:[%s172 + $0x68] sm:$0xff] %vm190, %v587
      %604 = vst.msk [vmem:[%s172 + $0x70] sm:$0xff] %vm190, %v588
      %605 = vst.msk [vmem:[%s172 + $0x78] sm:$0xff] %vm190, %v589
      %s606 = smul.u32 16, %s14
      %p607 = scmp.lt.s32.totalorder %s606, 47
      %s608 = scalar_select %p607, %s606, 47
      %s609 = smul.addr %s608, 8
      %s610 = scalar_lea.vmem %s3, %s609
      // Predicated region
      $region33: #{multires_block_forward.15} parent=31 // pred_check
        %p611 = pneg %p100
      $region34: #{multires_block_forward.15} parent=31 // pred_check_branch
        %613 = sbr.rel (%p611) target = $region36
      $region35: #{multires_block_forward.15} parent=31 // pred_region
        %s614 = smul.u32 16, %s14
      $region36: #{multires_block_forward.15} parent=31 // pred_fallthru
        _
    $region32: #{multires_block_forward.15} parent=5 // pred_fallthru
      _
    %p615 = scmp.le.s32.totalorder 2, %s9
    // Predicated region
    $region37: #{multires_block_forward.15} parent=5 // pred_check
      %p616 = pneg %p615
    $region38: #{multires_block_forward.15} parent=5 // pred_check_branch
      %618 = sbr.rel (%p616) target = $region40
    $region39: #{multires_block_forward.15} parent=5 // pred_region
      %s619 = ssub.s32 %s9, 2
      // Predicated region
      $region41: #{multires_block_forward.15} parent=39 // pred_check
        %p620 = pneg %p106
      $region42: #{multires_block_forward.15} parent=39 // pred_check_branch
        %622 = sbr.rel (%p620) target = $region44
      $region43: #{multires_block_forward.15} parent=39 // pred_region
        %s623 = smul.u32 16, %s15
        %p624 = scmp.lt.s32.totalorder %s623, 47
        %s625 = scalar_select %p624, %s623, 47
        %s626 = smul.addr %s625, 8
        %s627 = scalar_lea.vmem %s3, %s626
      $region44: #{multires_block_forward.15} parent=39 // pred_fallthru
        _
    $region40: #{multires_block_forward.15} parent=5 // pred_fallthru
      _
  $region6: #{multires_block_forward.15} parent=0 // loop_footer
    %s13 = sadd.s32 1, %s9
  $region7: #{multires_block_forward.15} parent=0 // loop_footer_branch
    %8 = sbr.rel target = $region3
  $region8: #{multires_block_forward.15} parent=0 // loop_exit
    _

</llo_original>
